<compile_context>
chip_gen: v5e
topology: v5e:2x2
jax: 0.10.0
libtpu: 0.0.40
codegen_flags: <defaults>
</compile_context>

<pallas_src>
import functools
import math

import jax
import jax.numpy as jnp
from jax.experimental import pallas as pl
from jax.experimental.pallas import tpu as pltpu

F32 = jnp.float32
NEG_INF = -1e30


# --------------------------------------------------------------------------
# In-kernel helpers
# --------------------------------------------------------------------------

def _ln(x, g, b, eps=1e-12):
    mu = jnp.mean(x, axis=-1, keepdims=True)
    var = jnp.mean(jnp.square(x - mu), axis=-1, keepdims=True)
    return (x - mu) * jax.lax.rsqrt(var + eps) * g + b


def _softmax_last(s):
    s = s - jnp.max(s, axis=-1, keepdims=True)
    e = jnp.exp(s)
    return e / jnp.sum(e, axis=-1, keepdims=True)


def _encoder(x, refs, *, num_heads):
    """Pos-emb + LN + fully fused BERT layers.

    Attention over all M = B*seq rows with a precomputed block-diagonal bias
    (so there is no per-batch Python loop), and per-head context accumulated
    straight through Wo into a full-width [M, C] accumulator (no concats).
    """
    (bias_ref, pos_ref, eg_ref, eb_ref, wqkv_ref, bqkv_ref, wo_ref, bo_ref,
     g1_ref, be1_ref, w1_ref, b1_ref, w2_ref, b2_ref, g2_ref, be2_ref) = refs

    h = _ln(x + pos_ref[...], eg_ref[...], eb_ref[...])
    m, c = h.shape
    d = c // num_heads
    scale = 1.0 / math.sqrt(d)
    bias = bias_ref[...]                      # [M, M] block-diagonal 0 / -1e30
    num_layers = wqkv_ref.shape[0]
    trans_b = (((1,), (1,)), ((), ()))        # q @ k.T without a transpose

    for l in range(num_layers):               # static unroll (num_layers == 2)
        # Fused QKV projection: one [M, C] @ [C, 3C] MXU pass.
        qkv = (jnp.dot(h, wqkv_ref[l], preferred_element_type=jnp.float32)
               + bqkv_ref[l])
        q = qkv[:, 0 * c:1 * c]
        k = qkv[:, 1 * c:2 * c]
        v = qkv[:, 2 * c:3 * c]
        wo_l = wo_ref[l]

        # Accumulate-through-Wo: attn_out = sum_h (softmax(q_h k_h^T) v_h) Wo_h
        acc = jnp.zeros((m, c), jnp.float32)
        for hh in range(num_heads):
            cols = slice(hh * d, (hh + 1) * d)
            s = jax.lax.dot_general(q[:, cols], k[:, cols], trans_b,
                                    preferred_element_type=jnp.float32)
            p = _softmax_last(s * scale + bias)
            ctx_h = jnp.dot(p, v[:, cols], preferred_element_type=jnp.float32)
            acc = acc + jnp.dot(ctx_h, wo_l[cols, :],
                                preferred_element_type=jnp.float32)
        h = _ln(h + acc + bo_ref[l], g1_ref[l], be1_ref[l])

        # FFN + residual + LN.
        # TODO(synk): HF/PyTorch 'gelu' is the exact erf form; the tanh
        # approximation is used here (tiny numeric deviation, safe lowering).
        inter = jax.nn.gelu(
            jnp.dot(h, w1_ref[l], preferred_element_type=jnp.float32) + b1_ref[l])
        ffn = jnp.dot(inter, w2_ref[l],
                      preferred_element_type=jnp.float32) + b2_ref[l]
        h = _ln(h + ffn, g2_ref[l], be2_ref[l])
    return h


# --------------------------------------------------------------------------
# The single fused Pallas kernel
# --------------------------------------------------------------------------

def _fused_forward_kernel(*refs, batch, l_glob, n_token, num_heads):
    # inputs
    patches_ref, wbb_ref, wred_ref, bred_ref = refs[0:4]
    glob_refs = refs[4:20]
    tm1t_ref, tm2_ref = refs[20:22]
    seq_refs = refs[22:38]
    predw_ref, predb_ref = refs[38:40]
    # output + scratch
    o_ref = refs[40]
    attn_scratch = refs[41]                   # VMEM-resident attn_feature

    # ---- 1. Stem: patch-embed matmul + 1x1-conv reduction (eval BN folded).
    # TODO(synk): resnet50 backbone is an external module not given in the
    # source; substituted by a single patch-embedding matmul.
    feat = jnp.dot(patches_ref[...], wbb_ref[...],
                   preferred_element_type=jnp.float32)
    visual = (jnp.dot(feat, wred_ref[...], preferred_element_type=jnp.float32)
              + bred_ref[...])                                   # [B*L, C]

    # ---- 2. Global BERT encoder (VMEM-resident input/output).
    glob = _encoder(visual, glob_refs, num_heads=num_heads)      # [B*L, C]

    # ---- 3. Token pooling: tanh linear + token linear + softmax + bmm.
    a1 = jnp.tanh(jnp.dot(glob, tm1t_ref[...],
                          preferred_element_type=jnp.float32))   # [B*L, C]
    tm2 = tm2_ref[...]                                           # [n_token, C]
    for b in range(batch):                    # static unroll (batch == 2)
        rows = slice(b * l_glob, (b + 1) * l_glob)
        # Permuted scores [n_token, L] produced directly by a transposed
        # contraction on the MXU (no explicit jnp.transpose / XLU relayout).
        s = jax.lax.dot_general(tm2, a1[rows], (((1,), (1,)), ((), ())),
                                preferred_element_type=jnp.float32)
        p = _softmax_last(s)
        attn_scratch[b * n_token:(b + 1) * n_token, :] = jnp.dot(
            p, visual[rows], preferred_element_type=jnp.float32)

    # ---- 4. Sequence BERT encoder on the VMEM-resident attn_feature.
    sequen = _encoder(attn_scratch[...], seq_refs, num_heads=num_heads)

    # ---- 5. Prediction (the only HBM-visible store of the whole forward).
    o_ref[...] = (jnp.dot(sequen, predw_ref[...],
                          preferred_element_type=jnp.float32)
                  + predb_ref[...]).astype(o_ref.dtype)
    # TODO(synk): training-only branch (prediction_ex + data-dependent
    # in-place argmax masking loops, dropout) is omitted; eval path returned.


# --------------------------------------------------------------------------
# Wrapper
# --------------------------------------------------------------------------

_ENC_KEYS = ("bias", "pos", "emb_g", "emb_b", "wqkv", "bqkv", "wo", "bo",
             "ln1_g", "ln1_b", "w1", "b1", "w2", "b2", "ln2_g", "ln2_b")


def _cost_estimate(args, out_shape, *, B, L, n_token, C, inter, num_layers):
    def enc_flops(M):
        per = (2 * M * C * 3 * C          # fused QKV
               + 2 * 2 * M * M * C        # scores + p@v (all heads)
               + 2 * M * C * C            # through-Wo
               + 2 * 2 * M * C * inter)   # FFN
        return num_layers * per

    Mg, Ms = B * L, B * n_token
    pp_cin, bb = args[0].shape[1], args[1].shape[1]
    flops = 2 * Mg * pp_cin * bb + 2 * Mg * bb * C
    flops += enc_flops(Mg) + enc_flops(Ms)
    flops += 2 * Mg * C * C + B * 2 * 2 * n_token * L * C
    flops += 2 * Ms * C * out_shape[1]
    trans = (num_layers * (Mg * Mg + Mg * inter)
             + num_layers * (Ms * Ms + Ms * inter) + Mg * C + B * n_token * L)
    nbytes = sum(int(a.size) * 4 for a in args) + out_shape[0] * out_shape[1] * 4
    return pl.CostEstimate(flops=int(flops), transcendentals=int(trans),
                           bytes_accessed=int(nbytes))


def bert_attn_model_forward(x_nchw, prep, *, patch=4, num_heads=4, n_token=8):
    B = x_nchw.shape[0]
    x = jnp.transpose(x_nchw, (0, 2, 3, 1)).astype(F32)      # NCHW -> NHWC
    _, H, W, Cin = x.shape
    Hp, Wp = H // patch, W // patch
    L = Wp * Hp
    C = prep["red_w"].shape[1]
    inter = prep["glob_bert"]["w1"].shape[2]
    num_layers = prep["glob_bert"]["wqkv"].shape[0]
    num_class = prep["pred_w"].shape[1]

    # Patch rows emitted in (b, w', h') order so the stem output already
    # matches PyTorch's permute(0, 3, 2, 1).contiguous().view(b, -1, c).
    patches = (x.reshape(B, Hp, patch, Wp, patch, Cin)
                 .transpose(0, 3, 1, 2, 4, 5)
                 .reshape(B * L, patch * patch * Cin))

    glob_args = tuple(prep["glob_bert"][k] for k in _ENC_KEYS)
    seq_args = tuple(prep["seq_bert"][k] for k in _ENC_KEYS)
    args = ((patches, prep["backbone_w"], prep["red_w"], prep["red_b"])
            + glob_args + (prep["tm1_t"], prep["tm2"]) + seq_args
            + (prep["pred_w"], prep["pred_b"]))

    out_shape = (B * n_token, num_class)
    kern = functools.partial(_fused_forward_kernel, batch=B, l_glob=L,
                             n_token=n_token, num_heads=num_heads)

    predict = pl.pallas_call(
        kern,
        out_shape=jax.ShapeDtypeStruct(out_shape, F32),
        in_specs=[pl.BlockSpec(a.shape) for a in args],
        out_specs=pl.BlockSpec(out_shape),
        scratch_shapes=[pltpu.VMEM((B * n_token, C), jnp.float32)],
        cost_estimate=_cost_estimate(args, out_shape, B=B, L=L,
                                     n_token=n_token, C=C, inter=inter,
                                     num_layers=num_layers),
    )(*args)
    return predict.reshape(B, n_token, num_class)


# --------------------------------------------------------------------------
# Parameters: raw (PyTorch-like) init + one-time prep (folding / stacking)
# --------------------------------------------------------------------------

def init_params(key, *, cin=3, patch=4, backbone_c=64, c_feature=32,
                n_token=8, num_class=64, intermediate=64, max_pos=64):
    keys = iter(jax.random.split(key, 256))

    def nrm(shape, std=0.02):
        return (std * jax.random.normal(next(keys), shape)).astype(F32)

    zeros = lambda s: jnp.zeros(s, F32)
    ones = lambda s: jnp.ones(s, F32)

    def bert_params(hidden, inter, n_layers):
        p = {"pos_emb": nrm((max_pos, hidden)),
             "emb_ln_g": ones((hidden,)), "emb_ln_b": zeros((hidden,)),
             "layers": []}
        for _ in range(n_layers):
            p["layers"].append({
                "wq": nrm((hidden, hidden)), "bq": zeros((hidden,)),
                "wk": nrm((hidden, hidden)), "bk": zeros((hidden,)),
                "wv": nrm((hidden, hidden)), "bv": zeros((hidden,)),
                "wo": nrm((hidden, hidden)), "bo": zeros((hidden,)),
                "ln1_g": ones((hidden,)), "ln1_b": zeros((hidden,)),
                "w1": nrm((hidden, inter)), "b1": zeros((inter,)),
                "w2": nrm((inter, hidden)), "b2": zeros((hidden,)),
                "ln2_g": ones((hidden,)), "ln2_b": zeros((hidden,)),
            })
        return p

    return {
        "backbone_w": nrm((patch * patch * cin, backbone_c)),
        "red_w": nrm((backbone_c, c_feature)),
        "bn_gamma": ones((c_feature,)), "bn_beta": zeros((c_feature,)),
        "bn_mean": zeros((c_feature,)), "bn_var": ones((c_feature,)),
        "glob_bert": bert_params(c_feature, intermediate, 2),
        "seq_bert": bert_params(c_feature, intermediate, 2),
        # loadPretrain() initializes these with uniform(0.0, 0.2)
        "trans_matrix_1": jax.random.uniform(next(keys), (c_feature, c_feature),
                                             F32, 0.0, 0.2),
        "trans_matrix_2": jax.random.uniform(next(keys), (n_token, c_feature),
                                             F32, 0.0, 0.2),
        "pred_w": nrm((c_feature, num_class)), "pred_b": zeros((num_class,)),
    }


def _block_diag_bias(batch, seq):
    idx = jnp.arange(batch * seq) // seq
    return jnp.where(idx[:, None] == idx[None, :], 0.0, NEG_INF).astype(F32)


def prepare_params(raw, *, batch, l_glob, n_token):
    """One-time prep: fold eval BN into the reduction weights, concat Wq/Wk/Wv
    into a single [C,3C] weight, stack per-layer tensors, transpose
    trans_matrix_1 (F.linear), pre-tile position embeddings and precompute the
    per-encoder block-diagonal attention bias."""

    def prep_bert(bp, seq):
        layers = bp["layers"]
        stack_m = lambda k: jnp.stack([lp[k] for lp in layers])
        stack_v = lambda k: jnp.stack([lp[k][None, :] for lp in layers])
        return {
            "bias": _block_diag_bias(batch, seq),
            "pos": jnp.tile(bp["pos_emb"][:seq], (batch, 1)),
            "emb_g": bp["emb_ln_g"][None, :],
            "emb_b": bp["emb_ln_b"][None, :],
            "wqkv": jnp.stack([jnp.concatenate([lp["wq"], lp["wk"], lp["wv"]],
                                               axis=1) for lp in layers]),
            "bqkv": jnp.stack([jnp.concatenate([lp["bq"], lp["bk"], lp["bv"]])[None, :]
                               for lp in layers]),
            "wo": stack_m("wo"), "bo": stack_v("bo"),
            "ln1_g": stack_v("ln1_g"), "ln1_b": stack_v("ln1_b"),
            "w1": stack_m("w1"), "b1": stack_v("b1"),
            "w2": stack_m("w2"), "b2": stack_v("b2"),
            "ln2_g": stack_v("ln2_g"), "ln2_b": stack_v("ln2_b"),
        }

    scale = raw["bn_gamma"] * jax.lax.rsqrt(raw["bn_var"] + 1e-5)
    return {
        "backbone_w": raw["backbone_w"],
        "red_w": raw["red_w"] * scale[None, :],
        "red_b": (raw["bn_beta"] - raw["bn_mean"] * scale)[None, :],
        "glob_bert": prep_bert(raw["glob_bert"], l_glob),
        "seq_bert": prep_bert(raw["seq_bert"], n_token),
        "tm1_t": raw["trans_matrix_1"].T,   # F.linear(x, W) == x @ W.T
        "tm2": raw["trans_matrix_2"],       # used via transposed dot_general
        "pred_w": raw["pred_w"],
        "pred_b": raw["pred_b"][None, :],
    }


# --------------------------------------------------------------------------
# Main
# --------------------------------------------------------------------------

if __name__ == "__main__":
    key = jax.random.PRNGKey(0)
    pkey, xkey = jax.random.split(key)

    # Small shapes consistent with the module's forward:
    #   image [B=2, C=3, H=8, W=32] (NCHW), c_feature=32, n_token=8,
    #   num_class=64, 2-layer BERTs with 4 attention heads.
    B, CIN, H, W = 2, 3, 8, 32
    PATCH, NUM_HEADS, N_TOKEN, NUM_CLASS = 4, 4, 8, 64

    raw = init_params(pkey, cin=CIN, patch=PATCH, n_token=N_TOKEN,
                      num_class=NUM_CLASS)
    prep = prepare_params(raw, batch=B,
                          l_glob=(H // PATCH) * (W // PATCH), n_token=N_TOKEN)
    x = jax.random.normal(xkey, (B, CIN, H, W), dtype=F32)

    fwd = jax.jit(lambda inp: bert_attn_model_forward(
        inp, prep, patch=PATCH, num_heads=NUM_HEADS, n_token=N_TOKEN))
    out = fwd(x)
    jax.block_until_ready(out)
    assert out.shape == (B, N_TOKEN, NUM_CLASS), out.shape
    assert out.dtype == jnp.float32
    assert bool(jnp.all(jnp.isfinite(out)))
    print("KERNEL_OK")
</pallas_src>

<mosaic_0001>
module attributes {stable_mosaic.version = 11 : i64} {
  func.func @_fused_forward_kernel(%arg0: memref<32x48xf32, #tpu.memory_space<vmem>>, %arg1: memref<48x64xf32, #tpu.memory_space<vmem>>, %arg2: memref<64x32xf32, #tpu.memory_space<vmem>>, %arg3: memref<1x32xf32, #tpu.memory_space<vmem>>, %arg4: memref<32x32xf32, #tpu.memory_space<vmem>>, %arg5: memref<32x32xf32, #tpu.memory_space<vmem>>, %arg6: memref<1x32xf32, #tpu.memory_space<vmem>>, %arg7: memref<1x32xf32, #tpu.memory_space<vmem>>, %arg8: memref<2x32x96xf32, #tpu.memory_space<vmem>>, %arg9: memref<2x1x96xf32, #tpu.memory_space<vmem>>, %arg10: memref<2x32x32xf32, #tpu.memory_space<vmem>>, %arg11: memref<2x1x32xf32, #tpu.memory_space<vmem>>, %arg12: memref<2x1x32xf32, #tpu.memory_space<vmem>>, %arg13: memref<2x1x32xf32, #tpu.memory_space<vmem>>, %arg14: memref<2x32x64xf32, #tpu.memory_space<vmem>>, %arg15: memref<2x1x64xf32, #tpu.memory_space<vmem>>, %arg16: memref<2x64x32xf32, #tpu.memory_space<vmem>>, %arg17: memref<2x1x32xf32, #tpu.memory_space<vmem>>, %arg18: memref<2x1x32xf32, #tpu.memory_space<vmem>>, %arg19: memref<2x1x32xf32, #tpu.memory_space<vmem>>, %arg20: memref<32x32xf32, #tpu.memory_space<vmem>>, %arg21: memref<8x32xf32, #tpu.memory_space<vmem>>, %arg22: memref<16x16xf32, #tpu.memory_space<vmem>>, %arg23: memref<16x32xf32, #tpu.memory_space<vmem>>, %arg24: memref<1x32xf32, #tpu.memory_space<vmem>>, %arg25: memref<1x32xf32, #tpu.memory_space<vmem>>, %arg26: memref<2x32x96xf32, #tpu.memory_space<vmem>>, %arg27: memref<2x1x96xf32, #tpu.memory_space<vmem>>, %arg28: memref<2x32x32xf32, #tpu.memory_space<vmem>>, %arg29: memref<2x1x32xf32, #tpu.memory_space<vmem>>, %arg30: memref<2x1x32xf32, #tpu.memory_space<vmem>>, %arg31: memref<2x1x32xf32, #tpu.memory_space<vmem>>, %arg32: memref<2x32x64xf32, #tpu.memory_space<vmem>>, %arg33: memref<2x1x64xf32, #tpu.memory_space<vmem>>, %arg34: memref<2x64x32xf32, #tpu.memory_space<vmem>>, %arg35: memref<2x1x32xf32, #tpu.memory_space<vmem>>, %arg36: memref<2x1x32xf32, #tpu.memory_space<vmem>>, %arg37: memref<2x1x32xf32, #tpu.memory_space<vmem>>, %arg38: memref<32x64xf32, #tpu.memory_space<vmem>>, %arg39: memref<1x64xf32, #tpu.memory_space<vmem>>, %arg40: memref<16x64xf32, #tpu.memory_space<vmem>>, %arg41: memref<16x32xf32, #tpu.memory_space<vmem>>) attributes {dimension_semantics = [], scalar_prefetch = 0 : i64, scratch_operands = 1 : i64, tpu.core_type = #tpu.core_type<tc>} {
    %c0 = arith.constant 0 : index
    %c0_0 = arith.constant 0 : index
    %0 = vector.load %arg0[%c0, %c0_0] : memref<32x48xf32, #tpu.memory_space<vmem>>, vector<32x48xf32>
    %c0_1 = arith.constant 0 : index
    %c0_2 = arith.constant 0 : index
    %1 = vector.load %arg1[%c0_1, %c0_2] : memref<48x64xf32, #tpu.memory_space<vmem>>, vector<48x64xf32>
    %cst = arith.constant dense<0.000000e+00> : vector<32x64xf32>
    %2 = tpu.matmul %0, %1, %cst {dimension_numbers = #tpu.dot_dimension_numbers<[1], [0], [0], [1], [0, 0, 1, 1], [], []>} : vector<32x48xf32>, vector<48x64xf32>, vector<32x64xf32> -> vector<32x64xf32>
    %c0_3 = arith.constant 0 : index
    %c0_4 = arith.constant 0 : index
    %3 = vector.load %arg2[%c0_3, %c0_4] : memref<64x32xf32, #tpu.memory_space<vmem>>, vector<64x32xf32>
    %cst_5 = arith.constant dense<0.000000e+00> : vector<32x32xf32>
    %4 = tpu.matmul %2, %3, %cst_5 {dimension_numbers = #tpu.dot_dimension_numbers<[1], [0], [0], [1], [0, 0, 1, 1], [], []>} : vector<32x64xf32>, vector<64x32xf32>, vector<32x32xf32> -> vector<32x32xf32>
    %c0_6 = arith.constant 0 : index
    %c0_7 = arith.constant 0 : index
    %5 = vector.load %arg3[%c0_6, %c0_7] : memref<1x32xf32, #tpu.memory_space<vmem>>, vector<1x32xf32>
    %6 = vector.broadcast %5 : vector<1x32xf32> to vector<32x32xf32>
    %7 = arith.addf %4, %6 : vector<32x32xf32>
    %c0_8 = arith.constant 0 : index
    %c0_9 = arith.constant 0 : index
    %8 = vector.load %arg5[%c0_8, %c0_9] : memref<32x32xf32, #tpu.memory_space<vmem>>, vector<32x32xf32>
    %9 = arith.addf %7, %8 : vector<32x32xf32>
    %c0_10 = arith.constant 0 : index
    %c0_11 = arith.constant 0 : index
    %10 = vector.load %arg6[%c0_10, %c0_11] : memref<1x32xf32, #tpu.memory_space<vmem>>, vector<1x32xf32>
    %c0_12 = arith.constant 0 : index
    %c0_13 = arith.constant 0 : index
    %11 = vector.load %arg7[%c0_12, %c0_13] : memref<1x32xf32, #tpu.memory_space<vmem>>, vector<1x32xf32>
    %cst_14 = arith.constant dense<0.000000e+00> : vector<32xf32>
    %12 = vector.multi_reduction <add>, %9, %cst_14 [1] : vector<32x32xf32> to vector<32xf32>
    %13 = vector.shape_cast %12 : vector<32xf32> to vector<32x1xf32>
    %cst_15 = arith.constant 3.200000e+01 : f32
    %14 = vector.broadcast %cst_15 : f32 to vector<32x1xf32>
    %15 = arith.divf %13, %14 : vector<32x1xf32>
    %16 = vector.broadcast %15 : vector<32x1xf32> to vector<32x32xf32>
    %17 = arith.subf %9, %16 : vector<32x32xf32>
    %18 = arith.mulf %17, %17 : vector<32x32xf32>
    %cst_16 = arith.constant dense<0.000000e+00> : vector<32xf32>
    %19 = vector.multi_reduction <add>, %18, %cst_16 [1] : vector<32x32xf32> to vector<32xf32>
    %20 = vector.shape_cast %19 : vector<32xf32> to vector<32x1xf32>
    %cst_17 = arith.constant 3.200000e+01 : f32
    %21 = vector.broadcast %cst_17 : f32 to vector<32x1xf32>
    %22 = arith.divf %20, %21 : vector<32x1xf32>
    %23 = vector.broadcast %15 : vector<32x1xf32> to vector<32x32xf32>
    %24 = arith.subf %9, %23 : vector<32x32xf32>
    %cst_18 = arith.constant 9.99999996E-13 : f32
    %25 = vector.broadcast %cst_18 : f32 to vector<32x1xf32>
    %26 = arith.addf %22, %25 : vector<32x1xf32>
    %27 = math.rsqrt %26 : vector<32x1xf32>
    %28 = vector.broadcast %27 : vector<32x1xf32> to vector<32x32xf32>
    %29 = arith.mulf %24, %28 : vector<32x32xf32>
    %30 = vector.broadcast %10 : vector<1x32xf32> to vector<32x32xf32>
    %31 = arith.mulf %29, %30 : vector<32x32xf32>
    %32 = vector.broadcast %11 : vector<1x32xf32> to vector<32x32xf32>
    %33 = arith.addf %31, %32 : vector<32x32xf32>
    %c0_19 = arith.constant 0 : index
    %c0_20 = arith.constant 0 : index
    %34 = vector.load %arg4[%c0_19, %c0_20] : memref<32x32xf32, #tpu.memory_space<vmem>>, vector<32x32xf32>
    %c0_21 = arith.constant 0 : index
    %c0_22 = arith.constant 0 : index
    %c0_23 = arith.constant 0 : index
    %35 = vector.load %arg8[%c0_21, %c0_22, %c0_23] : memref<2x32x96xf32, #tpu.memory_space<vmem>>, vector<1x32x96xf32>
    %36 = vector.shape_cast %35 : vector<1x32x96xf32> to vector<32x96xf32>
    %cst_24 = arith.constant dense<0.000000e+00> : vector<32x96xf32>
    %37 = tpu.matmul %33, %36, %cst_24 {dimension_numbers = #tpu.dot_dimension_numbers<[1], [0], [0], [1], [0, 0, 1, 1], [], []>} : vector<32x32xf32>, vector<32x96xf32>, vector<32x96xf32> -> vector<32x96xf32>
    %c0_25 = arith.constant 0 : index
    %c0_26 = arith.constant 0 : index
    %c0_27 = arith.constant 0 : index
    %38 = vector.load %arg9[%c0_25, %c0_26, %c0_27] : memref<2x1x96xf32, #tpu.memory_space<vmem>>, vector<1x1x96xf32>
    %39 = vector.shape_cast %38 : vector<1x1x96xf32> to vector<1x96xf32>
    %40 = vector.broadcast %39 : vector<1x96xf32> to vector<32x96xf32>
    %41 = arith.addf %37, %40 : vector<32x96xf32>
    %42 = vector.extract_strided_slice %41 {offsets = [0, 0], sizes = [32, 32], strides = [1, 1]} : vector<32x96xf32> to vector<32x32xf32>
    %43 = vector.extract_strided_slice %41 {offsets = [0, 32], sizes = [32, 32], strides = [1, 1]} : vector<32x96xf32> to vector<32x32xf32>
    %44 = vector.extract_strided_slice %41 {offsets = [0, 64], sizes = [32, 32], strides = [1, 1]} : vector<32x96xf32> to vector<32x32xf32>
    %c0_28 = arith.constant 0 : index
    %c0_29 = arith.constant 0 : index
    %c0_30 = arith.constant 0 : index
    %45 = vector.load %arg10[%c0_28, %c0_29, %c0_30] : memref<2x32x32xf32, #tpu.memory_space<vmem>>, vector<1x32x32xf32>
    %46 = vector.shape_cast %45 : vector<1x32x32xf32> to vector<32x32xf32>
    %cst_31 = arith.constant 0.000000e+00 : f32
    %47 = vector.broadcast %cst_31 : f32 to vector<32x32xf32>
    %48 = vector.extract_strided_slice %42 {offsets = [0, 0], sizes = [32, 8], strides = [1, 1]} : vector<32x32xf32> to vector<32x8xf32>
    %49 = vector.extract_strided_slice %43 {offsets = [0, 0], sizes = [32, 8], strides = [1, 1]} : vector<32x32xf32> to vector<32x8xf32>
    %cst_32 = arith.constant dense<0.000000e+00> : vector<32x32xf32>
    %50 = tpu.matmul %48, %49, %cst_32 {dimension_numbers = #tpu.dot_dimension_numbers<[1], [1], [0], [0], [0, 0, 1, 0], [], []>} : vector<32x8xf32>, vector<32x8xf32>, vector<32x32xf32> -> vector<32x32xf32>
    %cst_33 = arith.constant 0.353553385 : f32
    %51 = vector.broadcast %cst_33 : f32 to vector<32x32xf32>
    %52 = arith.mulf %50, %51 : vector<32x32xf32>
    %53 = arith.addf %52, %34 : vector<32x32xf32>
    %cst_34 = arith.constant dense<0xFF800000> : vector<32xf32>
    %54 = vector.multi_reduction <maximumf>, %53, %cst_34 [1] : vector<32x32xf32> to vector<32xf32>
    %55 = vector.shape_cast %54 : vector<32xf32> to vector<32x1xf32>
    %56 = vector.broadcast %55 : vector<32x1xf32> to vector<32x32xf32>
    %57 = arith.subf %53, %56 : vector<32x32xf32>
    %58 = math.exp %57 : vector<32x32xf32>
    %cst_35 = arith.constant dense<0.000000e+00> : vector<32xf32>
    %59 = vector.multi_reduction <add>, %58, %cst_35 [1] : vector<32x32xf32> to vector<32xf32>
    %60 = vector.shape_cast %59 : vector<32xf32> to vector<32x1xf32>
    %61 = vector.broadcast %60 : vector<32x1xf32> to vector<32x32xf32>
    %62 = arith.divf %58, %61 : vector<32x32xf32>
    %63 = vector.extract_strided_slice %44 {offsets = [0, 0], sizes = [32, 8], strides = [1, 1]} : vector<32x32xf32> to vector<32x8xf32>
    %cst_36 = arith.constant dense<0.000000e+00> : vector<32x8xf32>
    %64 = tpu.matmul %62, %63, %cst_36 {dimension_numbers = #tpu.dot_dimension_numbers<[1], [0], [0], [1], [0, 0, 1, 1], [], []>} : vector<32x32xf32>, vector<32x8xf32>, vector<32x8xf32> -> vector<32x8xf32>
    %65 = vector.extract_strided_slice %46 {offsets = [0, 0], sizes = [8, 32], strides = [1, 1]} : vector<32x32xf32> to vector<8x32xf32>
    %cst_37 = arith.constant dense<0.000000e+00> : vector<32x32xf32>
    %66 = tpu.matmul %64, %65, %cst_37 {dimension_numbers = #tpu.dot_dimension_numbers<[1], [0], [0], [1], [0, 0, 1, 1], [], []>} : vector<32x8xf32>, vector<8x32xf32>, vector<32x32xf32> -> vector<32x32xf32>
    %67 = arith.addf %47, %66 : vector<32x32xf32>
    %68 = vector.extract_strided_slice %42 {offsets = [0, 8], sizes = [32, 8], strides = [1, 1]} : vector<32x32xf32> to vector<32x8xf32>
    %69 = vector.extract_strided_slice %43 {offsets = [0, 8], sizes = [32, 8], strides = [1, 1]} : vector<32x32xf32> to vector<32x8xf32>
    %cst_38 = arith.constant dense<0.000000e+00> : vector<32x32xf32>
    %70 = tpu.matmul %68, %69, %cst_38 {dimension_numbers = #tpu.dot_dimension_numbers<[1], [1], [0], [0], [0, 0, 1, 0], [], []>} : vector<32x8xf32>, vector<32x8xf32>, vector<32x32xf32> -> vector<32x32xf32>
    %cst_39 = arith.constant 0.353553385 : f32
    %71 = vector.broadcast %cst_39 : f32 to vector<32x32xf32>
    %72 = arith.mulf %70, %71 : vector<32x32xf32>
    %73 = arith.addf %72, %34 : vector<32x32xf32>
    %cst_40 = arith.constant dense<0xFF800000> : vector<32xf32>
    %74 = vector.multi_reduction <maximumf>, %73, %cst_40 [1] : vector<32x32xf32> to vector<32xf32>
    %75 = vector.shape_cast %74 : vector<32xf32> to vector<32x1xf32>
    %76 = vector.broadcast %75 : vector<32x1xf32> to vector<32x32xf32>
    %77 = arith.subf %73, %76 : vector<32x32xf32>
    %78 = math.exp %77 : vector<32x32xf32>
    %cst_41 = arith.constant dense<0.000000e+00> : vector<32xf32>
    %79 = vector.multi_reduction <add>, %78, %cst_41 [1] : vector<32x32xf32> to vector<32xf32>
    %80 = vector.shape_cast %79 : vector<32xf32> to vector<32x1xf32>
    %81 = vector.broadcast %80 : vector<32x1xf32> to vector<32x32xf32>
    %82 = arith.divf %78, %81 : vector<32x32xf32>
    %83 = vector.extract_strided_slice %44 {offsets = [0, 8], sizes = [32, 8], strides = [1, 1]} : vector<32x32xf32> to vector<32x8xf32>
    %cst_42 = arith.constant dense<0.000000e+00> : vector<32x8xf32>
    %84 = tpu.matmul %82, %83, %cst_42 {dimension_numbers = #tpu.dot_dimension_numbers<[1], [0], [0], [1], [0, 0, 1, 1], [], []>} : vector<32x32xf32>, vector<32x8xf32>, vector<32x8xf32> -> vector<32x8xf32>
    %85 = vector.extract_strided_slice %46 {offsets = [8, 0], sizes = [8, 32], strides = [1, 1]} : vector<32x32xf32> to vector<8x32xf32>
    %cst_43 = arith.constant dense<0.000000e+00> : vector<32x32xf32>
    %86 = tpu.matmul %84, %85, %cst_43 {dimension_numbers = #tpu.dot_dimension_numbers<[1], [0], [0], [1], [0, 0, 1, 1], [], []>} : vector<32x8xf32>, vector<8x32xf32>, vector<32x32xf32> -> vector<32x32xf32>
    %87 = arith.addf %67, %86 : vector<32x32xf32>
    %88 = vector.extract_strided_slice %42 {offsets = [0, 16], sizes = [32, 8], strides = [1, 1]} : vector<32x32xf32> to vector<32x8xf32>
    %89 = vector.extract_strided_slice %43 {offsets = [0, 16], sizes = [32, 8], strides = [1, 1]} : vector<32x32xf32> to vector<32x8xf32>
    %cst_44 = arith.constant dense<0.000000e+00> : vector<32x32xf32>
    %90 = tpu.matmul %88, %89, %cst_44 {dimension_numbers = #tpu.dot_dimension_numbers<[1], [1], [0], [0], [0, 0, 1, 0], [], []>} : vector<32x8xf32>, vector<32x8xf32>, vector<32x32xf32> -> vector<32x32xf32>
    %cst_45 = arith.constant 0.353553385 : f32
    %91 = vector.broadcast %cst_45 : f32 to vector<32x32xf32>
    %92 = arith.mulf %90, %91 : vector<32x32xf32>
    %93 = arith.addf %92, %34 : vector<32x32xf32>
    %cst_46 = arith.constant dense<0xFF800000> : vector<32xf32>
    %94 = vector.multi_reduction <maximumf>, %93, %cst_46 [1] : vector<32x32xf32> to vector<32xf32>
    %95 = vector.shape_cast %94 : vector<32xf32> to vector<32x1xf32>
    %96 = vector.broadcast %95 : vector<32x1xf32> to vector<32x32xf32>
    %97 = arith.subf %93, %96 : vector<32x32xf32>
    %98 = math.exp %97 : vector<32x32xf32>
    %cst_47 = arith.constant dense<0.000000e+00> : vector<32xf32>
    %99 = vector.multi_reduction <add>, %98, %cst_47 [1] : vector<32x32xf32> to vector<32xf32>
    %100 = vector.shape_cast %99 : vector<32xf32> to vector<32x1xf32>
    %101 = vector.broadcast %100 : vector<32x1xf32> to vector<32x32xf32>
    %102 = arith.divf %98, %101 : vector<32x32xf32>
    %103 = vector.extract_strided_slice %44 {offsets = [0, 16], sizes = [32, 8], strides = [1, 1]} : vector<32x32xf32> to vector<32x8xf32>
    %cst_48 = arith.constant dense<0.000000e+00> : vector<32x8xf32>
    %104 = tpu.matmul %102, %103, %cst_48 {dimension_numbers = #tpu.dot_dimension_numbers<[1], [0], [0], [1], [0, 0, 1, 1], [], []>} : vector<32x32xf32>, vector<32x8xf32>, vector<32x8xf32> -> vector<32x8xf32>
    %105 = vector.extract_strided_slice %46 {offsets = [16, 0], sizes = [8, 32], strides = [1, 1]} : vector<32x32xf32> to vector<8x32xf32>
    %cst_49 = arith.constant dense<0.000000e+00> : vector<32x32xf32>
    %106 = tpu.matmul %104, %105, %cst_49 {dimension_numbers = #tpu.dot_dimension_numbers<[1], [0], [0], [1], [0, 0, 1, 1], [], []>} : vector<32x8xf32>, vector<8x32xf32>, vector<32x32xf32> -> vector<32x32xf32>
    %107 = arith.addf %87, %106 : vector<32x32xf32>
    %108 = vector.extract_strided_slice %42 {offsets = [0, 24], sizes = [32, 8], strides = [1, 1]} : vector<32x32xf32> to vector<32x8xf32>
    %109 = vector.extract_strided_slice %43 {offsets = [0, 24], sizes = [32, 8], strides = [1, 1]} : vector<32x32xf32> to vector<32x8xf32>
    %cst_50 = arith.constant dense<0.000000e+00> : vector<32x32xf32>
    %110 = tpu.matmul %108, %109, %cst_50 {dimension_numbers = #tpu.dot_dimension_numbers<[1], [1], [0], [0], [0, 0, 1, 0], [], []>} : vector<32x8xf32>, vector<32x8xf32>, vector<32x32xf32> -> vector<32x32xf32>
    %cst_51 = arith.constant 0.353553385 : f32
    %111 = vector.broadcast %cst_51 : f32 to vector<32x32xf32>
    %112 = arith.mulf %110, %111 : vector<32x32xf32>
    %113 = arith.addf %112, %34 : vector<32x32xf32>
    %cst_52 = arith.constant dense<0xFF800000> : vector<32xf32>
    %114 = vector.multi_reduction <maximumf>, %113, %cst_52 [1] : vector<32x32xf32> to vector<32xf32>
    %115 = vector.shape_cast %114 : vector<32xf32> to vector<32x1xf32>
    %116 = vector.broadcast %115 : vector<32x1xf32> to vector<32x32xf32>
    %117 = arith.subf %113, %116 : vector<32x32xf32>
    %118 = math.exp %117 : vector<32x32xf32>
    %cst_53 = arith.constant dense<0.000000e+00> : vector<32xf32>
    %119 = vector.multi_reduction <add>, %118, %cst_53 [1] : vector<32x32xf32> to vector<32xf32>
    %120 = vector.shape_cast %119 : vector<32xf32> to vector<32x1xf32>
    %121 = vector.broadcast %120 : vector<32x1xf32> to vector<32x32xf32>
    %122 = arith.divf %118, %121 : vector<32x32xf32>
    %123 = vector.extract_strided_slice %44 {offsets = [0, 24], sizes = [32, 8], strides = [1, 1]} : vector<32x32xf32> to vector<32x8xf32>
    %cst_54 = arith.constant dense<0.000000e+00> : vector<32x8xf32>
    %124 = tpu.matmul %122, %123, %cst_54 {dimension_numbers = #tpu.dot_dimension_numbers<[1], [0], [0], [1], [0, 0, 1, 1], [], []>} : vector<32x32xf32>, vector<32x8xf32>, vector<32x8xf32> -> vector<32x8xf32>
    %125 = vector.extract_strided_slice %46 {offsets = [24, 0], sizes = [8, 32], strides = [1, 1]} : vector<32x32xf32> to vector<8x32xf32>
    %cst_55 = arith.constant dense<0.000000e+00> : vector<32x32xf32>
    %126 = tpu.matmul %124, %125, %cst_55 {dimension_numbers = #tpu.dot_dimension_numbers<[1], [0], [0], [1], [0, 0, 1, 1], [], []>} : vector<32x8xf32>, vector<8x32xf32>, vector<32x32xf32> -> vector<32x32xf32>
    %127 = arith.addf %107, %126 : vector<32x32xf32>
    %128 = arith.addf %33, %127 : vector<32x32xf32>
    %c0_56 = arith.constant 0 : index
    %c0_57 = arith.constant 0 : index
    %c0_58 = arith.constant 0 : index
    %129 = vector.load %arg11[%c0_56, %c0_57, %c0_58] : memref<2x1x32xf32, #tpu.memory_space<vmem>>, vector<1x1x32xf32>
    %130 = vector.shape_cast %129 : vector<1x1x32xf32> to vector<1x32xf32>
    %131 = vector.broadcast %130 : vector<1x32xf32> to vector<32x32xf32>
    %132 = arith.addf %128, %131 : vector<32x32xf32>
    %c0_59 = arith.constant 0 : index
    %c0_60 = arith.constant 0 : index
    %c0_61 = arith.constant 0 : index
    %133 = vector.load %arg12[%c0_59, %c0_60, %c0_61] : memref<2x1x32xf32, #tpu.memory_space<vmem>>, vector<1x1x32xf32>
    %134 = vector.shape_cast %133 : vector<1x1x32xf32> to vector<1x32xf32>
    %c0_62 = arith.constant 0 : index
    %c0_63 = arith.constant 0 : index
    %c0_64 = arith.constant 0 : index
    %135 = vector.load %arg13[%c0_62, %c0_63, %c0_64] : memref<2x1x32xf32, #tpu.memory_space<vmem>>, vector<1x1x32xf32>
    %136 = vector.shape_cast %135 : vector<1x1x32xf32> to vector<1x32xf32>
    %cst_65 = arith.constant dense<0.000000e+00> : vector<32xf32>
    %137 = vector.multi_reduction <add>, %132, %cst_65 [1] : vector<32x32xf32> to vector<32xf32>
    %138 = vector.shape_cast %137 : vector<32xf32> to vector<32x1xf32>
    %cst_66 = arith.constant 3.200000e+01 : f32
    %139 = vector.broadcast %cst_66 : f32 to vector<32x1xf32>
    %140 = arith.divf %138, %139 : vector<32x1xf32>
    %141 = vector.broadcast %140 : vector<32x1xf32> to vector<32x32xf32>
    %142 = arith.subf %132, %141 : vector<32x32xf32>
    %143 = arith.mulf %142, %142 : vector<32x32xf32>
    %cst_67 = arith.constant dense<0.000000e+00> : vector<32xf32>
    %144 = vector.multi_reduction <add>, %143, %cst_67 [1] : vector<32x32xf32> to vector<32xf32>
    %145 = vector.shape_cast %144 : vector<32xf32> to vector<32x1xf32>
    %cst_68 = arith.constant 3.200000e+01 : f32
    %146 = vector.broadcast %cst_68 : f32 to vector<32x1xf32>
    %147 = arith.divf %145, %146 : vector<32x1xf32>
    %148 = vector.broadcast %140 : vector<32x1xf32> to vector<32x32xf32>
    %149 = arith.subf %132, %148 : vector<32x32xf32>
    %cst_69 = arith.constant 9.99999996E-13 : f32
    %150 = vector.broadcast %cst_69 : f32 to vector<32x1xf32>
    %151 = arith.addf %147, %150 : vector<32x1xf32>
    %152 = math.rsqrt %151 : vector<32x1xf32>
    %153 = vector.broadcast %152 : vector<32x1xf32> to vector<32x32xf32>
    %154 = arith.mulf %149, %153 : vector<32x32xf32>
    %155 = vector.broadcast %134 : vector<1x32xf32> to vector<32x32xf32>
    %156 = arith.mulf %154, %155 : vector<32x32xf32>
    %157 = vector.broadcast %136 : vector<1x32xf32> to vector<32x32xf32>
    %158 = arith.addf %156, %157 : vector<32x32xf32>
    %c0_70 = arith.constant 0 : index
    %c0_71 = arith.constant 0 : index
    %c0_72 = arith.constant 0 : index
    %159 = vector.load %arg14[%c0_70, %c0_71, %c0_72] : memref<2x32x64xf32, #tpu.memory_space<vmem>>, vector<1x32x64xf32>
    %160 = vector.shape_cast %159 : vector<1x32x64xf32> to vector<32x64xf32>
    %cst_73 = arith.constant dense<0.000000e+00> : vector<32x64xf32>
    %161 = tpu.matmul %158, %160, %cst_73 {dimension_numbers = #tpu.dot_dimension_numbers<[1], [0], [0], [1], [0, 0, 1, 1], [], []>} : vector<32x32xf32>, vector<32x64xf32>, vector<32x64xf32> -> vector<32x64xf32>
    %c0_74 = arith.constant 0 : index
    %c0_75 = arith.constant 0 : index
    %c0_76 = arith.constant 0 : index
    %162 = vector.load %arg15[%c0_74, %c0_75, %c0_76] : memref<2x1x64xf32, #tpu.memory_space<vmem>>, vector<1x1x64xf32>
    %163 = vector.shape_cast %162 : vector<1x1x64xf32> to vector<1x64xf32>
    %164 = vector.broadcast %163 : vector<1x64xf32> to vector<32x64xf32>
    %165 = arith.addf %161, %164 : vector<32x64xf32>
    %166 = arith.mulf %165, %165 : vector<32x64xf32>
    %167 = arith.mulf %165, %166 : vector<32x64xf32>
    %cst_77 = arith.constant 4.471500e-02 : f32
    %168 = vector.broadcast %cst_77 : f32 to vector<32x64xf32>
    %169 = arith.mulf %168, %167 : vector<32x64xf32>
    %170 = arith.addf %165, %169 : vector<32x64xf32>
    %cst_78 = arith.constant 0.797884583 : f32
    %171 = vector.broadcast %cst_78 : f32 to vector<32x64xf32>
    %172 = arith.mulf %171, %170 : vector<32x64xf32>
    %173 = math.tanh %172 : vector<32x64xf32>
    %cst_79 = arith.constant 1.000000e+00 : f32
    %174 = vector.broadcast %cst_79 : f32 to vector<32x64xf32>
    %175 = arith.addf %174, %173 : vector<32x64xf32>
    %cst_80 = arith.constant 5.000000e-01 : f32
    %176 = vector.broadcast %cst_80 : f32 to vector<32x64xf32>
    %177 = arith.mulf %176, %175 : vector<32x64xf32>
    %178 = arith.mulf %165, %177 : vector<32x64xf32>
    %c0_81 = arith.constant 0 : index
    %c0_82 = arith.constant 0 : index
    %c0_83 = arith.constant 0 : index
    %179 = vector.load %arg16[%c0_81, %c0_82, %c0_83] : memref<2x64x32xf32, #tpu.memory_space<vmem>>, vector<1x64x32xf32>
    %180 = vector.shape_cast %179 : vector<1x64x32xf32> to vector<64x32xf32>
    %cst_84 = arith.constant dense<0.000000e+00> : vector<32x32xf32>
    %181 = tpu.matmul %178, %180, %cst_84 {dimension_numbers = #tpu.dot_dimension_numbers<[1], [0], [0], [1], [0, 0, 1, 1], [], []>} : vector<32x64xf32>, vector<64x32xf32>, vector<32x32xf32> -> vector<32x32xf32>
    %c0_85 = arith.constant 0 : index
    %c0_86 = arith.constant 0 : index
    %c0_87 = arith.constant 0 : index
    %182 = vector.load %arg17[%c0_85, %c0_86, %c0_87] : memref<2x1x32xf32, #tpu.memory_space<vmem>>, vector<1x1x32xf32>
    %183 = vector.shape_cast %182 : vector<1x1x32xf32> to vector<1x32xf32>
    %184 = vector.broadcast %183 : vector<1x32xf32> to vector<32x32xf32>
    %185 = arith.addf %181, %184 : vector<32x32xf32>
    %186 = arith.addf %158, %185 : vector<32x32xf32>
    %c0_88 = arith.constant 0 : index
    %c0_89 = arith.constant 0 : index
    %c0_90 = arith.constant 0 : index
    %187 = vector.load %arg18[%c0_88, %c0_89, %c0_90] : memref<2x1x32xf32, #tpu.memory_space<vmem>>, vector<1x1x32xf32>
    %188 = vector.shape_cast %187 : vector<1x1x32xf32> to vector<1x32xf32>
    %c0_91 = arith.constant 0 : index
    %c0_92 = arith.constant 0 : index
    %c0_93 = arith.constant 0 : index
    %189 = vector.load %arg19[%c0_91, %c0_92, %c0_93] : memref<2x1x32xf32, #tpu.memory_space<vmem>>, vector<1x1x32xf32>
    %190 = vector.shape_cast %189 : vector<1x1x32xf32> to vector<1x32xf32>
    %cst_94 = arith.constant dense<0.000000e+00> : vector<32xf32>
    %191 = vector.multi_reduction <add>, %186, %cst_94 [1] : vector<32x32xf32> to vector<32xf32>
    %192 = vector.shape_cast %191 : vector<32xf32> to vector<32x1xf32>
    %cst_95 = arith.constant 3.200000e+01 : f32
    %193 = vector.broadcast %cst_95 : f32 to vector<32x1xf32>
    %194 = arith.divf %192, %193 : vector<32x1xf32>
    %195 = vector.broadcast %194 : vector<32x1xf32> to vector<32x32xf32>
    %196 = arith.subf %186, %195 : vector<32x32xf32>
    %197 = arith.mulf %196, %196 : vector<32x32xf32>
    %cst_96 = arith.constant dense<0.000000e+00> : vector<32xf32>
    %198 = vector.multi_reduction <add>, %197, %cst_96 [1] : vector<32x32xf32> to vector<32xf32>
    %199 = vector.shape_cast %198 : vector<32xf32> to vector<32x1xf32>
    %cst_97 = arith.constant 3.200000e+01 : f32
    %200 = vector.broadcast %cst_97 : f32 to vector<32x1xf32>
    %201 = arith.divf %199, %200 : vector<32x1xf32>
    %202 = vector.broadcast %194 : vector<32x1xf32> to vector<32x32xf32>
    %203 = arith.subf %186, %202 : vector<32x32xf32>
    %cst_98 = arith.constant 9.99999996E-13 : f32
    %204 = vector.broadcast %cst_98 : f32 to vector<32x1xf32>
    %205 = arith.addf %201, %204 : vector<32x1xf32>
    %206 = math.rsqrt %205 : vector<32x1xf32>
    %207 = vector.broadcast %206 : vector<32x1xf32> to vector<32x32xf32>
    %208 = arith.mulf %203, %207 : vector<32x32xf32>
    %209 = vector.broadcast %188 : vector<1x32xf32> to vector<32x32xf32>
    %210 = arith.mulf %208, %209 : vector<32x32xf32>
    %211 = vector.broadcast %190 : vector<1x32xf32> to vector<32x32xf32>
    %212 = arith.addf %210, %211 : vector<32x32xf32>
    %c1 = arith.constant 1 : index
    %c0_99 = arith.constant 0 : index
    %c0_100 = arith.constant 0 : index
    %213 = vector.load %arg8[%c1, %c0_99, %c0_100] : memref<2x32x96xf32, #tpu.memory_space<vmem>>, vector<1x32x96xf32>
    %214 = vector.shape_cast %213 : vector<1x32x96xf32> to vector<32x96xf32>
    %cst_101 = arith.constant dense<0.000000e+00> : vector<32x96xf32>
    %215 = tpu.matmul %212, %214, %cst_101 {dimension_numbers = #tpu.dot_dimension_numbers<[1], [0], [0], [1], [0, 0, 1, 1], [], []>} : vector<32x32xf32>, vector<32x96xf32>, vector<32x96xf32> -> vector<32x96xf32>
    %c1_102 = arith.constant 1 : index
    %c0_103 = arith.constant 0 : index
    %c0_104 = arith.constant 0 : index
    %216 = vector.load %arg9[%c1_102, %c0_103, %c0_104] : memref<2x1x96xf32, #tpu.memory_space<vmem>>, vector<1x1x96xf32>
    %217 = vector.shape_cast %216 : vector<1x1x96xf32> to vector<1x96xf32>
    %218 = vector.broadcast %217 : vector<1x96xf32> to vector<32x96xf32>
    %219 = arith.addf %215, %218 : vector<32x96xf32>
    %220 = vector.extract_strided_slice %219 {offsets = [0, 0], sizes = [32, 32], strides = [1, 1]} : vector<32x96xf32> to vector<32x32xf32>
    %221 = vector.extract_strided_slice %219 {offsets = [0, 32], sizes = [32, 32], strides = [1, 1]} : vector<32x96xf32> to vector<32x32xf32>
    %222 = vector.extract_strided_slice %219 {offsets = [0, 64], sizes = [32, 32], strides = [1, 1]} : vector<32x96xf32> to vector<32x32xf32>
    %c1_105 = arith.constant 1 : index
    %c0_106 = arith.constant 0 : index
    %c0_107 = arith.constant 0 : index
    %223 = vector.load %arg10[%c1_105, %c0_106, %c0_107] : memref<2x32x32xf32, #tpu.memory_space<vmem>>, vector<1x32x32xf32>
    %224 = vector.shape_cast %223 : vector<1x32x32xf32> to vector<32x32xf32>
    %cst_108 = arith.constant 0.000000e+00 : f32
    %225 = vector.broadcast %cst_108 : f32 to vector<32x32xf32>
    %226 = vector.extract_strided_slice %220 {offsets = [0, 0], sizes = [32, 8], strides = [1, 1]} : vector<32x32xf32> to vector<32x8xf32>
    %227 = vector.extract_strided_slice %221 {offsets = [0, 0], sizes = [32, 8], strides = [1, 1]} : vector<32x32xf32> to vector<32x8xf32>
    %cst_109 = arith.constant dense<0.000000e+00> : vector<32x32xf32>
    %228 = tpu.matmul %226, %227, %cst_109 {dimension_numbers = #tpu.dot_dimension_numbers<[1], [1], [0], [0], [0, 0, 1, 0], [], []>} : vector<32x8xf32>, vector<32x8xf32>, vector<32x32xf32> -> vector<32x32xf32>
    %cst_110 = arith.constant 0.353553385 : f32
    %229 = vector.broadcast %cst_110 : f32 to vector<32x32xf32>
    %230 = arith.mulf %228, %229 : vector<32x32xf32>
    %231 = arith.addf %230, %34 : vector<32x32xf32>
    %cst_111 = arith.constant dense<0xFF800000> : vector<32xf32>
    %232 = vector.multi_reduction <maximumf>, %231, %cst_111 [1] : vector<32x32xf32> to vector<32xf32>
    %233 = vector.shape_cast %232 : vector<32xf32> to vector<32x1xf32>
    %234 = vector.broadcast %233 : vector<32x1xf32> to vector<32x32xf32>
    %235 = arith.subf %231, %234 : vector<32x32xf32>
    %236 = math.exp %235 : vector<32x32xf32>
    %cst_112 = arith.constant dense<0.000000e+00> : vector<32xf32>
    %237 = vector.multi_reduction <add>, %236, %cst_112 [1] : vector<32x32xf32> to vector<32xf32>
    %238 = vector.shape_cast %237 : vector<32xf32> to vector<32x1xf32>
    %239 = vector.broadcast %238 : vector<32x1xf32> to vector<32x32xf32>
    %240 = arith.divf %236, %239 : vector<32x32xf32>
    %241 = vector.extract_strided_slice %222 {offsets = [0, 0], sizes = [32, 8], strides = [1, 1]} : vector<32x32xf32> to vector<32x8xf32>
    %cst_113 = arith.constant dense<0.000000e+00> : vector<32x8xf32>
    %242 = tpu.matmul %240, %241, %cst_113 {dimension_numbers = #tpu.dot_dimension_numbers<[1], [0], [0], [1], [0, 0, 1, 1], [], []>} : vector<32x32xf32>, vector<32x8xf32>, vector<32x8xf32> -> vector<32x8xf32>
    %243 = vector.extract_strided_slice %224 {offsets = [0, 0], sizes = [8, 32], strides = [1, 1]} : vector<32x32xf32> to vector<8x32xf32>
    %cst_114 = arith.constant dense<0.000000e+00> : vector<32x32xf32>
    %244 = tpu.matmul %242, %243, %cst_114 {dimension_numbers = #tpu.dot_dimension_numbers<[1], [0], [0], [1], [0, 0, 1, 1], [], []>} : vector<32x8xf32>, vector<8x32xf32>, vector<32x32xf32> -> vector<32x32xf32>
    %245 = arith.addf %225, %244 : vector<32x32xf32>
    %246 = vector.extract_strided_slice %220 {offsets = [0, 8], sizes = [32, 8], strides = [1, 1]} : vector<32x32xf32> to vector<32x8xf32>
    %247 = vector.extract_strided_slice %221 {offsets = [0, 8], sizes = [32, 8], strides = [1, 1]} : vector<32x32xf32> to vector<32x8xf32>
    %cst_115 = arith.constant dense<0.000000e+00> : vector<32x32xf32>
    %248 = tpu.matmul %246, %247, %cst_115 {dimension_numbers = #tpu.dot_dimension_numbers<[1], [1], [0], [0], [0, 0, 1, 0], [], []>} : vector<32x8xf32>, vector<32x8xf32>, vector<32x32xf32> -> vector<32x32xf32>
    %cst_116 = arith.constant 0.353553385 : f32
    %249 = vector.broadcast %cst_116 : f32 to vector<32x32xf32>
    %250 = arith.mulf %248, %249 : vector<32x32xf32>
    %251 = arith.addf %250, %34 : vector<32x32xf32>
    %cst_117 = arith.constant dense<0xFF800000> : vector<32xf32>
    %252 = vector.multi_reduction <maximumf>, %251, %cst_117 [1] : vector<32x32xf32> to vector<32xf32>
    %253 = vector.shape_cast %252 : vector<32xf32> to vector<32x1xf32>
    %254 = vector.broadcast %253 : vector<32x1xf32> to vector<32x32xf32>
    %255 = arith.subf %251, %254 : vector<32x32xf32>
    %256 = math.exp %255 : vector<32x32xf32>
    %cst_118 = arith.constant dense<0.000000e+00> : vector<32xf32>
    %257 = vector.multi_reduction <add>, %256, %cst_118 [1] : vector<32x32xf32> to vector<32xf32>
    %258 = vector.shape_cast %257 : vector<32xf32> to vector<32x1xf32>
    %259 = vector.broadcast %258 : vector<32x1xf32> to vector<32x32xf32>
    %260 = arith.divf %256, %259 : vector<32x32xf32>
    %261 = vector.extract_strided_slice %222 {offsets = [0, 8], sizes = [32, 8], strides = [1, 1]} : vector<32x32xf32> to vector<32x8xf32>
    %cst_119 = arith.constant dense<0.000000e+00> : vector<32x8xf32>
    %262 = tpu.matmul %260, %261, %cst_119 {dimension_numbers = #tpu.dot_dimension_numbers<[1], [0], [0], [1], [0, 0, 1, 1], [], []>} : vector<32x32xf32>, vector<32x8xf32>, vector<32x8xf32> -> vector<32x8xf32>
    %263 = vector.extract_strided_slice %224 {offsets = [8, 0], sizes = [8, 32], strides = [1, 1]} : vector<32x32xf32> to vector<8x32xf32>
    %cst_120 = arith.constant dense<0.000000e+00> : vector<32x32xf32>
    %264 = tpu.matmul %262, %263, %cst_120 {dimension_numbers = #tpu.dot_dimension_numbers<[1], [0], [0], [1], [0, 0, 1, 1], [], []>} : vector<32x8xf32>, vector<8x32xf32>, vector<32x32xf32> -> vector<32x32xf32>
    %265 = arith.addf %245, %264 : vector<32x32xf32>
    %266 = vector.extract_strided_slice %220 {offsets = [0, 16], sizes = [32, 8], strides = [1, 1]} : vector<32x32xf32> to vector<32x8xf32>
    %267 = vector.extract_strided_slice %221 {offsets = [0, 16], sizes = [32, 8], strides = [1, 1]} : vector<32x32xf32> to vector<32x8xf32>
    %cst_121 = arith.constant dense<0.000000e+00> : vector<32x32xf32>
    %268 = tpu.matmul %266, %267, %cst_121 {dimension_numbers = #tpu.dot_dimension_numbers<[1], [1], [0], [0], [0, 0, 1, 0], [], []>} : vector<32x8xf32>, vector<32x8xf32>, vector<32x32xf32> -> vector<32x32xf32>
    %cst_122 = arith.constant 0.353553385 : f32
    %269 = vector.broadcast %cst_122 : f32 to vector<32x32xf32>
    %270 = arith.mulf %268, %269 : vector<32x32xf32>
    %271 = arith.addf %270, %34 : vector<32x32xf32>
    %cst_123 = arith.constant dense<0xFF800000> : vector<32xf32>
    %272 = vector.multi_reduction <maximumf>, %271, %cst_123 [1] : vector<32x32xf32> to vector<32xf32>
    %273 = vector.shape_cast %272 : vector<32xf32> to vector<32x1xf32>
    %274 = vector.broadcast %273 : vector<32x1xf32> to vector<32x32xf32>
    %275 = arith.subf %271, %274 : vector<32x32xf32>
    %276 = math.exp %275 : vector<32x32xf32>
    %cst_124 = arith.constant dense<0.000000e+00> : vector<32xf32>
    %277 = vector.multi_reduction <add>, %276, %cst_124 [1] : vector<32x32xf32> to vector<32xf32>
    %278 = vector.shape_cast %277 : vector<32xf32> to vector<32x1xf32>
    %279 = vector.broadcast %278 : vector<32x1xf32> to vector<32x32xf32>
    %280 = arith.divf %276, %279 : vector<32x32xf32>
    %281 = vector.extract_strided_slice %222 {offsets = [0, 16], sizes = [32, 8], strides = [1, 1]} : vector<32x32xf32> to vector<32x8xf32>
    %cst_125 = arith.constant dense<0.000000e+00> : vector<32x8xf32>
    %282 = tpu.matmul %280, %281, %cst_125 {dimension_numbers = #tpu.dot_dimension_numbers<[1], [0], [0], [1], [0, 0, 1, 1], [], []>} : vector<32x32xf32>, vector<32x8xf32>, vector<32x8xf32> -> vector<32x8xf32>
    %283 = vector.extract_strided_slice %224 {offsets = [16, 0], sizes = [8, 32], strides = [1, 1]} : vector<32x32xf32> to vector<8x32xf32>
    %cst_126 = arith.constant dense<0.000000e+00> : vector<32x32xf32>
    %284 = tpu.matmul %282, %283, %cst_126 {dimension_numbers = #tpu.dot_dimension_numbers<[1], [0], [0], [1], [0, 0, 1, 1], [], []>} : vector<32x8xf32>, vector<8x32xf32>, vector<32x32xf32> -> vector<32x32xf32>
    %285 = arith.addf %265, %284 : vector<32x32xf32>
    %286 = vector.extract_strided_slice %220 {offsets = [0, 24], sizes = [32, 8], strides = [1, 1]} : vector<32x32xf32> to vector<32x8xf32>
    %287 = vector.extract_strided_slice %221 {offsets = [0, 24], sizes = [32, 8], strides = [1, 1]} : vector<32x32xf32> to vector<32x8xf32>
    %cst_127 = arith.constant dense<0.000000e+00> : vector<32x32xf32>
    %288 = tpu.matmul %286, %287, %cst_127 {dimension_numbers = #tpu.dot_dimension_numbers<[1], [1], [0], [0], [0, 0, 1, 0], [], []>} : vector<32x8xf32>, vector<32x8xf32>, vector<32x32xf32> -> vector<32x32xf32>
    %cst_128 = arith.constant 0.353553385 : f32
    %289 = vector.broadcast %cst_128 : f32 to vector<32x32xf32>
    %290 = arith.mulf %288, %289 : vector<32x32xf32>
    %291 = arith.addf %290, %34 : vector<32x32xf32>
    %cst_129 = arith.constant dense<0xFF800000> : vector<32xf32>
    %292 = vector.multi_reduction <maximumf>, %291, %cst_129 [1] : vector<32x32xf32> to vector<32xf32>
    %293 = vector.shape_cast %292 : vector<32xf32> to vector<32x1xf32>
    %294 = vector.broadcast %293 : vector<32x1xf32> to vector<32x32xf32>
    %295 = arith.subf %291, %294 : vector<32x32xf32>
    %296 = math.exp %295 : vector<32x32xf32>
    %cst_130 = arith.constant dense<0.000000e+00> : vector<32xf32>
    %297 = vector.multi_reduction <add>, %296, %cst_130 [1] : vector<32x32xf32> to vector<32xf32>
    %298 = vector.shape_cast %297 : vector<32xf32> to vector<32x1xf32>
    %299 = vector.broadcast %298 : vector<32x1xf32> to vector<32x32xf32>
    %300 = arith.divf %296, %299 : vector<32x32xf32>
    %301 = vector.extract_strided_slice %222 {offsets = [0, 24], sizes = [32, 8], strides = [1, 1]} : vector<32x32xf32> to vector<32x8xf32>
    %cst_131 = arith.constant dense<0.000000e+00> : vector<32x8xf32>
    %302 = tpu.matmul %300, %301, %cst_131 {dimension_numbers = #tpu.dot_dimension_numbers<[1], [0], [0], [1], [0, 0, 1, 1], [], []>} : vector<32x32xf32>, vector<32x8xf32>, vector<32x8xf32> -> vector<32x8xf32>
    %303 = vector.extract_strided_slice %224 {offsets = [24, 0], sizes = [8, 32], strides = [1, 1]} : vector<32x32xf32> to vector<8x32xf32>
    %cst_132 = arith.constant dense<0.000000e+00> : vector<32x32xf32>
    %304 = tpu.matmul %302, %303, %cst_132 {dimension_numbers = #tpu.dot_dimension_numbers<[1], [0], [0], [1], [0, 0, 1, 1], [], []>} : vector<32x8xf32>, vector<8x32xf32>, vector<32x32xf32> -> vector<32x32xf32>
    %305 = arith.addf %285, %304 : vector<32x32xf32>
    %306 = arith.addf %212, %305 : vector<32x32xf32>
    %c1_133 = arith.constant 1 : index
    %c0_134 = arith.constant 0 : index
    %c0_135 = arith.constant 0 : index
    %307 = vector.load %arg11[%c1_133, %c0_134, %c0_135] : memref<2x1x32xf32, #tpu.memory_space<vmem>>, vector<1x1x32xf32>
    %308 = vector.shape_cast %307 : vector<1x1x32xf32> to vector<1x32xf32>
    %309 = vector.broadcast %308 : vector<1x32xf32> to vector<32x32xf32>
    %310 = arith.addf %306, %309 : vector<32x32xf32>
    %c1_136 = arith.constant 1 : index
    %c0_137 = arith.constant 0 : index
    %c0_138 = arith.constant 0 : index
    %311 = vector.load %arg12[%c1_136, %c0_137, %c0_138] : memref<2x1x32xf32, #tpu.memory_space<vmem>>, vector<1x1x32xf32>
    %312 = vector.shape_cast %311 : vector<1x1x32xf32> to vector<1x32xf32>
    %c1_139 = arith.constant 1 : index
    %c0_140 = arith.constant 0 : index
    %c0_141 = arith.constant 0 : index
    %313 = vector.load %arg13[%c1_139, %c0_140, %c0_141] : memref<2x1x32xf32, #tpu.memory_space<vmem>>, vector<1x1x32xf32>
    %314 = vector.shape_cast %313 : vector<1x1x32xf32> to vector<1x32xf32>
    %cst_142 = arith.constant dense<0.000000e+00> : vector<32xf32>
    %315 = vector.multi_reduction <add>, %310, %cst_142 [1] : vector<32x32xf32> to vector<32xf32>
    %316 = vector.shape_cast %315 : vector<32xf32> to vector<32x1xf32>
    %cst_143 = arith.constant 3.200000e+01 : f32
    %317 = vector.broadcast %cst_143 : f32 to vector<32x1xf32>
    %318 = arith.divf %316, %317 : vector<32x1xf32>
    %319 = vector.broadcast %318 : vector<32x1xf32> to vector<32x32xf32>
    %320 = arith.subf %310, %319 : vector<32x32xf32>
    %321 = arith.mulf %320, %320 : vector<32x32xf32>
    %cst_144 = arith.constant dense<0.000000e+00> : vector<32xf32>
    %322 = vector.multi_reduction <add>, %321, %cst_144 [1] : vector<32x32xf32> to vector<32xf32>
    %323 = vector.shape_cast %322 : vector<32xf32> to vector<32x1xf32>
    %cst_145 = arith.constant 3.200000e+01 : f32
    %324 = vector.broadcast %cst_145 : f32 to vector<32x1xf32>
    %325 = arith.divf %323, %324 : vector<32x1xf32>
    %326 = vector.broadcast %318 : vector<32x1xf32> to vector<32x32xf32>
    %327 = arith.subf %310, %326 : vector<32x32xf32>
    %cst_146 = arith.constant 9.99999996E-13 : f32
    %328 = vector.broadcast %cst_146 : f32 to vector<32x1xf32>
    %329 = arith.addf %325, %328 : vector<32x1xf32>
    %330 = math.rsqrt %329 : vector<32x1xf32>
    %331 = vector.broadcast %330 : vector<32x1xf32> to vector<32x32xf32>
    %332 = arith.mulf %327, %331 : vector<32x32xf32>
    %333 = vector.broadcast %312 : vector<1x32xf32> to vector<32x32xf32>
    %334 = arith.mulf %332, %333 : vector<32x32xf32>
    %335 = vector.broadcast %314 : vector<1x32xf32> to vector<32x32xf32>
    %336 = arith.addf %334, %335 : vector<32x32xf32>
    %c1_147 = arith.constant 1 : index
    %c0_148 = arith.constant 0 : index
    %c0_149 = arith.constant 0 : index
    %337 = vector.load %arg14[%c1_147, %c0_148, %c0_149] : memref<2x32x64xf32, #tpu.memory_space<vmem>>, vector<1x32x64xf32>
    %338 = vector.shape_cast %337 : vector<1x32x64xf32> to vector<32x64xf32>
    %cst_150 = arith.constant dense<0.000000e+00> : vector<32x64xf32>
    %339 = tpu.matmul %336, %338, %cst_150 {dimension_numbers = #tpu.dot_dimension_numbers<[1], [0], [0], [1], [0, 0, 1, 1], [], []>} : vector<32x32xf32>, vector<32x64xf32>, vector<32x64xf32> -> vector<32x64xf32>
    %c1_151 = arith.constant 1 : index
    %c0_152 = arith.constant 0 : index
    %c0_153 = arith.constant 0 : index
    %340 = vector.load %arg15[%c1_151, %c0_152, %c0_153] : memref<2x1x64xf32, #tpu.memory_space<vmem>>, vector<1x1x64xf32>
    %341 = vector.shape_cast %340 : vector<1x1x64xf32> to vector<1x64xf32>
    %342 = vector.broadcast %341 : vector<1x64xf32> to vector<32x64xf32>
    %343 = arith.addf %339, %342 : vector<32x64xf32>
    %344 = arith.mulf %343, %343 : vector<32x64xf32>
    %345 = arith.mulf %343, %344 : vector<32x64xf32>
    %cst_154 = arith.constant 4.471500e-02 : f32
    %346 = vector.broadcast %cst_154 : f32 to vector<32x64xf32>
    %347 = arith.mulf %346, %345 : vector<32x64xf32>
    %348 = arith.addf %343, %347 : vector<32x64xf32>
    %cst_155 = arith.constant 0.797884583 : f32
    %349 = vector.broadcast %cst_155 : f32 to vector<32x64xf32>
    %350 = arith.mulf %349, %348 : vector<32x64xf32>
    %351 = math.tanh %350 : vector<32x64xf32>
    %cst_156 = arith.constant 1.000000e+00 : f32
    %352 = vector.broadcast %cst_156 : f32 to vector<32x64xf32>
    %353 = arith.addf %352, %351 : vector<32x64xf32>
    %cst_157 = arith.constant 5.000000e-01 : f32
    %354 = vector.broadcast %cst_157 : f32 to vector<32x64xf32>
    %355 = arith.mulf %354, %353 : vector<32x64xf32>
    %356 = arith.mulf %343, %355 : vector<32x64xf32>
    %c1_158 = arith.constant 1 : index
    %c0_159 = arith.constant 0 : index
    %c0_160 = arith.constant 0 : index
    %357 = vector.load %arg16[%c1_158, %c0_159, %c0_160] : memref<2x64x32xf32, #tpu.memory_space<vmem>>, vector<1x64x32xf32>
    %358 = vector.shape_cast %357 : vector<1x64x32xf32> to vector<64x32xf32>
    %cst_161 = arith.constant dense<0.000000e+00> : vector<32x32xf32>
    %359 = tpu.matmul %356, %358, %cst_161 {dimension_numbers = #tpu.dot_dimension_numbers<[1], [0], [0], [1], [0, 0, 1, 1], [], []>} : vector<32x64xf32>, vector<64x32xf32>, vector<32x32xf32> -> vector<32x32xf32>
    %c1_162 = arith.constant 1 : index
    %c0_163 = arith.constant 0 : index
    %c0_164 = arith.constant 0 : index
    %360 = vector.load %arg17[%c1_162, %c0_163, %c0_164] : memref<2x1x32xf32, #tpu.memory_space<vmem>>, vector<1x1x32xf32>
    %361 = vector.shape_cast %360 : vector<1x1x32xf32> to vector<1x32xf32>
    %362 = vector.broadcast %361 : vector<1x32xf32> to vector<32x32xf32>
    %363 = arith.addf %359, %362 : vector<32x32xf32>
    %364 = arith.addf %336, %363 : vector<32x32xf32>
    %c1_165 = arith.constant 1 : index
    %c0_166 = arith.constant 0 : index
    %c0_167 = arith.constant 0 : index
    %365 = vector.load %arg18[%c1_165, %c0_166, %c0_167] : memref<2x1x32xf32, #tpu.memory_space<vmem>>, vector<1x1x32xf32>
    %366 = vector.shape_cast %365 : vector<1x1x32xf32> to vector<1x32xf32>
    %c1_168 = arith.constant 1 : index
    %c0_169 = arith.constant 0 : index
    %c0_170 = arith.constant 0 : index
    %367 = vector.load %arg19[%c1_168, %c0_169, %c0_170] : memref<2x1x32xf32, #tpu.memory_space<vmem>>, vector<1x1x32xf32>
    %368 = vector.shape_cast %367 : vector<1x1x32xf32> to vector<1x32xf32>
    %cst_171 = arith.constant dense<0.000000e+00> : vector<32xf32>
    %369 = vector.multi_reduction <add>, %364, %cst_171 [1] : vector<32x32xf32> to vector<32xf32>
    %370 = vector.shape_cast %369 : vector<32xf32> to vector<32x1xf32>
    %cst_172 = arith.constant 3.200000e+01 : f32
    %371 = vector.broadcast %cst_172 : f32 to vector<32x1xf32>
    %372 = arith.divf %370, %371 : vector<32x1xf32>
    %373 = vector.broadcast %372 : vector<32x1xf32> to vector<32x32xf32>
    %374 = arith.subf %364, %373 : vector<32x32xf32>
    %375 = arith.mulf %374, %374 : vector<32x32xf32>
    %cst_173 = arith.constant dense<0.000000e+00> : vector<32xf32>
    %376 = vector.multi_reduction <add>, %375, %cst_173 [1] : vector<32x32xf32> to vector<32xf32>
    %377 = vector.shape_cast %376 : vector<32xf32> to vector<32x1xf32>
    %cst_174 = arith.constant 3.200000e+01 : f32
    %378 = vector.broadcast %cst_174 : f32 to vector<32x1xf32>
    %379 = arith.divf %377, %378 : vector<32x1xf32>
    %380 = vector.broadcast %372 : vector<32x1xf32> to vector<32x32xf32>
    %381 = arith.subf %364, %380 : vector<32x32xf32>
    %cst_175 = arith.constant 9.99999996E-13 : f32
    %382 = vector.broadcast %cst_175 : f32 to vector<32x1xf32>
    %383 = arith.addf %379, %382 : vector<32x1xf32>
    %384 = math.rsqrt %383 : vector<32x1xf32>
    %385 = vector.broadcast %384 : vector<32x1xf32> to vector<32x32xf32>
    %386 = arith.mulf %381, %385 : vector<32x32xf32>
    %387 = vector.broadcast %366 : vector<1x32xf32> to vector<32x32xf32>
    %388 = arith.mulf %386, %387 : vector<32x32xf32>
    %389 = vector.broadcast %368 : vector<1x32xf32> to vector<32x32xf32>
    %390 = arith.addf %388, %389 : vector<32x32xf32>
    %c0_176 = arith.constant 0 : index
    %c0_177 = arith.constant 0 : index
    %391 = vector.load %arg20[%c0_176, %c0_177] : memref<32x32xf32, #tpu.memory_space<vmem>>, vector<32x32xf32>
    %cst_178 = arith.constant dense<0.000000e+00> : vector<32x32xf32>
    %392 = tpu.matmul %390, %391, %cst_178 {dimension_numbers = #tpu.dot_dimension_numbers<[1], [0], [0], [1], [0, 0, 1, 1], [], []>} : vector<32x32xf32>, vector<32x32xf32>, vector<32x32xf32> -> vector<32x32xf32>
    %393 = math.tanh %392 : vector<32x32xf32>
    %c0_179 = arith.constant 0 : index
    %c0_180 = arith.constant 0 : index
    %394 = vector.load %arg21[%c0_179, %c0_180] : memref<8x32xf32, #tpu.memory_space<vmem>>, vector<8x32xf32>
    %395 = vector.extract_strided_slice %393 {offsets = [0, 0], sizes = [16, 32], strides = [1, 1]} : vector<32x32xf32> to vector<16x32xf32>
    %cst_181 = arith.constant dense<0.000000e+00> : vector<8x16xf32>
    %396 = tpu.matmul %394, %395, %cst_181 {dimension_numbers = #tpu.dot_dimension_numbers<[1], [1], [0], [0], [0, 0, 1, 0], [], []>} : vector<8x32xf32>, vector<16x32xf32>, vector<8x16xf32> -> vector<8x16xf32>
    %cst_182 = arith.constant dense<0xFF800000> : vector<8xf32>
    %397 = vector.multi_reduction <maximumf>, %396, %cst_182 [1] : vector<8x16xf32> to vector<8xf32>
    %398 = vector.shape_cast %397 : vector<8xf32> to vector<8x1xf32>
    %399 = vector.broadcast %398 : vector<8x1xf32> to vector<8x16xf32>
    %400 = arith.subf %396, %399 : vector<8x16xf32>
    %401 = math.exp %400 : vector<8x16xf32>
    %cst_183 = arith.constant dense<0.000000e+00> : vector<8xf32>
    %402 = vector.multi_reduction <add>, %401, %cst_183 [1] : vector<8x16xf32> to vector<8xf32>
    %403 = vector.shape_cast %402 : vector<8xf32> to vector<8x1xf32>
    %404 = vector.broadcast %403 : vector<8x1xf32> to vector<8x16xf32>
    %405 = arith.divf %401, %404 : vector<8x16xf32>
    %406 = vector.extract_strided_slice %7 {offsets = [0, 0], sizes = [16, 32], strides = [1, 1]} : vector<32x32xf32> to vector<16x32xf32>
    %cst_184 = arith.constant dense<0.000000e+00> : vector<8x32xf32>
    %407 = tpu.matmul %405, %406, %cst_184 {dimension_numbers = #tpu.dot_dimension_numbers<[1], [0], [0], [1], [0, 0, 1, 1], [], []>} : vector<8x16xf32>, vector<16x32xf32>, vector<8x32xf32> -> vector<8x32xf32>
    %c0_185 = arith.constant 0 : index
    %c0_186 = arith.constant 0 : index
    %408 = vector.load %arg41[%c0_185, %c0_186] : memref<16x32xf32, #tpu.memory_space<vmem>>, vector<8x32xf32>
    tpu.vector_store %arg41[%c0_185, %c0_186], %407 {strides = array<i32>} : memref<16x32xf32, #tpu.memory_space<vmem>>, vector<8x32xf32>,
    %409 = vector.extract_strided_slice %393 {offsets = [16, 0], sizes = [16, 32], strides = [1, 1]} : vector<32x32xf32> to vector<16x32xf32>
    %cst_187 = arith.constant dense<0.000000e+00> : vector<8x16xf32>
    %410 = tpu.matmul %394, %409, %cst_187 {dimension_numbers = #tpu.dot_dimension_numbers<[1], [1], [0], [0], [0, 0, 1, 0], [], []>} : vector<8x32xf32>, vector<16x32xf32>, vector<8x16xf32> -> vector<8x16xf32>
    %cst_188 = arith.constant dense<0xFF800000> : vector<8xf32>
    %411 = vector.multi_reduction <maximumf>, %410, %cst_188 [1] : vector<8x16xf32> to vector<8xf32>
    %412 = vector.shape_cast %411 : vector<8xf32> to vector<8x1xf32>
    %413 = vector.broadcast %412 : vector<8x1xf32> to vector<8x16xf32>
    %414 = arith.subf %410, %413 : vector<8x16xf32>
    %415 = math.exp %414 : vector<8x16xf32>
    %cst_189 = arith.constant dense<0.000000e+00> : vector<8xf32>
    %416 = vector.multi_reduction <add>, %415, %cst_189 [1] : vector<8x16xf32> to vector<8xf32>
    %417 = vector.shape_cast %416 : vector<8xf32> to vector<8x1xf32>
    %418 = vector.broadcast %417 : vector<8x1xf32> to vector<8x16xf32>
    %419 = arith.divf %415, %418 : vector<8x16xf32>
    %420 = vector.extract_strided_slice %7 {offsets = [16, 0], sizes = [16, 32], strides = [1, 1]} : vector<32x32xf32> to vector<16x32xf32>
    %cst_190 = arith.constant dense<0.000000e+00> : vector<8x32xf32>
    %421 = tpu.matmul %419, %420, %cst_190 {dimension_numbers = #tpu.dot_dimension_numbers<[1], [0], [0], [1], [0, 0, 1, 1], [], []>} : vector<8x16xf32>, vector<16x32xf32>, vector<8x32xf32> -> vector<8x32xf32>
    %c8 = arith.constant 8 : index
    %c0_191 = arith.constant 0 : index
    %422 = vector.load %arg41[%c8, %c0_191] : memref<16x32xf32, #tpu.memory_space<vmem>>, vector<8x32xf32>
    tpu.vector_store %arg41[%c8, %c0_191], %421 {strides = array<i32>} : memref<16x32xf32, #tpu.memory_space<vmem>>, vector<8x32xf32>,
    %c0_192 = arith.constant 0 : index
    %c0_193 = arith.constant 0 : index
    %423 = vector.load %arg41[%c0_192, %c0_193] : memref<16x32xf32, #tpu.memory_space<vmem>>, vector<16x32xf32>
    %c0_194 = arith.constant 0 : index
    %c0_195 = arith.constant 0 : index
    %424 = vector.load %arg23[%c0_194, %c0_195] : memref<16x32xf32, #tpu.memory_space<vmem>>, vector<16x32xf32>
    %425 = arith.addf %423, %424 : vector<16x32xf32>
    %c0_196 = arith.constant 0 : index
    %c0_197 = arith.constant 0 : index
    %426 = vector.load %arg24[%c0_196, %c0_197] : memref<1x32xf32, #tpu.memory_space<vmem>>, vector<1x32xf32>
    %c0_198 = arith.constant 0 : index
    %c0_199 = arith.constant 0 : index
    %427 = vector.load %arg25[%c0_198, %c0_199] : memref<1x32xf32, #tpu.memory_space<vmem>>, vector<1x32xf32>
    %cst_200 = arith.constant dense<0.000000e+00> : vector<16xf32>
    %428 = vector.multi_reduction <add>, %425, %cst_200 [1] : vector<16x32xf32> to vector<16xf32>
    %429 = vector.shape_cast %428 : vector<16xf32> to vector<16x1xf32>
    %cst_201 = arith.constant 3.200000e+01 : f32
    %430 = vector.broadcast %cst_201 : f32 to vector<16x1xf32>
    %431 = arith.divf %429, %430 : vector<16x1xf32>
    %432 = vector.broadcast %431 : vector<16x1xf32> to vector<16x32xf32>
    %433 = arith.subf %425, %432 : vector<16x32xf32>
    %434 = arith.mulf %433, %433 : vector<16x32xf32>
    %cst_202 = arith.constant dense<0.000000e+00> : vector<16xf32>
    %435 = vector.multi_reduction <add>, %434, %cst_202 [1] : vector<16x32xf32> to vector<16xf32>
    %436 = vector.shape_cast %435 : vector<16xf32> to vector<16x1xf32>
    %cst_203 = arith.constant 3.200000e+01 : f32
    %437 = vector.broadcast %cst_203 : f32 to vector<16x1xf32>
    %438 = arith.divf %436, %437 : vector<16x1xf32>
    %439 = vector.broadcast %431 : vector<16x1xf32> to vector<16x32xf32>
    %440 = arith.subf %425, %439 : vector<16x32xf32>
    %cst_204 = arith.constant 9.99999996E-13 : f32
    %441 = vector.broadcast %cst_204 : f32 to vector<16x1xf32>
    %442 = arith.addf %438, %441 : vector<16x1xf32>
    %443 = math.rsqrt %442 : vector<16x1xf32>
    %444 = vector.broadcast %443 : vector<16x1xf32> to vector<16x32xf32>
    %445 = arith.mulf %440, %444 : vector<16x32xf32>
    %446 = vector.broadcast %426 : vector<1x32xf32> to vector<16x32xf32>
    %447 = arith.mulf %445, %446 : vector<16x32xf32>
    %448 = vector.broadcast %427 : vector<1x32xf32> to vector<16x32xf32>
    %449 = arith.addf %447, %448 : vector<16x32xf32>
    %c0_205 = arith.constant 0 : index
    %c0_206 = arith.constant 0 : index
    %450 = vector.load %arg22[%c0_205, %c0_206] : memref<16x16xf32, #tpu.memory_space<vmem>>, vector<16x16xf32>
    %c0_207 = arith.constant 0 : index
    %c0_208 = arith.constant 0 : index
    %c0_209 = arith.constant 0 : index
    %451 = vector.load %arg26[%c0_207, %c0_208, %c0_209] : memref<2x32x96xf32, #tpu.memory_space<vmem>>, vector<1x32x96xf32>
    %452 = vector.shape_cast %451 : vector<1x32x96xf32> to vector<32x96xf32>
    %cst_210 = arith.constant dense<0.000000e+00> : vector<16x96xf32>
    %453 = tpu.matmul %449, %452, %cst_210 {dimension_numbers = #tpu.dot_dimension_numbers<[1], [0], [0], [1], [0, 0, 1, 1], [], []>} : vector<16x32xf32>, vector<32x96xf32>, vector<16x96xf32> -> vector<16x96xf32>
    %c0_211 = arith.constant 0 : index
    %c0_212 = arith.constant 0 : index
    %c0_213 = arith.constant 0 : index
    %454 = vector.load %arg27[%c0_211, %c0_212, %c0_213] : memref<2x1x96xf32, #tpu.memory_space<vmem>>, vector<1x1x96xf32>
    %455 = vector.shape_cast %454 : vector<1x1x96xf32> to vector<1x96xf32>
    %456 = vector.broadcast %455 : vector<1x96xf32> to vector<16x96xf32>
    %457 = arith.addf %453, %456 : vector<16x96xf32>
    %458 = vector.extract_strided_slice %457 {offsets = [0, 0], sizes = [16, 32], strides = [1, 1]} : vector<16x96xf32> to vector<16x32xf32>
    %459 = vector.extract_strided_slice %457 {offsets = [0, 32], sizes = [16, 32], strides = [1, 1]} : vector<16x96xf32> to vector<16x32xf32>
    %460 = vector.extract_strided_slice %457 {offsets = [0, 64], sizes = [16, 32], strides = [1, 1]} : vector<16x96xf32> to vector<16x32xf32>
    %c0_214 = arith.constant 0 : index
    %c0_215 = arith.constant 0 : index
    %c0_216 = arith.constant 0 : index
    %461 = vector.load %arg28[%c0_214, %c0_215, %c0_216] : memref<2x32x32xf32, #tpu.memory_space<vmem>>, vector<1x32x32xf32>
    %462 = vector.shape_cast %461 : vector<1x32x32xf32> to vector<32x32xf32>
    %cst_217 = arith.constant 0.000000e+00 : f32
    %463 = vector.broadcast %cst_217 : f32 to vector<16x32xf32>
    %464 = vector.extract_strided_slice %458 {offsets = [0, 0], sizes = [16, 8], strides = [1, 1]} : vector<16x32xf32> to vector<16x8xf32>
    %465 = vector.extract_strided_slice %459 {offsets = [0, 0], sizes = [16, 8], strides = [1, 1]} : vector<16x32xf32> to vector<16x8xf32>
    %cst_218 = arith.constant dense<0.000000e+00> : vector<16x16xf32>
    %466 = tpu.matmul %464, %465, %cst_218 {dimension_numbers = #tpu.dot_dimension_numbers<[1], [1], [0], [0], [0, 0, 1, 0], [], []>} : vector<16x8xf32>, vector<16x8xf32>, vector<16x16xf32> -> vector<16x16xf32>
    %cst_219 = arith.constant 0.353553385 : f32
    %467 = vector.broadcast %cst_219 : f32 to vector<16x16xf32>
    %468 = arith.mulf %466, %467 : vector<16x16xf32>
    %469 = arith.addf %468, %450 : vector<16x16xf32>
    %cst_220 = arith.constant dense<0xFF800000> : vector<16xf32>
    %470 = vector.multi_reduction <maximumf>, %469, %cst_220 [1] : vector<16x16xf32> to vector<16xf32>
    %471 = vector.shape_cast %470 : vector<16xf32> to vector<16x1xf32>
    %472 = vector.broadcast %471 : vector<16x1xf32> to vector<16x16xf32>
    %473 = arith.subf %469, %472 : vector<16x16xf32>
    %474 = math.exp %473 : vector<16x16xf32>
    %cst_221 = arith.constant dense<0.000000e+00> : vector<16xf32>
    %475 = vector.multi_reduction <add>, %474, %cst_221 [1] : vector<16x16xf32> to vector<16xf32>
    %476 = vector.shape_cast %475 : vector<16xf32> to vector<16x1xf32>
    %477 = vector.broadcast %476 : vector<16x1xf32> to vector<16x16xf32>
    %478 = arith.divf %474, %477 : vector<16x16xf32>
    %479 = vector.extract_strided_slice %460 {offsets = [0, 0], sizes = [16, 8], strides = [1, 1]} : vector<16x32xf32> to vector<16x8xf32>
    %cst_222 = arith.constant dense<0.000000e+00> : vector<16x8xf32>
    %480 = tpu.matmul %478, %479, %cst_222 {dimension_numbers = #tpu.dot_dimension_numbers<[1], [0], [0], [1], [0, 0, 1, 1], [], []>} : vector<16x16xf32>, vector<16x8xf32>, vector<16x8xf32> -> vector<16x8xf32>
    %481 = vector.extract_strided_slice %462 {offsets = [0, 0], sizes = [8, 32], strides = [1, 1]} : vector<32x32xf32> to vector<8x32xf32>
    %cst_223 = arith.constant dense<0.000000e+00> : vector<16x32xf32>
    %482 = tpu.matmul %480, %481, %cst_223 {dimension_numbers = #tpu.dot_dimension_numbers<[1], [0], [0], [1], [0, 0, 1, 1], [], []>} : vector<16x8xf32>, vector<8x32xf32>, vector<16x32xf32> -> vector<16x32xf32>
    %483 = arith.addf %463, %482 : vector<16x32xf32>
    %484 = vector.extract_strided_slice %458 {offsets = [0, 8], sizes = [16, 8], strides = [1, 1]} : vector<16x32xf32> to vector<16x8xf32>
    %485 = vector.extract_strided_slice %459 {offsets = [0, 8], sizes = [16, 8], strides = [1, 1]} : vector<16x32xf32> to vector<16x8xf32>
    %cst_224 = arith.constant dense<0.000000e+00> : vector<16x16xf32>
    %486 = tpu.matmul %484, %485, %cst_224 {dimension_numbers = #tpu.dot_dimension_numbers<[1], [1], [0], [0], [0, 0, 1, 0], [], []>} : vector<16x8xf32>, vector<16x8xf32>, vector<16x16xf32> -> vector<16x16xf32>
    %cst_225 = arith.constant 0.353553385 : f32
    %487 = vector.broadcast %cst_225 : f32 to vector<16x16xf32>
    %488 = arith.mulf %486, %487 : vector<16x16xf32>
    %489 = arith.addf %488, %450 : vector<16x16xf32>
    %cst_226 = arith.constant dense<0xFF800000> : vector<16xf32>
    %490 = vector.multi_reduction <maximumf>, %489, %cst_226 [1] : vector<16x16xf32> to vector<16xf32>
    %491 = vector.shape_cast %490 : vector<16xf32> to vector<16x1xf32>
    %492 = vector.broadcast %491 : vector<16x1xf32> to vector<16x16xf32>
    %493 = arith.subf %489, %492 : vector<16x16xf32>
    %494 = math.exp %493 : vector<16x16xf32>
    %cst_227 = arith.constant dense<0.000000e+00> : vector<16xf32>
    %495 = vector.multi_reduction <add>, %494, %cst_227 [1] : vector<16x16xf32> to vector<16xf32>
    %496 = vector.shape_cast %495 : vector<16xf32> to vector<16x1xf32>
    %497 = vector.broadcast %496 : vector<16x1xf32> to vector<16x16xf32>
    %498 = arith.divf %494, %497 : vector<16x16xf32>
    %499 = vector.extract_strided_slice %460 {offsets = [0, 8], sizes = [16, 8], strides = [1, 1]} : vector<16x32xf32> to vector<16x8xf32>
    %cst_228 = arith.constant dense<0.000000e+00> : vector<16x8xf32>
    %500 = tpu.matmul %498, %499, %cst_228 {dimension_numbers = #tpu.dot_dimension_numbers<[1], [0], [0], [1], [0, 0, 1, 1], [], []>} : vector<16x16xf32>, vector<16x8xf32>, vector<16x8xf32> -> vector<16x8xf32>
    %501 = vector.extract_strided_slice %462 {offsets = [8, 0], sizes = [8, 32], strides = [1, 1]} : vector<32x32xf32> to vector<8x32xf32>
    %cst_229 = arith.constant dense<0.000000e+00> : vector<16x32xf32>
    %502 = tpu.matmul %500, %501, %cst_229 {dimension_numbers = #tpu.dot_dimension_numbers<[1], [0], [0], [1], [0, 0, 1, 1], [], []>} : vector<16x8xf32>, vector<8x32xf32>, vector<16x32xf32> -> vector<16x32xf32>
    %503 = arith.addf %483, %502 : vector<16x32xf32>
    %504 = vector.extract_strided_slice %458 {offsets = [0, 16], sizes = [16, 8], strides = [1, 1]} : vector<16x32xf32> to vector<16x8xf32>
    %505 = vector.extract_strided_slice %459 {offsets = [0, 16], sizes = [16, 8], strides = [1, 1]} : vector<16x32xf32> to vector<16x8xf32>
    %cst_230 = arith.constant dense<0.000000e+00> : vector<16x16xf32>
    %506 = tpu.matmul %504, %505, %cst_230 {dimension_numbers = #tpu.dot_dimension_numbers<[1], [1], [0], [0], [0, 0, 1, 0], [], []>} : vector<16x8xf32>, vector<16x8xf32>, vector<16x16xf32> -> vector<16x16xf32>
    %cst_231 = arith.constant 0.353553385 : f32
    %507 = vector.broadcast %cst_231 : f32 to vector<16x16xf32>
    %508 = arith.mulf %506, %507 : vector<16x16xf32>
    %509 = arith.addf %508, %450 : vector<16x16xf32>
    %cst_232 = arith.constant dense<0xFF800000> : vector<16xf32>
    %510 = vector.multi_reduction <maximumf>, %509, %cst_232 [1] : vector<16x16xf32> to vector<16xf32>
    %511 = vector.shape_cast %510 : vector<16xf32> to vector<16x1xf32>
    %512 = vector.broadcast %511 : vector<16x1xf32> to vector<16x16xf32>
    %513 = arith.subf %509, %512 : vector<16x16xf32>
    %514 = math.exp %513 : vector<16x16xf32>
    %cst_233 = arith.constant dense<0.000000e+00> : vector<16xf32>
    %515 = vector.multi_reduction <add>, %514, %cst_233 [1] : vector<16x16xf32> to vector<16xf32>
    %516 = vector.shape_cast %515 : vector<16xf32> to vector<16x1xf32>
    %517 = vector.broadcast %516 : vector<16x1xf32> to vector<16x16xf32>
    %518 = arith.divf %514, %517 : vector<16x16xf32>
    %519 = vector.extract_strided_slice %460 {offsets = [0, 16], sizes = [16, 8], strides = [1, 1]} : vector<16x32xf32> to vector<16x8xf32>
    %cst_234 = arith.constant dense<0.000000e+00> : vector<16x8xf32>
    %520 = tpu.matmul %518, %519, %cst_234 {dimension_numbers = #tpu.dot_dimension_numbers<[1], [0], [0], [1], [0, 0, 1, 1], [], []>} : vector<16x16xf32>, vector<16x8xf32>, vector<16x8xf32> -> vector<16x8xf32>
    %521 = vector.extract_strided_slice %462 {offsets = [16, 0], sizes = [8, 32], strides = [1, 1]} : vector<32x32xf32> to vector<8x32xf32>
    %cst_235 = arith.constant dense<0.000000e+00> : vector<16x32xf32>
    %522 = tpu.matmul %520, %521, %cst_235 {dimension_numbers = #tpu.dot_dimension_numbers<[1], [0], [0], [1], [0, 0, 1, 1], [], []>} : vector<16x8xf32>, vector<8x32xf32>, vector<16x32xf32> -> vector<16x32xf32>
    %523 = arith.addf %503, %522 : vector<16x32xf32>
    %524 = vector.extract_strided_slice %458 {offsets = [0, 24], sizes = [16, 8], strides = [1, 1]} : vector<16x32xf32> to vector<16x8xf32>
    %525 = vector.extract_strided_slice %459 {offsets = [0, 24], sizes = [16, 8], strides = [1, 1]} : vector<16x32xf32> to vector<16x8xf32>
    %cst_236 = arith.constant dense<0.000000e+00> : vector<16x16xf32>
    %526 = tpu.matmul %524, %525, %cst_236 {dimension_numbers = #tpu.dot_dimension_numbers<[1], [1], [0], [0], [0, 0, 1, 0], [], []>} : vector<16x8xf32>, vector<16x8xf32>, vector<16x16xf32> -> vector<16x16xf32>
    %cst_237 = arith.constant 0.353553385 : f32
    %527 = vector.broadcast %cst_237 : f32 to vector<16x16xf32>
    %528 = arith.mulf %526, %527 : vector<16x16xf32>
    %529 = arith.addf %528, %450 : vector<16x16xf32>
    %cst_238 = arith.constant dense<0xFF800000> : vector<16xf32>
    %530 = vector.multi_reduction <maximumf>, %529, %cst_238 [1] : vector<16x16xf32> to vector<16xf32>
    %531 = vector.shape_cast %530 : vector<16xf32> to vector<16x1xf32>
    %532 = vector.broadcast %531 : vector<16x1xf32> to vector<16x16xf32>
    %533 = arith.subf %529, %532 : vector<16x16xf32>
    %534 = math.exp %533 : vector<16x16xf32>
    %cst_239 = arith.constant dense<0.000000e+00> : vector<16xf32>
    %535 = vector.multi_reduction <add>, %534, %cst_239 [1] : vector<16x16xf32> to vector<16xf32>
    %536 = vector.shape_cast %535 : vector<16xf32> to vector<16x1xf32>
    %537 = vector.broadcast %536 : vector<16x1xf32> to vector<16x16xf32>
    %538 = arith.divf %534, %537 : vector<16x16xf32>
    %539 = vector.extract_strided_slice %460 {offsets = [0, 24], sizes = [16, 8], strides = [1, 1]} : vector<16x32xf32> to vector<16x8xf32>
    %cst_240 = arith.constant dense<0.000000e+00> : vector<16x8xf32>
    %540 = tpu.matmul %538, %539, %cst_240 {dimension_numbers = #tpu.dot_dimension_numbers<[1], [0], [0], [1], [0, 0, 1, 1], [], []>} : vector<16x16xf32>, vector<16x8xf32>, vector<16x8xf32> -> vector<16x8xf32>
    %541 = vector.extract_strided_slice %462 {offsets = [24, 0], sizes = [8, 32], strides = [1, 1]} : vector<32x32xf32> to vector<8x32xf32>
    %cst_241 = arith.constant dense<0.000000e+00> : vector<16x32xf32>
    %542 = tpu.matmul %540, %541, %cst_241 {dimension_numbers = #tpu.dot_dimension_numbers<[1], [0], [0], [1], [0, 0, 1, 1], [], []>} : vector<16x8xf32>, vector<8x32xf32>, vector<16x32xf32> -> vector<16x32xf32>
    %543 = arith.addf %523, %542 : vector<16x32xf32>
    %544 = arith.addf %449, %543 : vector<16x32xf32>
    %c0_242 = arith.constant 0 : index
    %c0_243 = arith.constant 0 : index
    %c0_244 = arith.constant 0 : index
    %545 = vector.load %arg29[%c0_242, %c0_243, %c0_244] : memref<2x1x32xf32, #tpu.memory_space<vmem>>, vector<1x1x32xf32>
    %546 = vector.shape_cast %545 : vector<1x1x32xf32> to vector<1x32xf32>
    %547 = vector.broadcast %546 : vector<1x32xf32> to vector<16x32xf32>
    %548 = arith.addf %544, %547 : vector<16x32xf32>
    %c0_245 = arith.constant 0 : index
    %c0_246 = arith.constant 0 : index
    %c0_247 = arith.constant 0 : index
    %549 = vector.load %arg30[%c0_245, %c0_246, %c0_247] : memref<2x1x32xf32, #tpu.memory_space<vmem>>, vector<1x1x32xf32>
    %550 = vector.shape_cast %549 : vector<1x1x32xf32> to vector<1x32xf32>
    %c0_248 = arith.constant 0 : index
    %c0_249 = arith.constant 0 : index
    %c0_250 = arith.constant 0 : index
    %551 = vector.load %arg31[%c0_248, %c0_249, %c0_250] : memref<2x1x32xf32, #tpu.memory_space<vmem>>, vector<1x1x32xf32>
    %552 = vector.shape_cast %551 : vector<1x1x32xf32> to vector<1x32xf32>
    %cst_251 = arith.constant dense<0.000000e+00> : vector<16xf32>
    %553 = vector.multi_reduction <add>, %548, %cst_251 [1] : vector<16x32xf32> to vector<16xf32>
    %554 = vector.shape_cast %553 : vector<16xf32> to vector<16x1xf32>
    %cst_252 = arith.constant 3.200000e+01 : f32
    %555 = vector.broadcast %cst_252 : f32 to vector<16x1xf32>
    %556 = arith.divf %554, %555 : vector<16x1xf32>
    %557 = vector.broadcast %556 : vector<16x1xf32> to vector<16x32xf32>
    %558 = arith.subf %548, %557 : vector<16x32xf32>
    %559 = arith.mulf %558, %558 : vector<16x32xf32>
    %cst_253 = arith.constant dense<0.000000e+00> : vector<16xf32>
    %560 = vector.multi_reduction <add>, %559, %cst_253 [1] : vector<16x32xf32> to vector<16xf32>
    %561 = vector.shape_cast %560 : vector<16xf32> to vector<16x1xf32>
    %cst_254 = arith.constant 3.200000e+01 : f32
    %562 = vector.broadcast %cst_254 : f32 to vector<16x1xf32>
    %563 = arith.divf %561, %562 : vector<16x1xf32>
    %564 = vector.broadcast %556 : vector<16x1xf32> to vector<16x32xf32>
    %565 = arith.subf %548, %564 : vector<16x32xf32>
    %cst_255 = arith.constant 9.99999996E-13 : f32
    %566 = vector.broadcast %cst_255 : f32 to vector<16x1xf32>
    %567 = arith.addf %563, %566 : vector<16x1xf32>
    %568 = math.rsqrt %567 : vector<16x1xf32>
    %569 = vector.broadcast %568 : vector<16x1xf32> to vector<16x32xf32>
    %570 = arith.mulf %565, %569 : vector<16x32xf32>
    %571 = vector.broadcast %550 : vector<1x32xf32> to vector<16x32xf32>
    %572 = arith.mulf %570, %571 : vector<16x32xf32>
    %573 = vector.broadcast %552 : vector<1x32xf32> to vector<16x32xf32>
    %574 = arith.addf %572, %573 : vector<16x32xf32>
    %c0_256 = arith.constant 0 : index
    %c0_257 = arith.constant 0 : index
    %c0_258 = arith.constant 0 : index
    %575 = vector.load %arg32[%c0_256, %c0_257, %c0_258] : memref<2x32x64xf32, #tpu.memory_space<vmem>>, vector<1x32x64xf32>
    %576 = vector.shape_cast %575 : vector<1x32x64xf32> to vector<32x64xf32>
    %cst_259 = arith.constant dense<0.000000e+00> : vector<16x64xf32>
    %577 = tpu.matmul %574, %576, %cst_259 {dimension_numbers = #tpu.dot_dimension_numbers<[1], [0], [0], [1], [0, 0, 1, 1], [], []>} : vector<16x32xf32>, vector<32x64xf32>, vector<16x64xf32> -> vector<16x64xf32>
    %c0_260 = arith.constant 0 : index
    %c0_261 = arith.constant 0 : index
    %c0_262 = arith.constant 0 : index
    %578 = vector.load %arg33[%c0_260, %c0_261, %c0_262] : memref<2x1x64xf32, #tpu.memory_space<vmem>>, vector<1x1x64xf32>
    %579 = vector.shape_cast %578 : vector<1x1x64xf32> to vector<1x64xf32>
    %580 = vector.broadcast %579 : vector<1x64xf32> to vector<16x64xf32>
    %581 = arith.addf %577, %580 : vector<16x64xf32>
    %582 = arith.mulf %581, %581 : vector<16x64xf32>
    %583 = arith.mulf %581, %582 : vector<16x64xf32>
    %cst_263 = arith.constant 4.471500e-02 : f32
    %584 = vector.broadcast %cst_263 : f32 to vector<16x64xf32>
    %585 = arith.mulf %584, %583 : vector<16x64xf32>
    %586 = arith.addf %581, %585 : vector<16x64xf32>
    %cst_264 = arith.constant 0.797884583 : f32
    %587 = vector.broadcast %cst_264 : f32 to vector<16x64xf32>
    %588 = arith.mulf %587, %586 : vector<16x64xf32>
    %589 = math.tanh %588 : vector<16x64xf32>
    %cst_265 = arith.constant 1.000000e+00 : f32
    %590 = vector.broadcast %cst_265 : f32 to vector<16x64xf32>
    %591 = arith.addf %590, %589 : vector<16x64xf32>
    %cst_266 = arith.constant 5.000000e-01 : f32
    %592 = vector.broadcast %cst_266 : f32 to vector<16x64xf32>
    %593 = arith.mulf %592, %591 : vector<16x64xf32>
    %594 = arith.mulf %581, %593 : vector<16x64xf32>
    %c0_267 = arith.constant 0 : index
    %c0_268 = arith.constant 0 : index
    %c0_269 = arith.constant 0 : index
    %595 = vector.load %arg34[%c0_267, %c0_268, %c0_269] : memref<2x64x32xf32, #tpu.memory_space<vmem>>, vector<1x64x32xf32>
    %596 = vector.shape_cast %595 : vector<1x64x32xf32> to vector<64x32xf32>
    %cst_270 = arith.constant dense<0.000000e+00> : vector<16x32xf32>
    %597 = tpu.matmul %594, %596, %cst_270 {dimension_numbers = #tpu.dot_dimension_numbers<[1], [0], [0], [1], [0, 0, 1, 1], [], []>} : vector<16x64xf32>, vector<64x32xf32>, vector<16x32xf32> -> vector<16x32xf32>
    %c0_271 = arith.constant 0 : index
    %c0_272 = arith.constant 0 : index
    %c0_273 = arith.constant 0 : index
    %598 = vector.load %arg35[%c0_271, %c0_272, %c0_273] : memref<2x1x32xf32, #tpu.memory_space<vmem>>, vector<1x1x32xf32>
    %599 = vector.shape_cast %598 : vector<1x1x32xf32> to vector<1x32xf32>
    %600 = vector.broadcast %599 : vector<1x32xf32> to vector<16x32xf32>
    %601 = arith.addf %597, %600 : vector<16x32xf32>
    %602 = arith.addf %574, %601 : vector<16x32xf32>
    %c0_274 = arith.constant 0 : index
    %c0_275 = arith.constant 0 : index
    %c0_276 = arith.constant 0 : index
    %603 = vector.load %arg36[%c0_274, %c0_275, %c0_276] : memref<2x1x32xf32, #tpu.memory_space<vmem>>, vector<1x1x32xf32>
    %604 = vector.shape_cast %603 : vector<1x1x32xf32> to vector<1x32xf32>
    %c0_277 = arith.constant 0 : index
    %c0_278 = arith.constant 0 : index
    %c0_279 = arith.constant 0 : index
    %605 = vector.load %arg37[%c0_277, %c0_278, %c0_279] : memref<2x1x32xf32, #tpu.memory_space<vmem>>, vector<1x1x32xf32>
    %606 = vector.shape_cast %605 : vector<1x1x32xf32> to vector<1x32xf32>
    %cst_280 = arith.constant dense<0.000000e+00> : vector<16xf32>
    %607 = vector.multi_reduction <add>, %602, %cst_280 [1] : vector<16x32xf32> to vector<16xf32>
    %608 = vector.shape_cast %607 : vector<16xf32> to vector<16x1xf32>
    %cst_281 = arith.constant 3.200000e+01 : f32
    %609 = vector.broadcast %cst_281 : f32 to vector<16x1xf32>
    %610 = arith.divf %608, %609 : vector<16x1xf32>
    %611 = vector.broadcast %610 : vector<16x1xf32> to vector<16x32xf32>
    %612 = arith.subf %602, %611 : vector<16x32xf32>
    %613 = arith.mulf %612, %612 : vector<16x32xf32>
    %cst_282 = arith.constant dense<0.000000e+00> : vector<16xf32>
    %614 = vector.multi_reduction <add>, %613, %cst_282 [1] : vector<16x32xf32> to vector<16xf32>
    %615 = vector.shape_cast %614 : vector<16xf32> to vector<16x1xf32>
    %cst_283 = arith.constant 3.200000e+01 : f32
    %616 = vector.broadcast %cst_283 : f32 to vector<16x1xf32>
    %617 = arith.divf %615, %616 : vector<16x1xf32>
    %618 = vector.broadcast %610 : vector<16x1xf32> to vector<16x32xf32>
    %619 = arith.subf %602, %618 : vector<16x32xf32>
    %cst_284 = arith.constant 9.99999996E-13 : f32
    %620 = vector.broadcast %cst_284 : f32 to vector<16x1xf32>
    %621 = arith.addf %617, %620 : vector<16x1xf32>
    %622 = math.rsqrt %621 : vector<16x1xf32>
    %623 = vector.broadcast %622 : vector<16x1xf32> to vector<16x32xf32>
    %624 = arith.mulf %619, %623 : vector<16x32xf32>
    %625 = vector.broadcast %604 : vector<1x32xf32> to vector<16x32xf32>
    %626 = arith.mulf %624, %625 : vector<16x32xf32>
    %627 = vector.broadcast %606 : vector<1x32xf32> to vector<16x32xf32>
    %628 = arith.addf %626, %627 : vector<16x32xf32>
    %c1_285 = arith.constant 1 : index
    %c0_286 = arith.constant 0 : index
    %c0_287 = arith.constant 0 : index
    %629 = vector.load %arg26[%c1_285, %c0_286, %c0_287] : memref<2x32x96xf32, #tpu.memory_space<vmem>>, vector<1x32x96xf32>
    %630 = vector.shape_cast %629 : vector<1x32x96xf32> to vector<32x96xf32>
    %cst_288 = arith.constant dense<0.000000e+00> : vector<16x96xf32>
    %631 = tpu.matmul %628, %630, %cst_288 {dimension_numbers = #tpu.dot_dimension_numbers<[1], [0], [0], [1], [0, 0, 1, 1], [], []>} : vector<16x32xf32>, vector<32x96xf32>, vector<16x96xf32> -> vector<16x96xf32>
    %c1_289 = arith.constant 1 : index
    %c0_290 = arith.constant 0 : index
    %c0_291 = arith.constant 0 : index
    %632 = vector.load %arg27[%c1_289, %c0_290, %c0_291] : memref<2x1x96xf32, #tpu.memory_space<vmem>>, vector<1x1x96xf32>
    %633 = vector.shape_cast %632 : vector<1x1x96xf32> to vector<1x96xf32>
    %634 = vector.broadcast %633 : vector<1x96xf32> to vector<16x96xf32>
    %635 = arith.addf %631, %634 : vector<16x96xf32>
    %636 = vector.extract_strided_slice %635 {offsets = [0, 0], sizes = [16, 32], strides = [1, 1]} : vector<16x96xf32> to vector<16x32xf32>
    %637 = vector.extract_strided_slice %635 {offsets = [0, 32], sizes = [16, 32], strides = [1, 1]} : vector<16x96xf32> to vector<16x32xf32>
    %638 = vector.extract_strided_slice %635 {offsets = [0, 64], sizes = [16, 32], strides = [1, 1]} : vector<16x96xf32> to vector<16x32xf32>
    %c1_292 = arith.constant 1 : index
    %c0_293 = arith.constant 0 : index
    %c0_294 = arith.constant 0 : index
    %639 = vector.load %arg28[%c1_292, %c0_293, %c0_294] : memref<2x32x32xf32, #tpu.memory_space<vmem>>, vector<1x32x32xf32>
    %640 = vector.shape_cast %639 : vector<1x32x32xf32> to vector<32x32xf32>
    %cst_295 = arith.constant 0.000000e+00 : f32
    %641 = vector.broadcast %cst_295 : f32 to vector<16x32xf32>
    %642 = vector.extract_strided_slice %636 {offsets = [0, 0], sizes = [16, 8], strides = [1, 1]} : vector<16x32xf32> to vector<16x8xf32>
    %643 = vector.extract_strided_slice %637 {offsets = [0, 0], sizes = [16, 8], strides = [1, 1]} : vector<16x32xf32> to vector<16x8xf32>
    %cst_296 = arith.constant dense<0.000000e+00> : vector<16x16xf32>
    %644 = tpu.matmul %642, %643, %cst_296 {dimension_numbers = #tpu.dot_dimension_numbers<[1], [1], [0], [0], [0, 0, 1, 0], [], []>} : vector<16x8xf32>, vector<16x8xf32>, vector<16x16xf32> -> vector<16x16xf32>
    %cst_297 = arith.constant 0.353553385 : f32
    %645 = vector.broadcast %cst_297 : f32 to vector<16x16xf32>
    %646 = arith.mulf %644, %645 : vector<16x16xf32>
    %647 = arith.addf %646, %450 : vector<16x16xf32>
    %cst_298 = arith.constant dense<0xFF800000> : vector<16xf32>
    %648 = vector.multi_reduction <maximumf>, %647, %cst_298 [1] : vector<16x16xf32> to vector<16xf32>
    %649 = vector.shape_cast %648 : vector<16xf32> to vector<16x1xf32>
    %650 = vector.broadcast %649 : vector<16x1xf32> to vector<16x16xf32>
    %651 = arith.subf %647, %650 : vector<16x16xf32>
    %652 = math.exp %651 : vector<16x16xf32>
    %cst_299 = arith.constant dense<0.000000e+00> : vector<16xf32>
    %653 = vector.multi_reduction <add>, %652, %cst_299 [1] : vector<16x16xf32> to vector<16xf32>
    %654 = vector.shape_cast %653 : vector<16xf32> to vector<16x1xf32>
    %655 = vector.broadcast %654 : vector<16x1xf32> to vector<16x16xf32>
    %656 = arith.divf %652, %655 : vector<16x16xf32>
    %657 = vector.extract_strided_slice %638 {offsets = [0, 0], sizes = [16, 8], strides = [1, 1]} : vector<16x32xf32> to vector<16x8xf32>
    %cst_300 = arith.constant dense<0.000000e+00> : vector<16x8xf32>
    %658 = tpu.matmul %656, %657, %cst_300 {dimension_numbers = #tpu.dot_dimension_numbers<[1], [0], [0], [1], [0, 0, 1, 1], [], []>} : vector<16x16xf32>, vector<16x8xf32>, vector<16x8xf32> -> vector<16x8xf32>
    %659 = vector.extract_strided_slice %640 {offsets = [0, 0], sizes = [8, 32], strides = [1, 1]} : vector<32x32xf32> to vector<8x32xf32>
    %cst_301 = arith.constant dense<0.000000e+00> : vector<16x32xf32>
    %660 = tpu.matmul %658, %659, %cst_301 {dimension_numbers = #tpu.dot_dimension_numbers<[1], [0], [0], [1], [0, 0, 1, 1], [], []>} : vector<16x8xf32>, vector<8x32xf32>, vector<16x32xf32> -> vector<16x32xf32>
    %661 = arith.addf %641, %660 : vector<16x32xf32>
    %662 = vector.extract_strided_slice %636 {offsets = [0, 8], sizes = [16, 8], strides = [1, 1]} : vector<16x32xf32> to vector<16x8xf32>
    %663 = vector.extract_strided_slice %637 {offsets = [0, 8], sizes = [16, 8], strides = [1, 1]} : vector<16x32xf32> to vector<16x8xf32>
    %cst_302 = arith.constant dense<0.000000e+00> : vector<16x16xf32>
    %664 = tpu.matmul %662, %663, %cst_302 {dimension_numbers = #tpu.dot_dimension_numbers<[1], [1], [0], [0], [0, 0, 1, 0], [], []>} : vector<16x8xf32>, vector<16x8xf32>, vector<16x16xf32> -> vector<16x16xf32>
    %cst_303 = arith.constant 0.353553385 : f32
    %665 = vector.broadcast %cst_303 : f32 to vector<16x16xf32>
    %666 = arith.mulf %664, %665 : vector<16x16xf32>
    %667 = arith.addf %666, %450 : vector<16x16xf32>
    %cst_304 = arith.constant dense<0xFF800000> : vector<16xf32>
    %668 = vector.multi_reduction <maximumf>, %667, %cst_304 [1] : vector<16x16xf32> to vector<16xf32>
    %669 = vector.shape_cast %668 : vector<16xf32> to vector<16x1xf32>
    %670 = vector.broadcast %669 : vector<16x1xf32> to vector<16x16xf32>
    %671 = arith.subf %667, %670 : vector<16x16xf32>
    %672 = math.exp %671 : vector<16x16xf32>
    %cst_305 = arith.constant dense<0.000000e+00> : vector<16xf32>
    %673 = vector.multi_reduction <add>, %672, %cst_305 [1] : vector<16x16xf32> to vector<16xf32>
    %674 = vector.shape_cast %673 : vector<16xf32> to vector<16x1xf32>
    %675 = vector.broadcast %674 : vector<16x1xf32> to vector<16x16xf32>
    %676 = arith.divf %672, %675 : vector<16x16xf32>
    %677 = vector.extract_strided_slice %638 {offsets = [0, 8], sizes = [16, 8], strides = [1, 1]} : vector<16x32xf32> to vector<16x8xf32>
    %cst_306 = arith.constant dense<0.000000e+00> : vector<16x8xf32>
    %678 = tpu.matmul %676, %677, %cst_306 {dimension_numbers = #tpu.dot_dimension_numbers<[1], [0], [0], [1], [0, 0, 1, 1], [], []>} : vector<16x16xf32>, vector<16x8xf32>, vector<16x8xf32> -> vector<16x8xf32>
    %679 = vector.extract_strided_slice %640 {offsets = [8, 0], sizes = [8, 32], strides = [1, 1]} : vector<32x32xf32> to vector<8x32xf32>
    %cst_307 = arith.constant dense<0.000000e+00> : vector<16x32xf32>
    %680 = tpu.matmul %678, %679, %cst_307 {dimension_numbers = #tpu.dot_dimension_numbers<[1], [0], [0], [1], [0, 0, 1, 1], [], []>} : vector<16x8xf32>, vector<8x32xf32>, vector<16x32xf32> -> vector<16x32xf32>
    %681 = arith.addf %661, %680 : vector<16x32xf32>
    %682 = vector.extract_strided_slice %636 {offsets = [0, 16], sizes = [16, 8], strides = [1, 1]} : vector<16x32xf32> to vector<16x8xf32>
    %683 = vector.extract_strided_slice %637 {offsets = [0, 16], sizes = [16, 8], strides = [1, 1]} : vector<16x32xf32> to vector<16x8xf32>
    %cst_308 = arith.constant dense<0.000000e+00> : vector<16x16xf32>
    %684 = tpu.matmul %682, %683, %cst_308 {dimension_numbers = #tpu.dot_dimension_numbers<[1], [1], [0], [0], [0, 0, 1, 0], [], []>} : vector<16x8xf32>, vector<16x8xf32>, vector<16x16xf32> -> vector<16x16xf32>
    %cst_309 = arith.constant 0.353553385 : f32
    %685 = vector.broadcast %cst_309 : f32 to vector<16x16xf32>
    %686 = arith.mulf %684, %685 : vector<16x16xf32>
    %687 = arith.addf %686, %450 : vector<16x16xf32>
    %cst_310 = arith.constant dense<0xFF800000> : vector<16xf32>
    %688 = vector.multi_reduction <maximumf>, %687, %cst_310 [1] : vector<16x16xf32> to vector<16xf32>
    %689 = vector.shape_cast %688 : vector<16xf32> to vector<16x1xf32>
    %690 = vector.broadcast %689 : vector<16x1xf32> to vector<16x16xf32>
    %691 = arith.subf %687, %690 : vector<16x16xf32>
    %692 = math.exp %691 : vector<16x16xf32>
    %cst_311 = arith.constant dense<0.000000e+00> : vector<16xf32>
    %693 = vector.multi_reduction <add>, %692, %cst_311 [1] : vector<16x16xf32> to vector<16xf32>
    %694 = vector.shape_cast %693 : vector<16xf32> to vector<16x1xf32>
    %695 = vector.broadcast %694 : vector<16x1xf32> to vector<16x16xf32>
    %696 = arith.divf %692, %695 : vector<16x16xf32>
    %697 = vector.extract_strided_slice %638 {offsets = [0, 16], sizes = [16, 8], strides = [1, 1]} : vector<16x32xf32> to vector<16x8xf32>
    %cst_312 = arith.constant dense<0.000000e+00> : vector<16x8xf32>
    %698 = tpu.matmul %696, %697, %cst_312 {dimension_numbers = #tpu.dot_dimension_numbers<[1], [0], [0], [1], [0, 0, 1, 1], [], []>} : vector<16x16xf32>, vector<16x8xf32>, vector<16x8xf32> -> vector<16x8xf32>
    %699 = vector.extract_strided_slice %640 {offsets = [16, 0], sizes = [8, 32], strides = [1, 1]} : vector<32x32xf32> to vector<8x32xf32>
    %cst_313 = arith.constant dense<0.000000e+00> : vector<16x32xf32>
    %700 = tpu.matmul %698, %699, %cst_313 {dimension_numbers = #tpu.dot_dimension_numbers<[1], [0], [0], [1], [0, 0, 1, 1], [], []>} : vector<16x8xf32>, vector<8x32xf32>, vector<16x32xf32> -> vector<16x32xf32>
    %701 = arith.addf %681, %700 : vector<16x32xf32>
    %702 = vector.extract_strided_slice %636 {offsets = [0, 24], sizes = [16, 8], strides = [1, 1]} : vector<16x32xf32> to vector<16x8xf32>
    %703 = vector.extract_strided_slice %637 {offsets = [0, 24], sizes = [16, 8], strides = [1, 1]} : vector<16x32xf32> to vector<16x8xf32>
    %cst_314 = arith.constant dense<0.000000e+00> : vector<16x16xf32>
    %704 = tpu.matmul %702, %703, %cst_314 {dimension_numbers = #tpu.dot_dimension_numbers<[1], [1], [0], [0], [0, 0, 1, 0], [], []>} : vector<16x8xf32>, vector<16x8xf32>, vector<16x16xf32> -> vector<16x16xf32>
    %cst_315 = arith.constant 0.353553385 : f32
    %705 = vector.broadcast %cst_315 : f32 to vector<16x16xf32>
    %706 = arith.mulf %704, %705 : vector<16x16xf32>
    %707 = arith.addf %706, %450 : vector<16x16xf32>
    %cst_316 = arith.constant dense<0xFF800000> : vector<16xf32>
    %708 = vector.multi_reduction <maximumf>, %707, %cst_316 [1] : vector<16x16xf32> to vector<16xf32>
    %709 = vector.shape_cast %708 : vector<16xf32> to vector<16x1xf32>
    %710 = vector.broadcast %709 : vector<16x1xf32> to vector<16x16xf32>
    %711 = arith.subf %707, %710 : vector<16x16xf32>
    %712 = math.exp %711 : vector<16x16xf32>
    %cst_317 = arith.constant dense<0.000000e+00> : vector<16xf32>
    %713 = vector.multi_reduction <add>, %712, %cst_317 [1] : vector<16x16xf32> to vector<16xf32>
    %714 = vector.shape_cast %713 : vector<16xf32> to vector<16x1xf32>
    %715 = vector.broadcast %714 : vector<16x1xf32> to vector<16x16xf32>
    %716 = arith.divf %712, %715 : vector<16x16xf32>
    %717 = vector.extract_strided_slice %638 {offsets = [0, 24], sizes = [16, 8], strides = [1, 1]} : vector<16x32xf32> to vector<16x8xf32>
    %cst_318 = arith.constant dense<0.000000e+00> : vector<16x8xf32>
    %718 = tpu.matmul %716, %717, %cst_318 {dimension_numbers = #tpu.dot_dimension_numbers<[1], [0], [0], [1], [0, 0, 1, 1], [], []>} : vector<16x16xf32>, vector<16x8xf32>, vector<16x8xf32> -> vector<16x8xf32>
    %719 = vector.extract_strided_slice %640 {offsets = [24, 0], sizes = [8, 32], strides = [1, 1]} : vector<32x32xf32> to vector<8x32xf32>
    %cst_319 = arith.constant dense<0.000000e+00> : vector<16x32xf32>
    %720 = tpu.matmul %718, %719, %cst_319 {dimension_numbers = #tpu.dot_dimension_numbers<[1], [0], [0], [1], [0, 0, 1, 1], [], []>} : vector<16x8xf32>, vector<8x32xf32>, vector<16x32xf32> -> vector<16x32xf32>
    %721 = arith.addf %701, %720 : vector<16x32xf32>
    %722 = arith.addf %628, %721 : vector<16x32xf32>
    %c1_320 = arith.constant 1 : index
    %c0_321 = arith.constant 0 : index
    %c0_322 = arith.constant 0 : index
    %723 = vector.load %arg29[%c1_320, %c0_321, %c0_322] : memref<2x1x32xf32, #tpu.memory_space<vmem>>, vector<1x1x32xf32>
    %724 = vector.shape_cast %723 : vector<1x1x32xf32> to vector<1x32xf32>
    %725 = vector.broadcast %724 : vector<1x32xf32> to vector<16x32xf32>
    %726 = arith.addf %722, %725 : vector<16x32xf32>
    %c1_323 = arith.constant 1 : index
    %c0_324 = arith.constant 0 : index
    %c0_325 = arith.constant 0 : index
    %727 = vector.load %arg30[%c1_323, %c0_324, %c0_325] : memref<2x1x32xf32, #tpu.memory_space<vmem>>, vector<1x1x32xf32>
    %728 = vector.shape_cast %727 : vector<1x1x32xf32> to vector<1x32xf32>
    %c1_326 = arith.constant 1 : index
    %c0_327 = arith.constant 0 : index
    %c0_328 = arith.constant 0 : index
    %729 = vector.load %arg31[%c1_326, %c0_327, %c0_328] : memref<2x1x32xf32, #tpu.memory_space<vmem>>, vector<1x1x32xf32>
    %730 = vector.shape_cast %729 : vector<1x1x32xf32> to vector<1x32xf32>
    %cst_329 = arith.constant dense<0.000000e+00> : vector<16xf32>
    %731 = vector.multi_reduction <add>, %726, %cst_329 [1] : vector<16x32xf32> to vector<16xf32>
    %732 = vector.shape_cast %731 : vector<16xf32> to vector<16x1xf32>
    %cst_330 = arith.constant 3.200000e+01 : f32
    %733 = vector.broadcast %cst_330 : f32 to vector<16x1xf32>
    %734 = arith.divf %732, %733 : vector<16x1xf32>
    %735 = vector.broadcast %734 : vector<16x1xf32> to vector<16x32xf32>
    %736 = arith.subf %726, %735 : vector<16x32xf32>
    %737 = arith.mulf %736, %736 : vector<16x32xf32>
    %cst_331 = arith.constant dense<0.000000e+00> : vector<16xf32>
    %738 = vector.multi_reduction <add>, %737, %cst_331 [1] : vector<16x32xf32> to vector<16xf32>
    %739 = vector.shape_cast %738 : vector<16xf32> to vector<16x1xf32>
    %cst_332 = arith.constant 3.200000e+01 : f32
    %740 = vector.broadcast %cst_332 : f32 to vector<16x1xf32>
    %741 = arith.divf %739, %740 : vector<16x1xf32>
    %742 = vector.broadcast %734 : vector<16x1xf32> to vector<16x32xf32>
    %743 = arith.subf %726, %742 : vector<16x32xf32>
    %cst_333 = arith.constant 9.99999996E-13 : f32
    %744 = vector.broadcast %cst_333 : f32 to vector<16x1xf32>
    %745 = arith.addf %741, %744 : vector<16x1xf32>
    %746 = math.rsqrt %745 : vector<16x1xf32>
    %747 = vector.broadcast %746 : vector<16x1xf32> to vector<16x32xf32>
    %748 = arith.mulf %743, %747 : vector<16x32xf32>
    %749 = vector.broadcast %728 : vector<1x32xf32> to vector<16x32xf32>
    %750 = arith.mulf %748, %749 : vector<16x32xf32>
    %751 = vector.broadcast %730 : vector<1x32xf32> to vector<16x32xf32>
    %752 = arith.addf %750, %751 : vector<16x32xf32>
    %c1_334 = arith.constant 1 : index
    %c0_335 = arith.constant 0 : index
    %c0_336 = arith.constant 0 : index
    %753 = vector.load %arg32[%c1_334, %c0_335, %c0_336] : memref<2x32x64xf32, #tpu.memory_space<vmem>>, vector<1x32x64xf32>
    %754 = vector.shape_cast %753 : vector<1x32x64xf32> to vector<32x64xf32>
    %cst_337 = arith.constant dense<0.000000e+00> : vector<16x64xf32>
    %755 = tpu.matmul %752, %754, %cst_337 {dimension_numbers = #tpu.dot_dimension_numbers<[1], [0], [0], [1], [0, 0, 1, 1], [], []>} : vector<16x32xf32>, vector<32x64xf32>, vector<16x64xf32> -> vector<16x64xf32>
    %c1_338 = arith.constant 1 : index
    %c0_339 = arith.constant 0 : index
    %c0_340 = arith.constant 0 : index
    %756 = vector.load %arg33[%c1_338, %c0_339, %c0_340] : memref<2x1x64xf32, #tpu.memory_space<vmem>>, vector<1x1x64xf32>
    %757 = vector.shape_cast %756 : vector<1x1x64xf32> to vector<1x64xf32>
    %758 = vector.broadcast %757 : vector<1x64xf32> to vector<16x64xf32>
    %759 = arith.addf %755, %758 : vector<16x64xf32>
    %760 = arith.mulf %759, %759 : vector<16x64xf32>
    %761 = arith.mulf %759, %760 : vector<16x64xf32>
    %cst_341 = arith.constant 4.471500e-02 : f32
    %762 = vector.broadcast %cst_341 : f32 to vector<16x64xf32>
    %763 = arith.mulf %762, %761 : vector<16x64xf32>
    %764 = arith.addf %759, %763 : vector<16x64xf32>
    %cst_342 = arith.constant 0.797884583 : f32
    %765 = vector.broadcast %cst_342 : f32 to vector<16x64xf32>
    %766 = arith.mulf %765, %764 : vector<16x64xf32>
    %767 = math.tanh %766 : vector<16x64xf32>
    %cst_343 = arith.constant 1.000000e+00 : f32
    %768 = vector.broadcast %cst_343 : f32 to vector<16x64xf32>
    %769 = arith.addf %768, %767 : vector<16x64xf32>
    %cst_344 = arith.constant 5.000000e-01 : f32
    %770 = vector.broadcast %cst_344 : f32 to vector<16x64xf32>
    %771 = arith.mulf %770, %769 : vector<16x64xf32>
    %772 = arith.mulf %759, %771 : vector<16x64xf32>
    %c1_345 = arith.constant 1 : index
    %c0_346 = arith.constant 0 : index
    %c0_347 = arith.constant 0 : index
    %773 = vector.load %arg34[%c1_345, %c0_346, %c0_347] : memref<2x64x32xf32, #tpu.memory_space<vmem>>, vector<1x64x32xf32>
    %774 = vector.shape_cast %773 : vector<1x64x32xf32> to vector<64x32xf32>
    %cst_348 = arith.constant dense<0.000000e+00> : vector<16x32xf32>
    %775 = tpu.matmul %772, %774, %cst_348 {dimension_numbers = #tpu.dot_dimension_numbers<[1], [0], [0], [1], [0, 0, 1, 1], [], []>} : vector<16x64xf32>, vector<64x32xf32>, vector<16x32xf32> -> vector<16x32xf32>
    %c1_349 = arith.constant 1 : index
    %c0_350 = arith.constant 0 : index
    %c0_351 = arith.constant 0 : index
    %776 = vector.load %arg35[%c1_349, %c0_350, %c0_351] : memref<2x1x32xf32, #tpu.memory_space<vmem>>, vector<1x1x32xf32>
    %777 = vector.shape_cast %776 : vector<1x1x32xf32> to vector<1x32xf32>
    %778 = vector.broadcast %777 : vector<1x32xf32> to vector<16x32xf32>
    %779 = arith.addf %775, %778 : vector<16x32xf32>
    %780 = arith.addf %752, %779 : vector<16x32xf32>
    %c1_352 = arith.constant 1 : index
    %c0_353 = arith.constant 0 : index
    %c0_354 = arith.constant 0 : index
    %781 = vector.load %arg36[%c1_352, %c0_353, %c0_354] : memref<2x1x32xf32, #tpu.memory_space<vmem>>, vector<1x1x32xf32>
    %782 = vector.shape_cast %781 : vector<1x1x32xf32> to vector<1x32xf32>
    %c1_355 = arith.constant 1 : index
    %c0_356 = arith.constant 0 : index
    %c0_357 = arith.constant 0 : index
    %783 = vector.load %arg37[%c1_355, %c0_356, %c0_357] : memref<2x1x32xf32, #tpu.memory_space<vmem>>, vector<1x1x32xf32>
    %784 = vector.shape_cast %783 : vector<1x1x32xf32> to vector<1x32xf32>
    %cst_358 = arith.constant dense<0.000000e+00> : vector<16xf32>
    %785 = vector.multi_reduction <add>, %780, %cst_358 [1] : vector<16x32xf32> to vector<16xf32>
    %786 = vector.shape_cast %785 : vector<16xf32> to vector<16x1xf32>
    %cst_359 = arith.constant 3.200000e+01 : f32
    %787 = vector.broadcast %cst_359 : f32 to vector<16x1xf32>
    %788 = arith.divf %786, %787 : vector<16x1xf32>
    %789 = vector.broadcast %788 : vector<16x1xf32> to vector<16x32xf32>
    %790 = arith.subf %780, %789 : vector<16x32xf32>
    %791 = arith.mulf %790, %790 : vector<16x32xf32>
    %cst_360 = arith.constant dense<0.000000e+00> : vector<16xf32>
    %792 = vector.multi_reduction <add>, %791, %cst_360 [1] : vector<16x32xf32> to vector<16xf32>
    %793 = vector.shape_cast %792 : vector<16xf32> to vector<16x1xf32>
    %cst_361 = arith.constant 3.200000e+01 : f32
    %794 = vector.broadcast %cst_361 : f32 to vector<16x1xf32>
    %795 = arith.divf %793, %794 : vector<16x1xf32>
    %796 = vector.broadcast %788 : vector<16x1xf32> to vector<16x32xf32>
    %797 = arith.subf %780, %796 : vector<16x32xf32>
    %cst_362 = arith.constant 9.99999996E-13 : f32
    %798 = vector.broadcast %cst_362 : f32 to vector<16x1xf32>
    %799 = arith.addf %795, %798 : vector<16x1xf32>
    %800 = math.rsqrt %799 : vector<16x1xf32>
    %801 = vector.broadcast %800 : vector<16x1xf32> to vector<16x32xf32>
    %802 = arith.mulf %797, %801 : vector<16x32xf32>
    %803 = vector.broadcast %782 : vector<1x32xf32> to vector<16x32xf32>
    %804 = arith.mulf %802, %803 : vector<16x32xf32>
    %805 = vector.broadcast %784 : vector<1x32xf32> to vector<16x32xf32>
    %806 = arith.addf %804, %805 : vector<16x32xf32>
    %c0_363 = arith.constant 0 : index
    %c0_364 = arith.constant 0 : index
    %807 = vector.load %arg38[%c0_363, %c0_364] : memref<32x64xf32, #tpu.memory_space<vmem>>, vector<32x64xf32>
    %cst_365 = arith.constant dense<0.000000e+00> : vector<16x64xf32>
    %808 = tpu.matmul %806, %807, %cst_365 {dimension_numbers = #tpu.dot_dimension_numbers<[1], [0], [0], [1], [0, 0, 1, 1], [], []>} : vector<16x32xf32>, vector<32x64xf32>, vector<16x64xf32> -> vector<16x64xf32>
    %c0_366 = arith.constant 0 : index
    %c0_367 = arith.constant 0 : index
    %809 = vector.load %arg39[%c0_366, %c0_367] : memref<1x64xf32, #tpu.memory_space<vmem>>, vector<1x64xf32>
    %810 = vector.broadcast %809 : vector<1x64xf32> to vector<16x64xf32>
    %811 = arith.addf %808, %810 : vector<16x64xf32>
    %c0_368 = arith.constant 0 : index
    %c0_369 = arith.constant 0 : index
    %812 = vector.load %arg40[%c0_368, %c0_369] : memref<16x64xf32, #tpu.memory_space<vmem>>, vector<16x64xf32>
    tpu.vector_store %arg40[%c0_368, %c0_369], %811 {strides = array<i32>} : memref<16x64xf32, #tpu.memory_space<vmem>>, vector<16x64xf32>,
    return
  }
}

</mosaic_0001>

<llo_original>
// kernel: _lambda_.1
$region0: #{_lambda_.1}
  #allocation0 [shape = 'u32[]', space=smem, size = 0x4, offset = 0x4, fixed_abs, tag = 'smem constant byte address 0x4 - core index']
  #allocation1 [shape = 'u32[72,128]{1,0:T(1,128)}', space=vmem, size = 0x9000, scoped, tag = 'internal scratch']
  #allocation2 [shape = 'f32[16,32]{1,0:T(8,128)}', space=vmem, size = 0x2000, scoped, tag = 'scratch operand']
  %s0 = inlined_call_operand.smem [shape: u32[41], index: -1, kind: input, shape index: {}]
  %s1 = sld [smem:[%s0]]
  %s2 = scalar_lea.smem %s0, 1
  %s3 = sld [smem:[%s2]]
  %s4 = scalar_lea.smem %s0, 2
  %s5 = sld [smem:[%s4]]
  %s6 = scalar_lea.smem %s0, 3
  %s7 = sld [smem:[%s6]]
  %s8 = scalar_lea.smem %s0, 4
  %s9 = sld [smem:[%s8]]
  %s10 = scalar_lea.smem %s0, 5
  %s11 = sld [smem:[%s10]]
  %s12 = scalar_lea.smem %s0, 6
  %s13 = sld [smem:[%s12]]
  %s14 = scalar_lea.smem %s0, 7
  %s15 = sld [smem:[%s14]]
  %s16 = scalar_lea.smem %s0, 8
  %s17 = sld [smem:[%s16]]
  %s18 = scalar_lea.smem %s0, 9
  %s19 = sld [smem:[%s18]]
  %s20 = scalar_lea.smem %s0, 10
  %s21 = sld [smem:[%s20]]
  %s22 = scalar_lea.smem %s0, 11
  %s23 = sld [smem:[%s22]]
  %s24 = scalar_lea.smem %s0, 12
  %s25 = sld [smem:[%s24]]
  %s26 = scalar_lea.smem %s0, 13
  %s27 = sld [smem:[%s26]]
  %s28 = scalar_lea.smem %s0, 14
  %s29 = sld [smem:[%s28]]
  %s30 = scalar_lea.smem %s0, 15
  %s31 = sld [smem:[%s30]]
  %s32 = scalar_lea.smem %s0, 16
  %s33 = sld [smem:[%s32]]
  %s34 = scalar_lea.smem %s0, 17
  %s35 = sld [smem:[%s34]]
  %s36 = scalar_lea.smem %s0, 18
  %s37 = sld [smem:[%s36]]
  %s38 = scalar_lea.smem %s0, 19
  %s39 = sld [smem:[%s38]]
  %s40 = scalar_lea.smem %s0, 20
  %s41 = sld [smem:[%s40]]
  %s42 = scalar_lea.smem %s0, 21
  %s43 = sld [smem:[%s42]]
  %s44 = scalar_lea.smem %s0, 22
  %s45 = sld [smem:[%s44]]
  %s46 = scalar_lea.smem %s0, 23
  %s47 = sld [smem:[%s46]]
  %s48 = scalar_lea.smem %s0, 24
  %s49 = sld [smem:[%s48]]
  %s50 = scalar_lea.smem %s0, 25
  %s51 = sld [smem:[%s50]]
  %s52 = scalar_lea.smem %s0, 26
  %s53 = sld [smem:[%s52]]
  %s54 = scalar_lea.smem %s0, 27
  %s55 = sld [smem:[%s54]]
  %s56 = scalar_lea.smem %s0, 28
  %s57 = sld [smem:[%s56]]
  %s58 = scalar_lea.smem %s0, 29
  %s59 = sld [smem:[%s58]]
  %s60 = scalar_lea.smem %s0, 30
  %s61 = sld [smem:[%s60]]
  %s62 = scalar_lea.smem %s0, 31
  %s63 = sld [smem:[%s62]]
  %s64 = scalar_lea.smem %s0, 32
  %s65 = sld [smem:[%s64]]
  %s66 = scalar_lea.smem %s0, 33
  %s67 = sld [smem:[%s66]]
  %s68 = scalar_lea.smem %s0, 34
  %s69 = sld [smem:[%s68]]
  %s70 = scalar_lea.smem %s0, 35
  %s71 = sld [smem:[%s70]]
  %s72 = scalar_lea.smem %s0, 36
  %s73 = sld [smem:[%s72]]
  %s74 = scalar_lea.smem %s0, 37
  %s75 = sld [smem:[%s74]]
  %s76 = scalar_lea.smem %s0, 38
  %s77 = sld [smem:[%s76]]
  %s78 = scalar_lea.smem %s0, 39
  %s79 = sld [smem:[%s78]]
  %s80 = scalar_lea.smem %s0, 40
  %s81 = sld [smem:[%s80]]
  %s82 = sld [smem:[#allocation0]]
  $region170: #{_lambda_.1} parent=0
    _
  %s84 = ssub.s32 1, %s82
  %s85 = scalar_select 0, %s84, %s82
  $region1: #{_lambda_.1} parent=0
    #allocation3 [shape = 'u8[8192]{0}', space=vmem, size = 0x2000, scoped, tag = 'output window, operand 0, single buffered']
    #allocation4 [shape = 's32[1]{0}', space=sflag, size = 0x4, scoped, tag = 'scoped memory for _lambda_.1']
    %86 = vsyncpa [#allocation4], 0
    // Predicated region
    $region2: #{_lambda_.1} parent=1 // pred_check
      _
    $region3: #{_lambda_.1} parent=1 // pred_check_branch
      %88 = sbr.rel (0) target = $region5
    $region4: #{_lambda_.1} parent=1 // pred_region
      _
    $region5: #{_lambda_.1} parent=1 // pred_fallthru
      _
    // Predicated region
    $region6: #{_lambda_.1} parent=1 // pred_check
      _
    $region7: #{_lambda_.1} parent=1 // pred_check_branch
      %90 = sbr.rel (0) target = $region9
    $region8: #{_lambda_.1} parent=1 // pred_region
      _
    $region9: #{_lambda_.1} parent=1 // pred_fallthru
      _
    // Predicated region
    $region10: #{_lambda_.1} parent=1 // pred_check
      _
    $region11: #{_lambda_.1} parent=1 // pred_check_branch
      %92 = sbr.rel (0) target = $region13
    $region12: #{_lambda_.1} parent=1 // pred_region
      _
    $region13: #{_lambda_.1} parent=1 // pred_fallthru
      _
    // Predicated region
    $region14: #{_lambda_.1} parent=1 // pred_check
      _
    $region15: #{_lambda_.1} parent=1 // pred_check_branch
      %94 = sbr.rel (0) target = $region17
    $region16: #{_lambda_.1} parent=1 // pred_region
      _
    $region17: #{_lambda_.1} parent=1 // pred_fallthru
      _
    // Predicated region
    $region18: #{_lambda_.1} parent=1 // pred_check
      _
    $region19: #{_lambda_.1} parent=1 // pred_check_branch
      %96 = sbr.rel (0) target = $region21
    $region20: #{_lambda_.1} parent=1 // pred_region
      _
    $region21: #{_lambda_.1} parent=1 // pred_fallthru
      _
    // Predicated region
    $region22: #{_lambda_.1} parent=1 // pred_check
      _
    $region23: #{_lambda_.1} parent=1 // pred_check_branch
      %98 = sbr.rel (0) target = $region25
    $region24: #{_lambda_.1} parent=1 // pred_region
      _
    $region25: #{_lambda_.1} parent=1 // pred_fallthru
      _
    // Predicated region
    $region26: #{_lambda_.1} parent=1 // pred_check
      _
    $region27: #{_lambda_.1} parent=1 // pred_check_branch
      %100 = sbr.rel (0) target = $region29
    $region28: #{_lambda_.1} parent=1 // pred_region
      _
    $region29: #{_lambda_.1} parent=1 // pred_fallthru
      _
    // Predicated region
    $region30: #{_lambda_.1} parent=1 // pred_check
      _
    $region31: #{_lambda_.1} parent=1 // pred_check_branch
      %102 = sbr.rel (0) target = $region33
    $region32: #{_lambda_.1} parent=1 // pred_region
      _
    $region33: #{_lambda_.1} parent=1 // pred_fallthru
      _
    // Predicated region
    $region34: #{_lambda_.1} parent=1 // pred_check
      _
    $region35: #{_lambda_.1} parent=1 // pred_check_branch
      %104 = sbr.rel (0) target = $region37
    $region36: #{_lambda_.1} parent=1 // pred_region
      _
    $region37: #{_lambda_.1} parent=1 // pred_fallthru
      _
    // Predicated region
    $region38: #{_lambda_.1} parent=1 // pred_check
      _
    $region39: #{_lambda_.1} parent=1 // pred_check_branch
      %106 = sbr.rel (0) target = $region41
    $region40: #{_lambda_.1} parent=1 // pred_region
      _
    $region41: #{_lambda_.1} parent=1 // pred_fallthru
      _
    // Predicated region
    $region42: #{_lambda_.1} parent=1 // pred_check
      _
    $region43: #{_lambda_.1} parent=1 // pred_check_branch
      %108 = sbr.rel (0) target = $region45
    $region44: #{_lambda_.1} parent=1 // pred_region
      _
    $region45: #{_lambda_.1} parent=1 // pred_fallthru
      _
    // Predicated region
    $region46: #{_lambda_.1} parent=1 // pred_check
      _
    $region47: #{_lambda_.1} parent=1 // pred_check_branch
      %110 = sbr.rel (0) target = $region49
    $region48: #{_lambda_.1} parent=1 // pred_region
      _
    $region49: #{_lambda_.1} parent=1 // pred_fallthru
      _
    // Predicated region
    $region50: #{_lambda_.1} parent=1 // pred_check
      _
    $region51: #{_lambda_.1} parent=1 // pred_check_branch
      %112 = sbr.rel (0) target = $region53
    $region52: #{_lambda_.1} parent=1 // pred_region
      _
    $region53: #{_lambda_.1} parent=1 // pred_fallthru
      _
    // Predicated region
    $region54: #{_lambda_.1} parent=1 // pred_check
      _
    $region55: #{_lambda_.1} parent=1 // pred_check_branch
      %114 = sbr.rel (0) target = $region57
    $region56: #{_lambda_.1} parent=1 // pred_region
      _
    $region57: #{_lambda_.1} parent=1 // pred_fallthru
      _
    // Predicated region
    $region58: #{_lambda_.1} parent=1 // pred_check
      _
    $region59: #{_lambda_.1} parent=1 // pred_check_branch
      %116 = sbr.rel (0) target = $region61
    $region60: #{_lambda_.1} parent=1 // pred_region
      _
    $region61: #{_lambda_.1} parent=1 // pred_fallthru
      _
    // Predicated region
    $region62: #{_lambda_.1} parent=1 // pred_check
      _
    $region63: #{_lambda_.1} parent=1 // pred_check_branch
      %118 = sbr.rel (0) target = $region65
    $region64: #{_lambda_.1} parent=1 // pred_region
      _
    $region65: #{_lambda_.1} parent=1 // pred_fallthru
      _
    // Predicated region
    $region66: #{_lambda_.1} parent=1 // pred_check
      _
    $region67: #{_lambda_.1} parent=1 // pred_check_branch
      %120 = sbr.rel (0) target = $region69
    $region68: #{_lambda_.1} parent=1 // pred_region
      _
    $region69: #{_lambda_.1} parent=1 // pred_fallthru
      _
    // Predicated region
    $region70: #{_lambda_.1} parent=1 // pred_check
      _
    $region71: #{_lambda_.1} parent=1 // pred_check_branch
      %122 = sbr.rel (0) target = $region73
    $region72: #{_lambda_.1} parent=1 // pred_region
      _
    $region73: #{_lambda_.1} parent=1 // pred_fallthru
      _
    // Predicated region
    $region74: #{_lambda_.1} parent=1 // pred_check
      _
    $region75: #{_lambda_.1} parent=1 // pred_check_branch
      %124 = sbr.rel (0) target = $region77
    $region76: #{_lambda_.1} parent=1 // pred_region
      _
    $region77: #{_lambda_.1} parent=1 // pred_fallthru
      _
    // Predicated region
    $region78: #{_lambda_.1} parent=1 // pred_check
      _
    $region79: #{_lambda_.1} parent=1 // pred_check_branch
      %126 = sbr.rel (0) target = $region81
    $region80: #{_lambda_.1} parent=1 // pred_region
      _
    $region81: #{_lambda_.1} parent=1 // pred_fallthru
      _
    // Predicated region
    $region82: #{_lambda_.1} parent=1 // pred_check
      _
    $region83: #{_lambda_.1} parent=1 // pred_check_branch
      %128 = sbr.rel (0) target = $region85
    $region84: #{_lambda_.1} parent=1 // pred_region
      _
    $region85: #{_lambda_.1} parent=1 // pred_fallthru
      _
    // Predicated region
    $region86: #{_lambda_.1} parent=1 // pred_check
      _
    $region87: #{_lambda_.1} parent=1 // pred_check_branch
      %130 = sbr.rel (0) target = $region89
    $region88: #{_lambda_.1} parent=1 // pred_region
      _
    $region89: #{_lambda_.1} parent=1 // pred_fallthru
      _
    // Predicated region
    $region90: #{_lambda_.1} parent=1 // pred_check
      _
    $region91: #{_lambda_.1} parent=1 // pred_check_branch
      %132 = sbr.rel (0) target = $region93
    $region92: #{_lambda_.1} parent=1 // pred_region
      _
    $region93: #{_lambda_.1} parent=1 // pred_fallthru
      _
    // Predicated region
    $region94: #{_lambda_.1} parent=1 // pred_check
      _
    $region95: #{_lambda_.1} parent=1 // pred_check_branch
      %134 = sbr.rel (0) target = $region97
    $region96: #{_lambda_.1} parent=1 // pred_region
      _
    $region97: #{_lambda_.1} parent=1 // pred_fallthru
      _
    // Predicated region
    $region98: #{_lambda_.1} parent=1 // pred_check
      _
    $region99: #{_lambda_.1} parent=1 // pred_check_branch
      %136 = sbr.rel (0) target = $region101
    $region100: #{_lambda_.1} parent=1 // pred_region
      _
    $region101: #{_lambda_.1} parent=1 // pred_fallthru
      _
    // Predicated region
    $region102: #{_lambda_.1} parent=1 // pred_check
      _
    $region103: #{_lambda_.1} parent=1 // pred_check_branch
      %138 = sbr.rel (0) target = $region105
    $region104: #{_lambda_.1} parent=1 // pred_region
      _
    $region105: #{_lambda_.1} parent=1 // pred_fallthru
      _
    // Predicated region
    $region106: #{_lambda_.1} parent=1 // pred_check
      _
    $region107: #{_lambda_.1} parent=1 // pred_check_branch
      %140 = sbr.rel (0) target = $region109
    $region108: #{_lambda_.1} parent=1 // pred_region
      _
    $region109: #{_lambda_.1} parent=1 // pred_fallthru
      _
    // Predicated region
    $region110: #{_lambda_.1} parent=1 // pred_check
      _
    $region111: #{_lambda_.1} parent=1 // pred_check_branch
      %142 = sbr.rel (0) target = $region113
    $region112: #{_lambda_.1} parent=1 // pred_region
      _
    $region113: #{_lambda_.1} parent=1 // pred_fallthru
      _
    // Predicated region
    $region114: #{_lambda_.1} parent=1 // pred_check
      _
    $region115: #{_lambda_.1} parent=1 // pred_check_branch
      %144 = sbr.rel (0) target = $region117
    $region116: #{_lambda_.1} parent=1 // pred_region
      _
    $region117: #{_lambda_.1} parent=1 // pred_fallthru
      _
    // Predicated region
    $region118: #{_lambda_.1} parent=1 // pred_check
      _
    $region119: #{_lambda_.1} parent=1 // pred_check_branch
      %146 = sbr.rel (0) target = $region121
    $region120: #{_lambda_.1} parent=1 // pred_region
      _
    $region121: #{_lambda_.1} parent=1 // pred_fallthru
      _
    // Predicated region
    $region122: #{_lambda_.1} parent=1 // pred_check
      _
    $region123: #{_lambda_.1} parent=1 // pred_check_branch
      %148 = sbr.rel (0) target = $region125
    $region124: #{_lambda_.1} parent=1 // pred_region
      _
    $region125: #{_lambda_.1} parent=1 // pred_fallthru
      _
    // Predicated region
    $region126: #{_lambda_.1} parent=1 // pred_check
      _
    $region127: #{_lambda_.1} parent=1 // pred_check_branch
      %150 = sbr.rel (0) target = $region129
    $region128: #{_lambda_.1} parent=1 // pred_region
      _
    $region129: #{_lambda_.1} parent=1 // pred_fallthru
      _
    // Predicated region
    $region130: #{_lambda_.1} parent=1 // pred_check
      _
    $region131: #{_lambda_.1} parent=1 // pred_check_branch
      %152 = sbr.rel (0) target = $region133
    $region132: #{_lambda_.1} parent=1 // pred_region
      _
    $region133: #{_lambda_.1} parent=1 // pred_fallthru
      _
    // Predicated region
    $region134: #{_lambda_.1} parent=1 // pred_check
      _
    $region135: #{_lambda_.1} parent=1 // pred_check_branch
      %154 = sbr.rel (0) target = $region137
    $region136: #{_lambda_.1} parent=1 // pred_region
      _
    $region137: #{_lambda_.1} parent=1 // pred_fallthru
      _
    // Predicated region
    $region138: #{_lambda_.1} parent=1 // pred_check
      _
    $region139: #{_lambda_.1} parent=1 // pred_check_branch
      %156 = sbr.rel (0) target = $region141
    $region140: #{_lambda_.1} parent=1 // pred_region
      _
    $region141: #{_lambda_.1} parent=1 // pred_fallthru
      _
    // Predicated region
    $region142: #{_lambda_.1} parent=1 // pred_check
      _
    $region143: #{_lambda_.1} parent=1 // pred_check_branch
      %158 = sbr.rel (0) target = $region145
    $region144: #{_lambda_.1} parent=1 // pred_region
      _
    $region145: #{_lambda_.1} parent=1 // pred_fallthru
      _
    // Predicated region
    $region146: #{_lambda_.1} parent=1 // pred_check
      _
    $region147: #{_lambda_.1} parent=1 // pred_check_branch
      %160 = sbr.rel (0) target = $region149
    $region148: #{_lambda_.1} parent=1 // pred_region
      _
    $region149: #{_lambda_.1} parent=1 // pred_fallthru
      _
    // Predicated region
    $region150: #{_lambda_.1} parent=1 // pred_check
      _
    $region151: #{_lambda_.1} parent=1 // pred_check_branch
      %162 = sbr.rel (0) target = $region153
    $region152: #{_lambda_.1} parent=1 // pred_region
      _
    $region153: #{_lambda_.1} parent=1 // pred_fallthru
      _
    // Predicated region
    $region154: #{_lambda_.1} parent=1 // pred_check
      _
    $region155: #{_lambda_.1} parent=1 // pred_check_branch
      %164 = sbr.rel (0) target = $region157
    $region156: #{_lambda_.1} parent=1 // pred_region
      _
    $region157: #{_lambda_.1} parent=1 // pred_fallthru
      _
    // Predicated region
    $region158: #{_lambda_.1} parent=1 // pred_check
      _
    $region159: #{_lambda_.1} parent=1 // pred_check_branch
      %166 = sbr.rel (0) target = $region161
    $region160: #{_lambda_.1} parent=1 // pred_region
      _
    $region161: #{_lambda_.1} parent=1 // pred_fallthru
      _
    %v167 = vld [vmem:[%s1] sm:$0xff]
    %v168 = vld [vmem:[%s1 + $0x8] sm:$0xff]
    %v169 = vld [vmem:[%s1 + $0x10] sm:$0xff]
    %v170 = vld [vmem:[%s1 + $0x18] sm:$0xff]
    %v171 = vld [vmem:[%s3] sm:$0xff]
    %v172 = vld [vmem:[%s3 + $0x8] sm:$0xff]
    %v173 = vld [vmem:[%s3 + $0x10] sm:$0xff]
    %v174 = vld [vmem:[%s3 + $0x18] sm:$0xff]
    %v175 = vld [vmem:[%s3 + $0x20] sm:$0xff]
    %v176 = vld [vmem:[%s3 + $0x28] sm:$0xff]
    %vm177 = vcmask 392192
    %v179 = vsel %vm177, %v167, 0
    %v182 = vsel %vm177, %v168, 0
    %v185 = vsel %vm177, %v169, 0
    %v188 = vsel %vm177, %v170, 0
    %190 = vmatpush.msra.mxu0 0.0
    %191 = vmatpush.msra.mxu0 0.0
    %192 = vmatpush.msra.mxu0 0.0
    %193 = vmatpush.msra.mxu0 0.0
    %194 = vmatpush.msra.mxu0 0.0
    %195 = vmatpush.msra.mxu0 0.0
    %196 = vmatpush.msra.mxu0 0.0
    %197 = vmatpush.msra.mxu0 0.0
    %198 = vmatpush.msra.mxu0 0.0
    %199 = vmatpush.msra.mxu0 0.0
    %200 = vmatpush.msra.mxu0 %v176
    %201 = vmatpush.msra.mxu0 %v175
    %202 = vmatpush.msra.mxu0 %v174
    %203 = vmatpush.msra.mxu0 %v173
    %204 = vmatpush.msra.mxu0 %v172
    %205 = vmatpush.msra.mxu0 %v171
    %206 = vmatmul.f32.gmra.mxu0 %v179
    %v207 = vpop.f32.mrf.mxu0
    %v208 = vadd.f32 0.0, %v207
    %209 = vmatmul.f32.gmra.mxu0 %v182
    %v210 = vpop.f32.mrf.mxu0
    %v211 = vadd.f32 0.0, %v210
    %212 = vmatmul.f32.gmra.mxu0 %v185
    %v213 = vpop.f32.mrf.mxu0
    %v214 = vadd.f32 0.0, %v213
    %215 = vmatmul.f32.gmra.mxu0 %v188
    %v216 = vpop.f32.mrf.mxu0
    %v217 = vadd.f32 0.0, %v216
    %218 = vdwg.mxu0
    %v219 = vld [vmem:[%s5] sm:$0xff]
    %v220 = vld [vmem:[%s5 + $0x8] sm:$0xff]
    %v221 = vld [vmem:[%s5 + $0x10] sm:$0xff]
    %v222 = vld [vmem:[%s5 + $0x18] sm:$0xff]
    %v223 = vld [vmem:[%s5 + $0x20] sm:$0xff]
    %v224 = vld [vmem:[%s5 + $0x28] sm:$0xff]
    %v225 = vld [vmem:[%s5 + $0x30] sm:$0xff]
    %v226 = vld [vmem:[%s5 + $0x38] sm:$0xff]
    %v227 = vld [vmem:[%s7] sm:$0x1]
    %v229 = vperm.slane %v227, 0
    %vm231 = vcmask 523264
    %v233 = vsel %vm231, %v208, 0
    %v236 = vsel %vm231, %v211, 0
    %v239 = vsel %vm231, %v214, 0
    %v242 = vsel %vm231, %v217, 0
    %244 = vmatpush.msra.mxu0 0.0
    %245 = vmatpush.msra.mxu0 0.0
    %246 = vmatpush.msra.mxu0 0.0
    %247 = vmatpush.msra.mxu0 0.0
    %248 = vmatpush.msra.mxu0 0.0
    %249 = vmatpush.msra.mxu0 0.0
    %250 = vmatpush.msra.mxu0 0.0
    %251 = vmatpush.msra.mxu0 0.0
    %252 = vmatpush.msra.mxu0 %v226
    %253 = vmatpush.msra.mxu0 %v225
    %254 = vmatpush.msra.mxu0 %v224
    %255 = vmatpush.msra.mxu0 %v223
    %256 = vmatpush.msra.mxu0 %v222
    %257 = vmatpush.msra.mxu0 %v221
    %258 = vmatpush.msra.mxu0 %v220
    %259 = vmatpush.msra.mxu0 %v219
    %260 = vmatmul.f32.gmra.mxu0 %v233
    %v261 = vpop.f32.mrf.mxu0
    %v262 = vadd.f32 %v229, %v261
    %263 = vmatmul.f32.gmra.mxu0 %v236
    %v264 = vpop.f32.mrf.mxu0
    %v265 = vadd.f32 %v229, %v264
    %266 = vmatmul.f32.gmra.mxu0 %v239
    %v267 = vpop.f32.mrf.mxu0
    %v268 = vadd.f32 %v229, %v267
    %269 = vmatmul.f32.gmra.mxu0 %v242
    %v270 = vpop.f32.mrf.mxu0
    %v271 = vadd.f32 %v229, %v270
    %272 = vdwg.mxu0
    %v273 = vld [vmem:[%s11] sm:$0xff]
    %v274 = vld [vmem:[%s11 + $0x8] sm:$0xff]
    %v275 = vld [vmem:[%s11 + $0x10] sm:$0xff]
    %v276 = vld [vmem:[%s11 + $0x18] sm:$0xff]
    %v277 = vadd.f32 %v262, %v273
    %v278 = vadd.f32 %v265, %v274
    %v279 = vadd.f32 %v268, %v275
    %v280 = vadd.f32 %v271, %v276
    %v281 = vld [vmem:[%s13] sm:$0x1]
    %v282 = vld [vmem:[%s15] sm:$0x1]
    %vm283 = vcmask 261120
    %v284 = vsel %vm283, %v277, 0.0
    %285 = vadd.xlane.f32.xlu0 %v284
    %v286 = vpop.xlane.xlu0 %285
    %v287 = vsel %vm283, %v278, 0.0
    %288 = vadd.xlane.f32.xlu0 %v287
    %v289 = vpop.xlane.xlu0 %288
    %v290 = vsel %vm283, %v279, 0.0
    %291 = vadd.xlane.f32.xlu0 %v290
    %v292 = vpop.xlane.xlu0 %291
    %v293 = vsel %vm283, %v280, 0.0
    %294 = vadd.xlane.f32.xlu0 %v293
    %v295 = vpop.xlane.xlu0 %294
    %v296 = vrcp.pop 32.0
    %v297 = vmul.f32 32.0, %v296
    %v298 = vsub.f32 1.0, %v297
    %v299 = vmul.f32 %v296, %v298
    %v300 = vadd.f32 %v296, %v299
    %vm301 = vweird.f32 %v296
    %v302 = vsel %vm301, %v296, %v300
    %v303 = vmul.f32 %v286, %v302
    %v304 = vmul.f32 %v289, %v302
    %v305 = vmul.f32 %v292, %v302
    %v306 = vmul.f32 %v295, %v302
    %v307 = vsub.f32 %v277, %v303
    %v308 = vsub.f32 %v278, %v304
    %v309 = vsub.f32 %v279, %v305
    %v310 = vsub.f32 %v280, %v306
    %v311 = vmul.f32 %v307, %v307
    %v312 = vmul.f32 %v308, %v308
    %v313 = vmul.f32 %v309, %v309
    %v314 = vmul.f32 %v310, %v310
    %v315 = vsel %vm283, %v311, 0.0
    %316 = vadd.xlane.f32.xlu0 %v315
    %v317 = vpop.xlane.xlu0 %316
    %v318 = vsel %vm283, %v312, 0.0
    %319 = vadd.xlane.f32.xlu0 %v318
    %v320 = vpop.xlane.xlu0 %319
    %v321 = vsel %vm283, %v313, 0.0
    %322 = vadd.xlane.f32.xlu0 %v321
    %v323 = vpop.xlane.xlu0 %322
    %v324 = vsel %vm283, %v314, 0.0
    %325 = vadd.xlane.f32.xlu0 %v324
    %v326 = vpop.xlane.xlu0 %325
    %v327 = vmul.f32 %v317, %v302
    %v328 = vmul.f32 %v320, %v302
    %v329 = vmul.f32 %v323, %v302
    %v330 = vmul.f32 %v326, %v302
    %v331 = vadd.f32 %v327, 1e-12
    %v332 = vadd.f32 %v328, 1e-12
    %v333 = vadd.f32 %v329, 1e-12
    %v334 = vadd.f32 %v330, 1e-12
    %v335 = vrsqrt.pop %v331
    %v336 = vmul.f32 %v335, %v331
    %v337 = vmul.f32 %v336, %v335
    %v338 = vmul.f32 0.5, %v337
    %v339 = vsub.f32 1.5, %v338
    %v340 = vmul.f32 %v335, %v339
    %vm341 = vweird.f32 %v331
    %vm342 = vweird.f32 %v335
    %vm343 = vmor %vm341, %vm342
    %v344 = vsel %vm343, %v335, %v340
    %v345 = vrsqrt.pop %v332
    %v346 = vmul.f32 %v345, %v332
    %v347 = vmul.f32 %v346, %v345
    %v348 = vmul.f32 0.5, %v347
    %v349 = vsub.f32 1.5, %v348
    %v350 = vmul.f32 %v345, %v349
    %vm351 = vweird.f32 %v332
    %vm352 = vweird.f32 %v345
    %vm353 = vmor %vm351, %vm352
    %v354 = vsel %vm353, %v345, %v350
    %v355 = vrsqrt.pop %v333
    %v356 = vmul.f32 %v355, %v333
    %v357 = vmul.f32 %v356, %v355
    %v358 = vmul.f32 0.5, %v357
    %v359 = vsub.f32 1.5, %v358
    %v360 = vmul.f32 %v355, %v359
    %vm361 = vweird.f32 %v333
    %vm362 = vweird.f32 %v355
    %vm363 = vmor %vm361, %vm362
    %v364 = vsel %vm363, %v355, %v360
    %v365 = vrsqrt.pop %v334
    %v366 = vmul.f32 %v365, %v334
    %v367 = vmul.f32 %v366, %v365
    %v368 = vmul.f32 0.5, %v367
    %v369 = vsub.f32 1.5, %v368
    %v370 = vmul.f32 %v365, %v369
    %vm371 = vweird.f32 %v334
    %vm372 = vweird.f32 %v365
    %vm373 = vmor %vm371, %vm372
    %v374 = vsel %vm373, %v365, %v370
    %v375 = vmul.f32 %v307, %v344
    %v376 = vmul.f32 %v308, %v354
    %v377 = vmul.f32 %v309, %v364
    %v378 = vmul.f32 %v310, %v374
    %v380 = vperm.slane %v281, 0
    %v382 = vmul.f32 %v375, %v380
    %v383 = vmul.f32 %v376, %v380
    %v384 = vmul.f32 %v377, %v380
    %v385 = vmul.f32 %v378, %v380
    %v387 = vperm.slane %v282, 0
    %v389 = vadd.f32 %v382, %v387
    %v390 = vadd.f32 %v383, %v387
    %v391 = vadd.f32 %v384, %v387
    %v392 = vadd.f32 %v385, %v387
    %v393 = vld [vmem:[%s9] sm:$0xff]
    %v394 = vld [vmem:[%s9 + $0x8] sm:$0xff]
    %v395 = vld [vmem:[%s9 + $0x10] sm:$0xff]
    %v396 = vld [vmem:[%s9 + $0x18] sm:$0xff]
    %v397 = vld [vmem:[%s17] sm:$0xff]
    %v398 = vld [vmem:[%s17 + $0x8] sm:$0xff]
    %v399 = vld [vmem:[%s17 + $0x10] sm:$0xff]
    %v400 = vld [vmem:[%s17 + $0x18] sm:$0xff]
    %v401 = vld [vmem:[%s19] sm:$0x1]
    %v403 = vperm.slane %v401, 0
    %v406 = vsel %vm283, %v389, 0
    %v409 = vsel %vm283, %v390, 0
    %v412 = vsel %vm283, %v391, 0
    %v415 = vsel %vm283, %v392, 0
    %417 = vmatpush.msra.mxu0 0.0
    %418 = vmatpush.msra.mxu0 0.0
    %419 = vmatpush.msra.mxu0 0.0
    %420 = vmatpush.msra.mxu0 0.0
    %421 = vmatpush.msra.mxu0 0.0
    %422 = vmatpush.msra.mxu0 0.0
    %423 = vmatpush.msra.mxu0 0.0
    %424 = vmatpush.msra.mxu0 0.0
    %425 = vmatpush.msra.mxu0 0.0
    %426 = vmatpush.msra.mxu0 0.0
    %427 = vmatpush.msra.mxu0 0.0
    %428 = vmatpush.msra.mxu0 0.0
    %429 = vmatpush.msra.mxu0 %v400
    %430 = vmatpush.msra.mxu0 %v399
    %431 = vmatpush.msra.mxu0 %v398
    %432 = vmatpush.msra.mxu0 %v397
    %433 = vmatmul.f32.gmra.mxu0 %v406
    %v434 = vpop.f32.mrf.mxu0
    %v435 = vadd.f32 %v403, %v434
    %436 = vmatmul.f32.gmra.mxu0 %v409
    %v437 = vpop.f32.mrf.mxu0
    %v438 = vadd.f32 %v403, %v437
    %439 = vmatmul.f32.gmra.mxu0 %v412
    %v440 = vpop.f32.mrf.mxu0
    %v441 = vadd.f32 %v403, %v440
    %442 = vmatmul.f32.gmra.mxu0 %v415
    %v443 = vpop.f32.mrf.mxu0
    %v444 = vadd.f32 %v403, %v443
    %445 = vdwg.mxu0
    %v446 = vld [vmem:[%s21] sm:$0xff]
    %v447 = vld [vmem:[%s21 + $0x8] sm:$0xff]
    %v448 = vld [vmem:[%s21 + $0x10] sm:$0xff]
    %v449 = vld [vmem:[%s21 + $0x18] sm:$0xff]
    %454 = vrot.lane.b32.xlu0 %v435, 96
    %v455 = vpop.permute.xlu0 %454
    %456 = vrot.lane.b32.xlu0 %v438, 96
    %v457 = vpop.permute.xlu0 %456
    %458 = vrot.lane.b32.xlu0 %v441, 96
    %v459 = vpop.permute.xlu0 %458
    %460 = vrot.lane.b32.xlu0 %v444, 96
    %v461 = vpop.permute.xlu0 %460
    %vm462 = vcmask 64512
    %v463 = vsel %vm462, %v435, 0
    %v465 = vsel %vm462, %v438, 0
    %v467 = vsel %vm462, %v441, 0
    %v469 = vsel %vm462, %v444, 0
    %v471 = vsel %vm462, %v455, 0
    %v473 = vsel %vm462, %v457, 0
    %v475 = vsel %vm462, %v459, 0
    %v477 = vsel %vm462, %v461, 0
    %479 = vmatpush.xpose.msra.mxu0 0.0
    %480 = vmatpush.xpose.msra.mxu0 0.0
    %481 = vmatpush.xpose.msra.mxu0 0.0
    %482 = vmatpush.xpose.msra.mxu0 0.0
    %483 = vmatpush.xpose.msra.mxu0 0.0
    %484 = vmatpush.xpose.msra.mxu0 0.0
    %485 = vmatpush.xpose.msra.mxu0 0.0
    %486 = vmatpush.xpose.msra.mxu0 0.0
    %487 = vmatpush.xpose.msra.mxu0 0.0
    %488 = vmatpush.xpose.msra.mxu0 0.0
    %489 = vmatpush.xpose.msra.mxu0 0.0
    %490 = vmatpush.xpose.msra.mxu0 0.0
    %491 = vmatpush.xpose.msra.mxu0 %v477
    %492 = vmatpush.xpose.msra.mxu0 %v475
    %493 = vmatpush.xpose.msra.mxu0 %v473
    %494 = vmatpush.xpose.msra.mxu0 %v471
    %495 = vmatmul.f32.gmra.mxu0 %v463
    %v496 = vpop.f32.mrf.mxu0
    %v497 = vadd.f32 0.0, %v496
    %498 = vmatmul.f32.gmra.mxu0 %v465
    %v499 = vpop.f32.mrf.mxu0
    %v500 = vadd.f32 0.0, %v499
    %501 = vmatmul.f32.gmra.mxu0 %v467
    %v502 = vpop.f32.mrf.mxu0
    %v503 = vadd.f32 0.0, %v502
    %504 = vmatmul.f32.gmra.mxu0 %v469
    %v505 = vpop.f32.mrf.mxu0
    %v506 = vadd.f32 0.0, %v505
    %507 = vdwg.mxu0
    %v508 = vmul.f32 %v497, 0.35355338
    %v509 = vmul.f32 %v500, 0.35355338
    %v510 = vmul.f32 %v503, 0.35355338
    %v511 = vmul.f32 %v506, 0.35355338
    %v512 = vadd.f32 %v508, %v393
    %v513 = vadd.f32 %v509, %v394
    %v514 = vadd.f32 %v510, %v395
    %v515 = vadd.f32 %v511, %v396
    %v516 = vsel %vm283, %v512, -inf
    %517 = vmax.xlane.f32.xlu0 %v516
    %v518 = vpop.xlane.xlu0 %517
    %v519 = vsel %vm283, %v513, -inf
    %520 = vmax.xlane.f32.xlu0 %v519
    %v521 = vpop.xlane.xlu0 %520
    %v522 = vsel %vm283, %v514, -inf
    %523 = vmax.xlane.f32.xlu0 %v522
    %v524 = vpop.xlane.xlu0 %523
    %v525 = vsel %vm283, %v515, -inf
    %526 = vmax.xlane.f32.xlu0 %v525
    %v527 = vpop.xlane.xlu0 %526
    %v528 = vsub.f32 %v512, %v518
    %v529 = vsub.f32 %v513, %v521
    %v530 = vsub.f32 %v514, %v524
    %v531 = vsub.f32 %v515, %v527
    %v532 = vmul.f32 %v528, 1.442695
    %v533 = vpow.pop %v532
    %v534 = vmul.f32 %v529, 1.442695
    %v535 = vpow.pop %v534
    %v536 = vmul.f32 %v530, 1.442695
    %v537 = vpow.pop %v536
    %v538 = vmul.f32 %v531, 1.442695
    %v539 = vpow.pop %v538
    %v540 = vsel %vm283, %v533, 0.0
    %541 = vadd.xlane.f32.xlu0 %v540
    %v542 = vpop.xlane.xlu0 %541
    %v543 = vsel %vm283, %v535, 0.0
    %544 = vadd.xlane.f32.xlu0 %v543
    %v545 = vpop.xlane.xlu0 %544
    %v546 = vsel %vm283, %v537, 0.0
    %547 = vadd.xlane.f32.xlu0 %v546
    %v548 = vpop.xlane.xlu0 %547
    %v549 = vsel %vm283, %v539, 0.0
    %550 = vadd.xlane.f32.xlu0 %v549
    %v551 = vpop.xlane.xlu0 %550
    %v552 = vrcp.pop %v542
    %v553 = vmul.f32 %v542, %v552
    %v554 = vsub.f32 1.0, %v553
    %v555 = vmul.f32 %v552, %v554
    %v556 = vadd.f32 %v552, %v555
    %vm557 = vweird.f32 %v542
    %vm558 = vweird.f32 %v552
    %vm559 = vmor %vm557, %vm558
    %v560 = vsel %vm559, %v552, %v556
    %v561 = vand.u32 2147483647, %v542
    %vm562 = vcmp.eq.f32.partialorder %v561, 8.507059e+37
    %v563 = vand.u32 %v542, 2147483648
    %v564 = vor.u32 1.1754944e-38, %v563
    %v565 = vsel %vm562, %v564, %v560
    %v566 = vmul.f32 %v533, %v565
    %v567 = vrcp.pop %v545
    %v568 = vmul.f32 %v545, %v567
    %v569 = vsub.f32 1.0, %v568
    %v570 = vmul.f32 %v567, %v569
    %v571 = vadd.f32 %v567, %v570
    %vm572 = vweird.f32 %v545
    %vm573 = vweird.f32 %v567
    %vm574 = vmor %vm572, %vm573
    %v575 = vsel %vm574, %v567, %v571
    %v576 = vand.u32 2147483647, %v545
    %vm577 = vcmp.eq.f32.partialorder %v576, 8.507059e+37
    %v578 = vand.u32 %v545, 2147483648
    %v579 = vor.u32 1.1754944e-38, %v578
    %v580 = vsel %vm577, %v579, %v575
    %v581 = vmul.f32 %v535, %v580
    %v582 = vrcp.pop %v548
    %v583 = vmul.f32 %v548, %v582
    %v584 = vsub.f32 1.0, %v583
    %v585 = vmul.f32 %v582, %v584
    %v586 = vadd.f32 %v582, %v585
    %vm587 = vweird.f32 %v548
    %vm588 = vweird.f32 %v582
    %vm589 = vmor %vm587, %vm588
    %v590 = vsel %vm589, %v582, %v586
    %v591 = vand.u32 2147483647, %v548
    %vm592 = vcmp.eq.f32.partialorder %v591, 8.507059e+37
    %v593 = vand.u32 %v548, 2147483648
    %v594 = vor.u32 1.1754944e-38, %v593
    %v595 = vsel %vm592, %v594, %v590
    %v596 = vmul.f32 %v537, %v595
    %v597 = vrcp.pop %v551
    %v598 = vmul.f32 %v551, %v597
    %v599 = vsub.f32 1.0, %v598
    %v600 = vmul.f32 %v597, %v599
    %v601 = vadd.f32 %v597, %v600
    %vm602 = vweird.f32 %v551
    %vm603 = vweird.f32 %v597
    %vm604 = vmor %vm602, %vm603
    %v605 = vsel %vm604, %v597, %v601
    %v606 = vand.u32 2147483647, %v551
    %vm607 = vcmp.eq.f32.partialorder %v606, 8.507059e+37
    %v608 = vand.u32 %v551, 2147483648
    %v609 = vor.u32 1.1754944e-38, %v608
    %v610 = vsel %vm607, %v609, %v605
    %v611 = vmul.f32 %v539, %v610
    %612 = vrot.lane.b32.xlu0 %v435, 64
    %v613 = vpop.permute.xlu0 %612
    %614 = vrot.lane.b32.xlu0 %v438, 64
    %v615 = vpop.permute.xlu0 %614
    %616 = vrot.lane.b32.xlu0 %v441, 64
    %v617 = vpop.permute.xlu0 %616
    %618 = vrot.lane.b32.xlu0 %v444, 64
    %v619 = vpop.permute.xlu0 %618
    %v625 = vsel %vm283, %v566, 0
    %v628 = vsel %vm283, %v581, 0
    %v631 = vsel %vm283, %v596, 0
    %v634 = vsel %vm283, %v611, 0
    %636 = vmatpush.msra.mxu0 0.0
    %637 = vmatpush.msra.mxu0 0.0
    %638 = vmatpush.msra.mxu0 0.0
    %639 = vmatpush.msra.mxu0 0.0
    %640 = vmatpush.msra.mxu0 0.0
    %641 = vmatpush.msra.mxu0 0.0
    %642 = vmatpush.msra.mxu0 0.0
    %643 = vmatpush.msra.mxu0 0.0
    %644 = vmatpush.msra.mxu0 0.0
    %645 = vmatpush.msra.mxu0 0.0
    %646 = vmatpush.msra.mxu0 0.0
    %647 = vmatpush.msra.mxu0 0.0
    %648 = vmatpush.msra.mxu0 %v619
    %649 = vmatpush.msra.mxu0 %v617
    %650 = vmatpush.msra.mxu0 %v615
    %651 = vmatpush.msra.mxu0 %v613
    %652 = vmatmul.f32.gmra.mxu0 %v625
    %v653 = vpop.f32.mrf.mxu0
    %v654 = vadd.f32 0.0, %v653
    %655 = vmatmul.f32.gmra.mxu0 %v628
    %v656 = vpop.f32.mrf.mxu0
    %v657 = vadd.f32 0.0, %v656
    %658 = vmatmul.f32.gmra.mxu0 %v631
    %v659 = vpop.f32.mrf.mxu0
    %v660 = vadd.f32 0.0, %v659
    %661 = vmatmul.f32.gmra.mxu0 %v634
    %v662 = vpop.f32.mrf.mxu0
    %v663 = vadd.f32 0.0, %v662
    %664 = vdwg.mxu0
    %665 = vrot.lane.b32.xlu0 %v435, 120
    %v666 = vpop.permute.xlu0 %665
    %667 = vrot.lane.b32.xlu0 %v438, 120
    %v668 = vpop.permute.xlu0 %667
    %669 = vrot.lane.b32.xlu0 %v441, 120
    %v670 = vpop.permute.xlu0 %669
    %671 = vrot.lane.b32.xlu0 %v444, 120
    %v672 = vpop.permute.xlu0 %671
    %673 = vrot.lane.b32.xlu0 %v435, 88
    %v674 = vpop.permute.xlu0 %673
    %675 = vrot.lane.b32.xlu0 %v438, 88
    %v676 = vpop.permute.xlu0 %675
    %677 = vrot.lane.b32.xlu0 %v441, 88
    %v678 = vpop.permute.xlu0 %677
    %679 = vrot.lane.b32.xlu0 %v444, 88
    %v680 = vpop.permute.xlu0 %679
    %v681 = vsel %vm462, %v666, 0
    %v683 = vsel %vm462, %v668, 0
    %v685 = vsel %vm462, %v670, 0
    %v687 = vsel %vm462, %v672, 0
    %v689 = vsel %vm462, %v674, 0
    %v691 = vsel %vm462, %v676, 0
    %v693 = vsel %vm462, %v678, 0
    %v695 = vsel %vm462, %v680, 0
    %697 = vmatpush.xpose.msra.mxu0 0.0
    %698 = vmatpush.xpose.msra.mxu0 0.0
    %699 = vmatpush.xpose.msra.mxu0 0.0
    %700 = vmatpush.xpose.msra.mxu0 0.0
    %701 = vmatpush.xpose.msra.mxu0 0.0
    %702 = vmatpush.xpose.msra.mxu0 0.0
    %703 = vmatpush.xpose.msra.mxu0 0.0
    %704 = vmatpush.xpose.msra.mxu0 0.0
    %705 = vmatpush.xpose.msra.mxu0 0.0
    %706 = vmatpush.xpose.msra.mxu0 0.0
    %707 = vmatpush.xpose.msra.mxu0 0.0
    %708 = vmatpush.xpose.msra.mxu0 0.0
    %709 = vmatpush.xpose.msra.mxu0 %v695
    %710 = vmatpush.xpose.msra.mxu0 %v693
    %711 = vmatpush.xpose.msra.mxu0 %v691
    %712 = vmatpush.xpose.msra.mxu0 %v689
    %713 = vmatmul.f32.gmra.mxu0 %v681
    %v714 = vpop.f32.mrf.mxu0
    %v715 = vadd.f32 0.0, %v714
    %716 = vmatmul.f32.gmra.mxu0 %v683
    %v717 = vpop.f32.mrf.mxu0
    %v718 = vadd.f32 0.0, %v717
    %719 = vmatmul.f32.gmra.mxu0 %v685
    %v720 = vpop.f32.mrf.mxu0
    %v721 = vadd.f32 0.0, %v720
    %722 = vmatmul.f32.gmra.mxu0 %v687
    %v723 = vpop.f32.mrf.mxu0
    %v724 = vadd.f32 0.0, %v723
    %725 = vdwg.mxu0
    %v726 = vmul.f32 %v715, 0.35355338
    %v727 = vmul.f32 %v718, 0.35355338
    %v728 = vmul.f32 %v721, 0.35355338
    %v729 = vmul.f32 %v724, 0.35355338
    %v730 = vadd.f32 %v726, %v393
    %v731 = vadd.f32 %v727, %v394
    %v732 = vadd.f32 %v728, %v395
    %v733 = vadd.f32 %v729, %v396
    %v734 = vsel %vm283, %v730, -inf
    %735 = vmax.xlane.f32.xlu0 %v734
    %v736 = vpop.xlane.xlu0 %735
    %v737 = vsel %vm283, %v731, -inf
    %738 = vmax.xlane.f32.xlu0 %v737
    %v739 = vpop.xlane.xlu0 %738
    %v740 = vsel %vm283, %v732, -inf
    %741 = vmax.xlane.f32.xlu0 %v740
    %v742 = vpop.xlane.xlu0 %741
    %v743 = vsel %vm283, %v733, -inf
    %744 = vmax.xlane.f32.xlu0 %v743
    %v745 = vpop.xlane.xlu0 %744
    %v746 = vsub.f32 %v730, %v736
    %v747 = vsub.f32 %v731, %v739
    %v748 = vsub.f32 %v732, %v742
    %v749 = vsub.f32 %v733, %v745
    %v750 = vmul.f32 %v746, 1.442695
    %v751 = vpow.pop %v750
    %v752 = vmul.f32 %v747, 1.442695
    %v753 = vpow.pop %v752
    %v754 = vmul.f32 %v748, 1.442695
    %v755 = vpow.pop %v754
    %v756 = vmul.f32 %v749, 1.442695
    %v757 = vpow.pop %v756
    %v758 = vsel %vm283, %v751, 0.0
    %759 = vadd.xlane.f32.xlu0 %v758
    %v760 = vpop.xlane.xlu0 %759
    %v761 = vsel %vm283, %v753, 0.0
    %762 = vadd.xlane.f32.xlu0 %v761
    %v763 = vpop.xlane.xlu0 %762
    %v764 = vsel %vm283, %v755, 0.0
    %765 = vadd.xlane.f32.xlu0 %v764
    %v766 = vpop.xlane.xlu0 %765
    %v767 = vsel %vm283, %v757, 0.0
    %768 = vadd.xlane.f32.xlu0 %v767
    %v769 = vpop.xlane.xlu0 %768
    %v770 = vrcp.pop %v760
    %v771 = vmul.f32 %v760, %v770
    %v772 = vsub.f32 1.0, %v771
    %v773 = vmul.f32 %v770, %v772
    %v774 = vadd.f32 %v770, %v773
    %vm775 = vweird.f32 %v760
    %vm776 = vweird.f32 %v770
    %vm777 = vmor %vm775, %vm776
    %v778 = vsel %vm777, %v770, %v774
    %v779 = vand.u32 2147483647, %v760
    %vm780 = vcmp.eq.f32.partialorder %v779, 8.507059e+37
    %v781 = vand.u32 %v760, 2147483648
    %v782 = vor.u32 1.1754944e-38, %v781
    %v783 = vsel %vm780, %v782, %v778
    %v784 = vmul.f32 %v751, %v783
    %v785 = vrcp.pop %v763
    %v786 = vmul.f32 %v763, %v785
    %v787 = vsub.f32 1.0, %v786
    %v788 = vmul.f32 %v785, %v787
    %v789 = vadd.f32 %v785, %v788
    %vm790 = vweird.f32 %v763
    %vm791 = vweird.f32 %v785
    %vm792 = vmor %vm790, %vm791
    %v793 = vsel %vm792, %v785, %v789
    %v794 = vand.u32 2147483647, %v763
    %vm795 = vcmp.eq.f32.partialorder %v794, 8.507059e+37
    %v796 = vand.u32 %v763, 2147483648
    %v797 = vor.u32 1.1754944e-38, %v796
    %v798 = vsel %vm795, %v797, %v793
    %v799 = vmul.f32 %v753, %v798
    %v800 = vrcp.pop %v766
    %v801 = vmul.f32 %v766, %v800
    %v802 = vsub.f32 1.0, %v801
    %v803 = vmul.f32 %v800, %v802
    %v804 = vadd.f32 %v800, %v803
    %vm805 = vweird.f32 %v766
    %vm806 = vweird.f32 %v800
    %vm807 = vmor %vm805, %vm806
    %v808 = vsel %vm807, %v800, %v804
    %v809 = vand.u32 2147483647, %v766
    %vm810 = vcmp.eq.f32.partialorder %v809, 8.507059e+37
    %v811 = vand.u32 %v766, 2147483648
    %v812 = vor.u32 1.1754944e-38, %v811
    %v813 = vsel %vm810, %v812, %v808
    %v814 = vmul.f32 %v755, %v813
    %v815 = vrcp.pop %v769
    %v816 = vmul.f32 %v769, %v815
    %v817 = vsub.f32 1.0, %v816
    %v818 = vmul.f32 %v815, %v817
    %v819 = vadd.f32 %v815, %v818
    %vm820 = vweird.f32 %v769
    %vm821 = vweird.f32 %v815
    %vm822 = vmor %vm820, %vm821
    %v823 = vsel %vm822, %v815, %v819
    %v824 = vand.u32 2147483647, %v769
    %vm825 = vcmp.eq.f32.partialorder %v824, 8.507059e+37
    %v826 = vand.u32 %v769, 2147483648
    %v827 = vor.u32 1.1754944e-38, %v826
    %v828 = vsel %vm825, %v827, %v823
    %v829 = vmul.f32 %v757, %v828
    %830 = vrot.lane.b32.xlu0 %v435, 56
    %v831 = vpop.permute.xlu0 %830
    %832 = vrot.lane.b32.xlu0 %v438, 56
    %v833 = vpop.permute.xlu0 %832
    %834 = vrot.lane.b32.xlu0 %v441, 56
    %v835 = vpop.permute.xlu0 %834
    %836 = vrot.lane.b32.xlu0 %v444, 56
    %v837 = vpop.permute.xlu0 %836
    %v843 = vsel %vm283, %v784, 0
    %v846 = vsel %vm283, %v799, 0
    %v849 = vsel %vm283, %v814, 0
    %v852 = vsel %vm283, %v829, 0
    %854 = vmatpush.msra.mxu0 0.0
    %855 = vmatpush.msra.mxu0 0.0
    %856 = vmatpush.msra.mxu0 0.0
    %857 = vmatpush.msra.mxu0 0.0
    %858 = vmatpush.msra.mxu0 0.0
    %859 = vmatpush.msra.mxu0 0.0
    %860 = vmatpush.msra.mxu0 0.0
    %861 = vmatpush.msra.mxu0 0.0
    %862 = vmatpush.msra.mxu0 0.0
    %863 = vmatpush.msra.mxu0 0.0
    %864 = vmatpush.msra.mxu0 0.0
    %865 = vmatpush.msra.mxu0 0.0
    %866 = vmatpush.msra.mxu0 %v837
    %867 = vmatpush.msra.mxu0 %v835
    %868 = vmatpush.msra.mxu0 %v833
    %869 = vmatpush.msra.mxu0 %v831
    %870 = vmatmul.f32.gmra.mxu0 %v843
    %v871 = vpop.f32.mrf.mxu0
    %v872 = vadd.f32 0.0, %v871
    %873 = vmatmul.f32.gmra.mxu0 %v846
    %v874 = vpop.f32.mrf.mxu0
    %v875 = vadd.f32 0.0, %v874
    %876 = vmatmul.f32.gmra.mxu0 %v849
    %v877 = vpop.f32.mrf.mxu0
    %v878 = vadd.f32 0.0, %v877
    %879 = vmatmul.f32.gmra.mxu0 %v852
    %v880 = vpop.f32.mrf.mxu0
    %v881 = vadd.f32 0.0, %v880
    %882 = vdwg.mxu0
    %v884 = vsel %vm462, %v872, 0
    %v887 = vsel %vm462, %v875, 0
    %v890 = vsel %vm462, %v878, 0
    %v893 = vsel %vm462, %v881, 0
    %895 = vmatpush.msra.mxu0 0.0
    %896 = vmatpush.msra.mxu0 0.0
    %897 = vmatpush.msra.mxu0 0.0
    %898 = vmatpush.msra.mxu0 0.0
    %899 = vmatpush.msra.mxu0 0.0
    %900 = vmatpush.msra.mxu0 0.0
    %901 = vmatpush.msra.mxu0 0.0
    %902 = vmatpush.msra.mxu0 0.0
    %903 = vmatpush.msra.mxu0 0.0
    %904 = vmatpush.msra.mxu0 0.0
    %905 = vmatpush.msra.mxu0 0.0
    %906 = vmatpush.msra.mxu0 0.0
    %907 = vmatpush.msra.mxu0 0.0
    %908 = vmatpush.msra.mxu0 0.0
    %909 = vmatpush.msra.mxu0 0.0
    %910 = vmatpush.msra.mxu0 %v447
    %911 = vmatmul.f32.gmra.mxu0 %v884
    %v912 = vpop.f32.mrf.mxu0
    %v913 = vadd.f32 0.0, %v912
    %914 = vmatmul.f32.gmra.mxu0 %v887
    %v915 = vpop.f32.mrf.mxu0
    %v916 = vadd.f32 0.0, %v915
    %917 = vmatmul.f32.gmra.mxu0 %v890
    %v918 = vpop.f32.mrf.mxu0
    %v919 = vadd.f32 0.0, %v918
    %920 = vmatmul.f32.gmra.mxu0 %v893
    %v921 = vpop.f32.mrf.mxu0
    %v922 = vadd.f32 0.0, %v921
    %923 = vdwg.mxu0
    %v925 = vsel %vm462, %v654, 0
    %v928 = vsel %vm462, %v657, 0
    %v931 = vsel %vm462, %v660, 0
    %v934 = vsel %vm462, %v663, 0
    %936 = vmatpush.msra.mxu0 0.0
    %937 = vmatpush.msra.mxu0 0.0
    %938 = vmatpush.msra.mxu0 0.0
    %939 = vmatpush.msra.mxu0 0.0
    %940 = vmatpush.msra.mxu0 0.0
    %941 = vmatpush.msra.mxu0 0.0
    %942 = vmatpush.msra.mxu0 0.0
    %943 = vmatpush.msra.mxu0 0.0
    %944 = vmatpush.msra.mxu0 0.0
    %945 = vmatpush.msra.mxu0 0.0
    %946 = vmatpush.msra.mxu0 0.0
    %947 = vmatpush.msra.mxu0 0.0
    %948 = vmatpush.msra.mxu0 0.0
    %949 = vmatpush.msra.mxu0 0.0
    %950 = vmatpush.msra.mxu0 0.0
    %951 = vmatpush.msra.mxu0 %v446
    %952 = vmatmul.f32.gmra.mxu0 %v925
    %v953 = vpop.f32.mrf.mxu0
    %v954 = vadd.f32 %v913, %v953
    %955 = vmatmul.f32.gmra.mxu0 %v928
    %v956 = vpop.f32.mrf.mxu0
    %v957 = vadd.f32 %v916, %v956
    %958 = vmatmul.f32.gmra.mxu0 %v931
    %v959 = vpop.f32.mrf.mxu0
    %v960 = vadd.f32 %v919, %v959
    %961 = vmatmul.f32.gmra.mxu0 %v934
    %v962 = vpop.f32.mrf.mxu0
    %v963 = vadd.f32 %v922, %v962
    %964 = vdwg.mxu0
    %965 = vrot.lane.b32.xlu0 %v435, 112
    %v966 = vpop.permute.xlu0 %965
    %967 = vrot.lane.b32.xlu0 %v438, 112
    %v968 = vpop.permute.xlu0 %967
    %969 = vrot.lane.b32.xlu0 %v441, 112
    %v970 = vpop.permute.xlu0 %969
    %971 = vrot.lane.b32.xlu0 %v444, 112
    %v972 = vpop.permute.xlu0 %971
    %973 = vrot.lane.b32.xlu0 %v435, 80
    %v974 = vpop.permute.xlu0 %973
    %975 = vrot.lane.b32.xlu0 %v438, 80
    %v976 = vpop.permute.xlu0 %975
    %977 = vrot.lane.b32.xlu0 %v441, 80
    %v978 = vpop.permute.xlu0 %977
    %979 = vrot.lane.b32.xlu0 %v444, 80
    %v980 = vpop.permute.xlu0 %979
    %v981 = vsel %vm462, %v966, 0
    %v983 = vsel %vm462, %v968, 0
    %v985 = vsel %vm462, %v970, 0
    %v987 = vsel %vm462, %v972, 0
    %v989 = vsel %vm462, %v974, 0
    %v991 = vsel %vm462, %v976, 0
    %v993 = vsel %vm462, %v978, 0
    %v995 = vsel %vm462, %v980, 0
    %997 = vmatpush.xpose.msra.mxu0 0.0
    %998 = vmatpush.xpose.msra.mxu0 0.0
    %999 = vmatpush.xpose.msra.mxu0 0.0
    %1000 = vmatpush.xpose.msra.mxu0 0.0
    %1001 = vmatpush.xpose.msra.mxu0 0.0
    %1002 = vmatpush.xpose.msra.mxu0 0.0
    %1003 = vmatpush.xpose.msra.mxu0 0.0
    %1004 = vmatpush.xpose.msra.mxu0 0.0
    %1005 = vmatpush.xpose.msra.mxu0 0.0
    %1006 = vmatpush.xpose.msra.mxu0 0.0
    %1007 = vmatpush.xpose.msra.mxu0 0.0
    %1008 = vmatpush.xpose.msra.mxu0 0.0
    %1009 = vmatpush.xpose.msra.mxu0 %v995
    %1010 = vmatpush.xpose.msra.mxu0 %v993
    %1011 = vmatpush.xpose.msra.mxu0 %v991
    %1012 = vmatpush.xpose.msra.mxu0 %v989
    %1013 = vmatmul.f32.gmra.mxu0 %v981
    %v1014 = vpop.f32.mrf.mxu0
    %v1015 = vadd.f32 0.0, %v1014
    %1016 = vmatmul.f32.gmra.mxu0 %v983
    %v1017 = vpop.f32.mrf.mxu0
    %v1018 = vadd.f32 0.0, %v1017
    %1019 = vmatmul.f32.gmra.mxu0 %v985
    %v1020 = vpop.f32.mrf.mxu0
    %v1021 = vadd.f32 0.0, %v1020
    %1022 = vmatmul.f32.gmra.mxu0 %v987
    %v1023 = vpop.f32.mrf.mxu0
    %v1024 = vadd.f32 0.0, %v1023
    %1025 = vdwg.mxu0
    %v1026 = vmul.f32 %v1015, 0.35355338
    %v1027 = vmul.f32 %v1018, 0.35355338
    %v1028 = vmul.f32 %v1021, 0.35355338
    %v1029 = vmul.f32 %v1024, 0.35355338
    %v1030 = vadd.f32 %v1026, %v393
    %v1031 = vadd.f32 %v1027, %v394
    %v1032 = vadd.f32 %v1028, %v395
    %v1033 = vadd.f32 %v1029, %v396
    %v1034 = vsel %vm283, %v1030, -inf
    %1035 = vmax.xlane.f32.xlu0 %v1034
    %v1036 = vpop.xlane.xlu0 %1035
    %v1037 = vsel %vm283, %v1031, -inf
    %1038 = vmax.xlane.f32.xlu0 %v1037
    %v1039 = vpop.xlane.xlu0 %1038
    %v1040 = vsel %vm283, %v1032, -inf
    %1041 = vmax.xlane.f32.xlu0 %v1040
    %v1042 = vpop.xlane.xlu0 %1041
    %v1043 = vsel %vm283, %v1033, -inf
    %1044 = vmax.xlane.f32.xlu0 %v1043
    %v1045 = vpop.xlane.xlu0 %1044
    %v1046 = vsub.f32 %v1030, %v1036
    %v1047 = vsub.f32 %v1031, %v1039
    %v1048 = vsub.f32 %v1032, %v1042
    %v1049 = vsub.f32 %v1033, %v1045
    %v1050 = vmul.f32 %v1046, 1.442695
    %v1051 = vpow.pop %v1050
    %v1052 = vmul.f32 %v1047, 1.442695
    %v1053 = vpow.pop %v1052
    %v1054 = vmul.f32 %v1048, 1.442695
    %v1055 = vpow.pop %v1054
    %v1056 = vmul.f32 %v1049, 1.442695
    %v1057 = vpow.pop %v1056
    %v1058 = vsel %vm283, %v1051, 0.0
    %1059 = vadd.xlane.f32.xlu0 %v1058
    %v1060 = vpop.xlane.xlu0 %1059
    %v1061 = vsel %vm283, %v1053, 0.0
    %1062 = vadd.xlane.f32.xlu0 %v1061
    %v1063 = vpop.xlane.xlu0 %1062
    %v1064 = vsel %vm283, %v1055, 0.0
    %1065 = vadd.xlane.f32.xlu0 %v1064
    %v1066 = vpop.xlane.xlu0 %1065
    %v1067 = vsel %vm283, %v1057, 0.0
    %1068 = vadd.xlane.f32.xlu0 %v1067
    %v1069 = vpop.xlane.xlu0 %1068
    %v1070 = vrcp.pop %v1060
    %v1071 = vmul.f32 %v1060, %v1070
    %v1072 = vsub.f32 1.0, %v1071
    %v1073 = vmul.f32 %v1070, %v1072
    %v1074 = vadd.f32 %v1070, %v1073
    %vm1075 = vweird.f32 %v1060
    %vm1076 = vweird.f32 %v1070
    %vm1077 = vmor %vm1075, %vm1076
    %v1078 = vsel %vm1077, %v1070, %v1074
    %v1079 = vand.u32 2147483647, %v1060
    %vm1080 = vcmp.eq.f32.partialorder %v1079, 8.507059e+37
    %v1081 = vand.u32 %v1060, 2147483648
    %v1082 = vor.u32 1.1754944e-38, %v1081
    %v1083 = vsel %vm1080, %v1082, %v1078
    %v1084 = vmul.f32 %v1051, %v1083
    %v1085 = vrcp.pop %v1063
    %v1086 = vmul.f32 %v1063, %v1085
    %v1087 = vsub.f32 1.0, %v1086
    %v1088 = vmul.f32 %v1085, %v1087
    %v1089 = vadd.f32 %v1085, %v1088
    %vm1090 = vweird.f32 %v1063
    %vm1091 = vweird.f32 %v1085
    %vm1092 = vmor %vm1090, %vm1091
    %v1093 = vsel %vm1092, %v1085, %v1089
    %v1094 = vand.u32 2147483647, %v1063
    %vm1095 = vcmp.eq.f32.partialorder %v1094, 8.507059e+37
    %v1096 = vand.u32 %v1063, 2147483648
    %v1097 = vor.u32 1.1754944e-38, %v1096
    %v1098 = vsel %vm1095, %v1097, %v1093
    %v1099 = vmul.f32 %v1053, %v1098
    %v1100 = vrcp.pop %v1066
    %v1101 = vmul.f32 %v1066, %v1100
    %v1102 = vsub.f32 1.0, %v1101
    %v1103 = vmul.f32 %v1100, %v1102
    %v1104 = vadd.f32 %v1100, %v1103
    %vm1105 = vweird.f32 %v1066
    %vm1106 = vweird.f32 %v1100
    %vm1107 = vmor %vm1105, %vm1106
    %v1108 = vsel %vm1107, %v1100, %v1104
    %v1109 = vand.u32 2147483647, %v1066
    %vm1110 = vcmp.eq.f32.partialorder %v1109, 8.507059e+37
    %v1111 = vand.u32 %v1066, 2147483648
    %v1112 = vor.u32 1.1754944e-38, %v1111
    %v1113 = vsel %vm1110, %v1112, %v1108
    %v1114 = vmul.f32 %v1055, %v1113
    %v1115 = vrcp.pop %v1069
    %v1116 = vmul.f32 %v1069, %v1115
    %v1117 = vsub.f32 1.0, %v1116
    %v1118 = vmul.f32 %v1115, %v1117
    %v1119 = vadd.f32 %v1115, %v1118
    %vm1120 = vweird.f32 %v1069
    %vm1121 = vweird.f32 %v1115
    %vm1122 = vmor %vm1120, %vm1121
    %v1123 = vsel %vm1122, %v1115, %v1119
    %v1124 = vand.u32 2147483647, %v1069
    %vm1125 = vcmp.eq.f32.partialorder %v1124, 8.507059e+37
    %v1126 = vand.u32 %v1069, 2147483648
    %v1127 = vor.u32 1.1754944e-38, %v1126
    %v1128 = vsel %vm1125, %v1127, %v1123
    %v1129 = vmul.f32 %v1057, %v1128
    %1130 = vrot.lane.b32.xlu0 %v435, 48
    %v1131 = vpop.permute.xlu0 %1130
    %1132 = vrot.lane.b32.xlu0 %v438, 48
    %v1133 = vpop.permute.xlu0 %1132
    %1134 = vrot.lane.b32.xlu0 %v441, 48
    %v1135 = vpop.permute.xlu0 %1134
    %1136 = vrot.lane.b32.xlu0 %v444, 48
    %v1137 = vpop.permute.xlu0 %1136
    %v1143 = vsel %vm283, %v1084, 0
    %v1146 = vsel %vm283, %v1099, 0
    %v1149 = vsel %vm283, %v1114, 0
    %v1152 = vsel %vm283, %v1129, 0
    %1154 = vmatpush.msra.mxu0 0.0
    %1155 = vmatpush.msra.mxu0 0.0
    %1156 = vmatpush.msra.mxu0 0.0
    %1157 = vmatpush.msra.mxu0 0.0
    %1158 = vmatpush.msra.mxu0 0.0
    %1159 = vmatpush.msra.mxu0 0.0
    %1160 = vmatpush.msra.mxu0 0.0
    %1161 = vmatpush.msra.mxu0 0.0
    %1162 = vmatpush.msra.mxu0 0.0
    %1163 = vmatpush.msra.mxu0 0.0
    %1164 = vmatpush.msra.mxu0 0.0
    %1165 = vmatpush.msra.mxu0 0.0
    %1166 = vmatpush.msra.mxu0 %v1137
    %1167 = vmatpush.msra.mxu0 %v1135
    %1168 = vmatpush.msra.mxu0 %v1133
    %1169 = vmatpush.msra.mxu0 %v1131
    %1170 = vmatmul.f32.gmra.mxu0 %v1143
    %v1171 = vpop.f32.mrf.mxu0
    %v1172 = vadd.f32 0.0, %v1171
    %1173 = vmatmul.f32.gmra.mxu0 %v1146
    %v1174 = vpop.f32.mrf.mxu0
    %v1175 = vadd.f32 0.0, %v1174
    %1176 = vmatmul.f32.gmra.mxu0 %v1149
    %v1177 = vpop.f32.mrf.mxu0
    %v1178 = vadd.f32 0.0, %v1177
    %1179 = vmatmul.f32.gmra.mxu0 %v1152
    %v1180 = vpop.f32.mrf.mxu0
    %v1181 = vadd.f32 0.0, %v1180
    %1182 = vdwg.mxu0
    %v1184 = vsel %vm462, %v1172, 0
    %v1187 = vsel %vm462, %v1175, 0
    %v1190 = vsel %vm462, %v1178, 0
    %v1193 = vsel %vm462, %v1181, 0
    %1195 = vmatpush.msra.mxu0 0.0
    %1196 = vmatpush.msra.mxu0 0.0
    %1197 = vmatpush.msra.mxu0 0.0
    %1198 = vmatpush.msra.mxu0 0.0
    %1199 = vmatpush.msra.mxu0 0.0
    %1200 = vmatpush.msra.mxu0 0.0
    %1201 = vmatpush.msra.mxu0 0.0
    %1202 = vmatpush.msra.mxu0 0.0
    %1203 = vmatpush.msra.mxu0 0.0
    %1204 = vmatpush.msra.mxu0 0.0
    %1205 = vmatpush.msra.mxu0 0.0
    %1206 = vmatpush.msra.mxu0 0.0
    %1207 = vmatpush.msra.mxu0 0.0
    %1208 = vmatpush.msra.mxu0 0.0
    %1209 = vmatpush.msra.mxu0 0.0
    %1210 = vmatpush.msra.mxu0 %v448
    %1211 = vmatmul.f32.gmra.mxu0 %v1184
    %v1212 = vpop.f32.mrf.mxu0
    %v1213 = vadd.f32 0.0, %v1212
    %1214 = vmatmul.f32.gmra.mxu0 %v1187
    %v1215 = vpop.f32.mrf.mxu0
    %v1216 = vadd.f32 0.0, %v1215
    %1217 = vmatmul.f32.gmra.mxu0 %v1190
    %v1218 = vpop.f32.mrf.mxu0
    %v1219 = vadd.f32 0.0, %v1218
    %1220 = vmatmul.f32.gmra.mxu0 %v1193
    %v1221 = vpop.f32.mrf.mxu0
    %v1222 = vadd.f32 0.0, %v1221
    %1223 = vdwg.mxu0
    %v1224 = vadd.f32 %v954, %v1213
    %v1225 = vadd.f32 %v957, %v1216
    %v1226 = vadd.f32 %v960, %v1219
    %v1227 = vadd.f32 %v963, %v1222
    %1228 = vrot.lane.b32.xlu0 %v435, 104
    %v1229 = vpop.permute.xlu0 %1228
    %1230 = vrot.lane.b32.xlu0 %v438, 104
    %v1231 = vpop.permute.xlu0 %1230
    %1232 = vrot.lane.b32.xlu0 %v441, 104
    %v1233 = vpop.permute.xlu0 %1232
    %1234 = vrot.lane.b32.xlu0 %v444, 104
    %v1235 = vpop.permute.xlu0 %1234
    %1236 = vrot.lane.b32.xlu0 %v435, 72
    %v1237 = vpop.permute.xlu0 %1236
    %1238 = vrot.lane.b32.xlu0 %v438, 72
    %v1239 = vpop.permute.xlu0 %1238
    %1240 = vrot.lane.b32.xlu0 %v441, 72
    %v1241 = vpop.permute.xlu0 %1240
    %1242 = vrot.lane.b32.xlu0 %v444, 72
    %v1243 = vpop.permute.xlu0 %1242
    %v1244 = vsel %vm462, %v1229, 0
    %v1246 = vsel %vm462, %v1231, 0
    %v1248 = vsel %vm462, %v1233, 0
    %v1250 = vsel %vm462, %v1235, 0
    %v1252 = vsel %vm462, %v1237, 0
    %v1254 = vsel %vm462, %v1239, 0
    %v1256 = vsel %vm462, %v1241, 0
    %v1258 = vsel %vm462, %v1243, 0
    %1260 = vmatpush.xpose.msra.mxu0 0.0
    %1261 = vmatpush.xpose.msra.mxu0 0.0
    %1262 = vmatpush.xpose.msra.mxu0 0.0
    %1263 = vmatpush.xpose.msra.mxu0 0.0
    %1264 = vmatpush.xpose.msra.mxu0 0.0
    %1265 = vmatpush.xpose.msra.mxu0 0.0
    %1266 = vmatpush.xpose.msra.mxu0 0.0
    %1267 = vmatpush.xpose.msra.mxu0 0.0
    %1268 = vmatpush.xpose.msra.mxu0 0.0
    %1269 = vmatpush.xpose.msra.mxu0 0.0
    %1270 = vmatpush.xpose.msra.mxu0 0.0
    %1271 = vmatpush.xpose.msra.mxu0 0.0
    %1272 = vmatpush.xpose.msra.mxu0 %v1258
    %1273 = vmatpush.xpose.msra.mxu0 %v1256
    %1274 = vmatpush.xpose.msra.mxu0 %v1254
    %1275 = vmatpush.xpose.msra.mxu0 %v1252
    %1276 = vmatmul.f32.gmra.mxu0 %v1244
    %v1277 = vpop.f32.mrf.mxu0
    %v1278 = vadd.f32 0.0, %v1277
    %1279 = vmatmul.f32.gmra.mxu0 %v1246
    %v1280 = vpop.f32.mrf.mxu0
    %v1281 = vadd.f32 0.0, %v1280
    %1282 = vmatmul.f32.gmra.mxu0 %v1248
    %v1283 = vpop.f32.mrf.mxu0
    %v1284 = vadd.f32 0.0, %v1283
    %1285 = vmatmul.f32.gmra.mxu0 %v1250
    %v1286 = vpop.f32.mrf.mxu0
    %v1287 = vadd.f32 0.0, %v1286
    %1288 = vdwg.mxu0
    %v1289 = vmul.f32 %v1278, 0.35355338
    %v1290 = vmul.f32 %v1281, 0.35355338
    %v1291 = vmul.f32 %v1284, 0.35355338
    %v1292 = vmul.f32 %v1287, 0.35355338
    %v1293 = vadd.f32 %v1289, %v393
    %v1294 = vadd.f32 %v1290, %v394
    %v1295 = vadd.f32 %v1291, %v395
    %v1296 = vadd.f32 %v1292, %v396
    %v1297 = vsel %vm283, %v1293, -inf
    %1298 = vmax.xlane.f32.xlu0 %v1297
    %v1299 = vpop.xlane.xlu0 %1298
    %v1300 = vsel %vm283, %v1294, -inf
    %1301 = vmax.xlane.f32.xlu0 %v1300
    %v1302 = vpop.xlane.xlu0 %1301
    %v1303 = vsel %vm283, %v1295, -inf
    %1304 = vmax.xlane.f32.xlu0 %v1303
    %v1305 = vpop.xlane.xlu0 %1304
    %v1306 = vsel %vm283, %v1296, -inf
    %1307 = vmax.xlane.f32.xlu0 %v1306
    %v1308 = vpop.xlane.xlu0 %1307
    %v1309 = vsub.f32 %v1293, %v1299
    %v1310 = vsub.f32 %v1294, %v1302
    %v1311 = vsub.f32 %v1295, %v1305
    %v1312 = vsub.f32 %v1296, %v1308
    %v1313 = vmul.f32 %v1309, 1.442695
    %v1314 = vpow.pop %v1313
    %v1315 = vmul.f32 %v1310, 1.442695
    %v1316 = vpow.pop %v1315
    %v1317 = vmul.f32 %v1311, 1.442695
    %v1318 = vpow.pop %v1317
    %v1319 = vmul.f32 %v1312, 1.442695
    %v1320 = vpow.pop %v1319
    %v1321 = vsel %vm283, %v1314, 0.0
    %1322 = vadd.xlane.f32.xlu0 %v1321
    %v1323 = vpop.xlane.xlu0 %1322
    %v1324 = vsel %vm283, %v1316, 0.0
    %1325 = vadd.xlane.f32.xlu0 %v1324
    %v1326 = vpop.xlane.xlu0 %1325
    %v1327 = vsel %vm283, %v1318, 0.0
    %1328 = vadd.xlane.f32.xlu0 %v1327
    %v1329 = vpop.xlane.xlu0 %1328
    %v1330 = vsel %vm283, %v1320, 0.0
    %1331 = vadd.xlane.f32.xlu0 %v1330
    %v1332 = vpop.xlane.xlu0 %1331
    %v1333 = vrcp.pop %v1323
    %v1334 = vmul.f32 %v1323, %v1333
    %v1335 = vsub.f32 1.0, %v1334
    %v1336 = vmul.f32 %v1333, %v1335
    %v1337 = vadd.f32 %v1333, %v1336
    %vm1338 = vweird.f32 %v1323
    %vm1339 = vweird.f32 %v1333
    %vm1340 = vmor %vm1338, %vm1339
    %v1341 = vsel %vm1340, %v1333, %v1337
    %v1342 = vand.u32 2147483647, %v1323
    %vm1343 = vcmp.eq.f32.partialorder %v1342, 8.507059e+37
    %v1344 = vand.u32 %v1323, 2147483648
    %v1345 = vor.u32 1.1754944e-38, %v1344
    %v1346 = vsel %vm1343, %v1345, %v1341
    %v1347 = vmul.f32 %v1314, %v1346
    %v1348 = vrcp.pop %v1326
    %v1349 = vmul.f32 %v1326, %v1348
    %v1350 = vsub.f32 1.0, %v1349
    %v1351 = vmul.f32 %v1348, %v1350
    %v1352 = vadd.f32 %v1348, %v1351
    %vm1353 = vweird.f32 %v1326
    %vm1354 = vweird.f32 %v1348
    %vm1355 = vmor %vm1353, %vm1354
    %v1356 = vsel %vm1355, %v1348, %v1352
    %v1357 = vand.u32 2147483647, %v1326
    %vm1358 = vcmp.eq.f32.partialorder %v1357, 8.507059e+37
    %v1359 = vand.u32 %v1326, 2147483648
    %v1360 = vor.u32 1.1754944e-38, %v1359
    %v1361 = vsel %vm1358, %v1360, %v1356
    %v1362 = vmul.f32 %v1316, %v1361
    %v1363 = vrcp.pop %v1329
    %v1364 = vmul.f32 %v1329, %v1363
    %v1365 = vsub.f32 1.0, %v1364
    %v1366 = vmul.f32 %v1363, %v1365
    %v1367 = vadd.f32 %v1363, %v1366
    %vm1368 = vweird.f32 %v1329
    %vm1369 = vweird.f32 %v1363
    %vm1370 = vmor %vm1368, %vm1369
    %v1371 = vsel %vm1370, %v1363, %v1367
    %v1372 = vand.u32 2147483647, %v1329
    %vm1373 = vcmp.eq.f32.partialorder %v1372, 8.507059e+37
    %v1374 = vand.u32 %v1329, 2147483648
    %v1375 = vor.u32 1.1754944e-38, %v1374
    %v1376 = vsel %vm1373, %v1375, %v1371
    %v1377 = vmul.f32 %v1318, %v1376
    %v1378 = vrcp.pop %v1332
    %v1379 = vmul.f32 %v1332, %v1378
    %v1380 = vsub.f32 1.0, %v1379
    %v1381 = vmul.f32 %v1378, %v1380
    %v1382 = vadd.f32 %v1378, %v1381
    %vm1383 = vweird.f32 %v1332
    %vm1384 = vweird.f32 %v1378
    %vm1385 = vmor %vm1383, %vm1384
    %v1386 = vsel %vm1385, %v1378, %v1382
    %v1387 = vand.u32 2147483647, %v1332
    %vm1388 = vcmp.eq.f32.partialorder %v1387, 8.507059e+37
    %v1389 = vand.u32 %v1332, 2147483648
    %v1390 = vor.u32 1.1754944e-38, %v1389
    %v1391 = vsel %vm1388, %v1390, %v1386
    %v1392 = vmul.f32 %v1320, %v1391
    %1393 = vrot.lane.b32.xlu0 %v435, 40
    %v1394 = vpop.permute.xlu0 %1393
    %1395 = vrot.lane.b32.xlu0 %v438, 40
    %v1396 = vpop.permute.xlu0 %1395
    %1397 = vrot.lane.b32.xlu0 %v441, 40
    %v1398 = vpop.permute.xlu0 %1397
    %1399 = vrot.lane.b32.xlu0 %v444, 40
    %v1400 = vpop.permute.xlu0 %1399
    %v1406 = vsel %vm283, %v1347, 0
    %v1409 = vsel %vm283, %v1362, 0
    %v1412 = vsel %vm283, %v1377, 0
    %v1415 = vsel %vm283, %v1392, 0
    %1417 = vmatpush.msra.mxu0 0.0
    %1418 = vmatpush.msra.mxu0 0.0
    %1419 = vmatpush.msra.mxu0 0.0
    %1420 = vmatpush.msra.mxu0 0.0
    %1421 = vmatpush.msra.mxu0 0.0
    %1422 = vmatpush.msra.mxu0 0.0
    %1423 = vmatpush.msra.mxu0 0.0
    %1424 = vmatpush.msra.mxu0 0.0
    %1425 = vmatpush.msra.mxu0 0.0
    %1426 = vmatpush.msra.mxu0 0.0
    %1427 = vmatpush.msra.mxu0 0.0
    %1428 = vmatpush.msra.mxu0 0.0
    %1429 = vmatpush.msra.mxu0 %v1400
    %1430 = vmatpush.msra.mxu0 %v1398
    %1431 = vmatpush.msra.mxu0 %v1396
    %1432 = vmatpush.msra.mxu0 %v1394
    %1433 = vmatmul.f32.gmra.mxu0 %v1406
    %v1434 = vpop.f32.mrf.mxu0
    %v1435 = vadd.f32 0.0, %v1434
    %1436 = vmatmul.f32.gmra.mxu0 %v1409
    %v1437 = vpop.f32.mrf.mxu0
    %v1438 = vadd.f32 0.0, %v1437
    %1439 = vmatmul.f32.gmra.mxu0 %v1412
    %v1440 = vpop.f32.mrf.mxu0
    %v1441 = vadd.f32 0.0, %v1440
    %1442 = vmatmul.f32.gmra.mxu0 %v1415
    %v1443 = vpop.f32.mrf.mxu0
    %v1444 = vadd.f32 0.0, %v1443
    %1445 = vdwg.mxu0
    %v1447 = vsel %vm462, %v1435, 0
    %v1450 = vsel %vm462, %v1438, 0
    %v1453 = vsel %vm462, %v1441, 0
    %v1456 = vsel %vm462, %v1444, 0
    %1458 = vmatpush.msra.mxu0 0.0
    %1459 = vmatpush.msra.mxu0 0.0
    %1460 = vmatpush.msra.mxu0 0.0
    %1461 = vmatpush.msra.mxu0 0.0
    %1462 = vmatpush.msra.mxu0 0.0
    %1463 = vmatpush.msra.mxu0 0.0
    %1464 = vmatpush.msra.mxu0 0.0
    %1465 = vmatpush.msra.mxu0 0.0
    %1466 = vmatpush.msra.mxu0 0.0
    %1467 = vmatpush.msra.mxu0 0.0
    %1468 = vmatpush.msra.mxu0 0.0
    %1469 = vmatpush.msra.mxu0 0.0
    %1470 = vmatpush.msra.mxu0 0.0
    %1471 = vmatpush.msra.mxu0 0.0
    %1472 = vmatpush.msra.mxu0 0.0
    %1473 = vmatpush.msra.mxu0 %v449
    %1474 = vmatmul.f32.gmra.mxu0 %v1447
    %v1475 = vpop.f32.mrf.mxu0
    %v1476 = vadd.f32 0.0, %v1475
    %1477 = vmatmul.f32.gmra.mxu0 %v1450
    %v1478 = vpop.f32.mrf.mxu0
    %v1479 = vadd.f32 0.0, %v1478
    %1480 = vmatmul.f32.gmra.mxu0 %v1453
    %v1481 = vpop.f32.mrf.mxu0
    %v1482 = vadd.f32 0.0, %v1481
    %1483 = vmatmul.f32.gmra.mxu0 %v1456
    %v1484 = vpop.f32.mrf.mxu0
    %v1485 = vadd.f32 0.0, %v1484
    %1486 = vdwg.mxu0
    %v1487 = vadd.f32 %v1224, %v1476
    %v1488 = vadd.f32 %v1225, %v1479
    %v1489 = vadd.f32 %v1226, %v1482
    %v1490 = vadd.f32 %v1227, %v1485
    %v1491 = vadd.f32 %v389, %v1487
    %v1492 = vadd.f32 %v390, %v1488
    %v1493 = vadd.f32 %v391, %v1489
    %v1494 = vadd.f32 %v392, %v1490
    %v1495 = vld [vmem:[%s23] sm:$0x1]
    %v1497 = vperm.slane %v1495, 0
    %v1499 = vadd.f32 %v1491, %v1497
    %v1500 = vadd.f32 %v1492, %v1497
    %v1501 = vadd.f32 %v1493, %v1497
    %v1502 = vadd.f32 %v1494, %v1497
    %v1503 = vld [vmem:[%s25] sm:$0x1]
    %v1504 = vld [vmem:[%s27] sm:$0x1]
    %v1505 = vsel %vm283, %v1499, 0.0
    %1506 = vadd.xlane.f32.xlu0 %v1505
    %v1507 = vpop.xlane.xlu0 %1506
    %v1508 = vsel %vm283, %v1500, 0.0
    %1509 = vadd.xlane.f32.xlu0 %v1508
    %v1510 = vpop.xlane.xlu0 %1509
    %v1511 = vsel %vm283, %v1501, 0.0
    %1512 = vadd.xlane.f32.xlu0 %v1511
    %v1513 = vpop.xlane.xlu0 %1512
    %v1514 = vsel %vm283, %v1502, 0.0
    %1515 = vadd.xlane.f32.xlu0 %v1514
    %v1516 = vpop.xlane.xlu0 %1515
    %v1517 = vmul.f32 %v1507, %v302
    %v1518 = vmul.f32 %v1510, %v302
    %v1519 = vmul.f32 %v1513, %v302
    %v1520 = vmul.f32 %v1516, %v302
    %v1521 = vsub.f32 %v1499, %v1517
    %v1522 = vsub.f32 %v1500, %v1518
    %v1523 = vsub.f32 %v1501, %v1519
    %v1524 = vsub.f32 %v1502, %v1520
    %v1525 = vmul.f32 %v1521, %v1521
    %v1526 = vmul.f32 %v1522, %v1522
    %v1527 = vmul.f32 %v1523, %v1523
    %v1528 = vmul.f32 %v1524, %v1524
    %v1529 = vsel %vm283, %v1525, 0.0
    %1530 = vadd.xlane.f32.xlu0 %v1529
    %v1531 = vpop.xlane.xlu0 %1530
    %v1532 = vsel %vm283, %v1526, 0.0
    %1533 = vadd.xlane.f32.xlu0 %v1532
    %v1534 = vpop.xlane.xlu0 %1533
    %v1535 = vsel %vm283, %v1527, 0.0
    %1536 = vadd.xlane.f32.xlu0 %v1535
    %v1537 = vpop.xlane.xlu0 %1536
    %v1538 = vsel %vm283, %v1528, 0.0
    %1539 = vadd.xlane.f32.xlu0 %v1538
    %v1540 = vpop.xlane.xlu0 %1539
    %v1541 = vmul.f32 %v1531, %v302
    %v1542 = vmul.f32 %v1534, %v302
    %v1543 = vmul.f32 %v1537, %v302
    %v1544 = vmul.f32 %v1540, %v302
    %v1545 = vadd.f32 %v1541, 1e-12
    %v1546 = vadd.f32 %v1542, 1e-12
    %v1547 = vadd.f32 %v1543, 1e-12
    %v1548 = vadd.f32 %v1544, 1e-12
    %v1549 = vrsqrt.pop %v1545
    %v1550 = vmul.f32 %v1549, %v1545
    %v1551 = vmul.f32 %v1550, %v1549
    %v1552 = vmul.f32 0.5, %v1551
    %v1553 = vsub.f32 1.5, %v1552
    %v1554 = vmul.f32 %v1549, %v1553
    %vm1555 = vweird.f32 %v1545
    %vm1556 = vweird.f32 %v1549
    %vm1557 = vmor %vm1555, %vm1556
    %v1558 = vsel %vm1557, %v1549, %v1554
    %v1559 = vrsqrt.pop %v1546
    %v1560 = vmul.f32 %v1559, %v1546
    %v1561 = vmul.f32 %v1560, %v1559
    %v1562 = vmul.f32 0.5, %v1561
    %v1563 = vsub.f32 1.5, %v1562
    %v1564 = vmul.f32 %v1559, %v1563
    %vm1565 = vweird.f32 %v1546
    %vm1566 = vweird.f32 %v1559
    %vm1567 = vmor %vm1565, %vm1566
    %v1568 = vsel %vm1567, %v1559, %v1564
    %v1569 = vrsqrt.pop %v1547
    %v1570 = vmul.f32 %v1569, %v1547
    %v1571 = vmul.f32 %v1570, %v1569
    %v1572 = vmul.f32 0.5, %v1571
    %v1573 = vsub.f32 1.5, %v1572
    %v1574 = vmul.f32 %v1569, %v1573
    %vm1575 = vweird.f32 %v1547
    %vm1576 = vweird.f32 %v1569
    %vm1577 = vmor %vm1575, %vm1576
    %v1578 = vsel %vm1577, %v1569, %v1574
    %v1579 = vrsqrt.pop %v1548
    %v1580 = vmul.f32 %v1579, %v1548
    %v1581 = vmul.f32 %v1580, %v1579
    %v1582 = vmul.f32 0.5, %v1581
    %v1583 = vsub.f32 1.5, %v1582
    %v1584 = vmul.f32 %v1579, %v1583
    %vm1585 = vweird.f32 %v1548
    %vm1586 = vweird.f32 %v1579
    %vm1587 = vmor %vm1585, %vm1586
    %v1588 = vsel %vm1587, %v1579, %v1584
    %v1589 = vmul.f32 %v1521, %v1558
    %v1590 = vmul.f32 %v1522, %v1568
    %v1591 = vmul.f32 %v1523, %v1578
    %v1592 = vmul.f32 %v1524, %v1588
    %v1594 = vperm.slane %v1503, 0
    %v1596 = vmul.f32 %v1589, %v1594
    %v1597 = vmul.f32 %v1590, %v1594
    %v1598 = vmul.f32 %v1591, %v1594
    %v1599 = vmul.f32 %v1592, %v1594
    %v1601 = vperm.slane %v1504, 0
    %v1603 = vadd.f32 %v1596, %v1601
    %v1604 = vadd.f32 %v1597, %v1601
    %v1605 = vadd.f32 %v1598, %v1601
    %v1606 = vadd.f32 %v1599, %v1601
    %v1607 = vld [vmem:[%s29] sm:$0xff]
    %v1608 = vld [vmem:[%s29 + $0x8] sm:$0xff]
    %v1609 = vld [vmem:[%s29 + $0x10] sm:$0xff]
    %v1610 = vld [vmem:[%s29 + $0x18] sm:$0xff]
    %v1611 = vld [vmem:[%s31] sm:$0x1]
    %v1613 = vperm.slane %v1611, 0
    %v1616 = vsel %vm283, %v1603, 0
    %v1619 = vsel %vm283, %v1604, 0
    %v1622 = vsel %vm283, %v1605, 0
    %v1625 = vsel %vm283, %v1606, 0
    %1627 = vmatpush.msra.mxu0 0.0
    %1628 = vmatpush.msra.mxu0 0.0
    %1629 = vmatpush.msra.mxu0 0.0
    %1630 = vmatpush.msra.mxu0 0.0
    %1631 = vmatpush.msra.mxu0 0.0
    %1632 = vmatpush.msra.mxu0 0.0
    %1633 = vmatpush.msra.mxu0 0.0
    %1634 = vmatpush.msra.mxu0 0.0
    %1635 = vmatpush.msra.mxu0 0.0
    %1636 = vmatpush.msra.mxu0 0.0
    %1637 = vmatpush.msra.mxu0 0.0
    %1638 = vmatpush.msra.mxu0 0.0
    %1639 = vmatpush.msra.mxu0 %v1610
    %1640 = vmatpush.msra.mxu0 %v1609
    %1641 = vmatpush.msra.mxu0 %v1608
    %1642 = vmatpush.msra.mxu0 %v1607
    %1643 = vmatmul.f32.gmra.mxu0 %v1616
    %v1644 = vpop.f32.mrf.mxu0
    %v1645 = vadd.f32 %v1613, %v1644
    %1646 = vmatmul.f32.gmra.mxu0 %v1619
    %v1647 = vpop.f32.mrf.mxu0
    %v1648 = vadd.f32 %v1613, %v1647
    %1649 = vmatmul.f32.gmra.mxu0 %v1622
    %v1650 = vpop.f32.mrf.mxu0
    %v1651 = vadd.f32 %v1613, %v1650
    %1652 = vmatmul.f32.gmra.mxu0 %v1625
    %v1653 = vpop.f32.mrf.mxu0
    %v1654 = vadd.f32 %v1613, %v1653
    %1655 = vdwg.mxu0
    %v1656 = vmul.f32 %v1645, %v1645
    %v1657 = vmul.f32 %v1648, %v1648
    %v1658 = vmul.f32 %v1651, %v1651
    %v1659 = vmul.f32 %v1654, %v1654
    %v1660 = vmul.f32 %v1645, %v1656
    %v1661 = vmul.f32 %v1648, %v1657
    %v1662 = vmul.f32 %v1651, %v1658
    %v1663 = vmul.f32 %v1654, %v1659
    %v1664 = vmul.f32 %v1660, 0.044715
    %v1665 = vmul.f32 %v1661, 0.044715
    %v1666 = vmul.f32 %v1662, 0.044715
    %v1667 = vmul.f32 %v1663, 0.044715
    %v1668 = vadd.f32 %v1645, %v1664
    %v1669 = vadd.f32 %v1648, %v1665
    %v1670 = vadd.f32 %v1651, %v1666
    %v1671 = vadd.f32 %v1654, %v1667
    %v1672 = vmul.f32 %v1668, 0.7978846
    %v1673 = vmul.f32 %v1669, 0.7978846
    %v1674 = vmul.f32 %v1670, 0.7978846
    %v1675 = vmul.f32 %v1671, 0.7978846
    %v1676 = vtanh.pop %v1672
    %v1677 = vtanh.pop %v1673
    %v1678 = vtanh.pop %v1674
    %v1679 = vtanh.pop %v1675
    %v1680 = vadd.f32 %v1676, 1.0
    %v1681 = vadd.f32 %v1677, 1.0
    %v1682 = vadd.f32 %v1678, 1.0
    %v1683 = vadd.f32 %v1679, 1.0
    %v1684 = vmul.f32 %v1680, 0.5
    %v1685 = vmul.f32 %v1681, 0.5
    %v1686 = vmul.f32 %v1682, 0.5
    %v1687 = vmul.f32 %v1683, 0.5
    %v1688 = vmul.f32 %v1645, %v1684
    %v1689 = vmul.f32 %v1648, %v1685
    %v1690 = vmul.f32 %v1651, %v1686
    %v1691 = vmul.f32 %v1654, %v1687
    %v1692 = vld [vmem:[%s33] sm:$0xff]
    %v1693 = vld [vmem:[%s33 + $0x8] sm:$0xff]
    %v1694 = vld [vmem:[%s33 + $0x10] sm:$0xff]
    %v1695 = vld [vmem:[%s33 + $0x18] sm:$0xff]
    %v1696 = vld [vmem:[%s33 + $0x20] sm:$0xff]
    %v1697 = vld [vmem:[%s33 + $0x28] sm:$0xff]
    %v1698 = vld [vmem:[%s33 + $0x30] sm:$0xff]
    %v1699 = vld [vmem:[%s33 + $0x38] sm:$0xff]
    %v1700 = vld [vmem:[%s35] sm:$0x1]
    %v1702 = vperm.slane %v1700, 0
    %v1705 = vsel %vm231, %v1688, 0
    %v1708 = vsel %vm231, %v1689, 0
    %v1711 = vsel %vm231, %v1690, 0
    %v1714 = vsel %vm231, %v1691, 0
    %1716 = vmatpush.msra.mxu0 0.0
    %1717 = vmatpush.msra.mxu0 0.0
    %1718 = vmatpush.msra.mxu0 0.0
    %1719 = vmatpush.msra.mxu0 0.0
    %1720 = vmatpush.msra.mxu0 0.0
    %1721 = vmatpush.msra.mxu0 0.0
    %1722 = vmatpush.msra.mxu0 0.0
    %1723 = vmatpush.msra.mxu0 0.0
    %1724 = vmatpush.msra.mxu0 %v1699
    %1725 = vmatpush.msra.mxu0 %v1698
    %1726 = vmatpush.msra.mxu0 %v1697
    %1727 = vmatpush.msra.mxu0 %v1696
    %1728 = vmatpush.msra.mxu0 %v1695
    %1729 = vmatpush.msra.mxu0 %v1694
    %1730 = vmatpush.msra.mxu0 %v1693
    %1731 = vmatpush.msra.mxu0 %v1692
    %1732 = vmatmul.f32.gmra.mxu0 %v1705
    %v1733 = vpop.f32.mrf.mxu0
    %v1734 = vadd.f32 %v1702, %v1733
    %1735 = vmatmul.f32.gmra.mxu0 %v1708
    %v1736 = vpop.f32.mrf.mxu0
    %v1737 = vadd.f32 %v1702, %v1736
    %1738 = vmatmul.f32.gmra.mxu0 %v1711
    %v1739 = vpop.f32.mrf.mxu0
    %v1740 = vadd.f32 %v1702, %v1739
    %1741 = vmatmul.f32.gmra.mxu0 %v1714
    %v1742 = vpop.f32.mrf.mxu0
    %v1743 = vadd.f32 %v1702, %v1742
    %1744 = vdwg.mxu0
    %v1745 = vadd.f32 %v1603, %v1734
    %v1746 = vadd.f32 %v1604, %v1737
    %v1747 = vadd.f32 %v1605, %v1740
    %v1748 = vadd.f32 %v1606, %v1743
    %v1749 = vld [vmem:[%s37] sm:$0x1]
    %v1750 = vld [vmem:[%s39] sm:$0x1]
    %v1751 = vsel %vm283, %v1745, 0.0
    %1752 = vadd.xlane.f32.xlu0 %v1751
    %v1753 = vpop.xlane.xlu0 %1752
    %v1754 = vsel %vm283, %v1746, 0.0
    %1755 = vadd.xlane.f32.xlu0 %v1754
    %v1756 = vpop.xlane.xlu0 %1755
    %v1757 = vsel %vm283, %v1747, 0.0
    %1758 = vadd.xlane.f32.xlu0 %v1757
    %v1759 = vpop.xlane.xlu0 %1758
    %v1760 = vsel %vm283, %v1748, 0.0
    %1761 = vadd.xlane.f32.xlu0 %v1760
    %v1762 = vpop.xlane.xlu0 %1761
    %v1763 = vmul.f32 %v1753, %v302
    %v1764 = vmul.f32 %v1756, %v302
    %v1765 = vmul.f32 %v1759, %v302
    %v1766 = vmul.f32 %v1762, %v302
    %v1767 = vsub.f32 %v1745, %v1763
    %v1768 = vsub.f32 %v1746, %v1764
    %v1769 = vsub.f32 %v1747, %v1765
    %v1770 = vsub.f32 %v1748, %v1766
    %v1771 = vmul.f32 %v1767, %v1767
    %v1772 = vmul.f32 %v1768, %v1768
    %v1773 = vmul.f32 %v1769, %v1769
    %v1774 = vmul.f32 %v1770, %v1770
    %v1775 = vsel %vm283, %v1771, 0.0
    %1776 = vadd.xlane.f32.xlu0 %v1775
    %v1777 = vpop.xlane.xlu0 %1776
    %v1778 = vsel %vm283, %v1772, 0.0
    %1779 = vadd.xlane.f32.xlu0 %v1778
    %v1780 = vpop.xlane.xlu0 %1779
    %v1781 = vsel %vm283, %v1773, 0.0
    %1782 = vadd.xlane.f32.xlu0 %v1781
    %v1783 = vpop.xlane.xlu0 %1782
    %v1784 = vsel %vm283, %v1774, 0.0
    %1785 = vadd.xlane.f32.xlu0 %v1784
    %v1786 = vpop.xlane.xlu0 %1785
    %v1787 = vmul.f32 %v1777, %v302
    %v1788 = vmul.f32 %v1780, %v302
    %v1789 = vmul.f32 %v1783, %v302
    %v1790 = vmul.f32 %v1786, %v302
    %v1791 = vadd.f32 %v1787, 1e-12
    %v1792 = vadd.f32 %v1788, 1e-12
    %v1793 = vadd.f32 %v1789, 1e-12
    %v1794 = vadd.f32 %v1790, 1e-12
    %v1795 = vrsqrt.pop %v1791
    %v1796 = vmul.f32 %v1795, %v1791
    %v1797 = vmul.f32 %v1796, %v1795
    %v1798 = vmul.f32 0.5, %v1797
    %v1799 = vsub.f32 1.5, %v1798
    %v1800 = vmul.f32 %v1795, %v1799
    %vm1801 = vweird.f32 %v1791
    %vm1802 = vweird.f32 %v1795
    %vm1803 = vmor %vm1801, %vm1802
    %v1804 = vsel %vm1803, %v1795, %v1800
    %v1805 = vrsqrt.pop %v1792
    %v1806 = vmul.f32 %v1805, %v1792
    %v1807 = vmul.f32 %v1806, %v1805
    %v1808 = vmul.f32 0.5, %v1807
    %v1809 = vsub.f32 1.5, %v1808
    %v1810 = vmul.f32 %v1805, %v1809
    %vm1811 = vweird.f32 %v1792
    %vm1812 = vweird.f32 %v1805
    %vm1813 = vmor %vm1811, %vm1812
    %v1814 = vsel %vm1813, %v1805, %v1810
    %v1815 = vrsqrt.pop %v1793
    %v1816 = vmul.f32 %v1815, %v1793
    %v1817 = vmul.f32 %v1816, %v1815
    %v1818 = vmul.f32 0.5, %v1817
    %v1819 = vsub.f32 1.5, %v1818
    %v1820 = vmul.f32 %v1815, %v1819
    %vm1821 = vweird.f32 %v1793
    %vm1822 = vweird.f32 %v1815
    %vm1823 = vmor %vm1821, %vm1822
    %v1824 = vsel %vm1823, %v1815, %v1820
    %v1825 = vrsqrt.pop %v1794
    %v1826 = vmul.f32 %v1825, %v1794
    %v1827 = vmul.f32 %v1826, %v1825
    %v1828 = vmul.f32 0.5, %v1827
    %v1829 = vsub.f32 1.5, %v1828
    %v1830 = vmul.f32 %v1825, %v1829
    %vm1831 = vweird.f32 %v1794
    %vm1832 = vweird.f32 %v1825
    %vm1833 = vmor %vm1831, %vm1832
    %v1834 = vsel %vm1833, %v1825, %v1830
    %v1835 = vmul.f32 %v1767, %v1804
    %v1836 = vmul.f32 %v1768, %v1814
    %v1837 = vmul.f32 %v1769, %v1824
    %v1838 = vmul.f32 %v1770, %v1834
    %v1840 = vperm.slane %v1749, 0
    %v1842 = vmul.f32 %v1835, %v1840
    %v1843 = vmul.f32 %v1836, %v1840
    %v1844 = vmul.f32 %v1837, %v1840
    %v1845 = vmul.f32 %v1838, %v1840
    %v1847 = vperm.slane %v1750, 0
    %v1849 = vadd.f32 %v1842, %v1847
    %v1850 = vadd.f32 %v1843, %v1847
    %v1851 = vadd.f32 %v1844, %v1847
    %v1852 = vadd.f32 %v1845, %v1847
    %s1853 = scalar_lea.vmem %s17, 32
    %v1854 = vld [vmem:[%s1853] sm:$0xff]
    %v1855 = vld [vmem:[%s1853 + $0x8] sm:$0xff]
    %v1856 = vld [vmem:[%s1853 + $0x10] sm:$0xff]
    %v1857 = vld [vmem:[%s1853 + $0x18] sm:$0xff]
    %s1858 = scalar_lea.vmem %s19, 1
    %v1859 = vld [vmem:[%s1858] sm:$0x1]
    %v1861 = vperm.slane %v1859, 0
    %v1864 = vsel %vm283, %v1849, 0
    %v1867 = vsel %vm283, %v1850, 0
    %v1870 = vsel %vm283, %v1851, 0
    %v1873 = vsel %vm283, %v1852, 0
    %1875 = vmatpush.msra.mxu0 0.0
    %1876 = vmatpush.msra.mxu0 0.0
    %1877 = vmatpush.msra.mxu0 0.0
    %1878 = vmatpush.msra.mxu0 0.0
    %1879 = vmatpush.msra.mxu0 0.0
    %1880 = vmatpush.msra.mxu0 0.0
    %1881 = vmatpush.msra.mxu0 0.0
    %1882 = vmatpush.msra.mxu0 0.0
    %1883 = vmatpush.msra.mxu0 0.0
    %1884 = vmatpush.msra.mxu0 0.0
    %1885 = vmatpush.msra.mxu0 0.0
    %1886 = vmatpush.msra.mxu0 0.0
    %1887 = vmatpush.msra.mxu0 %v1857
    %1888 = vmatpush.msra.mxu0 %v1856
    %1889 = vmatpush.msra.mxu0 %v1855
    %1890 = vmatpush.msra.mxu0 %v1854
    %1891 = vmatmul.f32.gmra.mxu0 %v1864
    %v1892 = vpop.f32.mrf.mxu0
    %v1893 = vadd.f32 %v1861, %v1892
    %1894 = vmatmul.f32.gmra.mxu0 %v1867
    %v1895 = vpop.f32.mrf.mxu0
    %v1896 = vadd.f32 %v1861, %v1895
    %1897 = vmatmul.f32.gmra.mxu0 %v1870
    %v1898 = vpop.f32.mrf.mxu0
    %v1899 = vadd.f32 %v1861, %v1898
    %1900 = vmatmul.f32.gmra.mxu0 %v1873
    %v1901 = vpop.f32.mrf.mxu0
    %v1902 = vadd.f32 %v1861, %v1901
    %1903 = vdwg.mxu0
    %s1904 = scalar_lea.vmem %s21, 32
    %v1905 = vld [vmem:[%s1904] sm:$0xff]
    %v1906 = vld [vmem:[%s1904 + $0x8] sm:$0xff]
    %v1907 = vld [vmem:[%s1904 + $0x10] sm:$0xff]
    %v1908 = vld [vmem:[%s1904 + $0x18] sm:$0xff]
    %1913 = vrot.lane.b32.xlu0 %v1893, 96
    %v1914 = vpop.permute.xlu0 %1913
    %1915 = vrot.lane.b32.xlu0 %v1896, 96
    %v1916 = vpop.permute.xlu0 %1915
    %1917 = vrot.lane.b32.xlu0 %v1899, 96
    %v1918 = vpop.permute.xlu0 %1917
    %1919 = vrot.lane.b32.xlu0 %v1902, 96
    %v1920 = vpop.permute.xlu0 %1919
    %v1921 = vsel %vm462, %v1893, 0
    %v1923 = vsel %vm462, %v1896, 0
    %v1925 = vsel %vm462, %v1899, 0
    %v1927 = vsel %vm462, %v1902, 0
    %v1929 = vsel %vm462, %v1914, 0
    %v1931 = vsel %vm462, %v1916, 0
    %v1933 = vsel %vm462, %v1918, 0
    %v1935 = vsel %vm462, %v1920, 0
    %1937 = vmatpush.xpose.msra.mxu0 0.0
    %1938 = vmatpush.xpose.msra.mxu0 0.0
    %1939 = vmatpush.xpose.msra.mxu0 0.0
    %1940 = vmatpush.xpose.msra.mxu0 0.0
    %1941 = vmatpush.xpose.msra.mxu0 0.0
    %1942 = vmatpush.xpose.msra.mxu0 0.0
    %1943 = vmatpush.xpose.msra.mxu0 0.0
    %1944 = vmatpush.xpose.msra.mxu0 0.0
    %1945 = vmatpush.xpose.msra.mxu0 0.0
    %1946 = vmatpush.xpose.msra.mxu0 0.0
    %1947 = vmatpush.xpose.msra.mxu0 0.0
    %1948 = vmatpush.xpose.msra.mxu0 0.0
    %1949 = vmatpush.xpose.msra.mxu0 %v1935
    %1950 = vmatpush.xpose.msra.mxu0 %v1933
    %1951 = vmatpush.xpose.msra.mxu0 %v1931
    %1952 = vmatpush.xpose.msra.mxu0 %v1929
    %1953 = vmatmul.f32.gmra.mxu0 %v1921
    %v1954 = vpop.f32.mrf.mxu0
    %v1955 = vadd.f32 0.0, %v1954
    %1956 = vmatmul.f32.gmra.mxu0 %v1923
    %v1957 = vpop.f32.mrf.mxu0
    %v1958 = vadd.f32 0.0, %v1957
    %1959 = vmatmul.f32.gmra.mxu0 %v1925
    %v1960 = vpop.f32.mrf.mxu0
    %v1961 = vadd.f32 0.0, %v1960
    %1962 = vmatmul.f32.gmra.mxu0 %v1927
    %v1963 = vpop.f32.mrf.mxu0
    %v1964 = vadd.f32 0.0, %v1963
    %1965 = vdwg.mxu0
    %v1966 = vmul.f32 %v1955, 0.35355338
    %v1967 = vmul.f32 %v1958, 0.35355338
    %v1968 = vmul.f32 %v1961, 0.35355338
    %v1969 = vmul.f32 %v1964, 0.35355338
    %v1970 = vadd.f32 %v1966, %v393
    %v1971 = vadd.f32 %v1967, %v394
    %v1972 = vadd.f32 %v1968, %v395
    %v1973 = vadd.f32 %v1969, %v396
    %v1974 = vsel %vm283, %v1970, -inf
    %1975 = vmax.xlane.f32.xlu0 %v1974
    %v1976 = vpop.xlane.xlu0 %1975
    %v1977 = vsel %vm283, %v1971, -inf
    %1978 = vmax.xlane.f32.xlu0 %v1977
    %v1979 = vpop.xlane.xlu0 %1978
    %v1980 = vsel %vm283, %v1972, -inf
    %1981 = vmax.xlane.f32.xlu0 %v1980
    %v1982 = vpop.xlane.xlu0 %1981
    %v1983 = vsel %vm283, %v1973, -inf
    %1984 = vmax.xlane.f32.xlu0 %v1983
    %v1985 = vpop.xlane.xlu0 %1984
    %v1986 = vsub.f32 %v1970, %v1976
    %v1987 = vsub.f32 %v1971, %v1979
    %v1988 = vsub.f32 %v1972, %v1982
    %v1989 = vsub.f32 %v1973, %v1985
    %v1990 = vmul.f32 %v1986, 1.442695
    %v1991 = vpow.pop %v1990
    %v1992 = vmul.f32 %v1987, 1.442695
    %v1993 = vpow.pop %v1992
    %v1994 = vmul.f32 %v1988, 1.442695
    %v1995 = vpow.pop %v1994
    %v1996 = vmul.f32 %v1989, 1.442695
    %v1997 = vpow.pop %v1996
    %v1998 = vsel %vm283, %v1991, 0.0
    %1999 = vadd.xlane.f32.xlu0 %v1998
    %v2000 = vpop.xlane.xlu0 %1999
    %v2001 = vsel %vm283, %v1993, 0.0
    %2002 = vadd.xlane.f32.xlu0 %v2001
    %v2003 = vpop.xlane.xlu0 %2002
    %v2004 = vsel %vm283, %v1995, 0.0
    %2005 = vadd.xlane.f32.xlu0 %v2004
    %v2006 = vpop.xlane.xlu0 %2005
    %v2007 = vsel %vm283, %v1997, 0.0
    %2008 = vadd.xlane.f32.xlu0 %v2007
    %v2009 = vpop.xlane.xlu0 %2008
    %v2010 = vrcp.pop %v2000
    %v2011 = vmul.f32 %v2000, %v2010
    %v2012 = vsub.f32 1.0, %v2011
    %v2013 = vmul.f32 %v2010, %v2012
    %v2014 = vadd.f32 %v2010, %v2013
    %vm2015 = vweird.f32 %v2000
    %vm2016 = vweird.f32 %v2010
    %vm2017 = vmor %vm2015, %vm2016
    %v2018 = vsel %vm2017, %v2010, %v2014
    %v2019 = vand.u32 2147483647, %v2000
    %vm2020 = vcmp.eq.f32.partialorder %v2019, 8.507059e+37
    %v2021 = vand.u32 %v2000, 2147483648
    %v2022 = vor.u32 1.1754944e-38, %v2021
    %v2023 = vsel %vm2020, %v2022, %v2018
    %v2024 = vmul.f32 %v1991, %v2023
    %v2025 = vrcp.pop %v2003
    %v2026 = vmul.f32 %v2003, %v2025
    %v2027 = vsub.f32 1.0, %v2026
    %v2028 = vmul.f32 %v2025, %v2027
    %v2029 = vadd.f32 %v2025, %v2028
    %vm2030 = vweird.f32 %v2003
    %vm2031 = vweird.f32 %v2025
    %vm2032 = vmor %vm2030, %vm2031
    %v2033 = vsel %vm2032, %v2025, %v2029
    %v2034 = vand.u32 2147483647, %v2003
    %vm2035 = vcmp.eq.f32.partialorder %v2034, 8.507059e+37
    %v2036 = vand.u32 %v2003, 2147483648
    %v2037 = vor.u32 1.1754944e-38, %v2036
    %v2038 = vsel %vm2035, %v2037, %v2033
    %v2039 = vmul.f32 %v1993, %v2038
    %v2040 = vrcp.pop %v2006
    %v2041 = vmul.f32 %v2006, %v2040
    %v2042 = vsub.f32 1.0, %v2041
    %v2043 = vmul.f32 %v2040, %v2042
    %v2044 = vadd.f32 %v2040, %v2043
    %vm2045 = vweird.f32 %v2006
    %vm2046 = vweird.f32 %v2040
    %vm2047 = vmor %vm2045, %vm2046
    %v2048 = vsel %vm2047, %v2040, %v2044
    %v2049 = vand.u32 2147483647, %v2006
    %vm2050 = vcmp.eq.f32.partialorder %v2049, 8.507059e+37
    %v2051 = vand.u32 %v2006, 2147483648
    %v2052 = vor.u32 1.1754944e-38, %v2051
    %v2053 = vsel %vm2050, %v2052, %v2048
    %v2054 = vmul.f32 %v1995, %v2053
    %v2055 = vrcp.pop %v2009
    %v2056 = vmul.f32 %v2009, %v2055
    %v2057 = vsub.f32 1.0, %v2056
    %v2058 = vmul.f32 %v2055, %v2057
    %v2059 = vadd.f32 %v2055, %v2058
    %vm2060 = vweird.f32 %v2009
    %vm2061 = vweird.f32 %v2055
    %vm2062 = vmor %vm2060, %vm2061
    %v2063 = vsel %vm2062, %v2055, %v2059
    %v2064 = vand.u32 2147483647, %v2009
    %vm2065 = vcmp.eq.f32.partialorder %v2064, 8.507059e+37
    %v2066 = vand.u32 %v2009, 2147483648
    %v2067 = vor.u32 1.1754944e-38, %v2066
    %v2068 = vsel %vm2065, %v2067, %v2063
    %v2069 = vmul.f32 %v1997, %v2068
    %2070 = vrot.lane.b32.xlu0 %v1893, 64
    %v2071 = vpop.permute.xlu0 %2070
    %2072 = vrot.lane.b32.xlu0 %v1896, 64
    %v2073 = vpop.permute.xlu0 %2072
    %2074 = vrot.lane.b32.xlu0 %v1899, 64
    %v2075 = vpop.permute.xlu0 %2074
    %2076 = vrot.lane.b32.xlu0 %v1902, 64
    %v2077 = vpop.permute.xlu0 %2076
    %v2083 = vsel %vm283, %v2024, 0
    %v2086 = vsel %vm283, %v2039, 0
    %v2089 = vsel %vm283, %v2054, 0
    %v2092 = vsel %vm283, %v2069, 0
    %2094 = vmatpush.msra.mxu0 0.0
    %2095 = vmatpush.msra.mxu0 0.0
    %2096 = vmatpush.msra.mxu0 0.0
    %2097 = vmatpush.msra.mxu0 0.0
    %2098 = vmatpush.msra.mxu0 0.0
    %2099 = vmatpush.msra.mxu0 0.0
    %2100 = vmatpush.msra.mxu0 0.0
    %2101 = vmatpush.msra.mxu0 0.0
    %2102 = vmatpush.msra.mxu0 0.0
    %2103 = vmatpush.msra.mxu0 0.0
    %2104 = vmatpush.msra.mxu0 0.0
    %2105 = vmatpush.msra.mxu0 0.0
    %2106 = vmatpush.msra.mxu0 %v2077
    %2107 = vmatpush.msra.mxu0 %v2075
    %2108 = vmatpush.msra.mxu0 %v2073
    %2109 = vmatpush.msra.mxu0 %v2071
    %2110 = vmatmul.f32.gmra.mxu0 %v2083
    %v2111 = vpop.f32.mrf.mxu0
    %v2112 = vadd.f32 0.0, %v2111
    %2113 = vmatmul.f32.gmra.mxu0 %v2086
    %v2114 = vpop.f32.mrf.mxu0
    %v2115 = vadd.f32 0.0, %v2114
    %2116 = vmatmul.f32.gmra.mxu0 %v2089
    %v2117 = vpop.f32.mrf.mxu0
    %v2118 = vadd.f32 0.0, %v2117
    %2119 = vmatmul.f32.gmra.mxu0 %v2092
    %v2120 = vpop.f32.mrf.mxu0
    %v2121 = vadd.f32 0.0, %v2120
    %2122 = vdwg.mxu0
    %2123 = vrot.lane.b32.xlu0 %v1893, 120
    %v2124 = vpop.permute.xlu0 %2123
    %2125 = vrot.lane.b32.xlu0 %v1896, 120
    %v2126 = vpop.permute.xlu0 %2125
    %2127 = vrot.lane.b32.xlu0 %v1899, 120
    %v2128 = vpop.permute.xlu0 %2127
    %2129 = vrot.lane.b32.xlu0 %v1902, 120
    %v2130 = vpop.permute.xlu0 %2129
    %2131 = vrot.lane.b32.xlu0 %v1893, 88
    %v2132 = vpop.permute.xlu0 %2131
    %2133 = vrot.lane.b32.xlu0 %v1896, 88
    %v2134 = vpop.permute.xlu0 %2133
    %2135 = vrot.lane.b32.xlu0 %v1899, 88
    %v2136 = vpop.permute.xlu0 %2135
    %2137 = vrot.lane.b32.xlu0 %v1902, 88
    %v2138 = vpop.permute.xlu0 %2137
    %v2139 = vsel %vm462, %v2124, 0
    %v2141 = vsel %vm462, %v2126, 0
    %v2143 = vsel %vm462, %v2128, 0
    %v2145 = vsel %vm462, %v2130, 0
    %v2147 = vsel %vm462, %v2132, 0
    %v2149 = vsel %vm462, %v2134, 0
    %v2151 = vsel %vm462, %v2136, 0
    %v2153 = vsel %vm462, %v2138, 0
    %2155 = vmatpush.xpose.msra.mxu0 0.0
    %2156 = vmatpush.xpose.msra.mxu0 0.0
    %2157 = vmatpush.xpose.msra.mxu0 0.0
    %2158 = vmatpush.xpose.msra.mxu0 0.0
    %2159 = vmatpush.xpose.msra.mxu0 0.0
    %2160 = vmatpush.xpose.msra.mxu0 0.0
    %2161 = vmatpush.xpose.msra.mxu0 0.0
    %2162 = vmatpush.xpose.msra.mxu0 0.0
    %2163 = vmatpush.xpose.msra.mxu0 0.0
    %2164 = vmatpush.xpose.msra.mxu0 0.0
    %2165 = vmatpush.xpose.msra.mxu0 0.0
    %2166 = vmatpush.xpose.msra.mxu0 0.0
    %2167 = vmatpush.xpose.msra.mxu0 %v2153
    %2168 = vmatpush.xpose.msra.mxu0 %v2151
    %2169 = vmatpush.xpose.msra.mxu0 %v2149
    %2170 = vmatpush.xpose.msra.mxu0 %v2147
    %2171 = vmatmul.f32.gmra.mxu0 %v2139
    %v2172 = vpop.f32.mrf.mxu0
    %v2173 = vadd.f32 0.0, %v2172
    %2174 = vmatmul.f32.gmra.mxu0 %v2141
    %v2175 = vpop.f32.mrf.mxu0
    %v2176 = vadd.f32 0.0, %v2175
    %2177 = vmatmul.f32.gmra.mxu0 %v2143
    %v2178 = vpop.f32.mrf.mxu0
    %v2179 = vadd.f32 0.0, %v2178
    %2180 = vmatmul.f32.gmra.mxu0 %v2145
    %v2181 = vpop.f32.mrf.mxu0
    %v2182 = vadd.f32 0.0, %v2181
    %2183 = vdwg.mxu0
    %v2184 = vmul.f32 %v2173, 0.35355338
    %v2185 = vmul.f32 %v2176, 0.35355338
    %v2186 = vmul.f32 %v2179, 0.35355338
    %v2187 = vmul.f32 %v2182, 0.35355338
    %v2188 = vadd.f32 %v2184, %v393
    %v2189 = vadd.f32 %v2185, %v394
    %v2190 = vadd.f32 %v2186, %v395
    %v2191 = vadd.f32 %v2187, %v396
    %v2192 = vsel %vm283, %v2188, -inf
    %2193 = vmax.xlane.f32.xlu0 %v2192
    %v2194 = vpop.xlane.xlu0 %2193
    %v2195 = vsel %vm283, %v2189, -inf
    %2196 = vmax.xlane.f32.xlu0 %v2195
    %v2197 = vpop.xlane.xlu0 %2196
    %v2198 = vsel %vm283, %v2190, -inf
    %2199 = vmax.xlane.f32.xlu0 %v2198
    %v2200 = vpop.xlane.xlu0 %2199
    %v2201 = vsel %vm283, %v2191, -inf
    %2202 = vmax.xlane.f32.xlu0 %v2201
    %v2203 = vpop.xlane.xlu0 %2202
    %v2204 = vsub.f32 %v2188, %v2194
    %v2205 = vsub.f32 %v2189, %v2197
    %v2206 = vsub.f32 %v2190, %v2200
    %v2207 = vsub.f32 %v2191, %v2203
    %v2208 = vmul.f32 %v2204, 1.442695
    %v2209 = vpow.pop %v2208
    %v2210 = vmul.f32 %v2205, 1.442695
    %v2211 = vpow.pop %v2210
    %v2212 = vmul.f32 %v2206, 1.442695
    %v2213 = vpow.pop %v2212
    %v2214 = vmul.f32 %v2207, 1.442695
    %v2215 = vpow.pop %v2214
    %v2216 = vsel %vm283, %v2209, 0.0
    %2217 = vadd.xlane.f32.xlu0 %v2216
    %v2218 = vpop.xlane.xlu0 %2217
    %v2219 = vsel %vm283, %v2211, 0.0
    %2220 = vadd.xlane.f32.xlu0 %v2219
    %v2221 = vpop.xlane.xlu0 %2220
    %v2222 = vsel %vm283, %v2213, 0.0
    %2223 = vadd.xlane.f32.xlu0 %v2222
    %v2224 = vpop.xlane.xlu0 %2223
    %v2225 = vsel %vm283, %v2215, 0.0
    %2226 = vadd.xlane.f32.xlu0 %v2225
    %v2227 = vpop.xlane.xlu0 %2226
    %v2228 = vrcp.pop %v2218
    %v2229 = vmul.f32 %v2218, %v2228
    %v2230 = vsub.f32 1.0, %v2229
    %v2231 = vmul.f32 %v2228, %v2230
    %v2232 = vadd.f32 %v2228, %v2231
    %vm2233 = vweird.f32 %v2218
    %vm2234 = vweird.f32 %v2228
    %vm2235 = vmor %vm2233, %vm2234
    %v2236 = vsel %vm2235, %v2228, %v2232
    %v2237 = vand.u32 2147483647, %v2218
    %vm2238 = vcmp.eq.f32.partialorder %v2237, 8.507059e+37
    %v2239 = vand.u32 %v2218, 2147483648
    %v2240 = vor.u32 1.1754944e-38, %v2239
    %v2241 = vsel %vm2238, %v2240, %v2236
    %v2242 = vmul.f32 %v2209, %v2241
    %v2243 = vrcp.pop %v2221
    %v2244 = vmul.f32 %v2221, %v2243
    %v2245 = vsub.f32 1.0, %v2244
    %v2246 = vmul.f32 %v2243, %v2245
    %v2247 = vadd.f32 %v2243, %v2246
    %vm2248 = vweird.f32 %v2221
    %vm2249 = vweird.f32 %v2243
    %vm2250 = vmor %vm2248, %vm2249
    %v2251 = vsel %vm2250, %v2243, %v2247
    %v2252 = vand.u32 2147483647, %v2221
    %vm2253 = vcmp.eq.f32.partialorder %v2252, 8.507059e+37
    %v2254 = vand.u32 %v2221, 2147483648
    %v2255 = vor.u32 1.1754944e-38, %v2254
    %v2256 = vsel %vm2253, %v2255, %v2251
    %v2257 = vmul.f32 %v2211, %v2256
    %v2258 = vrcp.pop %v2224
    %v2259 = vmul.f32 %v2224, %v2258
    %v2260 = vsub.f32 1.0, %v2259
    %v2261 = vmul.f32 %v2258, %v2260
    %v2262 = vadd.f32 %v2258, %v2261
    %vm2263 = vweird.f32 %v2224
    %vm2264 = vweird.f32 %v2258
    %vm2265 = vmor %vm2263, %vm2264
    %v2266 = vsel %vm2265, %v2258, %v2262
    %v2267 = vand.u32 2147483647, %v2224
    %vm2268 = vcmp.eq.f32.partialorder %v2267, 8.507059e+37
    %v2269 = vand.u32 %v2224, 2147483648
    %v2270 = vor.u32 1.1754944e-38, %v2269
    %v2271 = vsel %vm2268, %v2270, %v2266
    %v2272 = vmul.f32 %v2213, %v2271
    %v2273 = vrcp.pop %v2227
    %v2274 = vmul.f32 %v2227, %v2273
    %v2275 = vsub.f32 1.0, %v2274
    %v2276 = vmul.f32 %v2273, %v2275
    %v2277 = vadd.f32 %v2273, %v2276
    %vm2278 = vweird.f32 %v2227
    %vm2279 = vweird.f32 %v2273
    %vm2280 = vmor %vm2278, %vm2279
    %v2281 = vsel %vm2280, %v2273, %v2277
    %v2282 = vand.u32 2147483647, %v2227
    %vm2283 = vcmp.eq.f32.partialorder %v2282, 8.507059e+37
    %v2284 = vand.u32 %v2227, 2147483648
    %v2285 = vor.u32 1.1754944e-38, %v2284
    %v2286 = vsel %vm2283, %v2285, %v2281
    %v2287 = vmul.f32 %v2215, %v2286
    %2288 = vrot.lane.b32.xlu0 %v1893, 56
    %v2289 = vpop.permute.xlu0 %2288
    %2290 = vrot.lane.b32.xlu0 %v1896, 56
    %v2291 = vpop.permute.xlu0 %2290
    %2292 = vrot.lane.b32.xlu0 %v1899, 56
    %v2293 = vpop.permute.xlu0 %2292
    %2294 = vrot.lane.b32.xlu0 %v1902, 56
    %v2295 = vpop.permute.xlu0 %2294
    %v2301 = vsel %vm283, %v2242, 0
    %v2304 = vsel %vm283, %v2257, 0
    %v2307 = vsel %vm283, %v2272, 0
    %v2310 = vsel %vm283, %v2287, 0
    %2312 = vmatpush.msra.mxu0 0.0
    %2313 = vmatpush.msra.mxu0 0.0
    %2314 = vmatpush.msra.mxu0 0.0
    %2315 = vmatpush.msra.mxu0 0.0
    %2316 = vmatpush.msra.mxu0 0.0
    %2317 = vmatpush.msra.mxu0 0.0
    %2318 = vmatpush.msra.mxu0 0.0
    %2319 = vmatpush.msra.mxu0 0.0
    %2320 = vmatpush.msra.mxu0 0.0
    %2321 = vmatpush.msra.mxu0 0.0
    %2322 = vmatpush.msra.mxu0 0.0
    %2323 = vmatpush.msra.mxu0 0.0
    %2324 = vmatpush.msra.mxu0 %v2295
    %2325 = vmatpush.msra.mxu0 %v2293
    %2326 = vmatpush.msra.mxu0 %v2291
    %2327 = vmatpush.msra.mxu0 %v2289
    %2328 = vmatmul.f32.gmra.mxu0 %v2301
    %v2329 = vpop.f32.mrf.mxu0
    %v2330 = vadd.f32 0.0, %v2329
    %2331 = vmatmul.f32.gmra.mxu0 %v2304
    %v2332 = vpop.f32.mrf.mxu0
    %v2333 = vadd.f32 0.0, %v2332
    %2334 = vmatmul.f32.gmra.mxu0 %v2307
    %v2335 = vpop.f32.mrf.mxu0
    %v2336 = vadd.f32 0.0, %v2335
    %2337 = vmatmul.f32.gmra.mxu0 %v2310
    %v2338 = vpop.f32.mrf.mxu0
    %v2339 = vadd.f32 0.0, %v2338
    %2340 = vdwg.mxu0
    %v2342 = vsel %vm462, %v2330, 0
    %v2345 = vsel %vm462, %v2333, 0
    %v2348 = vsel %vm462, %v2336, 0
    %v2351 = vsel %vm462, %v2339, 0
    %2353 = vmatpush.msra.mxu0 0.0
    %2354 = vmatpush.msra.mxu0 0.0
    %2355 = vmatpush.msra.mxu0 0.0
    %2356 = vmatpush.msra.mxu0 0.0
    %2357 = vmatpush.msra.mxu0 0.0
    %2358 = vmatpush.msra.mxu0 0.0
    %2359 = vmatpush.msra.mxu0 0.0
    %2360 = vmatpush.msra.mxu0 0.0
    %2361 = vmatpush.msra.mxu0 0.0
    %2362 = vmatpush.msra.mxu0 0.0
    %2363 = vmatpush.msra.mxu0 0.0
    %2364 = vmatpush.msra.mxu0 0.0
    %2365 = vmatpush.msra.mxu0 0.0
    %2366 = vmatpush.msra.mxu0 0.0
    %2367 = vmatpush.msra.mxu0 0.0
    %2368 = vmatpush.msra.mxu0 %v1906
    %2369 = vmatmul.f32.gmra.mxu0 %v2342
    %v2370 = vpop.f32.mrf.mxu0
    %v2371 = vadd.f32 0.0, %v2370
    %2372 = vmatmul.f32.gmra.mxu0 %v2345
    %v2373 = vpop.f32.mrf.mxu0
    %v2374 = vadd.f32 0.0, %v2373
    %2375 = vmatmul.f32.gmra.mxu0 %v2348
    %v2376 = vpop.f32.mrf.mxu0
    %v2377 = vadd.f32 0.0, %v2376
    %2378 = vmatmul.f32.gmra.mxu0 %v2351
    %v2379 = vpop.f32.mrf.mxu0
    %v2380 = vadd.f32 0.0, %v2379
    %2381 = vdwg.mxu0
    %v2383 = vsel %vm462, %v2112, 0
    %v2386 = vsel %vm462, %v2115, 0
    %v2389 = vsel %vm462, %v2118, 0
    %v2392 = vsel %vm462, %v2121, 0
    %2394 = vmatpush.msra.mxu0 0.0
    %2395 = vmatpush.msra.mxu0 0.0
    %2396 = vmatpush.msra.mxu0 0.0
    %2397 = vmatpush.msra.mxu0 0.0
    %2398 = vmatpush.msra.mxu0 0.0
    %2399 = vmatpush.msra.mxu0 0.0
    %2400 = vmatpush.msra.mxu0 0.0
    %2401 = vmatpush.msra.mxu0 0.0
    %2402 = vmatpush.msra.mxu0 0.0
    %2403 = vmatpush.msra.mxu0 0.0
    %2404 = vmatpush.msra.mxu0 0.0
    %2405 = vmatpush.msra.mxu0 0.0
    %2406 = vmatpush.msra.mxu0 0.0
    %2407 = vmatpush.msra.mxu0 0.0
    %2408 = vmatpush.msra.mxu0 0.0
    %2409 = vmatpush.msra.mxu0 %v1905
    %2410 = vmatmul.f32.gmra.mxu0 %v2383
    %v2411 = vpop.f32.mrf.mxu0
    %v2412 = vadd.f32 %v2371, %v2411
    %2413 = vmatmul.f32.gmra.mxu0 %v2386
    %v2414 = vpop.f32.mrf.mxu0
    %v2415 = vadd.f32 %v2374, %v2414
    %2416 = vmatmul.f32.gmra.mxu0 %v2389
    %v2417 = vpop.f32.mrf.mxu0
    %v2418 = vadd.f32 %v2377, %v2417
    %2419 = vmatmul.f32.gmra.mxu0 %v2392
    %v2420 = vpop.f32.mrf.mxu0
    %v2421 = vadd.f32 %v2380, %v2420
    %2422 = vdwg.mxu0
    %2423 = vrot.lane.b32.xlu0 %v1893, 112
    %v2424 = vpop.permute.xlu0 %2423
    %2425 = vrot.lane.b32.xlu0 %v1896, 112
    %v2426 = vpop.permute.xlu0 %2425
    %2427 = vrot.lane.b32.xlu0 %v1899, 112
    %v2428 = vpop.permute.xlu0 %2427
    %2429 = vrot.lane.b32.xlu0 %v1902, 112
    %v2430 = vpop.permute.xlu0 %2429
    %2431 = vrot.lane.b32.xlu0 %v1893, 80
    %v2432 = vpop.permute.xlu0 %2431
    %2433 = vrot.lane.b32.xlu0 %v1896, 80
    %v2434 = vpop.permute.xlu0 %2433
    %2435 = vrot.lane.b32.xlu0 %v1899, 80
    %v2436 = vpop.permute.xlu0 %2435
    %2437 = vrot.lane.b32.xlu0 %v1902, 80
    %v2438 = vpop.permute.xlu0 %2437
    %v2439 = vsel %vm462, %v2424, 0
    %v2441 = vsel %vm462, %v2426, 0
    %v2443 = vsel %vm462, %v2428, 0
    %v2445 = vsel %vm462, %v2430, 0
    %v2447 = vsel %vm462, %v2432, 0
    %v2449 = vsel %vm462, %v2434, 0
    %v2451 = vsel %vm462, %v2436, 0
    %v2453 = vsel %vm462, %v2438, 0
    %2455 = vmatpush.xpose.msra.mxu0 0.0
    %2456 = vmatpush.xpose.msra.mxu0 0.0
    %2457 = vmatpush.xpose.msra.mxu0 0.0
    %2458 = vmatpush.xpose.msra.mxu0 0.0
    %2459 = vmatpush.xpose.msra.mxu0 0.0
    %2460 = vmatpush.xpose.msra.mxu0 0.0
    %2461 = vmatpush.xpose.msra.mxu0 0.0
    %2462 = vmatpush.xpose.msra.mxu0 0.0
    %2463 = vmatpush.xpose.msra.mxu0 0.0
    %2464 = vmatpush.xpose.msra.mxu0 0.0
    %2465 = vmatpush.xpose.msra.mxu0 0.0
    %2466 = vmatpush.xpose.msra.mxu0 0.0
    %2467 = vmatpush.xpose.msra.mxu0 %v2453
    %2468 = vmatpush.xpose.msra.mxu0 %v2451
    %2469 = vmatpush.xpose.msra.mxu0 %v2449
    %2470 = vmatpush.xpose.msra.mxu0 %v2447
    %2471 = vmatmul.f32.gmra.mxu0 %v2439
    %v2472 = vpop.f32.mrf.mxu0
    %v2473 = vadd.f32 0.0, %v2472
    %2474 = vmatmul.f32.gmra.mxu0 %v2441
    %v2475 = vpop.f32.mrf.mxu0
    %v2476 = vadd.f32 0.0, %v2475
    %2477 = vmatmul.f32.gmra.mxu0 %v2443
    %v2478 = vpop.f32.mrf.mxu0
    %v2479 = vadd.f32 0.0, %v2478
    %2480 = vmatmul.f32.gmra.mxu0 %v2445
    %v2481 = vpop.f32.mrf.mxu0
    %v2482 = vadd.f32 0.0, %v2481
    %2483 = vdwg.mxu0
    %v2484 = vmul.f32 %v2473, 0.35355338
    %v2485 = vmul.f32 %v2476, 0.35355338
    %v2486 = vmul.f32 %v2479, 0.35355338
    %v2487 = vmul.f32 %v2482, 0.35355338
    %v2488 = vadd.f32 %v2484, %v393
    %v2489 = vadd.f32 %v2485, %v394
    %v2490 = vadd.f32 %v2486, %v395
    %v2491 = vadd.f32 %v2487, %v396
    %v2492 = vsel %vm283, %v2488, -inf
    %2493 = vmax.xlane.f32.xlu0 %v2492
    %v2494 = vpop.xlane.xlu0 %2493
    %v2495 = vsel %vm283, %v2489, -inf
    %2496 = vmax.xlane.f32.xlu0 %v2495
    %v2497 = vpop.xlane.xlu0 %2496
    %v2498 = vsel %vm283, %v2490, -inf
    %2499 = vmax.xlane.f32.xlu0 %v2498
    %v2500 = vpop.xlane.xlu0 %2499
    %v2501 = vsel %vm283, %v2491, -inf
    %2502 = vmax.xlane.f32.xlu0 %v2501
    %v2503 = vpop.xlane.xlu0 %2502
    %v2504 = vsub.f32 %v2488, %v2494
    %v2505 = vsub.f32 %v2489, %v2497
    %v2506 = vsub.f32 %v2490, %v2500
    %v2507 = vsub.f32 %v2491, %v2503
    %v2508 = vmul.f32 %v2504, 1.442695
    %v2509 = vpow.pop %v2508
    %v2510 = vmul.f32 %v2505, 1.442695
    %v2511 = vpow.pop %v2510
    %v2512 = vmul.f32 %v2506, 1.442695
    %v2513 = vpow.pop %v2512
    %v2514 = vmul.f32 %v2507, 1.442695
    %v2515 = vpow.pop %v2514
    %v2516 = vsel %vm283, %v2509, 0.0
    %2517 = vadd.xlane.f32.xlu0 %v2516
    %v2518 = vpop.xlane.xlu0 %2517
    %v2519 = vsel %vm283, %v2511, 0.0
    %2520 = vadd.xlane.f32.xlu0 %v2519
    %v2521 = vpop.xlane.xlu0 %2520
    %v2522 = vsel %vm283, %v2513, 0.0
    %2523 = vadd.xlane.f32.xlu0 %v2522
    %v2524 = vpop.xlane.xlu0 %2523
    %v2525 = vsel %vm283, %v2515, 0.0
    %2526 = vadd.xlane.f32.xlu0 %v2525
    %v2527 = vpop.xlane.xlu0 %2526
    %v2528 = vrcp.pop %v2518
    %v2529 = vmul.f32 %v2518, %v2528
    %v2530 = vsub.f32 1.0, %v2529
    %v2531 = vmul.f32 %v2528, %v2530
    %v2532 = vadd.f32 %v2528, %v2531
    %vm2533 = vweird.f32 %v2518
    %vm2534 = vweird.f32 %v2528
    %vm2535 = vmor %vm2533, %vm2534
    %v2536 = vsel %vm2535, %v2528, %v2532
    %v2537 = vand.u32 2147483647, %v2518
    %vm2538 = vcmp.eq.f32.partialorder %v2537, 8.507059e+37
    %v2539 = vand.u32 %v2518, 2147483648
    %v2540 = vor.u32 1.1754944e-38, %v2539
    %v2541 = vsel %vm2538, %v2540, %v2536
    %v2542 = vmul.f32 %v2509, %v2541
    %v2543 = vrcp.pop %v2521
    %v2544 = vmul.f32 %v2521, %v2543
    %v2545 = vsub.f32 1.0, %v2544
    %v2546 = vmul.f32 %v2543, %v2545
    %v2547 = vadd.f32 %v2543, %v2546
    %vm2548 = vweird.f32 %v2521
    %vm2549 = vweird.f32 %v2543
    %vm2550 = vmor %vm2548, %vm2549
    %v2551 = vsel %vm2550, %v2543, %v2547
    %v2552 = vand.u32 2147483647, %v2521
    %vm2553 = vcmp.eq.f32.partialorder %v2552, 8.507059e+37
    %v2554 = vand.u32 %v2521, 2147483648
    %v2555 = vor.u32 1.1754944e-38, %v2554
    %v2556 = vsel %vm2553, %v2555, %v2551
    %v2557 = vmul.f32 %v2511, %v2556
    %v2558 = vrcp.pop %v2524
    %v2559 = vmul.f32 %v2524, %v2558
    %v2560 = vsub.f32 1.0, %v2559
    %v2561 = vmul.f32 %v2558, %v2560
    %v2562 = vadd.f32 %v2558, %v2561
    %vm2563 = vweird.f32 %v2524
    %vm2564 = vweird.f32 %v2558
    %vm2565 = vmor %vm2563, %vm2564
    %v2566 = vsel %vm2565, %v2558, %v2562
    %v2567 = vand.u32 2147483647, %v2524
    %vm2568 = vcmp.eq.f32.partialorder %v2567, 8.507059e+37
    %v2569 = vand.u32 %v2524, 2147483648
    %v2570 = vor.u32 1.1754944e-38, %v2569
    %v2571 = vsel %vm2568, %v2570, %v2566
    %v2572 = vmul.f32 %v2513, %v2571
    %v2573 = vrcp.pop %v2527
    %v2574 = vmul.f32 %v2527, %v2573
    %v2575 = vsub.f32 1.0, %v2574
    %v2576 = vmul.f32 %v2573, %v2575
    %v2577 = vadd.f32 %v2573, %v2576
    %vm2578 = vweird.f32 %v2527
    %vm2579 = vweird.f32 %v2573
    %vm2580 = vmor %vm2578, %vm2579
    %v2581 = vsel %vm2580, %v2573, %v2577
    %v2582 = vand.u32 2147483647, %v2527
    %vm2583 = vcmp.eq.f32.partialorder %v2582, 8.507059e+37
    %v2584 = vand.u32 %v2527, 2147483648
    %v2585 = vor.u32 1.1754944e-38, %v2584
    %v2586 = vsel %vm2583, %v2585, %v2581
    %v2587 = vmul.f32 %v2515, %v2586
    %2588 = vrot.lane.b32.xlu0 %v1893, 48
    %v2589 = vpop.permute.xlu0 %2588
    %2590 = vrot.lane.b32.xlu0 %v1896, 48
    %v2591 = vpop.permute.xlu0 %2590
    %2592 = vrot.lane.b32.xlu0 %v1899, 48
    %v2593 = vpop.permute.xlu0 %2592
    %2594 = vrot.lane.b32.xlu0 %v1902, 48
    %v2595 = vpop.permute.xlu0 %2594
    %v2601 = vsel %vm283, %v2542, 0
    %v2604 = vsel %vm283, %v2557, 0
    %v2607 = vsel %vm283, %v2572, 0
    %v2610 = vsel %vm283, %v2587, 0
    %2612 = vmatpush.msra.mxu0 0.0
    %2613 = vmatpush.msra.mxu0 0.0
    %2614 = vmatpush.msra.mxu0 0.0
    %2615 = vmatpush.msra.mxu0 0.0
    %2616 = vmatpush.msra.mxu0 0.0
    %2617 = vmatpush.msra.mxu0 0.0
    %2618 = vmatpush.msra.mxu0 0.0
    %2619 = vmatpush.msra.mxu0 0.0
    %2620 = vmatpush.msra.mxu0 0.0
    %2621 = vmatpush.msra.mxu0 0.0
    %2622 = vmatpush.msra.mxu0 0.0
    %2623 = vmatpush.msra.mxu0 0.0
    %2624 = vmatpush.msra.mxu0 %v2595
    %2625 = vmatpush.msra.mxu0 %v2593
    %2626 = vmatpush.msra.mxu0 %v2591
    %2627 = vmatpush.msra.mxu0 %v2589
    %2628 = vmatmul.f32.gmra.mxu0 %v2601
    %v2629 = vpop.f32.mrf.mxu0
    %v2630 = vadd.f32 0.0, %v2629
    %2631 = vmatmul.f32.gmra.mxu0 %v2604
    %v2632 = vpop.f32.mrf.mxu0
    %v2633 = vadd.f32 0.0, %v2632
    %2634 = vmatmul.f32.gmra.mxu0 %v2607
    %v2635 = vpop.f32.mrf.mxu0
    %v2636 = vadd.f32 0.0, %v2635
    %2637 = vmatmul.f32.gmra.mxu0 %v2610
    %v2638 = vpop.f32.mrf.mxu0
    %v2639 = vadd.f32 0.0, %v2638
    %2640 = vdwg.mxu0
    %v2642 = vsel %vm462, %v2630, 0
    %v2645 = vsel %vm462, %v2633, 0
    %v2648 = vsel %vm462, %v2636, 0
    %v2651 = vsel %vm462, %v2639, 0
    %2653 = vmatpush.msra.mxu0 0.0
    %2654 = vmatpush.msra.mxu0 0.0
    %2655 = vmatpush.msra.mxu0 0.0
    %2656 = vmatpush.msra.mxu0 0.0
    %2657 = vmatpush.msra.mxu0 0.0
    %2658 = vmatpush.msra.mxu0 0.0
    %2659 = vmatpush.msra.mxu0 0.0
    %2660 = vmatpush.msra.mxu0 0.0
    %2661 = vmatpush.msra.mxu0 0.0
    %2662 = vmatpush.msra.mxu0 0.0
    %2663 = vmatpush.msra.mxu0 0.0
    %2664 = vmatpush.msra.mxu0 0.0
    %2665 = vmatpush.msra.mxu0 0.0
    %2666 = vmatpush.msra.mxu0 0.0
    %2667 = vmatpush.msra.mxu0 0.0
    %2668 = vmatpush.msra.mxu0 %v1907
    %2669 = vmatmul.f32.gmra.mxu0 %v2642
    %v2670 = vpop.f32.mrf.mxu0
    %v2671 = vadd.f32 0.0, %v2670
    %2672 = vmatmul.f32.gmra.mxu0 %v2645
    %v2673 = vpop.f32.mrf.mxu0
    %v2674 = vadd.f32 0.0, %v2673
    %2675 = vmatmul.f32.gmra.mxu0 %v2648
    %v2676 = vpop.f32.mrf.mxu0
    %v2677 = vadd.f32 0.0, %v2676
    %2678 = vmatmul.f32.gmra.mxu0 %v2651
    %v2679 = vpop.f32.mrf.mxu0
    %v2680 = vadd.f32 0.0, %v2679
    %2681 = vdwg.mxu0
    %v2682 = vadd.f32 %v2412, %v2671
    %v2683 = vadd.f32 %v2415, %v2674
    %v2684 = vadd.f32 %v2418, %v2677
    %v2685 = vadd.f32 %v2421, %v2680
    %2686 = vrot.lane.b32.xlu0 %v1893, 104
    %v2687 = vpop.permute.xlu0 %2686
    %2688 = vrot.lane.b32.xlu0 %v1896, 104
    %v2689 = vpop.permute.xlu0 %2688
    %2690 = vrot.lane.b32.xlu0 %v1899, 104
    %v2691 = vpop.permute.xlu0 %2690
    %2692 = vrot.lane.b32.xlu0 %v1902, 104
    %v2693 = vpop.permute.xlu0 %2692
    %2694 = vrot.lane.b32.xlu0 %v1893, 72
    %v2695 = vpop.permute.xlu0 %2694
    %2696 = vrot.lane.b32.xlu0 %v1896, 72
    %v2697 = vpop.permute.xlu0 %2696
    %2698 = vrot.lane.b32.xlu0 %v1899, 72
    %v2699 = vpop.permute.xlu0 %2698
    %2700 = vrot.lane.b32.xlu0 %v1902, 72
    %v2701 = vpop.permute.xlu0 %2700
    %v2702 = vsel %vm462, %v2687, 0
    %v2704 = vsel %vm462, %v2689, 0
    %v2706 = vsel %vm462, %v2691, 0
    %v2708 = vsel %vm462, %v2693, 0
    %v2710 = vsel %vm462, %v2695, 0
    %v2712 = vsel %vm462, %v2697, 0
    %v2714 = vsel %vm462, %v2699, 0
    %v2716 = vsel %vm462, %v2701, 0
    %2718 = vmatpush.xpose.msra.mxu0 0.0
    %2719 = vmatpush.xpose.msra.mxu0 0.0
    %2720 = vmatpush.xpose.msra.mxu0 0.0
    %2721 = vmatpush.xpose.msra.mxu0 0.0
    %2722 = vmatpush.xpose.msra.mxu0 0.0
    %2723 = vmatpush.xpose.msra.mxu0 0.0
    %2724 = vmatpush.xpose.msra.mxu0 0.0
    %2725 = vmatpush.xpose.msra.mxu0 0.0
    %2726 = vmatpush.xpose.msra.mxu0 0.0
    %2727 = vmatpush.xpose.msra.mxu0 0.0
    %2728 = vmatpush.xpose.msra.mxu0 0.0
    %2729 = vmatpush.xpose.msra.mxu0 0.0
    %2730 = vmatpush.xpose.msra.mxu0 %v2716
    %2731 = vmatpush.xpose.msra.mxu0 %v2714
    %2732 = vmatpush.xpose.msra.mxu0 %v2712
    %2733 = vmatpush.xpose.msra.mxu0 %v2710
    %2734 = vmatmul.f32.gmra.mxu0 %v2702
    %v2735 = vpop.f32.mrf.mxu0
    %v2736 = vadd.f32 0.0, %v2735
    %2737 = vmatmul.f32.gmra.mxu0 %v2704
    %v2738 = vpop.f32.mrf.mxu0
    %v2739 = vadd.f32 0.0, %v2738
    %2740 = vmatmul.f32.gmra.mxu0 %v2706
    %v2741 = vpop.f32.mrf.mxu0
    %v2742 = vadd.f32 0.0, %v2741
    %2743 = vmatmul.f32.gmra.mxu0 %v2708
    %v2744 = vpop.f32.mrf.mxu0
    %v2745 = vadd.f32 0.0, %v2744
    %2746 = vdwg.mxu0
    %v2747 = vmul.f32 %v2736, 0.35355338
    %v2748 = vmul.f32 %v2739, 0.35355338
    %v2749 = vmul.f32 %v2742, 0.35355338
    %v2750 = vmul.f32 %v2745, 0.35355338
    %v2751 = vadd.f32 %v2747, %v393
    %v2752 = vadd.f32 %v2748, %v394
    %v2753 = vadd.f32 %v2749, %v395
    %v2754 = vadd.f32 %v2750, %v396
    %v2755 = vsel %vm283, %v2751, -inf
    %2756 = vmax.xlane.f32.xlu0 %v2755
    %v2757 = vpop.xlane.xlu0 %2756
    %v2758 = vsel %vm283, %v2752, -inf
    %2759 = vmax.xlane.f32.xlu0 %v2758
    %v2760 = vpop.xlane.xlu0 %2759
    %v2761 = vsel %vm283, %v2753, -inf
    %2762 = vmax.xlane.f32.xlu0 %v2761
    %v2763 = vpop.xlane.xlu0 %2762
    %v2764 = vsel %vm283, %v2754, -inf
    %2765 = vmax.xlane.f32.xlu0 %v2764
    %v2766 = vpop.xlane.xlu0 %2765
    %v2767 = vsub.f32 %v2751, %v2757
    %v2768 = vsub.f32 %v2752, %v2760
    %v2769 = vsub.f32 %v2753, %v2763
    %v2770 = vsub.f32 %v2754, %v2766
    %v2771 = vmul.f32 %v2767, 1.442695
    %v2772 = vpow.pop %v2771
    %v2773 = vmul.f32 %v2768, 1.442695
    %v2774 = vpow.pop %v2773
    %v2775 = vmul.f32 %v2769, 1.442695
    %v2776 = vpow.pop %v2775
    %v2777 = vmul.f32 %v2770, 1.442695
    %v2778 = vpow.pop %v2777
    %v2779 = vsel %vm283, %v2772, 0.0
    %2780 = vadd.xlane.f32.xlu0 %v2779
    %v2781 = vpop.xlane.xlu0 %2780
    %v2782 = vsel %vm283, %v2774, 0.0
    %2783 = vadd.xlane.f32.xlu0 %v2782
    %v2784 = vpop.xlane.xlu0 %2783
    %v2785 = vsel %vm283, %v2776, 0.0
    %2786 = vadd.xlane.f32.xlu0 %v2785
    %v2787 = vpop.xlane.xlu0 %2786
    %v2788 = vsel %vm283, %v2778, 0.0
    %2789 = vadd.xlane.f32.xlu0 %v2788
    %v2790 = vpop.xlane.xlu0 %2789
    %v2791 = vrcp.pop %v2781
    %v2792 = vmul.f32 %v2781, %v2791
    %v2793 = vsub.f32 1.0, %v2792
    %v2794 = vmul.f32 %v2791, %v2793
    %v2795 = vadd.f32 %v2791, %v2794
    %vm2796 = vweird.f32 %v2781
    %vm2797 = vweird.f32 %v2791
    %vm2798 = vmor %vm2796, %vm2797
    %v2799 = vsel %vm2798, %v2791, %v2795
    %v2800 = vand.u32 2147483647, %v2781
    %vm2801 = vcmp.eq.f32.partialorder %v2800, 8.507059e+37
    %v2802 = vand.u32 %v2781, 2147483648
    %v2803 = vor.u32 1.1754944e-38, %v2802
    %v2804 = vsel %vm2801, %v2803, %v2799
    %v2805 = vmul.f32 %v2772, %v2804
    %v2806 = vrcp.pop %v2784
    %v2807 = vmul.f32 %v2784, %v2806
    %v2808 = vsub.f32 1.0, %v2807
    %v2809 = vmul.f32 %v2806, %v2808
    %v2810 = vadd.f32 %v2806, %v2809
    %vm2811 = vweird.f32 %v2784
    %vm2812 = vweird.f32 %v2806
    %vm2813 = vmor %vm2811, %vm2812
    %v2814 = vsel %vm2813, %v2806, %v2810
    %v2815 = vand.u32 2147483647, %v2784
    %vm2816 = vcmp.eq.f32.partialorder %v2815, 8.507059e+37
    %v2817 = vand.u32 %v2784, 2147483648
    %v2818 = vor.u32 1.1754944e-38, %v2817
    %v2819 = vsel %vm2816, %v2818, %v2814
    %v2820 = vmul.f32 %v2774, %v2819
    %v2821 = vrcp.pop %v2787
    %v2822 = vmul.f32 %v2787, %v2821
    %v2823 = vsub.f32 1.0, %v2822
    %v2824 = vmul.f32 %v2821, %v2823
    %v2825 = vadd.f32 %v2821, %v2824
    %vm2826 = vweird.f32 %v2787
    %vm2827 = vweird.f32 %v2821
    %vm2828 = vmor %vm2826, %vm2827
    %v2829 = vsel %vm2828, %v2821, %v2825
    %v2830 = vand.u32 2147483647, %v2787
    %vm2831 = vcmp.eq.f32.partialorder %v2830, 8.507059e+37
    %v2832 = vand.u32 %v2787, 2147483648
    %v2833 = vor.u32 1.1754944e-38, %v2832
    %v2834 = vsel %vm2831, %v2833, %v2829
    %v2835 = vmul.f32 %v2776, %v2834
    %v2836 = vrcp.pop %v2790
    %v2837 = vmul.f32 %v2790, %v2836
    %v2838 = vsub.f32 1.0, %v2837
    %v2839 = vmul.f32 %v2836, %v2838
    %v2840 = vadd.f32 %v2836, %v2839
    %vm2841 = vweird.f32 %v2790
    %vm2842 = vweird.f32 %v2836
    %vm2843 = vmor %vm2841, %vm2842
    %v2844 = vsel %vm2843, %v2836, %v2840
    %v2845 = vand.u32 2147483647, %v2790
    %vm2846 = vcmp.eq.f32.partialorder %v2845, 8.507059e+37
    %v2847 = vand.u32 %v2790, 2147483648
    %v2848 = vor.u32 1.1754944e-38, %v2847
    %v2849 = vsel %vm2846, %v2848, %v2844
    %v2850 = vmul.f32 %v2778, %v2849
    %2851 = vrot.lane.b32.xlu0 %v1893, 40
    %v2852 = vpop.permute.xlu0 %2851
    %2853 = vrot.lane.b32.xlu0 %v1896, 40
    %v2854 = vpop.permute.xlu0 %2853
    %2855 = vrot.lane.b32.xlu0 %v1899, 40
    %v2856 = vpop.permute.xlu0 %2855
    %2857 = vrot.lane.b32.xlu0 %v1902, 40
    %v2858 = vpop.permute.xlu0 %2857
    %v2864 = vsel %vm283, %v2805, 0
    %v2867 = vsel %vm283, %v2820, 0
    %v2870 = vsel %vm283, %v2835, 0
    %v2873 = vsel %vm283, %v2850, 0
    %2875 = vmatpush.msra.mxu0 0.0
    %2876 = vmatpush.msra.mxu0 0.0
    %2877 = vmatpush.msra.mxu0 0.0
    %2878 = vmatpush.msra.mxu0 0.0
    %2879 = vmatpush.msra.mxu0 0.0
    %2880 = vmatpush.msra.mxu0 0.0
    %2881 = vmatpush.msra.mxu0 0.0
    %2882 = vmatpush.msra.mxu0 0.0
    %2883 = vmatpush.msra.mxu0 0.0
    %2884 = vmatpush.msra.mxu0 0.0
    %2885 = vmatpush.msra.mxu0 0.0
    %2886 = vmatpush.msra.mxu0 0.0
    %2887 = vmatpush.msra.mxu0 %v2858
    %2888 = vmatpush.msra.mxu0 %v2856
    %2889 = vmatpush.msra.mxu0 %v2854
    %2890 = vmatpush.msra.mxu0 %v2852
    %2891 = vmatmul.f32.gmra.mxu0 %v2864
    %v2892 = vpop.f32.mrf.mxu0
    %v2893 = vadd.f32 0.0, %v2892
    %2894 = vmatmul.f32.gmra.mxu0 %v2867
    %v2895 = vpop.f32.mrf.mxu0
    %v2896 = vadd.f32 0.0, %v2895
    %2897 = vmatmul.f32.gmra.mxu0 %v2870
    %v2898 = vpop.f32.mrf.mxu0
    %v2899 = vadd.f32 0.0, %v2898
    %2900 = vmatmul.f32.gmra.mxu0 %v2873
    %v2901 = vpop.f32.mrf.mxu0
    %v2902 = vadd.f32 0.0, %v2901
    %2903 = vdwg.mxu0
    %v2905 = vsel %vm462, %v2893, 0
    %v2908 = vsel %vm462, %v2896, 0
    %v2911 = vsel %vm462, %v2899, 0
    %v2914 = vsel %vm462, %v2902, 0
    %2916 = vmatpush.msra.mxu0 0.0
    %2917 = vmatpush.msra.mxu0 0.0
    %2918 = vmatpush.msra.mxu0 0.0
    %2919 = vmatpush.msra.mxu0 0.0
    %2920 = vmatpush.msra.mxu0 0.0
    %2921 = vmatpush.msra.mxu0 0.0
    %2922 = vmatpush.msra.mxu0 0.0
    %2923 = vmatpush.msra.mxu0 0.0
    %2924 = vmatpush.msra.mxu0 0.0
    %2925 = vmatpush.msra.mxu0 0.0
    %2926 = vmatpush.msra.mxu0 0.0
    %2927 = vmatpush.msra.mxu0 0.0
    %2928 = vmatpush.msra.mxu0 0.0
    %2929 = vmatpush.msra.mxu0 0.0
    %2930 = vmatpush.msra.mxu0 0.0
    %2931 = vmatpush.msra.mxu0 %v1908
    %2932 = vmatmul.f32.gmra.mxu0 %v2905
    %v2933 = vpop.f32.mrf.mxu0
    %v2934 = vadd.f32 0.0, %v2933
    %2935 = vmatmul.f32.gmra.mxu0 %v2908
    %v2936 = vpop.f32.mrf.mxu0
    %v2937 = vadd.f32 0.0, %v2936
    %2938 = vmatmul.f32.gmra.mxu0 %v2911
    %v2939 = vpop.f32.mrf.mxu0
    %v2940 = vadd.f32 0.0, %v2939
    %2941 = vmatmul.f32.gmra.mxu0 %v2914
    %v2942 = vpop.f32.mrf.mxu0
    %v2943 = vadd.f32 0.0, %v2942
    %2944 = vdwg.mxu0
    %v2945 = vadd.f32 %v2682, %v2934
    %v2946 = vadd.f32 %v2683, %v2937
    %v2947 = vadd.f32 %v2684, %v2940
    %v2948 = vadd.f32 %v2685, %v2943
    %v2949 = vadd.f32 %v1849, %v2945
    %v2950 = vadd.f32 %v1850, %v2946
    %v2951 = vadd.f32 %v1851, %v2947
    %v2952 = vadd.f32 %v1852, %v2948
    %s2953 = scalar_lea.vmem %s23, 1
    %v2954 = vld [vmem:[%s2953] sm:$0x1]
    %v2956 = vperm.slane %v2954, 0
    %v2958 = vadd.f32 %v2949, %v2956
    %v2959 = vadd.f32 %v2950, %v2956
    %v2960 = vadd.f32 %v2951, %v2956
    %v2961 = vadd.f32 %v2952, %v2956
    %s2962 = scalar_lea.vmem %s25, 1
    %v2963 = vld [vmem:[%s2962] sm:$0x1]
    %s2964 = scalar_lea.vmem %s27, 1
    %v2965 = vld [vmem:[%s2964] sm:$0x1]
    %v2966 = vsel %vm283, %v2958, 0.0
    %2967 = vadd.xlane.f32.xlu0 %v2966
    %v2968 = vpop.xlane.xlu0 %2967
    %v2969 = vsel %vm283, %v2959, 0.0
    %2970 = vadd.xlane.f32.xlu0 %v2969
    %v2971 = vpop.xlane.xlu0 %2970
    %v2972 = vsel %vm283, %v2960, 0.0
    %2973 = vadd.xlane.f32.xlu0 %v2972
    %v2974 = vpop.xlane.xlu0 %2973
    %v2975 = vsel %vm283, %v2961, 0.0
    %2976 = vadd.xlane.f32.xlu0 %v2975
    %v2977 = vpop.xlane.xlu0 %2976
    %v2978 = vmul.f32 %v2968, %v302
    %v2979 = vmul.f32 %v2971, %v302
    %v2980 = vmul.f32 %v2974, %v302
    %v2981 = vmul.f32 %v2977, %v302
    %v2982 = vsub.f32 %v2958, %v2978
    %v2983 = vsub.f32 %v2959, %v2979
    %v2984 = vsub.f32 %v2960, %v2980
    %v2985 = vsub.f32 %v2961, %v2981
    %v2986 = vmul.f32 %v2982, %v2982
    %v2987 = vmul.f32 %v2983, %v2983
    %v2988 = vmul.f32 %v2984, %v2984
    %v2989 = vmul.f32 %v2985, %v2985
    %v2990 = vsel %vm283, %v2986, 0.0
    %2991 = vadd.xlane.f32.xlu0 %v2990
    %v2992 = vpop.xlane.xlu0 %2991
    %v2993 = vsel %vm283, %v2987, 0.0
    %2994 = vadd.xlane.f32.xlu0 %v2993
    %v2995 = vpop.xlane.xlu0 %2994
    %v2996 = vsel %vm283, %v2988, 0.0
    %2997 = vadd.xlane.f32.xlu0 %v2996
    %v2998 = vpop.xlane.xlu0 %2997
    %v2999 = vsel %vm283, %v2989, 0.0
    %3000 = vadd.xlane.f32.xlu0 %v2999
    %v3001 = vpop.xlane.xlu0 %3000
    %v3002 = vmul.f32 %v2992, %v302
    %v3003 = vmul.f32 %v2995, %v302
    %v3004 = vmul.f32 %v2998, %v302
    %v3005 = vmul.f32 %v3001, %v302
    %v3006 = vadd.f32 %v3002, 1e-12
    %v3007 = vadd.f32 %v3003, 1e-12
    %v3008 = vadd.f32 %v3004, 1e-12
    %v3009 = vadd.f32 %v3005, 1e-12
    %v3010 = vrsqrt.pop %v3006
    %v3011 = vmul.f32 %v3010, %v3006
    %v3012 = vmul.f32 %v3011, %v3010
    %v3013 = vmul.f32 0.5, %v3012
    %v3014 = vsub.f32 1.5, %v3013
    %v3015 = vmul.f32 %v3010, %v3014
    %vm3016 = vweird.f32 %v3006
    %vm3017 = vweird.f32 %v3010
    %vm3018 = vmor %vm3016, %vm3017
    %v3019 = vsel %vm3018, %v3010, %v3015
    %v3020 = vrsqrt.pop %v3007
    %v3021 = vmul.f32 %v3020, %v3007
    %v3022 = vmul.f32 %v3021, %v3020
    %v3023 = vmul.f32 0.5, %v3022
    %v3024 = vsub.f32 1.5, %v3023
    %v3025 = vmul.f32 %v3020, %v3024
    %vm3026 = vweird.f32 %v3007
    %vm3027 = vweird.f32 %v3020
    %vm3028 = vmor %vm3026, %vm3027
    %v3029 = vsel %vm3028, %v3020, %v3025
    %v3030 = vrsqrt.pop %v3008
    %v3031 = vmul.f32 %v3030, %v3008
    %v3032 = vmul.f32 %v3031, %v3030
    %v3033 = vmul.f32 0.5, %v3032
    %v3034 = vsub.f32 1.5, %v3033
    %v3035 = vmul.f32 %v3030, %v3034
    %vm3036 = vweird.f32 %v3008
    %vm3037 = vweird.f32 %v3030
    %vm3038 = vmor %vm3036, %vm3037
    %v3039 = vsel %vm3038, %v3030, %v3035
    %v3040 = vrsqrt.pop %v3009
    %v3041 = vmul.f32 %v3040, %v3009
    %v3042 = vmul.f32 %v3041, %v3040
    %v3043 = vmul.f32 0.5, %v3042
    %v3044 = vsub.f32 1.5, %v3043
    %v3045 = vmul.f32 %v3040, %v3044
    %vm3046 = vweird.f32 %v3009
    %vm3047 = vweird.f32 %v3040
    %vm3048 = vmor %vm3046, %vm3047
    %v3049 = vsel %vm3048, %v3040, %v3045
    %v3050 = vmul.f32 %v2982, %v3019
    %v3051 = vmul.f32 %v2983, %v3029
    %v3052 = vmul.f32 %v2984, %v3039
    %v3053 = vmul.f32 %v2985, %v3049
    %v3055 = vperm.slane %v2963, 0
    %v3057 = vmul.f32 %v3050, %v3055
    %v3058 = vmul.f32 %v3051, %v3055
    %v3059 = vmul.f32 %v3052, %v3055
    %v3060 = vmul.f32 %v3053, %v3055
    %v3062 = vperm.slane %v2965, 0
    %v3064 = vadd.f32 %v3057, %v3062
    %v3065 = vadd.f32 %v3058, %v3062
    %v3066 = vadd.f32 %v3059, %v3062
    %v3067 = vadd.f32 %v3060, %v3062
    %s3068 = scalar_lea.vmem %s29, 32
    %v3069 = vld [vmem:[%s3068] sm:$0xff]
    %v3070 = vld [vmem:[%s3068 + $0x8] sm:$0xff]
    %v3071 = vld [vmem:[%s3068 + $0x10] sm:$0xff]
    %v3072 = vld [vmem:[%s3068 + $0x18] sm:$0xff]
    %s3073 = scalar_lea.vmem %s31, 1
    %v3074 = vld [vmem:[%s3073] sm:$0x1]
    %v3076 = vperm.slane %v3074, 0
    %v3079 = vsel %vm283, %v3064, 0
    %v3082 = vsel %vm283, %v3065, 0
    %v3085 = vsel %vm283, %v3066, 0
    %v3088 = vsel %vm283, %v3067, 0
    %3090 = vmatpush.msra.mxu0 0.0
    %3091 = vmatpush.msra.mxu0 0.0
    %3092 = vmatpush.msra.mxu0 0.0
    %3093 = vmatpush.msra.mxu0 0.0
    %3094 = vmatpush.msra.mxu0 0.0
    %3095 = vmatpush.msra.mxu0 0.0
    %3096 = vmatpush.msra.mxu0 0.0
    %3097 = vmatpush.msra.mxu0 0.0
    %3098 = vmatpush.msra.mxu0 0.0
    %3099 = vmatpush.msra.mxu0 0.0
    %3100 = vmatpush.msra.mxu0 0.0
    %3101 = vmatpush.msra.mxu0 0.0
    %3102 = vmatpush.msra.mxu0 %v3072
    %3103 = vmatpush.msra.mxu0 %v3071
    %3104 = vmatpush.msra.mxu0 %v3070
    %3105 = vmatpush.msra.mxu0 %v3069
    %3106 = vmatmul.f32.gmra.mxu0 %v3079
    %v3107 = vpop.f32.mrf.mxu0
    %v3108 = vadd.f32 %v3076, %v3107
    %3109 = vmatmul.f32.gmra.mxu0 %v3082
    %v3110 = vpop.f32.mrf.mxu0
    %v3111 = vadd.f32 %v3076, %v3110
    %3112 = vmatmul.f32.gmra.mxu0 %v3085
    %v3113 = vpop.f32.mrf.mxu0
    %v3114 = vadd.f32 %v3076, %v3113
    %3115 = vmatmul.f32.gmra.mxu0 %v3088
    %v3116 = vpop.f32.mrf.mxu0
    %v3117 = vadd.f32 %v3076, %v3116
    %3118 = vdwg.mxu0
    %v3119 = vmul.f32 %v3108, %v3108
    %v3120 = vmul.f32 %v3111, %v3111
    %v3121 = vmul.f32 %v3114, %v3114
    %v3122 = vmul.f32 %v3117, %v3117
    %v3123 = vmul.f32 %v3108, %v3119
    %v3124 = vmul.f32 %v3111, %v3120
    %v3125 = vmul.f32 %v3114, %v3121
    %v3126 = vmul.f32 %v3117, %v3122
    %v3127 = vmul.f32 %v3123, 0.044715
    %v3128 = vmul.f32 %v3124, 0.044715
    %v3129 = vmul.f32 %v3125, 0.044715
    %v3130 = vmul.f32 %v3126, 0.044715
    %v3131 = vadd.f32 %v3108, %v3127
    %v3132 = vadd.f32 %v3111, %v3128
    %v3133 = vadd.f32 %v3114, %v3129
    %v3134 = vadd.f32 %v3117, %v3130
    %v3135 = vmul.f32 %v3131, 0.7978846
    %v3136 = vmul.f32 %v3132, 0.7978846
    %v3137 = vmul.f32 %v3133, 0.7978846
    %v3138 = vmul.f32 %v3134, 0.7978846
    %v3139 = vtanh.pop %v3135
    %v3140 = vtanh.pop %v3136
    %v3141 = vtanh.pop %v3137
    %v3142 = vtanh.pop %v3138
    %v3143 = vadd.f32 %v3139, 1.0
    %v3144 = vadd.f32 %v3140, 1.0
    %v3145 = vadd.f32 %v3141, 1.0
    %v3146 = vadd.f32 %v3142, 1.0
    %v3147 = vmul.f32 %v3143, 0.5
    %v3148 = vmul.f32 %v3144, 0.5
    %v3149 = vmul.f32 %v3145, 0.5
    %v3150 = vmul.f32 %v3146, 0.5
    %v3151 = vmul.f32 %v3108, %v3147
    %v3152 = vmul.f32 %v3111, %v3148
    %v3153 = vmul.f32 %v3114, %v3149
    %v3154 = vmul.f32 %v3117, %v3150
    %s3155 = scalar_lea.vmem %s33, 64
    %v3156 = vld [vmem:[%s3155] sm:$0xff]
    %v3157 = vld [vmem:[%s3155 + $0x8] sm:$0xff]
    %v3158 = vld [vmem:[%s3155 + $0x10] sm:$0xff]
    %v3159 = vld [vmem:[%s3155 + $0x18] sm:$0xff]
    %v3160 = vld [vmem:[%s3155 + $0x20] sm:$0xff]
    %v3161 = vld [vmem:[%s3155 + $0x28] sm:$0xff]
    %v3162 = vld [vmem:[%s3155 + $0x30] sm:$0xff]
    %v3163 = vld [vmem:[%s3155 + $0x38] sm:$0xff]
    %s3164 = scalar_lea.vmem %s35, 1
    %v3165 = vld [vmem:[%s3164] sm:$0x1]
    %v3167 = vperm.slane %v3165, 0
    %v3170 = vsel %vm231, %v3151, 0
    %v3173 = vsel %vm231, %v3152, 0
    %v3176 = vsel %vm231, %v3153, 0
    %v3179 = vsel %vm231, %v3154, 0
    %3181 = vmatpush.msra.mxu0 0.0
    %3182 = vmatpush.msra.mxu0 0.0
    %3183 = vmatpush.msra.mxu0 0.0
    %3184 = vmatpush.msra.mxu0 0.0
    %3185 = vmatpush.msra.mxu0 0.0
    %3186 = vmatpush.msra.mxu0 0.0
    %3187 = vmatpush.msra.mxu0 0.0
    %3188 = vmatpush.msra.mxu0 0.0
    %3189 = vmatpush.msra.mxu0 %v3163
    %3190 = vmatpush.msra.mxu0 %v3162
    %3191 = vmatpush.msra.mxu0 %v3161
    %3192 = vmatpush.msra.mxu0 %v3160
    %3193 = vmatpush.msra.mxu0 %v3159
    %3194 = vmatpush.msra.mxu0 %v3158
    %3195 = vmatpush.msra.mxu0 %v3157
    %3196 = vmatpush.msra.mxu0 %v3156
    %3197 = vmatmul.f32.gmra.mxu0 %v3170
    %v3198 = vpop.f32.mrf.mxu0
    %v3199 = vadd.f32 %v3167, %v3198
    %3200 = vmatmul.f32.gmra.mxu0 %v3173
    %v3201 = vpop.f32.mrf.mxu0
    %v3202 = vadd.f32 %v3167, %v3201
    %3203 = vmatmul.f32.gmra.mxu0 %v3176
    %v3204 = vpop.f32.mrf.mxu0
    %v3205 = vadd.f32 %v3167, %v3204
    %3206 = vmatmul.f32.gmra.mxu0 %v3179
    %v3207 = vpop.f32.mrf.mxu0
    %v3208 = vadd.f32 %v3167, %v3207
    %3209 = vdwg.mxu0
    %v3210 = vadd.f32 %v3064, %v3199
    %v3211 = vadd.f32 %v3065, %v3202
    %v3212 = vadd.f32 %v3066, %v3205
    %v3213 = vadd.f32 %v3067, %v3208
    %s3214 = scalar_lea.vmem %s37, 1
    %v3215 = vld [vmem:[%s3214] sm:$0x1]
    %s3216 = scalar_lea.vmem %s39, 1
    %v3217 = vld [vmem:[%s3216] sm:$0x1]
    %v3218 = vsel %vm283, %v3210, 0.0
    %3219 = vadd.xlane.f32.xlu0 %v3218
    %v3220 = vpop.xlane.xlu0 %3219
    %v3221 = vsel %vm283, %v3211, 0.0
    %3222 = vadd.xlane.f32.xlu0 %v3221
    %v3223 = vpop.xlane.xlu0 %3222
    %v3224 = vsel %vm283, %v3212, 0.0
    %3225 = vadd.xlane.f32.xlu0 %v3224
    %v3226 = vpop.xlane.xlu0 %3225
    %v3227 = vsel %vm283, %v3213, 0.0
    %3228 = vadd.xlane.f32.xlu0 %v3227
    %v3229 = vpop.xlane.xlu0 %3228
    %v3230 = vmul.f32 %v3220, %v302
    %v3231 = vmul.f32 %v3223, %v302
    %v3232 = vmul.f32 %v3226, %v302
    %v3233 = vmul.f32 %v3229, %v302
    %v3234 = vsub.f32 %v3210, %v3230
    %v3235 = vsub.f32 %v3211, %v3231
    %v3236 = vsub.f32 %v3212, %v3232
    %v3237 = vsub.f32 %v3213, %v3233
    %v3238 = vmul.f32 %v3234, %v3234
    %v3239 = vmul.f32 %v3235, %v3235
    %v3240 = vmul.f32 %v3236, %v3236
    %v3241 = vmul.f32 %v3237, %v3237
    %v3242 = vsel %vm283, %v3238, 0.0
    %3243 = vadd.xlane.f32.xlu0 %v3242
    %v3244 = vpop.xlane.xlu0 %3243
    %v3245 = vsel %vm283, %v3239, 0.0
    %3246 = vadd.xlane.f32.xlu0 %v3245
    %v3247 = vpop.xlane.xlu0 %3246
    %v3248 = vsel %vm283, %v3240, 0.0
    %3249 = vadd.xlane.f32.xlu0 %v3248
    %v3250 = vpop.xlane.xlu0 %3249
    %v3251 = vsel %vm283, %v3241, 0.0
    %3252 = vadd.xlane.f32.xlu0 %v3251
    %v3253 = vpop.xlane.xlu0 %3252
    %v3254 = vmul.f32 %v3244, %v302
    %v3255 = vmul.f32 %v3247, %v302
    %v3256 = vmul.f32 %v3250, %v302
    %v3257 = vmul.f32 %v3253, %v302
    %v3258 = vadd.f32 %v3254, 1e-12
    %v3259 = vadd.f32 %v3255, 1e-12
    %v3260 = vadd.f32 %v3256, 1e-12
    %v3261 = vadd.f32 %v3257, 1e-12
    %v3262 = vrsqrt.pop %v3258
    %v3263 = vmul.f32 %v3262, %v3258
    %v3264 = vmul.f32 %v3263, %v3262
    %v3265 = vmul.f32 0.5, %v3264
    %v3266 = vsub.f32 1.5, %v3265
    %v3267 = vmul.f32 %v3262, %v3266
    %vm3268 = vweird.f32 %v3258
    %vm3269 = vweird.f32 %v3262
    %vm3270 = vmor %vm3268, %vm3269
    %v3271 = vsel %vm3270, %v3262, %v3267
    %v3272 = vrsqrt.pop %v3259
    %v3273 = vmul.f32 %v3272, %v3259
    %v3274 = vmul.f32 %v3273, %v3272
    %v3275 = vmul.f32 0.5, %v3274
    %v3276 = vsub.f32 1.5, %v3275
    %v3277 = vmul.f32 %v3272, %v3276
    %vm3278 = vweird.f32 %v3259
    %vm3279 = vweird.f32 %v3272
    %vm3280 = vmor %vm3278, %vm3279
    %v3281 = vsel %vm3280, %v3272, %v3277
    %v3282 = vrsqrt.pop %v3260
    %v3283 = vmul.f32 %v3282, %v3260
    %v3284 = vmul.f32 %v3283, %v3282
    %v3285 = vmul.f32 0.5, %v3284
    %v3286 = vsub.f32 1.5, %v3285
    %v3287 = vmul.f32 %v3282, %v3286
    %vm3288 = vweird.f32 %v3260
    %vm3289 = vweird.f32 %v3282
    %vm3290 = vmor %vm3288, %vm3289
    %v3291 = vsel %vm3290, %v3282, %v3287
    %v3292 = vrsqrt.pop %v3261
    %v3293 = vmul.f32 %v3292, %v3261
    %v3294 = vmul.f32 %v3293, %v3292
    %v3295 = vmul.f32 0.5, %v3294
    %v3296 = vsub.f32 1.5, %v3295
    %v3297 = vmul.f32 %v3292, %v3296
    %vm3298 = vweird.f32 %v3261
    %vm3299 = vweird.f32 %v3292
    %vm3300 = vmor %vm3298, %vm3299
    %v3301 = vsel %vm3300, %v3292, %v3297
    %v3302 = vmul.f32 %v3234, %v3271
    %v3303 = vmul.f32 %v3235, %v3281
    %v3304 = vmul.f32 %v3236, %v3291
    %v3305 = vmul.f32 %v3237, %v3301
    %v3307 = vperm.slane %v3215, 0
    %v3309 = vmul.f32 %v3302, %v3307
    %v3310 = vmul.f32 %v3303, %v3307
    %v3311 = vmul.f32 %v3304, %v3307
    %v3312 = vmul.f32 %v3305, %v3307
    %v3314 = vperm.slane %v3217, 0
    %v3316 = vadd.f32 %v3309, %v3314
    %v3317 = vadd.f32 %v3310, %v3314
    %v3318 = vadd.f32 %v3311, %v3314
    %v3319 = vadd.f32 %v3312, %v3314
    %v3320 = vld [vmem:[%s41] sm:$0xff]
    %v3321 = vld [vmem:[%s41 + $0x8] sm:$0xff]
    %v3322 = vld [vmem:[%s41 + $0x10] sm:$0xff]
    %v3323 = vld [vmem:[%s41 + $0x18] sm:$0xff]
    %v3325 = vsel %vm283, %v3316, 0
    %v3328 = vsel %vm283, %v3317, 0
    %v3331 = vsel %vm283, %v3318, 0
    %v3334 = vsel %vm283, %v3319, 0
    %3336 = vmatpush.msra.mxu0 0.0
    %3337 = vmatpush.msra.mxu0 0.0
    %3338 = vmatpush.msra.mxu0 0.0
    %3339 = vmatpush.msra.mxu0 0.0
    %3340 = vmatpush.msra.mxu0 0.0
    %3341 = vmatpush.msra.mxu0 0.0
    %3342 = vmatpush.msra.mxu0 0.0
    %3343 = vmatpush.msra.mxu0 0.0
    %3344 = vmatpush.msra.mxu0 0.0
    %3345 = vmatpush.msra.mxu0 0.0
    %3346 = vmatpush.msra.mxu0 0.0
    %3347 = vmatpush.msra.mxu0 0.0
    %3348 = vmatpush.msra.mxu0 %v3323
    %3349 = vmatpush.msra.mxu0 %v3322
    %3350 = vmatpush.msra.mxu0 %v3321
    %3351 = vmatpush.msra.mxu0 %v3320
    %3352 = vmatmul.f32.gmra.mxu0 %v3325
    %v3353 = vpop.f32.mrf.mxu0
    %v3354 = vadd.f32 0.0, %v3353
    %3355 = vmatmul.f32.gmra.mxu0 %v3328
    %v3356 = vpop.f32.mrf.mxu0
    %v3357 = vadd.f32 0.0, %v3356
    %3358 = vmatmul.f32.gmra.mxu0 %v3331
    %v3359 = vpop.f32.mrf.mxu0
    %v3360 = vadd.f32 0.0, %v3359
    %3361 = vmatmul.f32.gmra.mxu0 %v3334
    %v3362 = vpop.f32.mrf.mxu0
    %v3363 = vadd.f32 0.0, %v3362
    %3364 = vdwg.mxu0
    %v3365 = vtanh.pop %v3354
    %v3366 = vtanh.pop %v3357
    %v3367 = vtanh.pop %v3360
    %v3368 = vtanh.pop %v3363
    %v3369 = vld [vmem:[%s43] sm:$0xff]
    %v3371 = vsel %vm283, %v3369, 0
    %v3374 = vsel %vm283, %v3365, 0
    %v3377 = vsel %vm283, %v3366, 0
    %3379 = vmatpush.xpose.msra.mxu0 0.0
    %3380 = vmatpush.xpose.msra.mxu0 0.0
    %3381 = vmatpush.xpose.msra.mxu0 0.0
    %3382 = vmatpush.xpose.msra.mxu0 0.0
    %3383 = vmatpush.xpose.msra.mxu0 0.0
    %3384 = vmatpush.xpose.msra.mxu0 0.0
    %3385 = vmatpush.xpose.msra.mxu0 0.0
    %3386 = vmatpush.xpose.msra.mxu0 0.0
    %3387 = vmatpush.xpose.msra.mxu0 0.0
    %3388 = vmatpush.xpose.msra.mxu0 0.0
    %3389 = vmatpush.xpose.msra.mxu0 0.0
    %3390 = vmatpush.xpose.msra.mxu0 0.0
    %3391 = vmatpush.xpose.msra.mxu0 0.0
    %3392 = vmatpush.xpose.msra.mxu0 0.0
    %3393 = vmatpush.xpose.msra.mxu0 %v3377
    %3394 = vmatpush.xpose.msra.mxu0 %v3374
    %3395 = vmatmul.f32.gmra.mxu0 %v3371
    %v3396 = vpop.f32.mrf.mxu0
    %v3397 = vadd.f32 0.0, %v3396
    %3398 = vdwg.mxu0
    %vm3399 = vcmask 130048
    %v3400 = vsel %vm3399, %v3397, -inf
    %3401 = vmax.xlane.f32.xlu0 %v3400
    %v3402 = vpop.xlane.xlu0 %3401
    %v3403 = vsub.f32 %v3397, %v3402
    %v3404 = vmul.f32 %v3403, 1.442695
    %v3405 = vpow.pop %v3404
    %v3406 = vsel %vm3399, %v3405, 0.0
    %3407 = vadd.xlane.f32.xlu0 %v3406
    %v3408 = vpop.xlane.xlu0 %3407
    %v3409 = vrcp.pop %v3408
    %v3410 = vmul.f32 %v3408, %v3409
    %v3411 = vsub.f32 1.0, %v3410
    %v3412 = vmul.f32 %v3409, %v3411
    %v3413 = vadd.f32 %v3409, %v3412
    %vm3414 = vweird.f32 %v3408
    %vm3415 = vweird.f32 %v3409
    %vm3416 = vmor %vm3414, %vm3415
    %v3417 = vsel %vm3416, %v3409, %v3413
    %v3418 = vand.u32 2147483647, %v3408
    %vm3419 = vcmp.eq.f32.partialorder %v3418, 8.507059e+37
    %v3420 = vand.u32 %v3408, 2147483648
    %v3421 = vor.u32 1.1754944e-38, %v3420
    %v3422 = vsel %vm3419, %v3421, %v3417
    %v3423 = vmul.f32 %v3405, %v3422
    %v3425 = vsel %vm3399, %v3423, 0
    %3427 = vmatpush.msra.mxu0 0.0
    %3428 = vmatpush.msra.mxu0 0.0
    %3429 = vmatpush.msra.mxu0 0.0
    %3430 = vmatpush.msra.mxu0 0.0
    %3431 = vmatpush.msra.mxu0 0.0
    %3432 = vmatpush.msra.mxu0 0.0
    %3433 = vmatpush.msra.mxu0 0.0
    %3434 = vmatpush.msra.mxu0 0.0
    %3435 = vmatpush.msra.mxu0 0.0
    %3436 = vmatpush.msra.mxu0 0.0
    %3437 = vmatpush.msra.mxu0 0.0
    %3438 = vmatpush.msra.mxu0 0.0
    %3439 = vmatpush.msra.mxu0 0.0
    %3440 = vmatpush.msra.mxu0 0.0
    %3441 = vmatpush.msra.mxu0 %v265
    %3442 = vmatpush.msra.mxu0 %v262
    %3443 = vmatmul.f32.gmra.mxu0 %v3425
    %v3444 = vpop.f32.mrf.mxu0
    %v3445 = vadd.f32 0.0, %v3444
    %3446 = vdwg.mxu0
    %3447 = vst.msk [vmem:[#allocation2] sm:$0xff] %vm283, %v3445
    %v3449 = vsel %vm283, %v3367, 0
    %v3452 = vsel %vm283, %v3368, 0
    %3454 = vmatpush.xpose.msra.mxu0 0.0
    %3455 = vmatpush.xpose.msra.mxu0 0.0
    %3456 = vmatpush.xpose.msra.mxu0 0.0
    %3457 = vmatpush.xpose.msra.mxu0 0.0
    %3458 = vmatpush.xpose.msra.mxu0 0.0
    %3459 = vmatpush.xpose.msra.mxu0 0.0
    %3460 = vmatpush.xpose.msra.mxu0 0.0
    %3461 = vmatpush.xpose.msra.mxu0 0.0
    %3462 = vmatpush.xpose.msra.mxu0 0.0
    %3463 = vmatpush.xpose.msra.mxu0 0.0
    %3464 = vmatpush.xpose.msra.mxu0 0.0
    %3465 = vmatpush.xpose.msra.mxu0 0.0
    %3466 = vmatpush.xpose.msra.mxu0 0.0
    %3467 = vmatpush.xpose.msra.mxu0 0.0
    %3468 = vmatpush.xpose.msra.mxu0 %v3452
    %3469 = vmatpush.xpose.msra.mxu0 %v3449
    %3470 = vmatmul.f32.gmra.mxu0 %v3371
    %v3471 = vpop.f32.mrf.mxu0
    %v3472 = vadd.f32 0.0, %v3471
    %3473 = vdwg.mxu0
    %v3474 = vsel %vm3399, %v3472, -inf
    %3475 = vmax.xlane.f32.xlu0 %v3474
    %v3476 = vpop.xlane.xlu0 %3475
    %v3477 = vsub.f32 %v3472, %v3476
    %v3478 = vmul.f32 %v3477, 1.442695
    %v3479 = vpow.pop %v3478
    %v3480 = vsel %vm3399, %v3479, 0.0
    %3481 = vadd.xlane.f32.xlu0 %v3480
    %v3482 = vpop.xlane.xlu0 %3481
    %v3483 = vrcp.pop %v3482
    %v3484 = vmul.f32 %v3482, %v3483
    %v3485 = vsub.f32 1.0, %v3484
    %v3486 = vmul.f32 %v3483, %v3485
    %v3487 = vadd.f32 %v3483, %v3486
    %vm3488 = vweird.f32 %v3482
    %vm3489 = vweird.f32 %v3483
    %vm3490 = vmor %vm3488, %vm3489
    %v3491 = vsel %vm3490, %v3483, %v3487
    %v3492 = vand.u32 2147483647, %v3482
    %vm3493 = vcmp.eq.f32.partialorder %v3492, 8.507059e+37
    %v3494 = vand.u32 %v3482, 2147483648
    %v3495 = vor.u32 1.1754944e-38, %v3494
    %v3496 = vsel %vm3493, %v3495, %v3491
    %v3497 = vmul.f32 %v3479, %v3496
    %v3499 = vsel %vm3399, %v3497, 0
    %3501 = vmatpush.msra.mxu0 0.0
    %3502 = vmatpush.msra.mxu0 0.0
    %3503 = vmatpush.msra.mxu0 0.0
    %3504 = vmatpush.msra.mxu0 0.0
    %3505 = vmatpush.msra.mxu0 0.0
    %3506 = vmatpush.msra.mxu0 0.0
    %3507 = vmatpush.msra.mxu0 0.0
    %3508 = vmatpush.msra.mxu0 0.0
    %3509 = vmatpush.msra.mxu0 0.0
    %3510 = vmatpush.msra.mxu0 0.0
    %3511 = vmatpush.msra.mxu0 0.0
    %3512 = vmatpush.msra.mxu0 0.0
    %3513 = vmatpush.msra.mxu0 0.0
    %3514 = vmatpush.msra.mxu0 0.0
    %3515 = vmatpush.msra.mxu0 %v271
    %3516 = vmatpush.msra.mxu0 %v268
    %3517 = vmatmul.f32.gmra.mxu0 %v3499
    %v3518 = vpop.f32.mrf.mxu0
    %v3519 = vadd.f32 0.0, %v3518
    %3520 = vdwg.mxu0
    %3521 = vst.msk [vmem:[#allocation2 + $0x8] sm:$0xff] %vm283, %v3519
    %v3522 = vld [vmem:[#allocation2] sm:$0xff]
    %v3523 = vld [vmem:[#allocation2 + $0x8] sm:$0xff]
    %v3524 = vld [vmem:[%s47] sm:$0xff]
    %v3525 = vld [vmem:[%s47 + $0x8] sm:$0xff]
    %v3526 = vadd.f32 %v3522, %v3524
    %v3527 = vadd.f32 %v3523, %v3525
    %v3528 = vld [vmem:[%s49] sm:$0x1]
    %v3529 = vld [vmem:[%s51] sm:$0x1]
    %v3530 = vsel %vm283, %v3526, 0.0
    %3531 = vadd.xlane.f32.xlu0 %v3530
    %v3532 = vpop.xlane.xlu0 %3531
    %v3533 = vsel %vm283, %v3527, 0.0
    %3534 = vadd.xlane.f32.xlu0 %v3533
    %v3535 = vpop.xlane.xlu0 %3534
    %v3536 = vmul.f32 %v3532, %v302
    %v3537 = vmul.f32 %v3535, %v302
    %v3538 = vsub.f32 %v3526, %v3536
    %v3539 = vsub.f32 %v3527, %v3537
    %v3540 = vmul.f32 %v3538, %v3538
    %v3541 = vmul.f32 %v3539, %v3539
    %v3542 = vsel %vm283, %v3540, 0.0
    %3543 = vadd.xlane.f32.xlu0 %v3542
    %v3544 = vpop.xlane.xlu0 %3543
    %v3545 = vsel %vm283, %v3541, 0.0
    %3546 = vadd.xlane.f32.xlu0 %v3545
    %v3547 = vpop.xlane.xlu0 %3546
    %v3548 = vmul.f32 %v3544, %v302
    %v3549 = vmul.f32 %v3547, %v302
    %v3550 = vadd.f32 %v3548, 1e-12
    %v3551 = vadd.f32 %v3549, 1e-12
    %v3552 = vrsqrt.pop %v3550
    %v3553 = vmul.f32 %v3552, %v3550
    %v3554 = vmul.f32 %v3553, %v3552
    %v3555 = vmul.f32 0.5, %v3554
    %v3556 = vsub.f32 1.5, %v3555
    %v3557 = vmul.f32 %v3552, %v3556
    %vm3558 = vweird.f32 %v3550
    %vm3559 = vweird.f32 %v3552
    %vm3560 = vmor %vm3558, %vm3559
    %v3561 = vsel %vm3560, %v3552, %v3557
    %v3562 = vrsqrt.pop %v3551
    %v3563 = vmul.f32 %v3562, %v3551
    %v3564 = vmul.f32 %v3563, %v3562
    %v3565 = vmul.f32 0.5, %v3564
    %v3566 = vsub.f32 1.5, %v3565
    %v3567 = vmul.f32 %v3562, %v3566
    %vm3568 = vweird.f32 %v3551
    %vm3569 = vweird.f32 %v3562
    %vm3570 = vmor %vm3568, %vm3569
    %v3571 = vsel %vm3570, %v3562, %v3567
    %v3572 = vmul.f32 %v3538, %v3561
    %v3573 = vmul.f32 %v3539, %v3571
    %v3575 = vperm.slane %v3528, 0
    %v3577 = vmul.f32 %v3572, %v3575
    %v3578 = vmul.f32 %v3573, %v3575
    %v3580 = vperm.slane %v3529, 0
    %v3582 = vadd.f32 %v3577, %v3580
    %v3583 = vadd.f32 %v3578, %v3580
    %v3584 = vld [vmem:[%s45] sm:$0xff]
    %v3585 = vld [vmem:[%s45 + $0x8] sm:$0xff]
    %v3586 = vld [vmem:[%s53] sm:$0xff]
    %v3587 = vld [vmem:[%s53 + $0x8] sm:$0xff]
    %v3588 = vld [vmem:[%s53 + $0x10] sm:$0xff]
    %v3589 = vld [vmem:[%s53 + $0x18] sm:$0xff]
    %v3590 = vld [vmem:[%s55] sm:$0x1]
    %v3592 = vperm.slane %v3590, 0
    %v3595 = vsel %vm283, %v3582, 0
    %v3598 = vsel %vm283, %v3583, 0
    %3600 = vmatpush.msra.mxu0 0.0
    %3601 = vmatpush.msra.mxu0 0.0
    %3602 = vmatpush.msra.mxu0 0.0
    %3603 = vmatpush.msra.mxu0 0.0
    %3604 = vmatpush.msra.mxu0 0.0
    %3605 = vmatpush.msra.mxu0 0.0
    %3606 = vmatpush.msra.mxu0 0.0
    %3607 = vmatpush.msra.mxu0 0.0
    %3608 = vmatpush.msra.mxu0 0.0
    %3609 = vmatpush.msra.mxu0 0.0
    %3610 = vmatpush.msra.mxu0 0.0
    %3611 = vmatpush.msra.mxu0 0.0
    %3612 = vmatpush.msra.mxu0 %v3589
    %3613 = vmatpush.msra.mxu0 %v3588
    %3614 = vmatpush.msra.mxu0 %v3587
    %3615 = vmatpush.msra.mxu0 %v3586
    %3616 = vmatmul.f32.gmra.mxu0 %v3595
    %v3617 = vpop.f32.mrf.mxu0
    %v3618 = vadd.f32 %v3592, %v3617
    %3619 = vmatmul.f32.gmra.mxu0 %v3598
    %v3620 = vpop.f32.mrf.mxu0
    %v3621 = vadd.f32 %v3592, %v3620
    %3622 = vdwg.mxu0
    %v3623 = vld [vmem:[%s57] sm:$0xff]
    %v3624 = vld [vmem:[%s57 + $0x8] sm:$0xff]
    %v3625 = vld [vmem:[%s57 + $0x10] sm:$0xff]
    %v3626 = vld [vmem:[%s57 + $0x18] sm:$0xff]
    %3629 = vrot.lane.b32.xlu0 %v3618, 96
    %v3630 = vpop.permute.xlu0 %3629
    %3631 = vrot.lane.b32.xlu0 %v3621, 96
    %v3632 = vpop.permute.xlu0 %3631
    %v3633 = vsel %vm462, %v3618, 0
    %v3635 = vsel %vm462, %v3621, 0
    %v3637 = vsel %vm462, %v3630, 0
    %v3639 = vsel %vm462, %v3632, 0
    %3641 = vmatpush.xpose.msra.mxu0 0.0
    %3642 = vmatpush.xpose.msra.mxu0 0.0
    %3643 = vmatpush.xpose.msra.mxu0 0.0
    %3644 = vmatpush.xpose.msra.mxu0 0.0
    %3645 = vmatpush.xpose.msra.mxu0 0.0
    %3646 = vmatpush.xpose.msra.mxu0 0.0
    %3647 = vmatpush.xpose.msra.mxu0 0.0
    %3648 = vmatpush.xpose.msra.mxu0 0.0
    %3649 = vmatpush.xpose.msra.mxu0 0.0
    %3650 = vmatpush.xpose.msra.mxu0 0.0
    %3651 = vmatpush.xpose.msra.mxu0 0.0
    %3652 = vmatpush.xpose.msra.mxu0 0.0
    %3653 = vmatpush.xpose.msra.mxu0 0.0
    %3654 = vmatpush.xpose.msra.mxu0 0.0
    %3655 = vmatpush.xpose.msra.mxu0 %v3639
    %3656 = vmatpush.xpose.msra.mxu0 %v3637
    %3657 = vmatmul.f32.gmra.mxu0 %v3633
    %v3658 = vpop.f32.mrf.mxu0
    %v3659 = vadd.f32 0.0, %v3658
    %3660 = vmatmul.f32.gmra.mxu0 %v3635
    %v3661 = vpop.f32.mrf.mxu0
    %v3662 = vadd.f32 0.0, %v3661
    %3663 = vdwg.mxu0
    %v3664 = vmul.f32 %v3659, 0.35355338
    %v3665 = vmul.f32 %v3662, 0.35355338
    %v3666 = vadd.f32 %v3664, %v3584
    %v3667 = vadd.f32 %v3665, %v3585
    %v3668 = vsel %vm3399, %v3666, -inf
    %3669 = vmax.xlane.f32.xlu0 %v3668
    %v3670 = vpop.xlane.xlu0 %3669
    %v3671 = vsel %vm3399, %v3667, -inf
    %3672 = vmax.xlane.f32.xlu0 %v3671
    %v3673 = vpop.xlane.xlu0 %3672
    %v3674 = vsub.f32 %v3666, %v3670
    %v3675 = vsub.f32 %v3667, %v3673
    %v3676 = vmul.f32 %v3674, 1.442695
    %v3677 = vpow.pop %v3676
    %v3678 = vmul.f32 %v3675, 1.442695
    %v3679 = vpow.pop %v3678
    %v3680 = vsel %vm3399, %v3677, 0.0
    %3681 = vadd.xlane.f32.xlu0 %v3680
    %v3682 = vpop.xlane.xlu0 %3681
    %v3683 = vsel %vm3399, %v3679, 0.0
    %3684 = vadd.xlane.f32.xlu0 %v3683
    %v3685 = vpop.xlane.xlu0 %3684
    %v3686 = vrcp.pop %v3682
    %v3687 = vmul.f32 %v3682, %v3686
    %v3688 = vsub.f32 1.0, %v3687
    %v3689 = vmul.f32 %v3686, %v3688
    %v3690 = vadd.f32 %v3686, %v3689
    %vm3691 = vweird.f32 %v3682
    %vm3692 = vweird.f32 %v3686
    %vm3693 = vmor %vm3691, %vm3692
    %v3694 = vsel %vm3693, %v3686, %v3690
    %v3695 = vand.u32 2147483647, %v3682
    %vm3696 = vcmp.eq.f32.partialorder %v3695, 8.507059e+37
    %v3697 = vand.u32 %v3682, 2147483648
    %v3698 = vor.u32 1.1754944e-38, %v3697
    %v3699 = vsel %vm3696, %v3698, %v3694
    %v3700 = vmul.f32 %v3677, %v3699
    %v3701 = vrcp.pop %v3685
    %v3702 = vmul.f32 %v3685, %v3701
    %v3703 = vsub.f32 1.0, %v3702
    %v3704 = vmul.f32 %v3701, %v3703
    %v3705 = vadd.f32 %v3701, %v3704
    %vm3706 = vweird.f32 %v3685
    %vm3707 = vweird.f32 %v3701
    %vm3708 = vmor %vm3706, %vm3707
    %v3709 = vsel %vm3708, %v3701, %v3705
    %v3710 = vand.u32 2147483647, %v3685
    %vm3711 = vcmp.eq.f32.partialorder %v3710, 8.507059e+37
    %v3712 = vand.u32 %v3685, 2147483648
    %v3713 = vor.u32 1.1754944e-38, %v3712
    %v3714 = vsel %vm3711, %v3713, %v3709
    %v3715 = vmul.f32 %v3679, %v3714
    %3716 = vrot.lane.b32.xlu0 %v3618, 64
    %v3717 = vpop.permute.xlu0 %3716
    %3718 = vrot.lane.b32.xlu0 %v3621, 64
    %v3719 = vpop.permute.xlu0 %3718
    %v3723 = vsel %vm3399, %v3700, 0
    %v3726 = vsel %vm3399, %v3715, 0
    %3728 = vmatpush.msra.mxu0 0.0
    %3729 = vmatpush.msra.mxu0 0.0
    %3730 = vmatpush.msra.mxu0 0.0
    %3731 = vmatpush.msra.mxu0 0.0
    %3732 = vmatpush.msra.mxu0 0.0
    %3733 = vmatpush.msra.mxu0 0.0
    %3734 = vmatpush.msra.mxu0 0.0
    %3735 = vmatpush.msra.mxu0 0.0
    %3736 = vmatpush.msra.mxu0 0.0
    %3737 = vmatpush.msra.mxu0 0.0
    %3738 = vmatpush.msra.mxu0 0.0
    %3739 = vmatpush.msra.mxu0 0.0
    %3740 = vmatpush.msra.mxu0 0.0
    %3741 = vmatpush.msra.mxu0 0.0
    %3742 = vmatpush.msra.mxu0 %v3719
    %3743 = vmatpush.msra.mxu0 %v3717
    %3744 = vmatmul.f32.gmra.mxu0 %v3723
    %v3745 = vpop.f32.mrf.mxu0
    %v3746 = vadd.f32 0.0, %v3745
    %3747 = vmatmul.f32.gmra.mxu0 %v3726
    %v3748 = vpop.f32.mrf.mxu0
    %v3749 = vadd.f32 0.0, %v3748
    %3750 = vdwg.mxu0
    %3751 = vrot.lane.b32.xlu0 %v3618, 120
    %v3752 = vpop.permute.xlu0 %3751
    %3753 = vrot.lane.b32.xlu0 %v3621, 120
    %v3754 = vpop.permute.xlu0 %3753
    %3755 = vrot.lane.b32.xlu0 %v3618, 88
    %v3756 = vpop.permute.xlu0 %3755
    %3757 = vrot.lane.b32.xlu0 %v3621, 88
    %v3758 = vpop.permute.xlu0 %3757
    %v3759 = vsel %vm462, %v3752, 0
    %v3761 = vsel %vm462, %v3754, 0
    %v3763 = vsel %vm462, %v3756, 0
    %v3765 = vsel %vm462, %v3758, 0
    %3767 = vmatpush.xpose.msra.mxu0 0.0
    %3768 = vmatpush.xpose.msra.mxu0 0.0
    %3769 = vmatpush.xpose.msra.mxu0 0.0
    %3770 = vmatpush.xpose.msra.mxu0 0.0
    %3771 = vmatpush.xpose.msra.mxu0 0.0
    %3772 = vmatpush.xpose.msra.mxu0 0.0
    %3773 = vmatpush.xpose.msra.mxu0 0.0
    %3774 = vmatpush.xpose.msra.mxu0 0.0
    %3775 = vmatpush.xpose.msra.mxu0 0.0
    %3776 = vmatpush.xpose.msra.mxu0 0.0
    %3777 = vmatpush.xpose.msra.mxu0 0.0
    %3778 = vmatpush.xpose.msra.mxu0 0.0
    %3779 = vmatpush.xpose.msra.mxu0 0.0
    %3780 = vmatpush.xpose.msra.mxu0 0.0
    %3781 = vmatpush.xpose.msra.mxu0 %v3765
    %3782 = vmatpush.xpose.msra.mxu0 %v3763
    %3783 = vmatmul.f32.gmra.mxu0 %v3759
    %v3784 = vpop.f32.mrf.mxu0
    %v3785 = vadd.f32 0.0, %v3784
    %3786 = vmatmul.f32.gmra.mxu0 %v3761
    %v3787 = vpop.f32.mrf.mxu0
    %v3788 = vadd.f32 0.0, %v3787
    %3789 = vdwg.mxu0
    %v3790 = vmul.f32 %v3785, 0.35355338
    %v3791 = vmul.f32 %v3788, 0.35355338
    %v3792 = vadd.f32 %v3790, %v3584
    %v3793 = vadd.f32 %v3791, %v3585
    %v3794 = vsel %vm3399, %v3792, -inf
    %3795 = vmax.xlane.f32.xlu0 %v3794
    %v3796 = vpop.xlane.xlu0 %3795
    %v3797 = vsel %vm3399, %v3793, -inf
    %3798 = vmax.xlane.f32.xlu0 %v3797
    %v3799 = vpop.xlane.xlu0 %3798
    %v3800 = vsub.f32 %v3792, %v3796
    %v3801 = vsub.f32 %v3793, %v3799
    %v3802 = vmul.f32 %v3800, 1.442695
    %v3803 = vpow.pop %v3802
    %v3804 = vmul.f32 %v3801, 1.442695
    %v3805 = vpow.pop %v3804
    %v3806 = vsel %vm3399, %v3803, 0.0
    %3807 = vadd.xlane.f32.xlu0 %v3806
    %v3808 = vpop.xlane.xlu0 %3807
    %v3809 = vsel %vm3399, %v3805, 0.0
    %3810 = vadd.xlane.f32.xlu0 %v3809
    %v3811 = vpop.xlane.xlu0 %3810
    %v3812 = vrcp.pop %v3808
    %v3813 = vmul.f32 %v3808, %v3812
    %v3814 = vsub.f32 1.0, %v3813
    %v3815 = vmul.f32 %v3812, %v3814
    %v3816 = vadd.f32 %v3812, %v3815
    %vm3817 = vweird.f32 %v3808
    %vm3818 = vweird.f32 %v3812
    %vm3819 = vmor %vm3817, %vm3818
    %v3820 = vsel %vm3819, %v3812, %v3816
    %v3821 = vand.u32 2147483647, %v3808
    %vm3822 = vcmp.eq.f32.partialorder %v3821, 8.507059e+37
    %v3823 = vand.u32 %v3808, 2147483648
    %v3824 = vor.u32 1.1754944e-38, %v3823
    %v3825 = vsel %vm3822, %v3824, %v3820
    %v3826 = vmul.f32 %v3803, %v3825
    %v3827 = vrcp.pop %v3811
    %v3828 = vmul.f32 %v3811, %v3827
    %v3829 = vsub.f32 1.0, %v3828
    %v3830 = vmul.f32 %v3827, %v3829
    %v3831 = vadd.f32 %v3827, %v3830
    %vm3832 = vweird.f32 %v3811
    %vm3833 = vweird.f32 %v3827
    %vm3834 = vmor %vm3832, %vm3833
    %v3835 = vsel %vm3834, %v3827, %v3831
    %v3836 = vand.u32 2147483647, %v3811
    %vm3837 = vcmp.eq.f32.partialorder %v3836, 8.507059e+37
    %v3838 = vand.u32 %v3811, 2147483648
    %v3839 = vor.u32 1.1754944e-38, %v3838
    %v3840 = vsel %vm3837, %v3839, %v3835
    %v3841 = vmul.f32 %v3805, %v3840
    %3842 = vrot.lane.b32.xlu0 %v3618, 56
    %v3843 = vpop.permute.xlu0 %3842
    %3844 = vrot.lane.b32.xlu0 %v3621, 56
    %v3845 = vpop.permute.xlu0 %3844
    %v3849 = vsel %vm3399, %v3826, 0
    %v3852 = vsel %vm3399, %v3841, 0
    %3854 = vmatpush.msra.mxu0 0.0
    %3855 = vmatpush.msra.mxu0 0.0
    %3856 = vmatpush.msra.mxu0 0.0
    %3857 = vmatpush.msra.mxu0 0.0
    %3858 = vmatpush.msra.mxu0 0.0
    %3859 = vmatpush.msra.mxu0 0.0
    %3860 = vmatpush.msra.mxu0 0.0
    %3861 = vmatpush.msra.mxu0 0.0
    %3862 = vmatpush.msra.mxu0 0.0
    %3863 = vmatpush.msra.mxu0 0.0
    %3864 = vmatpush.msra.mxu0 0.0
    %3865 = vmatpush.msra.mxu0 0.0
    %3866 = vmatpush.msra.mxu0 0.0
    %3867 = vmatpush.msra.mxu0 0.0
    %3868 = vmatpush.msra.mxu0 %v3845
    %3869 = vmatpush.msra.mxu0 %v3843
    %3870 = vmatmul.f32.gmra.mxu0 %v3849
    %v3871 = vpop.f32.mrf.mxu0
    %v3872 = vadd.f32 0.0, %v3871
    %3873 = vmatmul.f32.gmra.mxu0 %v3852
    %v3874 = vpop.f32.mrf.mxu0
    %v3875 = vadd.f32 0.0, %v3874
    %3876 = vdwg.mxu0
    %v3878 = vsel %vm462, %v3872, 0
    %v3881 = vsel %vm462, %v3875, 0
    %3883 = vmatpush.msra.mxu0 0.0
    %3884 = vmatpush.msra.mxu0 0.0
    %3885 = vmatpush.msra.mxu0 0.0
    %3886 = vmatpush.msra.mxu0 0.0
    %3887 = vmatpush.msra.mxu0 0.0
    %3888 = vmatpush.msra.mxu0 0.0
    %3889 = vmatpush.msra.mxu0 0.0
    %3890 = vmatpush.msra.mxu0 0.0
    %3891 = vmatpush.msra.mxu0 0.0
    %3892 = vmatpush.msra.mxu0 0.0
    %3893 = vmatpush.msra.mxu0 0.0
    %3894 = vmatpush.msra.mxu0 0.0
    %3895 = vmatpush.msra.mxu0 0.0
    %3896 = vmatpush.msra.mxu0 0.0
    %3897 = vmatpush.msra.mxu0 0.0
    %3898 = vmatpush.msra.mxu0 %v3624
    %3899 = vmatmul.f32.gmra.mxu0 %v3878
    %v3900 = vpop.f32.mrf.mxu0
    %v3901 = vadd.f32 0.0, %v3900
    %3902 = vmatmul.f32.gmra.mxu0 %v3881
    %v3903 = vpop.f32.mrf.mxu0
    %v3904 = vadd.f32 0.0, %v3903
    %3905 = vdwg.mxu0
    %v3907 = vsel %vm462, %v3746, 0
    %v3910 = vsel %vm462, %v3749, 0
    %3912 = vmatpush.msra.mxu0 0.0
    %3913 = vmatpush.msra.mxu0 0.0
    %3914 = vmatpush.msra.mxu0 0.0
    %3915 = vmatpush.msra.mxu0 0.0
    %3916 = vmatpush.msra.mxu0 0.0
    %3917 = vmatpush.msra.mxu0 0.0
    %3918 = vmatpush.msra.mxu0 0.0
    %3919 = vmatpush.msra.mxu0 0.0
    %3920 = vmatpush.msra.mxu0 0.0
    %3921 = vmatpush.msra.mxu0 0.0
    %3922 = vmatpush.msra.mxu0 0.0
    %3923 = vmatpush.msra.mxu0 0.0
    %3924 = vmatpush.msra.mxu0 0.0
    %3925 = vmatpush.msra.mxu0 0.0
    %3926 = vmatpush.msra.mxu0 0.0
    %3927 = vmatpush.msra.mxu0 %v3623
    %3928 = vmatmul.f32.gmra.mxu0 %v3907
    %v3929 = vpop.f32.mrf.mxu0
    %v3930 = vadd.f32 %v3901, %v3929
    %3931 = vmatmul.f32.gmra.mxu0 %v3910
    %v3932 = vpop.f32.mrf.mxu0
    %v3933 = vadd.f32 %v3904, %v3932
    %3934 = vdwg.mxu0
    %3935 = vrot.lane.b32.xlu0 %v3618, 112
    %v3936 = vpop.permute.xlu0 %3935
    %3937 = vrot.lane.b32.xlu0 %v3621, 112
    %v3938 = vpop.permute.xlu0 %3937
    %3939 = vrot.lane.b32.xlu0 %v3618, 80
    %v3940 = vpop.permute.xlu0 %3939
    %3941 = vrot.lane.b32.xlu0 %v3621, 80
    %v3942 = vpop.permute.xlu0 %3941
    %v3943 = vsel %vm462, %v3936, 0
    %v3945 = vsel %vm462, %v3938, 0
    %v3947 = vsel %vm462, %v3940, 0
    %v3949 = vsel %vm462, %v3942, 0
    %3951 = vmatpush.xpose.msra.mxu0 0.0
    %3952 = vmatpush.xpose.msra.mxu0 0.0
    %3953 = vmatpush.xpose.msra.mxu0 0.0
    %3954 = vmatpush.xpose.msra.mxu0 0.0
    %3955 = vmatpush.xpose.msra.mxu0 0.0
    %3956 = vmatpush.xpose.msra.mxu0 0.0
    %3957 = vmatpush.xpose.msra.mxu0 0.0
    %3958 = vmatpush.xpose.msra.mxu0 0.0
    %3959 = vmatpush.xpose.msra.mxu0 0.0
    %3960 = vmatpush.xpose.msra.mxu0 0.0
    %3961 = vmatpush.xpose.msra.mxu0 0.0
    %3962 = vmatpush.xpose.msra.mxu0 0.0
    %3963 = vmatpush.xpose.msra.mxu0 0.0
    %3964 = vmatpush.xpose.msra.mxu0 0.0
    %3965 = vmatpush.xpose.msra.mxu0 %v3949
    %3966 = vmatpush.xpose.msra.mxu0 %v3947
    %3967 = vmatmul.f32.gmra.mxu0 %v3943
    %v3968 = vpop.f32.mrf.mxu0
    %v3969 = vadd.f32 0.0, %v3968
    %3970 = vmatmul.f32.gmra.mxu0 %v3945
    %v3971 = vpop.f32.mrf.mxu0
    %v3972 = vadd.f32 0.0, %v3971
    %3973 = vdwg.mxu0
    %v3974 = vmul.f32 %v3969, 0.35355338
    %v3975 = vmul.f32 %v3972, 0.35355338
    %v3976 = vadd.f32 %v3974, %v3584
    %v3977 = vadd.f32 %v3975, %v3585
    %v3978 = vsel %vm3399, %v3976, -inf
    %3979 = vmax.xlane.f32.xlu0 %v3978
    %v3980 = vpop.xlane.xlu0 %3979
    %v3981 = vsel %vm3399, %v3977, -inf
    %3982 = vmax.xlane.f32.xlu0 %v3981
    %v3983 = vpop.xlane.xlu0 %3982
    %v3984 = vsub.f32 %v3976, %v3980
    %v3985 = vsub.f32 %v3977, %v3983
    %v3986 = vmul.f32 %v3984, 1.442695
    %v3987 = vpow.pop %v3986
    %v3988 = vmul.f32 %v3985, 1.442695
    %v3989 = vpow.pop %v3988
    %v3990 = vsel %vm3399, %v3987, 0.0
    %3991 = vadd.xlane.f32.xlu0 %v3990
    %v3992 = vpop.xlane.xlu0 %3991
    %v3993 = vsel %vm3399, %v3989, 0.0
    %3994 = vadd.xlane.f32.xlu0 %v3993
    %v3995 = vpop.xlane.xlu0 %3994
    %v3996 = vrcp.pop %v3992
    %v3997 = vmul.f32 %v3992, %v3996
    %v3998 = vsub.f32 1.0, %v3997
    %v3999 = vmul.f32 %v3996, %v3998
    %v4000 = vadd.f32 %v3996, %v3999
    %vm4001 = vweird.f32 %v3992
    %vm4002 = vweird.f32 %v3996
    %vm4003 = vmor %vm4001, %vm4002
    %v4004 = vsel %vm4003, %v3996, %v4000
    %v4005 = vand.u32 2147483647, %v3992
    %vm4006 = vcmp.eq.f32.partialorder %v4005, 8.507059e+37
    %v4007 = vand.u32 %v3992, 2147483648
    %v4008 = vor.u32 1.1754944e-38, %v4007
    %v4009 = vsel %vm4006, %v4008, %v4004
    %v4010 = vmul.f32 %v3987, %v4009
    %v4011 = vrcp.pop %v3995
    %v4012 = vmul.f32 %v3995, %v4011
    %v4013 = vsub.f32 1.0, %v4012
    %v4014 = vmul.f32 %v4011, %v4013
    %v4015 = vadd.f32 %v4011, %v4014
    %vm4016 = vweird.f32 %v3995
    %vm4017 = vweird.f32 %v4011
    %vm4018 = vmor %vm4016, %vm4017
    %v4019 = vsel %vm4018, %v4011, %v4015
    %v4020 = vand.u32 2147483647, %v3995
    %vm4021 = vcmp.eq.f32.partialorder %v4020, 8.507059e+37
    %v4022 = vand.u32 %v3995, 2147483648
    %v4023 = vor.u32 1.1754944e-38, %v4022
    %v4024 = vsel %vm4021, %v4023, %v4019
    %v4025 = vmul.f32 %v3989, %v4024
    %4026 = vrot.lane.b32.xlu0 %v3618, 48
    %v4027 = vpop.permute.xlu0 %4026
    %4028 = vrot.lane.b32.xlu0 %v3621, 48
    %v4029 = vpop.permute.xlu0 %4028
    %v4033 = vsel %vm3399, %v4010, 0
    %v4036 = vsel %vm3399, %v4025, 0
    %4038 = vmatpush.msra.mxu0 0.0
    %4039 = vmatpush.msra.mxu0 0.0
    %4040 = vmatpush.msra.mxu0 0.0
    %4041 = vmatpush.msra.mxu0 0.0
    %4042 = vmatpush.msra.mxu0 0.0
    %4043 = vmatpush.msra.mxu0 0.0
    %4044 = vmatpush.msra.mxu0 0.0
    %4045 = vmatpush.msra.mxu0 0.0
    %4046 = vmatpush.msra.mxu0 0.0
    %4047 = vmatpush.msra.mxu0 0.0
    %4048 = vmatpush.msra.mxu0 0.0
    %4049 = vmatpush.msra.mxu0 0.0
    %4050 = vmatpush.msra.mxu0 0.0
    %4051 = vmatpush.msra.mxu0 0.0
    %4052 = vmatpush.msra.mxu0 %v4029
    %4053 = vmatpush.msra.mxu0 %v4027
    %4054 = vmatmul.f32.gmra.mxu0 %v4033
    %v4055 = vpop.f32.mrf.mxu0
    %v4056 = vadd.f32 0.0, %v4055
    %4057 = vmatmul.f32.gmra.mxu0 %v4036
    %v4058 = vpop.f32.mrf.mxu0
    %v4059 = vadd.f32 0.0, %v4058
    %4060 = vdwg.mxu0
    %v4062 = vsel %vm462, %v4056, 0
    %v4065 = vsel %vm462, %v4059, 0
    %4067 = vmatpush.msra.mxu0 0.0
    %4068 = vmatpush.msra.mxu0 0.0
    %4069 = vmatpush.msra.mxu0 0.0
    %4070 = vmatpush.msra.mxu0 0.0
    %4071 = vmatpush.msra.mxu0 0.0
    %4072 = vmatpush.msra.mxu0 0.0
    %4073 = vmatpush.msra.mxu0 0.0
    %4074 = vmatpush.msra.mxu0 0.0
    %4075 = vmatpush.msra.mxu0 0.0
    %4076 = vmatpush.msra.mxu0 0.0
    %4077 = vmatpush.msra.mxu0 0.0
    %4078 = vmatpush.msra.mxu0 0.0
    %4079 = vmatpush.msra.mxu0 0.0
    %4080 = vmatpush.msra.mxu0 0.0
    %4081 = vmatpush.msra.mxu0 0.0
    %4082 = vmatpush.msra.mxu0 %v3625
    %4083 = vmatmul.f32.gmra.mxu0 %v4062
    %v4084 = vpop.f32.mrf.mxu0
    %v4085 = vadd.f32 0.0, %v4084
    %4086 = vmatmul.f32.gmra.mxu0 %v4065
    %v4087 = vpop.f32.mrf.mxu0
    %v4088 = vadd.f32 0.0, %v4087
    %4089 = vdwg.mxu0
    %v4090 = vadd.f32 %v3930, %v4085
    %v4091 = vadd.f32 %v3933, %v4088
    %4092 = vrot.lane.b32.xlu0 %v3618, 104
    %v4093 = vpop.permute.xlu0 %4092
    %4094 = vrot.lane.b32.xlu0 %v3621, 104
    %v4095 = vpop.permute.xlu0 %4094
    %4096 = vrot.lane.b32.xlu0 %v3618, 72
    %v4097 = vpop.permute.xlu0 %4096
    %4098 = vrot.lane.b32.xlu0 %v3621, 72
    %v4099 = vpop.permute.xlu0 %4098
    %v4100 = vsel %vm462, %v4093, 0
    %v4102 = vsel %vm462, %v4095, 0
    %v4104 = vsel %vm462, %v4097, 0
    %v4106 = vsel %vm462, %v4099, 0
    %4108 = vmatpush.xpose.msra.mxu0 0.0
    %4109 = vmatpush.xpose.msra.mxu0 0.0
    %4110 = vmatpush.xpose.msra.mxu0 0.0
    %4111 = vmatpush.xpose.msra.mxu0 0.0
    %4112 = vmatpush.xpose.msra.mxu0 0.0
    %4113 = vmatpush.xpose.msra.mxu0 0.0
    %4114 = vmatpush.xpose.msra.mxu0 0.0
    %4115 = vmatpush.xpose.msra.mxu0 0.0
    %4116 = vmatpush.xpose.msra.mxu0 0.0
    %4117 = vmatpush.xpose.msra.mxu0 0.0
    %4118 = vmatpush.xpose.msra.mxu0 0.0
    %4119 = vmatpush.xpose.msra.mxu0 0.0
    %4120 = vmatpush.xpose.msra.mxu0 0.0
    %4121 = vmatpush.xpose.msra.mxu0 0.0
    %4122 = vmatpush.xpose.msra.mxu0 %v4106
    %4123 = vmatpush.xpose.msra.mxu0 %v4104
    %4124 = vmatmul.f32.gmra.mxu0 %v4100
    %v4125 = vpop.f32.mrf.mxu0
    %v4126 = vadd.f32 0.0, %v4125
    %4127 = vmatmul.f32.gmra.mxu0 %v4102
    %v4128 = vpop.f32.mrf.mxu0
    %v4129 = vadd.f32 0.0, %v4128
    %4130 = vdwg.mxu0
    %v4131 = vmul.f32 %v4126, 0.35355338
    %v4132 = vmul.f32 %v4129, 0.35355338
    %v4133 = vadd.f32 %v4131, %v3584
    %v4134 = vadd.f32 %v4132, %v3585
    %v4135 = vsel %vm3399, %v4133, -inf
    %4136 = vmax.xlane.f32.xlu0 %v4135
    %v4137 = vpop.xlane.xlu0 %4136
    %v4138 = vsel %vm3399, %v4134, -inf
    %4139 = vmax.xlane.f32.xlu0 %v4138
    %v4140 = vpop.xlane.xlu0 %4139
    %v4141 = vsub.f32 %v4133, %v4137
    %v4142 = vsub.f32 %v4134, %v4140
    %v4143 = vmul.f32 %v4141, 1.442695
    %v4144 = vpow.pop %v4143
    %v4145 = vmul.f32 %v4142, 1.442695
    %v4146 = vpow.pop %v4145
    %v4147 = vsel %vm3399, %v4144, 0.0
    %4148 = vadd.xlane.f32.xlu0 %v4147
    %v4149 = vpop.xlane.xlu0 %4148
    %v4150 = vsel %vm3399, %v4146, 0.0
    %4151 = vadd.xlane.f32.xlu0 %v4150
    %v4152 = vpop.xlane.xlu0 %4151
    %v4153 = vrcp.pop %v4149
    %v4154 = vmul.f32 %v4149, %v4153
    %v4155 = vsub.f32 1.0, %v4154
    %v4156 = vmul.f32 %v4153, %v4155
    %v4157 = vadd.f32 %v4153, %v4156
    %vm4158 = vweird.f32 %v4149
    %vm4159 = vweird.f32 %v4153
    %vm4160 = vmor %vm4158, %vm4159
    %v4161 = vsel %vm4160, %v4153, %v4157
    %v4162 = vand.u32 2147483647, %v4149
    %vm4163 = vcmp.eq.f32.partialorder %v4162, 8.507059e+37
    %v4164 = vand.u32 %v4149, 2147483648
    %v4165 = vor.u32 1.1754944e-38, %v4164
    %v4166 = vsel %vm4163, %v4165, %v4161
    %v4167 = vmul.f32 %v4144, %v4166
    %v4168 = vrcp.pop %v4152
    %v4169 = vmul.f32 %v4152, %v4168
    %v4170 = vsub.f32 1.0, %v4169
    %v4171 = vmul.f32 %v4168, %v4170
    %v4172 = vadd.f32 %v4168, %v4171
    %vm4173 = vweird.f32 %v4152
    %vm4174 = vweird.f32 %v4168
    %vm4175 = vmor %vm4173, %vm4174
    %v4176 = vsel %vm4175, %v4168, %v4172
    %v4177 = vand.u32 2147483647, %v4152
    %vm4178 = vcmp.eq.f32.partialorder %v4177, 8.507059e+37
    %v4179 = vand.u32 %v4152, 2147483648
    %v4180 = vor.u32 1.1754944e-38, %v4179
    %v4181 = vsel %vm4178, %v4180, %v4176
    %v4182 = vmul.f32 %v4146, %v4181
    %4183 = vrot.lane.b32.xlu0 %v3618, 40
    %v4184 = vpop.permute.xlu0 %4183
    %4185 = vrot.lane.b32.xlu0 %v3621, 40
    %v4186 = vpop.permute.xlu0 %4185
    %v4190 = vsel %vm3399, %v4167, 0
    %v4193 = vsel %vm3399, %v4182, 0
    %4195 = vmatpush.msra.mxu0 0.0
    %4196 = vmatpush.msra.mxu0 0.0
    %4197 = vmatpush.msra.mxu0 0.0
    %4198 = vmatpush.msra.mxu0 0.0
    %4199 = vmatpush.msra.mxu0 0.0
    %4200 = vmatpush.msra.mxu0 0.0
    %4201 = vmatpush.msra.mxu0 0.0
    %4202 = vmatpush.msra.mxu0 0.0
    %4203 = vmatpush.msra.mxu0 0.0
    %4204 = vmatpush.msra.mxu0 0.0
    %4205 = vmatpush.msra.mxu0 0.0
    %4206 = vmatpush.msra.mxu0 0.0
    %4207 = vmatpush.msra.mxu0 0.0
    %4208 = vmatpush.msra.mxu0 0.0
    %4209 = vmatpush.msra.mxu0 %v4186
    %4210 = vmatpush.msra.mxu0 %v4184
    %4211 = vmatmul.f32.gmra.mxu0 %v4190
    %v4212 = vpop.f32.mrf.mxu0
    %v4213 = vadd.f32 0.0, %v4212
    %4214 = vmatmul.f32.gmra.mxu0 %v4193
    %v4215 = vpop.f32.mrf.mxu0
    %v4216 = vadd.f32 0.0, %v4215
    %4217 = vdwg.mxu0
    %v4219 = vsel %vm462, %v4213, 0
    %v4222 = vsel %vm462, %v4216, 0
    %4224 = vmatpush.msra.mxu0 0.0
    %4225 = vmatpush.msra.mxu0 0.0
    %4226 = vmatpush.msra.mxu0 0.0
    %4227 = vmatpush.msra.mxu0 0.0
    %4228 = vmatpush.msra.mxu0 0.0
    %4229 = vmatpush.msra.mxu0 0.0
    %4230 = vmatpush.msra.mxu0 0.0
    %4231 = vmatpush.msra.mxu0 0.0
    %4232 = vmatpush.msra.mxu0 0.0
    %4233 = vmatpush.msra.mxu0 0.0
    %4234 = vmatpush.msra.mxu0 0.0
    %4235 = vmatpush.msra.mxu0 0.0
    %4236 = vmatpush.msra.mxu0 0.0
    %4237 = vmatpush.msra.mxu0 0.0
    %4238 = vmatpush.msra.mxu0 0.0
    %4239 = vmatpush.msra.mxu0 %v3626
    %4240 = vmatmul.f32.gmra.mxu0 %v4219
    %v4241 = vpop.f32.mrf.mxu0
    %v4242 = vadd.f32 0.0, %v4241
    %4243 = vmatmul.f32.gmra.mxu0 %v4222
    %v4244 = vpop.f32.mrf.mxu0
    %v4245 = vadd.f32 0.0, %v4244
    %4246 = vdwg.mxu0
    %v4247 = vadd.f32 %v4090, %v4242
    %v4248 = vadd.f32 %v4091, %v4245
    %v4249 = vadd.f32 %v3582, %v4247
    %v4250 = vadd.f32 %v3583, %v4248
    %v4251 = vld [vmem:[%s59] sm:$0x1]
    %v4253 = vperm.slane %v4251, 0
    %v4255 = vadd.f32 %v4249, %v4253
    %v4256 = vadd.f32 %v4250, %v4253
    %v4257 = vld [vmem:[%s61] sm:$0x1]
    %v4258 = vld [vmem:[%s63] sm:$0x1]
    %v4259 = vsel %vm283, %v4255, 0.0
    %4260 = vadd.xlane.f32.xlu0 %v4259
    %v4261 = vpop.xlane.xlu0 %4260
    %v4262 = vsel %vm283, %v4256, 0.0
    %4263 = vadd.xlane.f32.xlu0 %v4262
    %v4264 = vpop.xlane.xlu0 %4263
    %v4265 = vmul.f32 %v4261, %v302
    %v4266 = vmul.f32 %v4264, %v302
    %v4267 = vsub.f32 %v4255, %v4265
    %v4268 = vsub.f32 %v4256, %v4266
    %v4269 = vmul.f32 %v4267, %v4267
    %v4270 = vmul.f32 %v4268, %v4268
    %v4271 = vsel %vm283, %v4269, 0.0
    %4272 = vadd.xlane.f32.xlu0 %v4271
    %v4273 = vpop.xlane.xlu0 %4272
    %v4274 = vsel %vm283, %v4270, 0.0
    %4275 = vadd.xlane.f32.xlu0 %v4274
    %v4276 = vpop.xlane.xlu0 %4275
    %v4277 = vmul.f32 %v4273, %v302
    %v4278 = vmul.f32 %v4276, %v302
    %v4279 = vadd.f32 %v4277, 1e-12
    %v4280 = vadd.f32 %v4278, 1e-12
    %v4281 = vrsqrt.pop %v4279
    %v4282 = vmul.f32 %v4281, %v4279
    %v4283 = vmul.f32 %v4282, %v4281
    %v4284 = vmul.f32 0.5, %v4283
    %v4285 = vsub.f32 1.5, %v4284
    %v4286 = vmul.f32 %v4281, %v4285
    %vm4287 = vweird.f32 %v4279
    %vm4288 = vweird.f32 %v4281
    %vm4289 = vmor %vm4287, %vm4288
    %v4290 = vsel %vm4289, %v4281, %v4286
    %v4291 = vrsqrt.pop %v4280
    %v4292 = vmul.f32 %v4291, %v4280
    %v4293 = vmul.f32 %v4292, %v4291
    %v4294 = vmul.f32 0.5, %v4293
    %v4295 = vsub.f32 1.5, %v4294
    %v4296 = vmul.f32 %v4291, %v4295
    %vm4297 = vweird.f32 %v4280
    %vm4298 = vweird.f32 %v4291
    %vm4299 = vmor %vm4297, %vm4298
    %v4300 = vsel %vm4299, %v4291, %v4296
    %v4301 = vmul.f32 %v4267, %v4290
    %v4302 = vmul.f32 %v4268, %v4300
    %v4304 = vperm.slane %v4257, 0
    %v4306 = vmul.f32 %v4301, %v4304
    %v4307 = vmul.f32 %v4302, %v4304
    %v4309 = vperm.slane %v4258, 0
    %v4311 = vadd.f32 %v4306, %v4309
    %v4312 = vadd.f32 %v4307, %v4309
    %v4313 = vld [vmem:[%s65] sm:$0xff]
    %v4314 = vld [vmem:[%s65 + $0x8] sm:$0xff]
    %v4315 = vld [vmem:[%s65 + $0x10] sm:$0xff]
    %v4316 = vld [vmem:[%s65 + $0x18] sm:$0xff]
    %v4317 = vld [vmem:[%s67] sm:$0x1]
    %v4319 = vperm.slane %v4317, 0
    %v4322 = vsel %vm283, %v4311, 0
    %v4325 = vsel %vm283, %v4312, 0
    %4327 = vmatpush.msra.mxu0 0.0
    %4328 = vmatpush.msra.mxu0 0.0
    %4329 = vmatpush.msra.mxu0 0.0
    %4330 = vmatpush.msra.mxu0 0.0
    %4331 = vmatpush.msra.mxu0 0.0
    %4332 = vmatpush.msra.mxu0 0.0
    %4333 = vmatpush.msra.mxu0 0.0
    %4334 = vmatpush.msra.mxu0 0.0
    %4335 = vmatpush.msra.mxu0 0.0
    %4336 = vmatpush.msra.mxu0 0.0
    %4337 = vmatpush.msra.mxu0 0.0
    %4338 = vmatpush.msra.mxu0 0.0
    %4339 = vmatpush.msra.mxu0 %v4316
    %4340 = vmatpush.msra.mxu0 %v4315
    %4341 = vmatpush.msra.mxu0 %v4314
    %4342 = vmatpush.msra.mxu0 %v4313
    %4343 = vmatmul.f32.gmra.mxu0 %v4322
    %v4344 = vpop.f32.mrf.mxu0
    %v4345 = vadd.f32 %v4319, %v4344
    %4346 = vmatmul.f32.gmra.mxu0 %v4325
    %v4347 = vpop.f32.mrf.mxu0
    %v4348 = vadd.f32 %v4319, %v4347
    %4349 = vdwg.mxu0
    %v4350 = vmul.f32 %v4345, %v4345
    %v4351 = vmul.f32 %v4348, %v4348
    %v4352 = vmul.f32 %v4345, %v4350
    %v4353 = vmul.f32 %v4348, %v4351
    %v4354 = vmul.f32 %v4352, 0.044715
    %v4355 = vmul.f32 %v4353, 0.044715
    %v4356 = vadd.f32 %v4345, %v4354
    %v4357 = vadd.f32 %v4348, %v4355
    %v4358 = vmul.f32 %v4356, 0.7978846
    %v4359 = vmul.f32 %v4357, 0.7978846
    %v4360 = vtanh.pop %v4358
    %v4361 = vtanh.pop %v4359
    %v4362 = vadd.f32 %v4360, 1.0
    %v4363 = vadd.f32 %v4361, 1.0
    %v4364 = vmul.f32 %v4362, 0.5
    %v4365 = vmul.f32 %v4363, 0.5
    %v4366 = vmul.f32 %v4345, %v4364
    %v4367 = vmul.f32 %v4348, %v4365
    %v4368 = vld [vmem:[%s69] sm:$0xff]
    %v4369 = vld [vmem:[%s69 + $0x8] sm:$0xff]
    %v4370 = vld [vmem:[%s69 + $0x10] sm:$0xff]
    %v4371 = vld [vmem:[%s69 + $0x18] sm:$0xff]
    %v4372 = vld [vmem:[%s69 + $0x20] sm:$0xff]
    %v4373 = vld [vmem:[%s69 + $0x28] sm:$0xff]
    %v4374 = vld [vmem:[%s69 + $0x30] sm:$0xff]
    %v4375 = vld [vmem:[%s69 + $0x38] sm:$0xff]
    %v4376 = vld [vmem:[%s71] sm:$0x1]
    %v4378 = vperm.slane %v4376, 0
    %v4381 = vsel %vm231, %v4366, 0
    %v4384 = vsel %vm231, %v4367, 0
    %4386 = vmatpush.msra.mxu0 0.0
    %4387 = vmatpush.msra.mxu0 0.0
    %4388 = vmatpush.msra.mxu0 0.0
    %4389 = vmatpush.msra.mxu0 0.0
    %4390 = vmatpush.msra.mxu0 0.0
    %4391 = vmatpush.msra.mxu0 0.0
    %4392 = vmatpush.msra.mxu0 0.0
    %4393 = vmatpush.msra.mxu0 0.0
    %4394 = vmatpush.msra.mxu0 %v4375
    %4395 = vmatpush.msra.mxu0 %v4374
    %4396 = vmatpush.msra.mxu0 %v4373
    %4397 = vmatpush.msra.mxu0 %v4372
    %4398 = vmatpush.msra.mxu0 %v4371
    %4399 = vmatpush.msra.mxu0 %v4370
    %4400 = vmatpush.msra.mxu0 %v4369
    %4401 = vmatpush.msra.mxu0 %v4368
    %4402 = vmatmul.f32.gmra.mxu0 %v4381
    %v4403 = vpop.f32.mrf.mxu0
    %v4404 = vadd.f32 %v4378, %v4403
    %4405 = vmatmul.f32.gmra.mxu0 %v4384
    %v4406 = vpop.f32.mrf.mxu0
    %v4407 = vadd.f32 %v4378, %v4406
    %4408 = vdwg.mxu0
    %v4409 = vadd.f32 %v4311, %v4404
    %v4410 = vadd.f32 %v4312, %v4407
    %v4411 = vld [vmem:[%s73] sm:$0x1]
    %v4412 = vld [vmem:[%s75] sm:$0x1]
    %v4413 = vsel %vm283, %v4409, 0.0
    %4414 = vadd.xlane.f32.xlu0 %v4413
    %v4415 = vpop.xlane.xlu0 %4414
    %v4416 = vsel %vm283, %v4410, 0.0
    %4417 = vadd.xlane.f32.xlu0 %v4416
    %v4418 = vpop.xlane.xlu0 %4417
    %v4419 = vmul.f32 %v4415, %v302
    %v4420 = vmul.f32 %v4418, %v302
    %v4421 = vsub.f32 %v4409, %v4419
    %v4422 = vsub.f32 %v4410, %v4420
    %v4423 = vmul.f32 %v4421, %v4421
    %v4424 = vmul.f32 %v4422, %v4422
    %v4425 = vsel %vm283, %v4423, 0.0
    %4426 = vadd.xlane.f32.xlu0 %v4425
    %v4427 = vpop.xlane.xlu0 %4426
    %v4428 = vsel %vm283, %v4424, 0.0
    %4429 = vadd.xlane.f32.xlu0 %v4428
    %v4430 = vpop.xlane.xlu0 %4429
    %v4431 = vmul.f32 %v4427, %v302
    %v4432 = vmul.f32 %v4430, %v302
    %v4433 = vadd.f32 %v4431, 1e-12
    %v4434 = vadd.f32 %v4432, 1e-12
    %v4435 = vrsqrt.pop %v4433
    %v4436 = vmul.f32 %v4435, %v4433
    %v4437 = vmul.f32 %v4436, %v4435
    %v4438 = vmul.f32 0.5, %v4437
    %v4439 = vsub.f32 1.5, %v4438
    %v4440 = vmul.f32 %v4435, %v4439
    %vm4441 = vweird.f32 %v4433
    %vm4442 = vweird.f32 %v4435
    %vm4443 = vmor %vm4441, %vm4442
    %v4444 = vsel %vm4443, %v4435, %v4440
    %v4445 = vrsqrt.pop %v4434
    %v4446 = vmul.f32 %v4445, %v4434
    %v4447 = vmul.f32 %v4446, %v4445
    %v4448 = vmul.f32 0.5, %v4447
    %v4449 = vsub.f32 1.5, %v4448
    %v4450 = vmul.f32 %v4445, %v4449
    %vm4451 = vweird.f32 %v4434
    %vm4452 = vweird.f32 %v4445
    %vm4453 = vmor %vm4451, %vm4452
    %v4454 = vsel %vm4453, %v4445, %v4450
    %v4455 = vmul.f32 %v4421, %v4444
    %v4456 = vmul.f32 %v4422, %v4454
    %v4458 = vperm.slane %v4411, 0
    %v4460 = vmul.f32 %v4455, %v4458
    %v4461 = vmul.f32 %v4456, %v4458
    %v4463 = vperm.slane %v4412, 0
    %v4465 = vadd.f32 %v4460, %v4463
    %v4466 = vadd.f32 %v4461, %v4463
    %s4467 = scalar_lea.vmem %s53, 32
    %v4468 = vld [vmem:[%s4467] sm:$0xff]
    %v4469 = vld [vmem:[%s4467 + $0x8] sm:$0xff]
    %v4470 = vld [vmem:[%s4467 + $0x10] sm:$0xff]
    %v4471 = vld [vmem:[%s4467 + $0x18] sm:$0xff]
    %s4472 = scalar_lea.vmem %s55, 1
    %v4473 = vld [vmem:[%s4472] sm:$0x1]
    %v4475 = vperm.slane %v4473, 0
    %v4478 = vsel %vm283, %v4465, 0
    %v4481 = vsel %vm283, %v4466, 0
    %4483 = vmatpush.msra.mxu0 0.0
    %4484 = vmatpush.msra.mxu0 0.0
    %4485 = vmatpush.msra.mxu0 0.0
    %4486 = vmatpush.msra.mxu0 0.0
    %4487 = vmatpush.msra.mxu0 0.0
    %4488 = vmatpush.msra.mxu0 0.0
    %4489 = vmatpush.msra.mxu0 0.0
    %4490 = vmatpush.msra.mxu0 0.0
    %4491 = vmatpush.msra.mxu0 0.0
    %4492 = vmatpush.msra.mxu0 0.0
    %4493 = vmatpush.msra.mxu0 0.0
    %4494 = vmatpush.msra.mxu0 0.0
    %4495 = vmatpush.msra.mxu0 %v4471
    %4496 = vmatpush.msra.mxu0 %v4470
    %4497 = vmatpush.msra.mxu0 %v4469
    %4498 = vmatpush.msra.mxu0 %v4468
    %4499 = vmatmul.f32.gmra.mxu0 %v4478
    %v4500 = vpop.f32.mrf.mxu0
    %v4501 = vadd.f32 %v4475, %v4500
    %4502 = vmatmul.f32.gmra.mxu0 %v4481
    %v4503 = vpop.f32.mrf.mxu0
    %v4504 = vadd.f32 %v4475, %v4503
    %4505 = vdwg.mxu0
    %s4506 = scalar_lea.vmem %s57, 32
    %v4507 = vld [vmem:[%s4506] sm:$0xff]
    %v4508 = vld [vmem:[%s4506 + $0x8] sm:$0xff]
    %v4509 = vld [vmem:[%s4506 + $0x10] sm:$0xff]
    %v4510 = vld [vmem:[%s4506 + $0x18] sm:$0xff]
    %4513 = vrot.lane.b32.xlu0 %v4501, 96
    %v4514 = vpop.permute.xlu0 %4513
    %4515 = vrot.lane.b32.xlu0 %v4504, 96
    %v4516 = vpop.permute.xlu0 %4515
    %v4517 = vsel %vm462, %v4501, 0
    %v4519 = vsel %vm462, %v4504, 0
    %v4521 = vsel %vm462, %v4514, 0
    %v4523 = vsel %vm462, %v4516, 0
    %4525 = vmatpush.xpose.msra.mxu0 0.0
    %4526 = vmatpush.xpose.msra.mxu0 0.0
    %4527 = vmatpush.xpose.msra.mxu0 0.0
    %4528 = vmatpush.xpose.msra.mxu0 0.0
    %4529 = vmatpush.xpose.msra.mxu0 0.0
    %4530 = vmatpush.xpose.msra.mxu0 0.0
    %4531 = vmatpush.xpose.msra.mxu0 0.0
    %4532 = vmatpush.xpose.msra.mxu0 0.0
    %4533 = vmatpush.xpose.msra.mxu0 0.0
    %4534 = vmatpush.xpose.msra.mxu0 0.0
    %4535 = vmatpush.xpose.msra.mxu0 0.0
    %4536 = vmatpush.xpose.msra.mxu0 0.0
    %4537 = vmatpush.xpose.msra.mxu0 0.0
    %4538 = vmatpush.xpose.msra.mxu0 0.0
    %4539 = vmatpush.xpose.msra.mxu0 %v4523
    %4540 = vmatpush.xpose.msra.mxu0 %v4521
    %4541 = vmatmul.f32.gmra.mxu0 %v4517
    %v4542 = vpop.f32.mrf.mxu0
    %v4543 = vadd.f32 0.0, %v4542
    %4544 = vmatmul.f32.gmra.mxu0 %v4519
    %v4545 = vpop.f32.mrf.mxu0
    %v4546 = vadd.f32 0.0, %v4545
    %4547 = vdwg.mxu0
    %v4548 = vmul.f32 %v4543, 0.35355338
    %v4549 = vmul.f32 %v4546, 0.35355338
    %v4550 = vadd.f32 %v4548, %v3584
    %v4551 = vadd.f32 %v4549, %v3585
    %v4552 = vsel %vm3399, %v4550, -inf
    %4553 = vmax.xlane.f32.xlu0 %v4552
    %v4554 = vpop.xlane.xlu0 %4553
    %v4555 = vsel %vm3399, %v4551, -inf
    %4556 = vmax.xlane.f32.xlu0 %v4555
    %v4557 = vpop.xlane.xlu0 %4556
    %v4558 = vsub.f32 %v4550, %v4554
    %v4559 = vsub.f32 %v4551, %v4557
    %v4560 = vmul.f32 %v4558, 1.442695
    %v4561 = vpow.pop %v4560
    %v4562 = vmul.f32 %v4559, 1.442695
    %v4563 = vpow.pop %v4562
    %v4564 = vsel %vm3399, %v4561, 0.0
    %4565 = vadd.xlane.f32.xlu0 %v4564
    %v4566 = vpop.xlane.xlu0 %4565
    %v4567 = vsel %vm3399, %v4563, 0.0
    %4568 = vadd.xlane.f32.xlu0 %v4567
    %v4569 = vpop.xlane.xlu0 %4568
    %v4570 = vrcp.pop %v4566
    %v4571 = vmul.f32 %v4566, %v4570
    %v4572 = vsub.f32 1.0, %v4571
    %v4573 = vmul.f32 %v4570, %v4572
    %v4574 = vadd.f32 %v4570, %v4573
    %vm4575 = vweird.f32 %v4566
    %vm4576 = vweird.f32 %v4570
    %vm4577 = vmor %vm4575, %vm4576
    %v4578 = vsel %vm4577, %v4570, %v4574
    %v4579 = vand.u32 2147483647, %v4566
    %vm4580 = vcmp.eq.f32.partialorder %v4579, 8.507059e+37
    %v4581 = vand.u32 %v4566, 2147483648
    %v4582 = vor.u32 1.1754944e-38, %v4581
    %v4583 = vsel %vm4580, %v4582, %v4578
    %v4584 = vmul.f32 %v4561, %v4583
    %v4585 = vrcp.pop %v4569
    %v4586 = vmul.f32 %v4569, %v4585
    %v4587 = vsub.f32 1.0, %v4586
    %v4588 = vmul.f32 %v4585, %v4587
    %v4589 = vadd.f32 %v4585, %v4588
    %vm4590 = vweird.f32 %v4569
    %vm4591 = vweird.f32 %v4585
    %vm4592 = vmor %vm4590, %vm4591
    %v4593 = vsel %vm4592, %v4585, %v4589
    %v4594 = vand.u32 2147483647, %v4569
    %vm4595 = vcmp.eq.f32.partialorder %v4594, 8.507059e+37
    %v4596 = vand.u32 %v4569, 2147483648
    %v4597 = vor.u32 1.1754944e-38, %v4596
    %v4598 = vsel %vm4595, %v4597, %v4593
    %v4599 = vmul.f32 %v4563, %v4598
    %4600 = vrot.lane.b32.xlu0 %v4501, 64
    %v4601 = vpop.permute.xlu0 %4600
    %4602 = vrot.lane.b32.xlu0 %v4504, 64
    %v4603 = vpop.permute.xlu0 %4602
    %v4607 = vsel %vm3399, %v4584, 0
    %v4610 = vsel %vm3399, %v4599, 0
    %4612 = vmatpush.msra.mxu0 0.0
    %4613 = vmatpush.msra.mxu0 0.0
    %4614 = vmatpush.msra.mxu0 0.0
    %4615 = vmatpush.msra.mxu0 0.0
    %4616 = vmatpush.msra.mxu0 0.0
    %4617 = vmatpush.msra.mxu0 0.0
    %4618 = vmatpush.msra.mxu0 0.0
    %4619 = vmatpush.msra.mxu0 0.0
    %4620 = vmatpush.msra.mxu0 0.0
    %4621 = vmatpush.msra.mxu0 0.0
    %4622 = vmatpush.msra.mxu0 0.0
    %4623 = vmatpush.msra.mxu0 0.0
    %4624 = vmatpush.msra.mxu0 0.0
    %4625 = vmatpush.msra.mxu0 0.0
    %4626 = vmatpush.msra.mxu0 %v4603
    %4627 = vmatpush.msra.mxu0 %v4601
    %4628 = vmatmul.f32.gmra.mxu0 %v4607
    %v4629 = vpop.f32.mrf.mxu0
    %v4630 = vadd.f32 0.0, %v4629
    %4631 = vmatmul.f32.gmra.mxu0 %v4610
    %v4632 = vpop.f32.mrf.mxu0
    %v4633 = vadd.f32 0.0, %v4632
    %4634 = vdwg.mxu0
    %4635 = vrot.lane.b32.xlu0 %v4501, 120
    %v4636 = vpop.permute.xlu0 %4635
    %4637 = vrot.lane.b32.xlu0 %v4504, 120
    %v4638 = vpop.permute.xlu0 %4637
    %4639 = vrot.lane.b32.xlu0 %v4501, 88
    %v4640 = vpop.permute.xlu0 %4639
    %4641 = vrot.lane.b32.xlu0 %v4504, 88
    %v4642 = vpop.permute.xlu0 %4641
    %v4643 = vsel %vm462, %v4636, 0
    %v4645 = vsel %vm462, %v4638, 0
    %v4647 = vsel %vm462, %v4640, 0
    %v4649 = vsel %vm462, %v4642, 0
    %4651 = vmatpush.xpose.msra.mxu0 0.0
    %4652 = vmatpush.xpose.msra.mxu0 0.0
    %4653 = vmatpush.xpose.msra.mxu0 0.0
    %4654 = vmatpush.xpose.msra.mxu0 0.0
    %4655 = vmatpush.xpose.msra.mxu0 0.0
    %4656 = vmatpush.xpose.msra.mxu0 0.0
    %4657 = vmatpush.xpose.msra.mxu0 0.0
    %4658 = vmatpush.xpose.msra.mxu0 0.0
    %4659 = vmatpush.xpose.msra.mxu0 0.0
    %4660 = vmatpush.xpose.msra.mxu0 0.0
    %4661 = vmatpush.xpose.msra.mxu0 0.0
    %4662 = vmatpush.xpose.msra.mxu0 0.0
    %4663 = vmatpush.xpose.msra.mxu0 0.0
    %4664 = vmatpush.xpose.msra.mxu0 0.0
    %4665 = vmatpush.xpose.msra.mxu0 %v4649
    %4666 = vmatpush.xpose.msra.mxu0 %v4647
    %4667 = vmatmul.f32.gmra.mxu0 %v4643
    %v4668 = vpop.f32.mrf.mxu0
    %v4669 = vadd.f32 0.0, %v4668
    %4670 = vmatmul.f32.gmra.mxu0 %v4645
    %v4671 = vpop.f32.mrf.mxu0
    %v4672 = vadd.f32 0.0, %v4671
    %4673 = vdwg.mxu0
    %v4674 = vmul.f32 %v4669, 0.35355338
    %v4675 = vmul.f32 %v4672, 0.35355338
    %v4676 = vadd.f32 %v4674, %v3584
    %v4677 = vadd.f32 %v4675, %v3585
    %v4678 = vsel %vm3399, %v4676, -inf
    %4679 = vmax.xlane.f32.xlu0 %v4678
    %v4680 = vpop.xlane.xlu0 %4679
    %v4681 = vsel %vm3399, %v4677, -inf
    %4682 = vmax.xlane.f32.xlu0 %v4681
    %v4683 = vpop.xlane.xlu0 %4682
    %v4684 = vsub.f32 %v4676, %v4680
    %v4685 = vsub.f32 %v4677, %v4683
    %v4686 = vmul.f32 %v4684, 1.442695
    %v4687 = vpow.pop %v4686
    %v4688 = vmul.f32 %v4685, 1.442695
    %v4689 = vpow.pop %v4688
    %v4690 = vsel %vm3399, %v4687, 0.0
    %4691 = vadd.xlane.f32.xlu0 %v4690
    %v4692 = vpop.xlane.xlu0 %4691
    %v4693 = vsel %vm3399, %v4689, 0.0
    %4694 = vadd.xlane.f32.xlu0 %v4693
    %v4695 = vpop.xlane.xlu0 %4694
    %v4696 = vrcp.pop %v4692
    %v4697 = vmul.f32 %v4692, %v4696
    %v4698 = vsub.f32 1.0, %v4697
    %v4699 = vmul.f32 %v4696, %v4698
    %v4700 = vadd.f32 %v4696, %v4699
    %vm4701 = vweird.f32 %v4692
    %vm4702 = vweird.f32 %v4696
    %vm4703 = vmor %vm4701, %vm4702
    %v4704 = vsel %vm4703, %v4696, %v4700
    %v4705 = vand.u32 2147483647, %v4692
    %vm4706 = vcmp.eq.f32.partialorder %v4705, 8.507059e+37
    %v4707 = vand.u32 %v4692, 2147483648
    %v4708 = vor.u32 1.1754944e-38, %v4707
    %v4709 = vsel %vm4706, %v4708, %v4704
    %v4710 = vmul.f32 %v4687, %v4709
    %v4711 = vrcp.pop %v4695
    %v4712 = vmul.f32 %v4695, %v4711
    %v4713 = vsub.f32 1.0, %v4712
    %v4714 = vmul.f32 %v4711, %v4713
    %v4715 = vadd.f32 %v4711, %v4714
    %vm4716 = vweird.f32 %v4695
    %vm4717 = vweird.f32 %v4711
    %vm4718 = vmor %vm4716, %vm4717
    %v4719 = vsel %vm4718, %v4711, %v4715
    %v4720 = vand.u32 2147483647, %v4695
    %vm4721 = vcmp.eq.f32.partialorder %v4720, 8.507059e+37
    %v4722 = vand.u32 %v4695, 2147483648
    %v4723 = vor.u32 1.1754944e-38, %v4722
    %v4724 = vsel %vm4721, %v4723, %v4719
    %v4725 = vmul.f32 %v4689, %v4724
    %4726 = vrot.lane.b32.xlu0 %v4501, 56
    %v4727 = vpop.permute.xlu0 %4726
    %4728 = vrot.lane.b32.xlu0 %v4504, 56
    %v4729 = vpop.permute.xlu0 %4728
    %v4733 = vsel %vm3399, %v4710, 0
    %v4736 = vsel %vm3399, %v4725, 0
    %4738 = vmatpush.msra.mxu0 0.0
    %4739 = vmatpush.msra.mxu0 0.0
    %4740 = vmatpush.msra.mxu0 0.0
    %4741 = vmatpush.msra.mxu0 0.0
    %4742 = vmatpush.msra.mxu0 0.0
    %4743 = vmatpush.msra.mxu0 0.0
    %4744 = vmatpush.msra.mxu0 0.0
    %4745 = vmatpush.msra.mxu0 0.0
    %4746 = vmatpush.msra.mxu0 0.0
    %4747 = vmatpush.msra.mxu0 0.0
    %4748 = vmatpush.msra.mxu0 0.0
    %4749 = vmatpush.msra.mxu0 0.0
    %4750 = vmatpush.msra.mxu0 0.0
    %4751 = vmatpush.msra.mxu0 0.0
    %4752 = vmatpush.msra.mxu0 %v4729
    %4753 = vmatpush.msra.mxu0 %v4727
    %4754 = vmatmul.f32.gmra.mxu0 %v4733
    %v4755 = vpop.f32.mrf.mxu0
    %v4756 = vadd.f32 0.0, %v4755
    %4757 = vmatmul.f32.gmra.mxu0 %v4736
    %v4758 = vpop.f32.mrf.mxu0
    %v4759 = vadd.f32 0.0, %v4758
    %4760 = vdwg.mxu0
    %v4762 = vsel %vm462, %v4756, 0
    %v4765 = vsel %vm462, %v4759, 0
    %4767 = vmatpush.msra.mxu0 0.0
    %4768 = vmatpush.msra.mxu0 0.0
    %4769 = vmatpush.msra.mxu0 0.0
    %4770 = vmatpush.msra.mxu0 0.0
    %4771 = vmatpush.msra.mxu0 0.0
    %4772 = vmatpush.msra.mxu0 0.0
    %4773 = vmatpush.msra.mxu0 0.0
    %4774 = vmatpush.msra.mxu0 0.0
    %4775 = vmatpush.msra.mxu0 0.0
    %4776 = vmatpush.msra.mxu0 0.0
    %4777 = vmatpush.msra.mxu0 0.0
    %4778 = vmatpush.msra.mxu0 0.0
    %4779 = vmatpush.msra.mxu0 0.0
    %4780 = vmatpush.msra.mxu0 0.0
    %4781 = vmatpush.msra.mxu0 0.0
    %4782 = vmatpush.msra.mxu0 %v4508
    %4783 = vmatmul.f32.gmra.mxu0 %v4762
    %v4784 = vpop.f32.mrf.mxu0
    %v4785 = vadd.f32 0.0, %v4784
    %4786 = vmatmul.f32.gmra.mxu0 %v4765
    %v4787 = vpop.f32.mrf.mxu0
    %v4788 = vadd.f32 0.0, %v4787
    %4789 = vdwg.mxu0
    %v4791 = vsel %vm462, %v4630, 0
    %v4794 = vsel %vm462, %v4633, 0
    %4796 = vmatpush.msra.mxu0 0.0
    %4797 = vmatpush.msra.mxu0 0.0
    %4798 = vmatpush.msra.mxu0 0.0
    %4799 = vmatpush.msra.mxu0 0.0
    %4800 = vmatpush.msra.mxu0 0.0
    %4801 = vmatpush.msra.mxu0 0.0
    %4802 = vmatpush.msra.mxu0 0.0
    %4803 = vmatpush.msra.mxu0 0.0
    %4804 = vmatpush.msra.mxu0 0.0
    %4805 = vmatpush.msra.mxu0 0.0
    %4806 = vmatpush.msra.mxu0 0.0
    %4807 = vmatpush.msra.mxu0 0.0
    %4808 = vmatpush.msra.mxu0 0.0
    %4809 = vmatpush.msra.mxu0 0.0
    %4810 = vmatpush.msra.mxu0 0.0
    %4811 = vmatpush.msra.mxu0 %v4507
    %4812 = vmatmul.f32.gmra.mxu0 %v4791
    %v4813 = vpop.f32.mrf.mxu0
    %v4814 = vadd.f32 %v4785, %v4813
    %4815 = vmatmul.f32.gmra.mxu0 %v4794
    %v4816 = vpop.f32.mrf.mxu0
    %v4817 = vadd.f32 %v4788, %v4816
    %4818 = vdwg.mxu0
    %4819 = vrot.lane.b32.xlu0 %v4501, 112
    %v4820 = vpop.permute.xlu0 %4819
    %4821 = vrot.lane.b32.xlu0 %v4504, 112
    %v4822 = vpop.permute.xlu0 %4821
    %4823 = vrot.lane.b32.xlu0 %v4501, 80
    %v4824 = vpop.permute.xlu0 %4823
    %4825 = vrot.lane.b32.xlu0 %v4504, 80
    %v4826 = vpop.permute.xlu0 %4825
    %v4827 = vsel %vm462, %v4820, 0
    %v4829 = vsel %vm462, %v4822, 0
    %v4831 = vsel %vm462, %v4824, 0
    %v4833 = vsel %vm462, %v4826, 0
    %4835 = vmatpush.xpose.msra.mxu0 0.0
    %4836 = vmatpush.xpose.msra.mxu0 0.0
    %4837 = vmatpush.xpose.msra.mxu0 0.0
    %4838 = vmatpush.xpose.msra.mxu0 0.0
    %4839 = vmatpush.xpose.msra.mxu0 0.0
    %4840 = vmatpush.xpose.msra.mxu0 0.0
    %4841 = vmatpush.xpose.msra.mxu0 0.0
    %4842 = vmatpush.xpose.msra.mxu0 0.0
    %4843 = vmatpush.xpose.msra.mxu0 0.0
    %4844 = vmatpush.xpose.msra.mxu0 0.0
    %4845 = vmatpush.xpose.msra.mxu0 0.0
    %4846 = vmatpush.xpose.msra.mxu0 0.0
    %4847 = vmatpush.xpose.msra.mxu0 0.0
    %4848 = vmatpush.xpose.msra.mxu0 0.0
    %4849 = vmatpush.xpose.msra.mxu0 %v4833
    %4850 = vmatpush.xpose.msra.mxu0 %v4831
    %4851 = vmatmul.f32.gmra.mxu0 %v4827
    %v4852 = vpop.f32.mrf.mxu0
    %v4853 = vadd.f32 0.0, %v4852
    %4854 = vmatmul.f32.gmra.mxu0 %v4829
    %v4855 = vpop.f32.mrf.mxu0
    %v4856 = vadd.f32 0.0, %v4855
    %4857 = vdwg.mxu0
    %v4858 = vmul.f32 %v4853, 0.35355338
    %v4859 = vmul.f32 %v4856, 0.35355338
    %v4860 = vadd.f32 %v4858, %v3584
    %v4861 = vadd.f32 %v4859, %v3585
    %v4862 = vsel %vm3399, %v4860, -inf
    %4863 = vmax.xlane.f32.xlu0 %v4862
    %v4864 = vpop.xlane.xlu0 %4863
    %v4865 = vsel %vm3399, %v4861, -inf
    %4866 = vmax.xlane.f32.xlu0 %v4865
    %v4867 = vpop.xlane.xlu0 %4866
    %v4868 = vsub.f32 %v4860, %v4864
    %v4869 = vsub.f32 %v4861, %v4867
    %v4870 = vmul.f32 %v4868, 1.442695
    %v4871 = vpow.pop %v4870
    %v4872 = vmul.f32 %v4869, 1.442695
    %v4873 = vpow.pop %v4872
    %v4874 = vsel %vm3399, %v4871, 0.0
    %4875 = vadd.xlane.f32.xlu0 %v4874
    %v4876 = vpop.xlane.xlu0 %4875
    %v4877 = vsel %vm3399, %v4873, 0.0
    %4878 = vadd.xlane.f32.xlu0 %v4877
    %v4879 = vpop.xlane.xlu0 %4878
    %v4880 = vrcp.pop %v4876
    %v4881 = vmul.f32 %v4876, %v4880
    %v4882 = vsub.f32 1.0, %v4881
    %v4883 = vmul.f32 %v4880, %v4882
    %v4884 = vadd.f32 %v4880, %v4883
    %vm4885 = vweird.f32 %v4876
    %vm4886 = vweird.f32 %v4880
    %vm4887 = vmor %vm4885, %vm4886
    %v4888 = vsel %vm4887, %v4880, %v4884
    %v4889 = vand.u32 2147483647, %v4876
    %vm4890 = vcmp.eq.f32.partialorder %v4889, 8.507059e+37
    %v4891 = vand.u32 %v4876, 2147483648
    %v4892 = vor.u32 1.1754944e-38, %v4891
    %v4893 = vsel %vm4890, %v4892, %v4888
    %v4894 = vmul.f32 %v4871, %v4893
    %v4895 = vrcp.pop %v4879
    %v4896 = vmul.f32 %v4879, %v4895
    %v4897 = vsub.f32 1.0, %v4896
    %v4898 = vmul.f32 %v4895, %v4897
    %v4899 = vadd.f32 %v4895, %v4898
    %vm4900 = vweird.f32 %v4879
    %vm4901 = vweird.f32 %v4895
    %vm4902 = vmor %vm4900, %vm4901
    %v4903 = vsel %vm4902, %v4895, %v4899
    %v4904 = vand.u32 2147483647, %v4879
    %vm4905 = vcmp.eq.f32.partialorder %v4904, 8.507059e+37
    %v4906 = vand.u32 %v4879, 2147483648
    %v4907 = vor.u32 1.1754944e-38, %v4906
    %v4908 = vsel %vm4905, %v4907, %v4903
    %v4909 = vmul.f32 %v4873, %v4908
    %4910 = vrot.lane.b32.xlu0 %v4501, 48
    %v4911 = vpop.permute.xlu0 %4910
    %4912 = vrot.lane.b32.xlu0 %v4504, 48
    %v4913 = vpop.permute.xlu0 %4912
    %v4917 = vsel %vm3399, %v4894, 0
    %v4920 = vsel %vm3399, %v4909, 0
    %4922 = vmatpush.msra.mxu0 0.0
    %4923 = vmatpush.msra.mxu0 0.0
    %4924 = vmatpush.msra.mxu0 0.0
    %4925 = vmatpush.msra.mxu0 0.0
    %4926 = vmatpush.msra.mxu0 0.0
    %4927 = vmatpush.msra.mxu0 0.0
    %4928 = vmatpush.msra.mxu0 0.0
    %4929 = vmatpush.msra.mxu0 0.0
    %4930 = vmatpush.msra.mxu0 0.0
    %4931 = vmatpush.msra.mxu0 0.0
    %4932 = vmatpush.msra.mxu0 0.0
    %4933 = vmatpush.msra.mxu0 0.0
    %4934 = vmatpush.msra.mxu0 0.0
    %4935 = vmatpush.msra.mxu0 0.0
    %4936 = vmatpush.msra.mxu0 %v4913
    %4937 = vmatpush.msra.mxu0 %v4911
    %4938 = vmatmul.f32.gmra.mxu0 %v4917
    %v4939 = vpop.f32.mrf.mxu0
    %v4940 = vadd.f32 0.0, %v4939
    %4941 = vmatmul.f32.gmra.mxu0 %v4920
    %v4942 = vpop.f32.mrf.mxu0
    %v4943 = vadd.f32 0.0, %v4942
    %4944 = vdwg.mxu0
    %v4946 = vsel %vm462, %v4940, 0
    %v4949 = vsel %vm462, %v4943, 0
    %4951 = vmatpush.msra.mxu0 0.0
    %4952 = vmatpush.msra.mxu0 0.0
    %4953 = vmatpush.msra.mxu0 0.0
    %4954 = vmatpush.msra.mxu0 0.0
    %4955 = vmatpush.msra.mxu0 0.0
    %4956 = vmatpush.msra.mxu0 0.0
    %4957 = vmatpush.msra.mxu0 0.0
    %4958 = vmatpush.msra.mxu0 0.0
    %4959 = vmatpush.msra.mxu0 0.0
    %4960 = vmatpush.msra.mxu0 0.0
    %4961 = vmatpush.msra.mxu0 0.0
    %4962 = vmatpush.msra.mxu0 0.0
    %4963 = vmatpush.msra.mxu0 0.0
    %4964 = vmatpush.msra.mxu0 0.0
    %4965 = vmatpush.msra.mxu0 0.0
    %4966 = vmatpush.msra.mxu0 %v4509
    %4967 = vmatmul.f32.gmra.mxu0 %v4946
    %v4968 = vpop.f32.mrf.mxu0
    %v4969 = vadd.f32 0.0, %v4968
    %4970 = vmatmul.f32.gmra.mxu0 %v4949
    %v4971 = vpop.f32.mrf.mxu0
    %v4972 = vadd.f32 0.0, %v4971
    %4973 = vdwg.mxu0
    %v4974 = vadd.f32 %v4814, %v4969
    %v4975 = vadd.f32 %v4817, %v4972
    %4976 = vrot.lane.b32.xlu0 %v4501, 104
    %v4977 = vpop.permute.xlu0 %4976
    %4978 = vrot.lane.b32.xlu0 %v4504, 104
    %v4979 = vpop.permute.xlu0 %4978
    %4980 = vrot.lane.b32.xlu0 %v4501, 72
    %v4981 = vpop.permute.xlu0 %4980
    %4982 = vrot.lane.b32.xlu0 %v4504, 72
    %v4983 = vpop.permute.xlu0 %4982
    %v4984 = vsel %vm462, %v4977, 0
    %v4986 = vsel %vm462, %v4979, 0
    %v4988 = vsel %vm462, %v4981, 0
    %v4990 = vsel %vm462, %v4983, 0
    %4992 = vmatpush.xpose.msra.mxu0 0.0
    %4993 = vmatpush.xpose.msra.mxu0 0.0
    %4994 = vmatpush.xpose.msra.mxu0 0.0
    %4995 = vmatpush.xpose.msra.mxu0 0.0
    %4996 = vmatpush.xpose.msra.mxu0 0.0
    %4997 = vmatpush.xpose.msra.mxu0 0.0
    %4998 = vmatpush.xpose.msra.mxu0 0.0
    %4999 = vmatpush.xpose.msra.mxu0 0.0
    %5000 = vmatpush.xpose.msra.mxu0 0.0
    %5001 = vmatpush.xpose.msra.mxu0 0.0
    %5002 = vmatpush.xpose.msra.mxu0 0.0
    %5003 = vmatpush.xpose.msra.mxu0 0.0
    %5004 = vmatpush.xpose.msra.mxu0 0.0
    %5005 = vmatpush.xpose.msra.mxu0 0.0
    %5006 = vmatpush.xpose.msra.mxu0 %v4990
    %5007 = vmatpush.xpose.msra.mxu0 %v4988
    %5008 = vmatmul.f32.gmra.mxu0 %v4984
    %v5009 = vpop.f32.mrf.mxu0
    %v5010 = vadd.f32 0.0, %v5009
    %5011 = vmatmul.f32.gmra.mxu0 %v4986
    %v5012 = vpop.f32.mrf.mxu0
    %v5013 = vadd.f32 0.0, %v5012
    %5014 = vdwg.mxu0
    %v5015 = vmul.f32 %v5010, 0.35355338
    %v5016 = vmul.f32 %v5013, 0.35355338
    %v5017 = vadd.f32 %v5015, %v3584
    %v5018 = vadd.f32 %v5016, %v3585
    %v5019 = vsel %vm3399, %v5017, -inf
    %5020 = vmax.xlane.f32.xlu0 %v5019
    %v5021 = vpop.xlane.xlu0 %5020
    %v5022 = vsel %vm3399, %v5018, -inf
    %5023 = vmax.xlane.f32.xlu0 %v5022
    %v5024 = vpop.xlane.xlu0 %5023
    %v5025 = vsub.f32 %v5017, %v5021
    %v5026 = vsub.f32 %v5018, %v5024
    %v5027 = vmul.f32 %v5025, 1.442695
    %v5028 = vpow.pop %v5027
    %v5029 = vmul.f32 %v5026, 1.442695
    %v5030 = vpow.pop %v5029
    %v5031 = vsel %vm3399, %v5028, 0.0
    %5032 = vadd.xlane.f32.xlu0 %v5031
    %v5033 = vpop.xlane.xlu0 %5032
    %v5034 = vsel %vm3399, %v5030, 0.0
    %5035 = vadd.xlane.f32.xlu0 %v5034
    %v5036 = vpop.xlane.xlu0 %5035
    %v5037 = vrcp.pop %v5033
    %v5038 = vmul.f32 %v5033, %v5037
    %v5039 = vsub.f32 1.0, %v5038
    %v5040 = vmul.f32 %v5037, %v5039
    %v5041 = vadd.f32 %v5037, %v5040
    %vm5042 = vweird.f32 %v5033
    %vm5043 = vweird.f32 %v5037
    %vm5044 = vmor %vm5042, %vm5043
    %v5045 = vsel %vm5044, %v5037, %v5041
    %v5046 = vand.u32 2147483647, %v5033
    %vm5047 = vcmp.eq.f32.partialorder %v5046, 8.507059e+37
    %v5048 = vand.u32 %v5033, 2147483648
    %v5049 = vor.u32 1.1754944e-38, %v5048
    %v5050 = vsel %vm5047, %v5049, %v5045
    %v5051 = vmul.f32 %v5028, %v5050
    %v5052 = vrcp.pop %v5036
    %v5053 = vmul.f32 %v5036, %v5052
    %v5054 = vsub.f32 1.0, %v5053
    %v5055 = vmul.f32 %v5052, %v5054
    %v5056 = vadd.f32 %v5052, %v5055
    %vm5057 = vweird.f32 %v5036
    %vm5058 = vweird.f32 %v5052
    %vm5059 = vmor %vm5057, %vm5058
    %v5060 = vsel %vm5059, %v5052, %v5056
    %v5061 = vand.u32 2147483647, %v5036
    %vm5062 = vcmp.eq.f32.partialorder %v5061, 8.507059e+37
    %v5063 = vand.u32 %v5036, 2147483648
    %v5064 = vor.u32 1.1754944e-38, %v5063
    %v5065 = vsel %vm5062, %v5064, %v5060
    %v5066 = vmul.f32 %v5030, %v5065
    %5067 = vrot.lane.b32.xlu0 %v4501, 40
    %v5068 = vpop.permute.xlu0 %5067
    %5069 = vrot.lane.b32.xlu0 %v4504, 40
    %v5070 = vpop.permute.xlu0 %5069
    %v5074 = vsel %vm3399, %v5051, 0
    %v5077 = vsel %vm3399, %v5066, 0
    %5079 = vmatpush.msra.mxu0 0.0
    %5080 = vmatpush.msra.mxu0 0.0
    %5081 = vmatpush.msra.mxu0 0.0
    %5082 = vmatpush.msra.mxu0 0.0
    %5083 = vmatpush.msra.mxu0 0.0
    %5084 = vmatpush.msra.mxu0 0.0
    %5085 = vmatpush.msra.mxu0 0.0
    %5086 = vmatpush.msra.mxu0 0.0
    %5087 = vmatpush.msra.mxu0 0.0
    %5088 = vmatpush.msra.mxu0 0.0
    %5089 = vmatpush.msra.mxu0 0.0
    %5090 = vmatpush.msra.mxu0 0.0
    %5091 = vmatpush.msra.mxu0 0.0
    %5092 = vmatpush.msra.mxu0 0.0
    %5093 = vmatpush.msra.mxu0 %v5070
    %5094 = vmatpush.msra.mxu0 %v5068
    %5095 = vmatmul.f32.gmra.mxu0 %v5074
    %v5096 = vpop.f32.mrf.mxu0
    %v5097 = vadd.f32 0.0, %v5096
    %5098 = vmatmul.f32.gmra.mxu0 %v5077
    %v5099 = vpop.f32.mrf.mxu0
    %v5100 = vadd.f32 0.0, %v5099
    %5101 = vdwg.mxu0
    %v5103 = vsel %vm462, %v5097, 0
    %v5106 = vsel %vm462, %v5100, 0
    %5108 = vmatpush.msra.mxu0 0.0
    %5109 = vmatpush.msra.mxu0 0.0
    %5110 = vmatpush.msra.mxu0 0.0
    %5111 = vmatpush.msra.mxu0 0.0
    %5112 = vmatpush.msra.mxu0 0.0
    %5113 = vmatpush.msra.mxu0 0.0
    %5114 = vmatpush.msra.mxu0 0.0
    %5115 = vmatpush.msra.mxu0 0.0
    %5116 = vmatpush.msra.mxu0 0.0
    %5117 = vmatpush.msra.mxu0 0.0
    %5118 = vmatpush.msra.mxu0 0.0
    %5119 = vmatpush.msra.mxu0 0.0
    %5120 = vmatpush.msra.mxu0 0.0
    %5121 = vmatpush.msra.mxu0 0.0
    %5122 = vmatpush.msra.mxu0 0.0
    %5123 = vmatpush.msra.mxu0 %v4510
    %5124 = vmatmul.f32.gmra.mxu0 %v5103
    %v5125 = vpop.f32.mrf.mxu0
    %v5126 = vadd.f32 0.0, %v5125
    %5127 = vmatmul.f32.gmra.mxu0 %v5106
    %v5128 = vpop.f32.mrf.mxu0
    %v5129 = vadd.f32 0.0, %v5128
    %5130 = vdwg.mxu0
    %v5131 = vadd.f32 %v4974, %v5126
    %v5132 = vadd.f32 %v4975, %v5129
    %v5133 = vadd.f32 %v4465, %v5131
    %v5134 = vadd.f32 %v4466, %v5132
    %s5135 = scalar_lea.vmem %s59, 1
    %v5136 = vld [vmem:[%s5135] sm:$0x1]
    %v5138 = vperm.slane %v5136, 0
    %v5140 = vadd.f32 %v5133, %v5138
    %v5141 = vadd.f32 %v5134, %v5138
    %s5142 = scalar_lea.vmem %s61, 1
    %v5143 = vld [vmem:[%s5142] sm:$0x1]
    %s5144 = scalar_lea.vmem %s63, 1
    %v5145 = vld [vmem:[%s5144] sm:$0x1]
    %v5146 = vsel %vm283, %v5140, 0.0
    %5147 = vadd.xlane.f32.xlu0 %v5146
    %v5148 = vpop.xlane.xlu0 %5147
    %v5149 = vsel %vm283, %v5141, 0.0
    %5150 = vadd.xlane.f32.xlu0 %v5149
    %v5151 = vpop.xlane.xlu0 %5150
    %v5152 = vmul.f32 %v5148, %v302
    %v5153 = vmul.f32 %v5151, %v302
    %v5154 = vsub.f32 %v5140, %v5152
    %v5155 = vsub.f32 %v5141, %v5153
    %v5156 = vmul.f32 %v5154, %v5154
    %v5157 = vmul.f32 %v5155, %v5155
    %v5158 = vsel %vm283, %v5156, 0.0
    %5159 = vadd.xlane.f32.xlu0 %v5158
    %v5160 = vpop.xlane.xlu0 %5159
    %v5161 = vsel %vm283, %v5157, 0.0
    %5162 = vadd.xlane.f32.xlu0 %v5161
    %v5163 = vpop.xlane.xlu0 %5162
    %v5164 = vmul.f32 %v5160, %v302
    %v5165 = vmul.f32 %v5163, %v302
    %v5166 = vadd.f32 %v5164, 1e-12
    %v5167 = vadd.f32 %v5165, 1e-12
    %v5168 = vrsqrt.pop %v5166
    %v5169 = vmul.f32 %v5168, %v5166
    %v5170 = vmul.f32 %v5169, %v5168
    %v5171 = vmul.f32 0.5, %v5170
    %v5172 = vsub.f32 1.5, %v5171
    %v5173 = vmul.f32 %v5168, %v5172
    %vm5174 = vweird.f32 %v5166
    %vm5175 = vweird.f32 %v5168
    %vm5176 = vmor %vm5174, %vm5175
    %v5177 = vsel %vm5176, %v5168, %v5173
    %v5178 = vrsqrt.pop %v5167
    %v5179 = vmul.f32 %v5178, %v5167
    %v5180 = vmul.f32 %v5179, %v5178
    %v5181 = vmul.f32 0.5, %v5180
    %v5182 = vsub.f32 1.5, %v5181
    %v5183 = vmul.f32 %v5178, %v5182
    %vm5184 = vweird.f32 %v5167
    %vm5185 = vweird.f32 %v5178
    %vm5186 = vmor %vm5184, %vm5185
    %v5187 = vsel %vm5186, %v5178, %v5183
    %v5188 = vmul.f32 %v5154, %v5177
    %v5189 = vmul.f32 %v5155, %v5187
    %v5191 = vperm.slane %v5143, 0
    %v5193 = vmul.f32 %v5188, %v5191
    %v5194 = vmul.f32 %v5189, %v5191
    %v5196 = vperm.slane %v5145, 0
    %v5198 = vadd.f32 %v5193, %v5196
    %v5199 = vadd.f32 %v5194, %v5196
    %s5200 = scalar_lea.vmem %s65, 32
    %v5201 = vld [vmem:[%s5200] sm:$0xff]
    %v5202 = vld [vmem:[%s5200 + $0x8] sm:$0xff]
    %v5203 = vld [vmem:[%s5200 + $0x10] sm:$0xff]
    %v5204 = vld [vmem:[%s5200 + $0x18] sm:$0xff]
    %s5205 = scalar_lea.vmem %s67, 1
    %v5206 = vld [vmem:[%s5205] sm:$0x1]
    %v5208 = vperm.slane %v5206, 0
    %v5211 = vsel %vm283, %v5198, 0
    %v5214 = vsel %vm283, %v5199, 0
    %5216 = vmatpush.msra.mxu0 0.0
    %5217 = vmatpush.msra.mxu0 0.0
    %5218 = vmatpush.msra.mxu0 0.0
    %5219 = vmatpush.msra.mxu0 0.0
    %5220 = vmatpush.msra.mxu0 0.0
    %5221 = vmatpush.msra.mxu0 0.0
    %5222 = vmatpush.msra.mxu0 0.0
    %5223 = vmatpush.msra.mxu0 0.0
    %5224 = vmatpush.msra.mxu0 0.0
    %5225 = vmatpush.msra.mxu0 0.0
    %5226 = vmatpush.msra.mxu0 0.0
    %5227 = vmatpush.msra.mxu0 0.0
    %5228 = vmatpush.msra.mxu0 %v5204
    %5229 = vmatpush.msra.mxu0 %v5203
    %5230 = vmatpush.msra.mxu0 %v5202
    %5231 = vmatpush.msra.mxu0 %v5201
    %5232 = vmatmul.f32.gmra.mxu0 %v5211
    %v5233 = vpop.f32.mrf.mxu0
    %v5234 = vadd.f32 %v5208, %v5233
    %5235 = vmatmul.f32.gmra.mxu0 %v5214
    %v5236 = vpop.f32.mrf.mxu0
    %v5237 = vadd.f32 %v5208, %v5236
    %5238 = vdwg.mxu0
    %v5239 = vmul.f32 %v5234, %v5234
    %v5240 = vmul.f32 %v5237, %v5237
    %v5241 = vmul.f32 %v5234, %v5239
    %v5242 = vmul.f32 %v5237, %v5240
    %v5243 = vmul.f32 %v5241, 0.044715
    %v5244 = vmul.f32 %v5242, 0.044715
    %v5245 = vadd.f32 %v5234, %v5243
    %v5246 = vadd.f32 %v5237, %v5244
    %v5247 = vmul.f32 %v5245, 0.7978846
    %v5248 = vmul.f32 %v5246, 0.7978846
    %v5249 = vtanh.pop %v5247
    %v5250 = vtanh.pop %v5248
    %v5251 = vadd.f32 %v5249, 1.0
    %v5252 = vadd.f32 %v5250, 1.0
    %v5253 = vmul.f32 %v5251, 0.5
    %v5254 = vmul.f32 %v5252, 0.5
    %v5255 = vmul.f32 %v5234, %v5253
    %v5256 = vmul.f32 %v5237, %v5254
    %s5257 = scalar_lea.vmem %s69, 64
    %v5258 = vld [vmem:[%s5257] sm:$0xff]
    %v5259 = vld [vmem:[%s5257 + $0x8] sm:$0xff]
    %v5260 = vld [vmem:[%s5257 + $0x10] sm:$0xff]
    %v5261 = vld [vmem:[%s5257 + $0x18] sm:$0xff]
    %v5262 = vld [vmem:[%s5257 + $0x20] sm:$0xff]
    %v5263 = vld [vmem:[%s5257 + $0x28] sm:$0xff]
    %v5264 = vld [vmem:[%s5257 + $0x30] sm:$0xff]
    %v5265 = vld [vmem:[%s5257 + $0x38] sm:$0xff]
    %s5266 = scalar_lea.vmem %s71, 1
    %v5267 = vld [vmem:[%s5266] sm:$0x1]
    %v5269 = vperm.slane %v5267, 0
    %v5272 = vsel %vm231, %v5255, 0
    %v5275 = vsel %vm231, %v5256, 0
    %5277 = vmatpush.msra.mxu0 0.0
    %5278 = vmatpush.msra.mxu0 0.0
    %5279 = vmatpush.msra.mxu0 0.0
    %5280 = vmatpush.msra.mxu0 0.0
    %5281 = vmatpush.msra.mxu0 0.0
    %5282 = vmatpush.msra.mxu0 0.0
    %5283 = vmatpush.msra.mxu0 0.0
    %5284 = vmatpush.msra.mxu0 0.0
    %5285 = vmatpush.msra.mxu0 %v5265
    %5286 = vmatpush.msra.mxu0 %v5264
    %5287 = vmatpush.msra.mxu0 %v5263
    %5288 = vmatpush.msra.mxu0 %v5262
    %5289 = vmatpush.msra.mxu0 %v5261
    %5290 = vmatpush.msra.mxu0 %v5260
    %5291 = vmatpush.msra.mxu0 %v5259
    %5292 = vmatpush.msra.mxu0 %v5258
    %5293 = vmatmul.f32.gmra.mxu0 %v5272
    %v5294 = vpop.f32.mrf.mxu0
    %v5295 = vadd.f32 %v5269, %v5294
    %5296 = vmatmul.f32.gmra.mxu0 %v5275
    %v5297 = vpop.f32.mrf.mxu0
    %v5298 = vadd.f32 %v5269, %v5297
    %5299 = vdwg.mxu0
    %v5300 = vadd.f32 %v5198, %v5295
    %v5301 = vadd.f32 %v5199, %v5298
    %s5302 = scalar_lea.vmem %s73, 1
    %v5303 = vld [vmem:[%s5302] sm:$0x1]
    %s5304 = scalar_lea.vmem %s75, 1
    %v5305 = vld [vmem:[%s5304] sm:$0x1]
    %v5306 = vsel %vm283, %v5300, 0.0
    %5307 = vadd.xlane.f32.xlu0 %v5306
    %v5308 = vpop.xlane.xlu0 %5307
    %v5309 = vsel %vm283, %v5301, 0.0
    %5310 = vadd.xlane.f32.xlu0 %v5309
    %v5311 = vpop.xlane.xlu0 %5310
    %v5312 = vmul.f32 %v5308, %v302
    %v5313 = vmul.f32 %v5311, %v302
    %v5314 = vsub.f32 %v5300, %v5312
    %v5315 = vsub.f32 %v5301, %v5313
    %v5316 = vmul.f32 %v5314, %v5314
    %v5317 = vmul.f32 %v5315, %v5315
    %v5318 = vsel %vm283, %v5316, 0.0
    %5319 = vadd.xlane.f32.xlu0 %v5318
    %v5320 = vpop.xlane.xlu0 %5319
    %v5321 = vsel %vm283, %v5317, 0.0
    %5322 = vadd.xlane.f32.xlu0 %v5321
    %v5323 = vpop.xlane.xlu0 %5322
    %v5324 = vmul.f32 %v5320, %v302
    %v5325 = vmul.f32 %v5323, %v302
    %v5326 = vadd.f32 %v5324, 1e-12
    %v5327 = vadd.f32 %v5325, 1e-12
    %v5328 = vrsqrt.pop %v5326
    %v5329 = vmul.f32 %v5328, %v5326
    %v5330 = vmul.f32 %v5329, %v5328
    %v5331 = vmul.f32 0.5, %v5330
    %v5332 = vsub.f32 1.5, %v5331
    %v5333 = vmul.f32 %v5328, %v5332
    %vm5334 = vweird.f32 %v5326
    %vm5335 = vweird.f32 %v5328
    %vm5336 = vmor %vm5334, %vm5335
    %v5337 = vsel %vm5336, %v5328, %v5333
    %v5338 = vrsqrt.pop %v5327
    %v5339 = vmul.f32 %v5338, %v5327
    %v5340 = vmul.f32 %v5339, %v5338
    %v5341 = vmul.f32 0.5, %v5340
    %v5342 = vsub.f32 1.5, %v5341
    %v5343 = vmul.f32 %v5338, %v5342
    %vm5344 = vweird.f32 %v5327
    %vm5345 = vweird.f32 %v5338
    %vm5346 = vmor %vm5344, %vm5345
    %v5347 = vsel %vm5346, %v5338, %v5343
    %v5348 = vmul.f32 %v5314, %v5337
    %v5349 = vmul.f32 %v5315, %v5347
    %v5351 = vperm.slane %v5303, 0
    %v5353 = vmul.f32 %v5348, %v5351
    %v5354 = vmul.f32 %v5349, %v5351
    %v5356 = vperm.slane %v5305, 0
    %v5358 = vadd.f32 %v5353, %v5356
    %v5359 = vadd.f32 %v5354, %v5356
    %v5360 = vld [vmem:[%s77] sm:$0xff]
    %v5361 = vld [vmem:[%s77 + $0x8] sm:$0xff]
    %v5362 = vld [vmem:[%s77 + $0x10] sm:$0xff]
    %v5363 = vld [vmem:[%s77 + $0x18] sm:$0xff]
    %v5364 = vld [vmem:[%s79] sm:$0x1]
    %v5366 = vperm.slane %v5364, 0
    %v5369 = vsel %vm283, %v5358, 0
    %v5372 = vsel %vm283, %v5359, 0
    %5374 = vmatpush.msra.mxu0 0.0
    %5375 = vmatpush.msra.mxu0 0.0
    %5376 = vmatpush.msra.mxu0 0.0
    %5377 = vmatpush.msra.mxu0 0.0
    %5378 = vmatpush.msra.mxu0 0.0
    %5379 = vmatpush.msra.mxu0 0.0
    %5380 = vmatpush.msra.mxu0 0.0
    %5381 = vmatpush.msra.mxu0 0.0
    %5382 = vmatpush.msra.mxu0 0.0
    %5383 = vmatpush.msra.mxu0 0.0
    %5384 = vmatpush.msra.mxu0 0.0
    %5385 = vmatpush.msra.mxu0 0.0
    %5386 = vmatpush.msra.mxu0 %v5363
    %5387 = vmatpush.msra.mxu0 %v5362
    %5388 = vmatpush.msra.mxu0 %v5361
    %5389 = vmatpush.msra.mxu0 %v5360
    %5390 = vmatmul.f32.gmra.mxu0 %v5369
    %v5391 = vpop.f32.mrf.mxu0
    %v5392 = vadd.f32 %v5366, %v5391
    %5393 = vmatmul.f32.gmra.mxu0 %v5372
    %v5394 = vpop.f32.mrf.mxu0
    %v5395 = vadd.f32 %v5366, %v5394
    %5396 = vdwg.mxu0
    %5397 = vst.msk [vmem:[#allocation3] sm:$0xff] %vm231, %v5392
    %5398 = vst.msk [vmem:[#allocation3 + $0x8] sm:$0xff] %vm231, %v5395
    // Predicated region
    $region162: #{_lambda_.1} parent=1 // pred_check
      _
    $region163: #{_lambda_.1} parent=1 // pred_check_branch
      %5400 = sbr.rel (0) target = $region165
    $region164: #{_lambda_.1} parent=1 // pred_region
      %5402 = vsyncadd [#allocation4], 0
      %s5403 = sshll.u32 [#allocation3], 4
      %s5404 = int_to_ptr.vmem [resolvable:$true] %s5403
      %s5405 = sshll.u32 %s81, 4
      %s5406 = int_to_ptr.hbm [resolvable:$true] %s5405
      %5411 = dma.vmem_to_hbm [thread:$0]  %s5404, 256, %s5406, [#allocation4], 128, 128, 8
    $region165: #{_lambda_.1} parent=1 // pred_fallthru
      _
    // Predicated region
    $region166: #{_lambda_.1} parent=1 // pred_check
      _
    $region167: #{_lambda_.1} parent=1 // pred_check_branch
      %5413 = sbr.rel (0) target = $region169
    $region168: #{_lambda_.1} parent=1 // pred_region
      %5415 = dma.done [#allocation4], 256
    $region169: #{_lambda_.1} parent=1 // pred_fallthru
      _
    %5416 = vsyncpa [#allocation4], 1

</llo_original>
